<compile_context>
chip_gen: v7x
topology: tpu7x:2x2x1
jax: 0.10.0
libtpu: 0.0.40
codegen_flags: <defaults>
</compile_context>

<pallas_src>
import functools
import math

import jax
import jax.numpy as jnp
from jax.experimental import pallas as pl
from jax.experimental.pallas import tpu as pltpu


# ---------------------------------------------------------------------------
# Pallas kernel: conv2d (caller-padded "same") + bias + optional ReLU,
# as a sum of KH*KW shifted bf16 matmuls accumulated in a f32 VMEM scratch.
# ---------------------------------------------------------------------------
def _conv_bias_act_kernel(x_ref, w_ref, b_ref, o_ref, acc_ref,
                          *, NB, H, W, KH, KW, relu):
    # x_ref  : (NB, Hp, Wp, Cin)  padded f32 activations for NB batch images
    # w_ref  : (KH, KW, Cin, TN)  bf16 filter bank, one Cout tile
    # b_ref  : (1, TN)            f32 bias tile
    # o_ref  : (NB, H, W, TN)     output tile
    # acc_ref: (NB*H*W, TN)       f32 VMEM scratch accumulator
    Cin = x_ref.shape[-1]
    TN = o_ref.shape[-1]

    # Materialize the KW dx-shifted, bf16-cast copies once (3 copies, not 9);
    # the dy slice below stays on whole sublane tiles and is cheap.
    x_sh = [x_ref[:, :, dx:dx + W, :].astype(jnp.bfloat16) for dx in range(KW)]

    first = True
    for dy in range(KH):                      # static, fully unrolled taps
        for dx in range(KW):
            patch = x_sh[dx][:, dy:dy + H].reshape(NB * H * W, Cin)
            part = jnp.dot(patch, w_ref[dy, dx],
                           preferred_element_type=jnp.float32)
            if first:
                acc_ref[...] = part
                first = False
            else:
                acc_ref[...] += part

    out = acc_ref[...] + b_ref[...]
    if relu:
        out = jnp.maximum(out, 0.0)
    o_ref[...] = out.reshape(NB, H, W, TN).astype(o_ref.dtype)


def conv2d_bias_act(x, w, b, *, relu):
    """x: (N,H,W,Cin) f32 NHWC; w: (KH,KW,Cin,Cout) bf16 HWIO; b: (Cout,) f32."""
    N, H, W, Cin = x.shape
    KH, KW, _, Cout = w.shape
    ph, pw = KH // 2, KW // 2                 # PyTorch padding=1 (3x3), 0 (1x1)

    # Lane-dense output: pad Cout up to a multiple of 128 (e.g. 200 -> 256).
    Cout_p = max(128, ((Cout + 127) // 128) * 128)
    if Cout_p != Cout:
        w = jnp.pad(w, ((0, 0), (0, 0), (0, 0), (0, Cout_p - Cout)))
        b = jnp.pad(b, ((0, Cout_p - Cout),))

    # Cout tile: 256-wide when possible (full MXU N on v6e/v7x), else 128.
    tn = 256 if Cout_p % 256 == 0 else 128
    tn = min(tn, Cout_p)

    # Batch block: raise the MXU M dimension toward NB*H*W = 256.
    nb = 1
    for cand in (4, 2, 1):
        if N % cand == 0:
            nb = cand
            break

    # TODO(synk): padding still done wrapper-side via jnp.pad (minor; fuses
    # with the NCHW->NHWC transpose under jit).
    xp = jnp.pad(x, ((0, 0), (ph, ph), (pw, pw), (0, 0)))
    Hp, Wp = H + 2 * ph, W + 2 * pw
    b2 = b.reshape(1, Cout_p).astype(jnp.float32)

    kernel = functools.partial(_conv_bias_act_kernel,
                               NB=nb, H=H, W=W, KH=KH, KW=KW, relu=relu)

    out = pl.pallas_call(
        kernel,
        out_shape=jax.ShapeDtypeStruct((N, H, W, Cout_p), x.dtype),
        grid_spec=pltpu.PrefetchScalarGridSpec(
            num_scalar_prefetch=0,
            grid=(N // nb, Cout_p // tn),
            in_specs=[
                pl.BlockSpec((nb, Hp, Wp, Cin), lambda i, j: (i, 0, 0, 0)),
                pl.BlockSpec((KH, KW, Cin, tn), lambda i, j: (0, 0, 0, j)),
                pl.BlockSpec((1, tn), lambda i, j: (0, j)),
            ],
            out_specs=pl.BlockSpec((nb, H, W, tn), lambda i, j: (i, 0, 0, j)),
            scratch_shapes=[pltpu.VMEM((nb * H * W, tn), jnp.float32)],
        ),
        compiler_params=pltpu.CompilerParams(
            dimension_semantics=("parallel", "parallel")),
    )(xp, w, b2)

    if Cout_p != Cout:
        out = out[..., :Cout]
    return out


# ---------------------------------------------------------------------------
# Parameter construction (Kaiming-style uniform like nn.Conv2d default init).
# Weights stored bf16 (HWIO), biases f32.
# ---------------------------------------------------------------------------
def build_params(key, in_ch, mid_ch, num_classes):
    def conv_init(k, kh, kw, cin, cout):
        kw_key, kb_key = jax.random.split(k)
        fan_in = cin * kh * kw
        bound = 1.0 / math.sqrt(fan_in)
        w_oihw = jax.random.uniform(kw_key, (cout, cin, kh, kw), jnp.float32,
                                    minval=-bound, maxval=bound)
        w_hwio = jnp.transpose(w_oihw, (2, 3, 1, 0)).astype(jnp.bfloat16)
        bias = jax.random.uniform(kb_key, (cout,), jnp.float32,
                                  minval=-bound, maxval=bound)
        return w_hwio, bias

    k6, k7, k8 = jax.random.split(key, 3)
    w6, b6 = conv_init(k6, 3, 3, in_ch, mid_ch)
    w7, b7 = conv_init(k7, 3, 3, mid_ch, mid_ch)
    w8, b8 = conv_init(k8, 1, 1, mid_ch, num_classes)
    return dict(w6=w6, b6=b6, w7=w7, b7=b7, w8=w8, b8=b8)


# ---------------------------------------------------------------------------
# Full forward pass (eval mode: the three F.dropout calls are identity)
# ---------------------------------------------------------------------------
@jax.jit
def inference_forward(x_nchw, params):
    x = jnp.transpose(x_nchw, (0, 2, 3, 1))                           # NCHW -> NHWC
    x = conv2d_bias_act(x, params["w6"], params["b6"], relu=True)     # cls_fc6 + ReLU
    x = conv2d_bias_act(x, params["w7"], params["b7"], relu=True)     # cls_fc7 + ReLU
    x = conv2d_bias_act(x, params["w8"], params["b8"], relu=False)    # cls_fc8 (1x1)
    return jnp.transpose(x, (0, 3, 1, 2))                             # back to NCHW


# Pure-JAX reference (same bf16-weight / bf16-activation, f32-accumulate math)
def _reference_forward(x_nchw, params):
    def conv(x, w, b, relu):
        y = jax.lax.conv_general_dilated(
            x.astype(jnp.bfloat16), w, window_strides=(1, 1), padding="SAME",
            dimension_numbers=("NHWC", "HWIO", "NHWC"),
            preferred_element_type=jnp.float32)
        y = y + b
        return jnp.maximum(y, 0.0) if relu else y

    x = jnp.transpose(x_nchw, (0, 2, 3, 1))
    x = conv(x, params["w6"], params["b6"], True)
    x = conv(x, params["w7"], params["b7"], True)
    x = conv(x, params["w8"], params["b8"], False)
    return jnp.transpose(x, (0, 3, 1, 2))


if __name__ == "__main__":
    # Small shapes consistent with the module structure
    # (full module: in_ch=768, mid_ch=1024, num_classes=200 — scaled down).
    N, IN_CH, H, W = 2, 128, 8, 8
    MID_CH, NUM_CLASSES = 256, 200

    key = jax.random.PRNGKey(0)
    kx, kp = jax.random.split(key)
    x = jax.random.normal(kx, (N, IN_CH, H, W), jnp.float32)   # NCHW like PyTorch
    params = build_params(kp, IN_CH, MID_CH, NUM_CLASSES)

    out = jax.block_until_ready(inference_forward(x, params))
    assert out.shape == (N, NUM_CLASSES, H, W), out.shape

    ref = _reference_forward(x, params)
    max_err = float(jnp.max(jnp.abs(out - ref)))
    assert jnp.allclose(out, ref, rtol=1e-2, atol=1e-2), max_err

    print("KERNEL_OK")
</pallas_src>

<mosaic_0001>
module attributes {stable_mosaic.version = 11 : i64} {
  func.func @_conv_bias_act_kernel(%arg0: i32, %arg1: i32, %arg2: memref<2x10x10x128xf32, #tpu.memory_space<vmem>>, %arg3: memref<3x3x128x256xbf16, #tpu.memory_space<vmem>>, %arg4: memref<1x256xf32, #tpu.memory_space<vmem>>, %arg5: memref<2x8x8x256xf32, #tpu.memory_space<vmem>>, %arg6: memref<128x256xf32, #tpu.memory_space<vmem>>) attributes {dimension_semantics = [#tpu.dimension_semantics<parallel>, #tpu.dimension_semantics<parallel>], iteration_bounds = array<i64: 1, 1>, scalar_prefetch = 0 : i64, scratch_operands = 1 : i64, tpu.core_type = #tpu.core_type<tc>, window_params = [{transform_indices = @transform_0, window_bounds = array<i64: 2, 10, 10, 128>}, {transform_indices = @transform_1, window_bounds = array<i64: 3, 3, 128, 256>}, {transform_indices = @transform_2, window_bounds = array<i64: 1, 256>}, {transform_indices = @transform_3, window_bounds = array<i64: 2, 8, 8, 256>}]} {
    %c0 = arith.constant 0 : index
    %c0_0 = arith.constant 0 : index
    %c0_1 = arith.constant 0 : index
    %c0_2 = arith.constant 0 : index
    %0 = vector.load %arg2[%c0, %c0_0, %c0_1, %c0_2] : memref<2x10x10x128xf32, #tpu.memory_space<vmem>>, vector<2x10x8x128xf32>
    %1 = arith.truncf %0 : vector<2x10x8x128xf32> to vector<2x10x8x128xbf16>
    %c0_3 = arith.constant 0 : index
    %c0_4 = arith.constant 0 : index
    %c1 = arith.constant 1 : index
    %c0_5 = arith.constant 0 : index
    %2 = vector.load %arg2[%c0_3, %c0_4, %c1, %c0_5] : memref<2x10x10x128xf32, #tpu.memory_space<vmem>>, vector<2x10x8x128xf32>
    %3 = arith.truncf %2 : vector<2x10x8x128xf32> to vector<2x10x8x128xbf16>
    %c0_6 = arith.constant 0 : index
    %c0_7 = arith.constant 0 : index
    %c2 = arith.constant 2 : index
    %c0_8 = arith.constant 0 : index
    %4 = vector.load %arg2[%c0_6, %c0_7, %c2, %c0_8] : memref<2x10x10x128xf32, #tpu.memory_space<vmem>>, vector<2x10x8x128xf32>
    %5 = arith.truncf %4 : vector<2x10x8x128xf32> to vector<2x10x8x128xbf16>
    %6 = vector.extract_strided_slice %1 {offsets = [0, 0, 0, 0], sizes = [2, 8, 8, 128], strides = [1, 1, 1, 1]} : vector<2x10x8x128xbf16> to vector<2x8x8x128xbf16>
    %7 = vector.shape_cast %6 : vector<2x8x8x128xbf16> to vector<128x128xbf16>
    %c0_9 = arith.constant 0 : index
    %c0_10 = arith.constant 0 : index
    %c0_11 = arith.constant 0 : index
    %c0_12 = arith.constant 0 : index
    %8 = vector.load %arg3[%c0_9, %c0_10, %c0_11, %c0_12] : memref<3x3x128x256xbf16, #tpu.memory_space<vmem>>, vector<1x1x128x256xbf16>
    %9 = vector.shape_cast %8 : vector<1x1x128x256xbf16> to vector<128x256xbf16>
    %cst = arith.constant dense<0.000000e+00> : vector<128x256xf32>
    %10 = tpu.matmul %7, %9, %cst {dimension_numbers = #tpu.dot_dimension_numbers<[1], [0], [0], [1], [0, 0, 1, 1], [], []>} : vector<128x128xbf16>, vector<128x256xbf16>, vector<128x256xf32> -> vector<128x256xf32>
    %c0_13 = arith.constant 0 : index
    %c0_14 = arith.constant 0 : index
    %11 = vector.load %arg6[%c0_13, %c0_14] : memref<128x256xf32, #tpu.memory_space<vmem>>, vector<128x256xf32>
    tpu.vector_store %arg6[%c0_13, %c0_14], %10 {strides = array<i32>} : memref<128x256xf32, #tpu.memory_space<vmem>>, vector<128x256xf32>,
    %12 = vector.extract_strided_slice %3 {offsets = [0, 0, 0, 0], sizes = [2, 8, 8, 128], strides = [1, 1, 1, 1]} : vector<2x10x8x128xbf16> to vector<2x8x8x128xbf16>
    %13 = vector.shape_cast %12 : vector<2x8x8x128xbf16> to vector<128x128xbf16>
    %c0_15 = arith.constant 0 : index
    %c1_16 = arith.constant 1 : index
    %c0_17 = arith.constant 0 : index
    %c0_18 = arith.constant 0 : index
    %14 = vector.load %arg3[%c0_15, %c1_16, %c0_17, %c0_18] : memref<3x3x128x256xbf16, #tpu.memory_space<vmem>>, vector<1x1x128x256xbf16>
    %15 = vector.shape_cast %14 : vector<1x1x128x256xbf16> to vector<128x256xbf16>
    %cst_19 = arith.constant dense<0.000000e+00> : vector<128x256xf32>
    %16 = tpu.matmul %13, %15, %cst_19 {dimension_numbers = #tpu.dot_dimension_numbers<[1], [0], [0], [1], [0, 0, 1, 1], [], []>} : vector<128x128xbf16>, vector<128x256xbf16>, vector<128x256xf32> -> vector<128x256xf32>
    %c0_20 = arith.constant 0 : index
    %c0_21 = arith.constant 0 : index
    %17 = vector.load %arg6[%c0_20, %c0_21] : memref<128x256xf32, #tpu.memory_space<vmem>>, vector<128x256xf32>
    %18 = arith.addf %17, %16 : vector<128x256xf32>
    %c0_22 = arith.constant 0 : index
    %c0_23 = arith.constant 0 : index
    %19 = vector.load %arg6[%c0_22, %c0_23] : memref<128x256xf32, #tpu.memory_space<vmem>>, vector<128x256xf32>
    tpu.vector_store %arg6[%c0_22, %c0_23], %18 {strides = array<i32>} : memref<128x256xf32, #tpu.memory_space<vmem>>, vector<128x256xf32>,
    %20 = vector.extract_strided_slice %5 {offsets = [0, 0, 0, 0], sizes = [2, 8, 8, 128], strides = [1, 1, 1, 1]} : vector<2x10x8x128xbf16> to vector<2x8x8x128xbf16>
    %21 = vector.shape_cast %20 : vector<2x8x8x128xbf16> to vector<128x128xbf16>
    %c0_24 = arith.constant 0 : index
    %c2_25 = arith.constant 2 : index
    %c0_26 = arith.constant 0 : index
    %c0_27 = arith.constant 0 : index
    %22 = vector.load %arg3[%c0_24, %c2_25, %c0_26, %c0_27] : memref<3x3x128x256xbf16, #tpu.memory_space<vmem>>, vector<1x1x128x256xbf16>
    %23 = vector.shape_cast %22 : vector<1x1x128x256xbf16> to vector<128x256xbf16>
    %cst_28 = arith.constant dense<0.000000e+00> : vector<128x256xf32>
    %24 = tpu.matmul %21, %23, %cst_28 {dimension_numbers = #tpu.dot_dimension_numbers<[1], [0], [0], [1], [0, 0, 1, 1], [], []>} : vector<128x128xbf16>, vector<128x256xbf16>, vector<128x256xf32> -> vector<128x256xf32>
    %c0_29 = arith.constant 0 : index
    %c0_30 = arith.constant 0 : index
    %25 = vector.load %arg6[%c0_29, %c0_30] : memref<128x256xf32, #tpu.memory_space<vmem>>, vector<128x256xf32>
    %26 = arith.addf %25, %24 : vector<128x256xf32>
    %c0_31 = arith.constant 0 : index
    %c0_32 = arith.constant 0 : index
    %27 = vector.load %arg6[%c0_31, %c0_32] : memref<128x256xf32, #tpu.memory_space<vmem>>, vector<128x256xf32>
    tpu.vector_store %arg6[%c0_31, %c0_32], %26 {strides = array<i32>} : memref<128x256xf32, #tpu.memory_space<vmem>>, vector<128x256xf32>,
    %28 = vector.extract_strided_slice %1 {offsets = [0, 1, 0, 0], sizes = [2, 8, 8, 128], strides = [1, 1, 1, 1]} : vector<2x10x8x128xbf16> to vector<2x8x8x128xbf16>
    %29 = vector.shape_cast %28 : vector<2x8x8x128xbf16> to vector<128x128xbf16>
    %c1_33 = arith.constant 1 : index
    %c0_34 = arith.constant 0 : index
    %c0_35 = arith.constant 0 : index
    %c0_36 = arith.constant 0 : index
    %30 = vector.load %arg3[%c1_33, %c0_34, %c0_35, %c0_36] : memref<3x3x128x256xbf16, #tpu.memory_space<vmem>>, vector<1x1x128x256xbf16>
    %31 = vector.shape_cast %30 : vector<1x1x128x256xbf16> to vector<128x256xbf16>
    %cst_37 = arith.constant dense<0.000000e+00> : vector<128x256xf32>
    %32 = tpu.matmul %29, %31, %cst_37 {dimension_numbers = #tpu.dot_dimension_numbers<[1], [0], [0], [1], [0, 0, 1, 1], [], []>} : vector<128x128xbf16>, vector<128x256xbf16>, vector<128x256xf32> -> vector<128x256xf32>
    %c0_38 = arith.constant 0 : index
    %c0_39 = arith.constant 0 : index
    %33 = vector.load %arg6[%c0_38, %c0_39] : memref<128x256xf32, #tpu.memory_space<vmem>>, vector<128x256xf32>
    %34 = arith.addf %33, %32 : vector<128x256xf32>
    %c0_40 = arith.constant 0 : index
    %c0_41 = arith.constant 0 : index
    %35 = vector.load %arg6[%c0_40, %c0_41] : memref<128x256xf32, #tpu.memory_space<vmem>>, vector<128x256xf32>
    tpu.vector_store %arg6[%c0_40, %c0_41], %34 {strides = array<i32>} : memref<128x256xf32, #tpu.memory_space<vmem>>, vector<128x256xf32>,
    %36 = vector.extract_strided_slice %3 {offsets = [0, 1, 0, 0], sizes = [2, 8, 8, 128], strides = [1, 1, 1, 1]} : vector<2x10x8x128xbf16> to vector<2x8x8x128xbf16>
    %37 = vector.shape_cast %36 : vector<2x8x8x128xbf16> to vector<128x128xbf16>
    %c1_42 = arith.constant 1 : index
    %c1_43 = arith.constant 1 : index
    %c0_44 = arith.constant 0 : index
    %c0_45 = arith.constant 0 : index
    %38 = vector.load %arg3[%c1_42, %c1_43, %c0_44, %c0_45] : memref<3x3x128x256xbf16, #tpu.memory_space<vmem>>, vector<1x1x128x256xbf16>
    %39 = vector.shape_cast %38 : vector<1x1x128x256xbf16> to vector<128x256xbf16>
    %cst_46 = arith.constant dense<0.000000e+00> : vector<128x256xf32>
    %40 = tpu.matmul %37, %39, %cst_46 {dimension_numbers = #tpu.dot_dimension_numbers<[1], [0], [0], [1], [0, 0, 1, 1], [], []>} : vector<128x128xbf16>, vector<128x256xbf16>, vector<128x256xf32> -> vector<128x256xf32>
    %c0_47 = arith.constant 0 : index
    %c0_48 = arith.constant 0 : index
    %41 = vector.load %arg6[%c0_47, %c0_48] : memref<128x256xf32, #tpu.memory_space<vmem>>, vector<128x256xf32>
    %42 = arith.addf %41, %40 : vector<128x256xf32>
    %c0_49 = arith.constant 0 : index
    %c0_50 = arith.constant 0 : index
    %43 = vector.load %arg6[%c0_49, %c0_50] : memref<128x256xf32, #tpu.memory_space<vmem>>, vector<128x256xf32>
    tpu.vector_store %arg6[%c0_49, %c0_50], %42 {strides = array<i32>} : memref<128x256xf32, #tpu.memory_space<vmem>>, vector<128x256xf32>,
    %44 = vector.extract_strided_slice %5 {offsets = [0, 1, 0, 0], sizes = [2, 8, 8, 128], strides = [1, 1, 1, 1]} : vector<2x10x8x128xbf16> to vector<2x8x8x128xbf16>
    %45 = vector.shape_cast %44 : vector<2x8x8x128xbf16> to vector<128x128xbf16>
    %c1_51 = arith.constant 1 : index
    %c2_52 = arith.constant 2 : index
    %c0_53 = arith.constant 0 : index
    %c0_54 = arith.constant 0 : index
    %46 = vector.load %arg3[%c1_51, %c2_52, %c0_53, %c0_54] : memref<3x3x128x256xbf16, #tpu.memory_space<vmem>>, vector<1x1x128x256xbf16>
    %47 = vector.shape_cast %46 : vector<1x1x128x256xbf16> to vector<128x256xbf16>
    %cst_55 = arith.constant dense<0.000000e+00> : vector<128x256xf32>
    %48 = tpu.matmul %45, %47, %cst_55 {dimension_numbers = #tpu.dot_dimension_numbers<[1], [0], [0], [1], [0, 0, 1, 1], [], []>} : vector<128x128xbf16>, vector<128x256xbf16>, vector<128x256xf32> -> vector<128x256xf32>
    %c0_56 = arith.constant 0 : index
    %c0_57 = arith.constant 0 : index
    %49 = vector.load %arg6[%c0_56, %c0_57] : memref<128x256xf32, #tpu.memory_space<vmem>>, vector<128x256xf32>
    %50 = arith.addf %49, %48 : vector<128x256xf32>
    %c0_58 = arith.constant 0 : index
    %c0_59 = arith.constant 0 : index
    %51 = vector.load %arg6[%c0_58, %c0_59] : memref<128x256xf32, #tpu.memory_space<vmem>>, vector<128x256xf32>
    tpu.vector_store %arg6[%c0_58, %c0_59], %50 {strides = array<i32>} : memref<128x256xf32, #tpu.memory_space<vmem>>, vector<128x256xf32>,
    %52 = vector.extract_strided_slice %1 {offsets = [0, 2, 0, 0], sizes = [2, 8, 8, 128], strides = [1, 1, 1, 1]} : vector<2x10x8x128xbf16> to vector<2x8x8x128xbf16>
    %53 = vector.shape_cast %52 : vector<2x8x8x128xbf16> to vector<128x128xbf16>
    %c2_60 = arith.constant 2 : index
    %c0_61 = arith.constant 0 : index
    %c0_62 = arith.constant 0 : index
    %c0_63 = arith.constant 0 : index
    %54 = vector.load %arg3[%c2_60, %c0_61, %c0_62, %c0_63] : memref<3x3x128x256xbf16, #tpu.memory_space<vmem>>, vector<1x1x128x256xbf16>
    %55 = vector.shape_cast %54 : vector<1x1x128x256xbf16> to vector<128x256xbf16>
    %cst_64 = arith.constant dense<0.000000e+00> : vector<128x256xf32>
    %56 = tpu.matmul %53, %55, %cst_64 {dimension_numbers = #tpu.dot_dimension_numbers<[1], [0], [0], [1], [0, 0, 1, 1], [], []>} : vector<128x128xbf16>, vector<128x256xbf16>, vector<128x256xf32> -> vector<128x256xf32>
    %c0_65 = arith.constant 0 : index
    %c0_66 = arith.constant 0 : index
    %57 = vector.load %arg6[%c0_65, %c0_66] : memref<128x256xf32, #tpu.memory_space<vmem>>, vector<128x256xf32>
    %58 = arith.addf %57, %56 : vector<128x256xf32>
    %c0_67 = arith.constant 0 : index
    %c0_68 = arith.constant 0 : index
    %59 = vector.load %arg6[%c0_67, %c0_68] : memref<128x256xf32, #tpu.memory_space<vmem>>, vector<128x256xf32>
    tpu.vector_store %arg6[%c0_67, %c0_68], %58 {strides = array<i32>} : memref<128x256xf32, #tpu.memory_space<vmem>>, vector<128x256xf32>,
    %60 = vector.extract_strided_slice %3 {offsets = [0, 2, 0, 0], sizes = [2, 8, 8, 128], strides = [1, 1, 1, 1]} : vector<2x10x8x128xbf16> to vector<2x8x8x128xbf16>
    %61 = vector.shape_cast %60 : vector<2x8x8x128xbf16> to vector<128x128xbf16>
    %c2_69 = arith.constant 2 : index
    %c1_70 = arith.constant 1 : index
    %c0_71 = arith.constant 0 : index
    %c0_72 = arith.constant 0 : index
    %62 = vector.load %arg3[%c2_69, %c1_70, %c0_71, %c0_72] : memref<3x3x128x256xbf16, #tpu.memory_space<vmem>>, vector<1x1x128x256xbf16>
    %63 = vector.shape_cast %62 : vector<1x1x128x256xbf16> to vector<128x256xbf16>
    %cst_73 = arith.constant dense<0.000000e+00> : vector<128x256xf32>
    %64 = tpu.matmul %61, %63, %cst_73 {dimension_numbers = #tpu.dot_dimension_numbers<[1], [0], [0], [1], [0, 0, 1, 1], [], []>} : vector<128x128xbf16>, vector<128x256xbf16>, vector<128x256xf32> -> vector<128x256xf32>
    %c0_74 = arith.constant 0 : index
    %c0_75 = arith.constant 0 : index
    %65 = vector.load %arg6[%c0_74, %c0_75] : memref<128x256xf32, #tpu.memory_space<vmem>>, vector<128x256xf32>
    %66 = arith.addf %65, %64 : vector<128x256xf32>
    %c0_76 = arith.constant 0 : index
    %c0_77 = arith.constant 0 : index
    %67 = vector.load %arg6[%c0_76, %c0_77] : memref<128x256xf32, #tpu.memory_space<vmem>>, vector<128x256xf32>
    tpu.vector_store %arg6[%c0_76, %c0_77], %66 {strides = array<i32>} : memref<128x256xf32, #tpu.memory_space<vmem>>, vector<128x256xf32>,
    %68 = vector.extract_strided_slice %5 {offsets = [0, 2, 0, 0], sizes = [2, 8, 8, 128], strides = [1, 1, 1, 1]} : vector<2x10x8x128xbf16> to vector<2x8x8x128xbf16>
    %69 = vector.shape_cast %68 : vector<2x8x8x128xbf16> to vector<128x128xbf16>
    %c2_78 = arith.constant 2 : index
    %c2_79 = arith.constant 2 : index
    %c0_80 = arith.constant 0 : index
    %c0_81 = arith.constant 0 : index
    %70 = vector.load %arg3[%c2_78, %c2_79, %c0_80, %c0_81] : memref<3x3x128x256xbf16, #tpu.memory_space<vmem>>, vector<1x1x128x256xbf16>
    %71 = vector.shape_cast %70 : vector<1x1x128x256xbf16> to vector<128x256xbf16>
    %cst_82 = arith.constant dense<0.000000e+00> : vector<128x256xf32>
    %72 = tpu.matmul %69, %71, %cst_82 {dimension_numbers = #tpu.dot_dimension_numbers<[1], [0], [0], [1], [0, 0, 1, 1], [], []>} : vector<128x128xbf16>, vector<128x256xbf16>, vector<128x256xf32> -> vector<128x256xf32>
    %c0_83 = arith.constant 0 : index
    %c0_84 = arith.constant 0 : index
    %73 = vector.load %arg6[%c0_83, %c0_84] : memref<128x256xf32, #tpu.memory_space<vmem>>, vector<128x256xf32>
    %74 = arith.addf %73, %72 : vector<128x256xf32>
    %c0_85 = arith.constant 0 : index
    %c0_86 = arith.constant 0 : index
    %75 = vector.load %arg6[%c0_85, %c0_86] : memref<128x256xf32, #tpu.memory_space<vmem>>, vector<128x256xf32>
    tpu.vector_store %arg6[%c0_85, %c0_86], %74 {strides = array<i32>} : memref<128x256xf32, #tpu.memory_space<vmem>>, vector<128x256xf32>,
    %c0_87 = arith.constant 0 : index
    %c0_88 = arith.constant 0 : index
    %76 = vector.load %arg6[%c0_87, %c0_88] : memref<128x256xf32, #tpu.memory_space<vmem>>, vector<128x256xf32>
    %c0_89 = arith.constant 0 : index
    %c0_90 = arith.constant 0 : index
    %77 = vector.load %arg4[%c0_89, %c0_90] : memref<1x256xf32, #tpu.memory_space<vmem>>, vector<1x256xf32>
    %78 = vector.broadcast %77 : vector<1x256xf32> to vector<128x256xf32>
    %79 = arith.addf %76, %78 : vector<128x256xf32>
    %cst_91 = arith.constant 0.000000e+00 : f32
    %80 = vector.broadcast %cst_91 : f32 to vector<128x256xf32>
    %81 = arith.maximumf %79, %80 : vector<128x256xf32>
    %82 = vector.shape_cast %81 : vector<128x256xf32> to vector<2x8x8x256xf32>
    %c0_92 = arith.constant 0 : index
    %c0_93 = arith.constant 0 : index
    %c0_94 = arith.constant 0 : index
    %c0_95 = arith.constant 0 : index
    %83 = vector.load %arg5[%c0_92, %c0_93, %c0_94, %c0_95] : memref<2x8x8x256xf32, #tpu.memory_space<vmem>>, vector<2x8x8x256xf32>
    tpu.vector_store %arg5[%c0_92, %c0_93, %c0_94, %c0_95], %82 {strides = array<i32>} : memref<2x8x8x256xf32, #tpu.memory_space<vmem>>, vector<2x8x8x256xf32>,
    return
  }
  func.func @transform_0(%arg0: i32, %arg1: i32) -> (i32, i32, i32, i32) {
    %c0_i32 = arith.constant 0 : i32
    %c0_i32_0 = arith.constant 0 : i32
    %c0_i32_1 = arith.constant 0 : i32
    %c0_i32_2 = arith.constant 0 : i32
    return %arg0, %c0_i32, %c0_i32_0, %c0_i32_1 : i32, i32, i32, i32
  }
  func.func @transform_1(%arg0: i32, %arg1: i32) -> (i32, i32, i32, i32) {
    %c0_i32 = arith.constant 0 : i32
    %c0_i32_0 = arith.constant 0 : i32
    %c0_i32_1 = arith.constant 0 : i32
    %c0_i32_2 = arith.constant 0 : i32
    return %c0_i32, %c0_i32_0, %c0_i32_1, %arg1 : i32, i32, i32, i32
  }
  func.func @transform_2(%arg0: i32, %arg1: i32) -> (i32, i32) {
    %c0_i32 = arith.constant 0 : i32
    %c0_i32_0 = arith.constant 0 : i32
    return %c0_i32, %arg1 : i32, i32
  }
  func.func @transform_3(%arg0: i32, %arg1: i32) -> (i32, i32, i32, i32) {
    %c0_i32 = arith.constant 0 : i32
    %c0_i32_0 = arith.constant 0 : i32
    %c0_i32_1 = arith.constant 0 : i32
    return %arg0, %c0_i32, %c0_i32_0, %arg1 : i32, i32, i32, i32
  }
}

module attributes {stable_mosaic.version = 11 : i64} {
  func.func @_conv_bias_act_kernel(%arg0: i32, %arg1: i32, %arg2: memref<2x10x10x256xf32, #tpu.memory_space<vmem>>, %arg3: memref<3x3x256x256xbf16, #tpu.memory_space<vmem>>, %arg4: memref<1x256xf32, #tpu.memory_space<vmem>>, %arg5: memref<2x8x8x256xf32, #tpu.memory_space<vmem>>, %arg6: memref<128x256xf32, #tpu.memory_space<vmem>>) attributes {dimension_semantics = [#tpu.dimension_semantics<parallel>, #tpu.dimension_semantics<parallel>], iteration_bounds = array<i64: 1, 1>, scalar_prefetch = 0 : i64, scratch_operands = 1 : i64, tpu.core_type = #tpu.core_type<tc>, window_params = [{transform_indices = @transform_0, window_bounds = array<i64: 2, 10, 10, 256>}, {transform_indices = @transform_1, window_bounds = array<i64: 3, 3, 256, 256>}, {transform_indices = @transform_2, window_bounds = array<i64: 1, 256>}, {transform_indices = @transform_3, window_bounds = array<i64: 2, 8, 8, 256>}]} {
    %c0 = arith.constant 0 : index
    %c0_0 = arith.constant 0 : index
    %c0_1 = arith.constant 0 : index
    %c0_2 = arith.constant 0 : index
    %0 = vector.load %arg2[%c0, %c0_0, %c0_1, %c0_2] : memref<2x10x10x256xf32, #tpu.memory_space<vmem>>, vector<2x10x8x256xf32>
    %1 = arith.truncf %0 : vector<2x10x8x256xf32> to vector<2x10x8x256xbf16>
    %c0_3 = arith.constant 0 : index
    %c0_4 = arith.constant 0 : index
    %c1 = arith.constant 1 : index
    %c0_5 = arith.constant 0 : index
    %2 = vector.load %arg2[%c0_3, %c0_4, %c1, %c0_5] : memref<2x10x10x256xf32, #tpu.memory_space<vmem>>, vector<2x10x8x256xf32>
    %3 = arith.truncf %2 : vector<2x10x8x256xf32> to vector<2x10x8x256xbf16>
    %c0_6 = arith.constant 0 : index
    %c0_7 = arith.constant 0 : index
    %c2 = arith.constant 2 : index
    %c0_8 = arith.constant 0 : index
    %4 = vector.load %arg2[%c0_6, %c0_7, %c2, %c0_8] : memref<2x10x10x256xf32, #tpu.memory_space<vmem>>, vector<2x10x8x256xf32>
    %5 = arith.truncf %4 : vector<2x10x8x256xf32> to vector<2x10x8x256xbf16>
    %6 = vector.extract_strided_slice %1 {offsets = [0, 0, 0, 0], sizes = [2, 8, 8, 256], strides = [1, 1, 1, 1]} : vector<2x10x8x256xbf16> to vector<2x8x8x256xbf16>
    %7 = vector.shape_cast %6 : vector<2x8x8x256xbf16> to vector<128x256xbf16>
    %c0_9 = arith.constant 0 : index
    %c0_10 = arith.constant 0 : index
    %c0_11 = arith.constant 0 : index
    %c0_12 = arith.constant 0 : index
    %8 = vector.load %arg3[%c0_9, %c0_10, %c0_11, %c0_12] : memref<3x3x256x256xbf16, #tpu.memory_space<vmem>>, vector<1x1x256x256xbf16>
    %9 = vector.shape_cast %8 : vector<1x1x256x256xbf16> to vector<256x256xbf16>
    %cst = arith.constant dense<0.000000e+00> : vector<128x256xf32>
    %10 = tpu.matmul %7, %9, %cst {dimension_numbers = #tpu.dot_dimension_numbers<[1], [0], [0], [1], [0, 0, 1, 1], [], []>} : vector<128x256xbf16>, vector<256x256xbf16>, vector<128x256xf32> -> vector<128x256xf32>
    %c0_13 = arith.constant 0 : index
    %c0_14 = arith.constant 0 : index
    %11 = vector.load %arg6[%c0_13, %c0_14] : memref<128x256xf32, #tpu.memory_space<vmem>>, vector<128x256xf32>
    tpu.vector_store %arg6[%c0_13, %c0_14], %10 {strides = array<i32>} : memref<128x256xf32, #tpu.memory_space<vmem>>, vector<128x256xf32>,
    %12 = vector.extract_strided_slice %3 {offsets = [0, 0, 0, 0], sizes = [2, 8, 8, 256], strides = [1, 1, 1, 1]} : vector<2x10x8x256xbf16> to vector<2x8x8x256xbf16>
    %13 = vector.shape_cast %12 : vector<2x8x8x256xbf16> to vector<128x256xbf16>
    %c0_15 = arith.constant 0 : index
    %c1_16 = arith.constant 1 : index
    %c0_17 = arith.constant 0 : index
    %c0_18 = arith.constant 0 : index
    %14 = vector.load %arg3[%c0_15, %c1_16, %c0_17, %c0_18] : memref<3x3x256x256xbf16, #tpu.memory_space<vmem>>, vector<1x1x256x256xbf16>
    %15 = vector.shape_cast %14 : vector<1x1x256x256xbf16> to vector<256x256xbf16>
    %cst_19 = arith.constant dense<0.000000e+00> : vector<128x256xf32>
    %16 = tpu.matmul %13, %15, %cst_19 {dimension_numbers = #tpu.dot_dimension_numbers<[1], [0], [0], [1], [0, 0, 1, 1], [], []>} : vector<128x256xbf16>, vector<256x256xbf16>, vector<128x256xf32> -> vector<128x256xf32>
    %c0_20 = arith.constant 0 : index
    %c0_21 = arith.constant 0 : index
    %17 = vector.load %arg6[%c0_20, %c0_21] : memref<128x256xf32, #tpu.memory_space<vmem>>, vector<128x256xf32>
    %18 = arith.addf %17, %16 : vector<128x256xf32>
    %c0_22 = arith.constant 0 : index
    %c0_23 = arith.constant 0 : index
    %19 = vector.load %arg6[%c0_22, %c0_23] : memref<128x256xf32, #tpu.memory_space<vmem>>, vector<128x256xf32>
    tpu.vector_store %arg6[%c0_22, %c0_23], %18 {strides = array<i32>} : memref<128x256xf32, #tpu.memory_space<vmem>>, vector<128x256xf32>,
    %20 = vector.extract_strided_slice %5 {offsets = [0, 0, 0, 0], sizes = [2, 8, 8, 256], strides = [1, 1, 1, 1]} : vector<2x10x8x256xbf16> to vector<2x8x8x256xbf16>
    %21 = vector.shape_cast %20 : vector<2x8x8x256xbf16> to vector<128x256xbf16>
    %c0_24 = arith.constant 0 : index
    %c2_25 = arith.constant 2 : index
    %c0_26 = arith.constant 0 : index
    %c0_27 = arith.constant 0 : index
    %22 = vector.load %arg3[%c0_24, %c2_25, %c0_26, %c0_27] : memref<3x3x256x256xbf16, #tpu.memory_space<vmem>>, vector<1x1x256x256xbf16>
    %23 = vector.shape_cast %22 : vector<1x1x256x256xbf16> to vector<256x256xbf16>
    %cst_28 = arith.constant dense<0.000000e+00> : vector<128x256xf32>
    %24 = tpu.matmul %21, %23, %cst_28 {dimension_numbers = #tpu.dot_dimension_numbers<[1], [0], [0], [1], [0, 0, 1, 1], [], []>} : vector<128x256xbf16>, vector<256x256xbf16>, vector<128x256xf32> -> vector<128x256xf32>
    %c0_29 = arith.constant 0 : index
    %c0_30 = arith.constant 0 : index
    %25 = vector.load %arg6[%c0_29, %c0_30] : memref<128x256xf32, #tpu.memory_space<vmem>>, vector<128x256xf32>
    %26 = arith.addf %25, %24 : vector<128x256xf32>
    %c0_31 = arith.constant 0 : index
    %c0_32 = arith.constant 0 : index
    %27 = vector.load %arg6[%c0_31, %c0_32] : memref<128x256xf32, #tpu.memory_space<vmem>>, vector<128x256xf32>
    tpu.vector_store %arg6[%c0_31, %c0_32], %26 {strides = array<i32>} : memref<128x256xf32, #tpu.memory_space<vmem>>, vector<128x256xf32>,
    %28 = vector.extract_strided_slice %1 {offsets = [0, 1, 0, 0], sizes = [2, 8, 8, 256], strides = [1, 1, 1, 1]} : vector<2x10x8x256xbf16> to vector<2x8x8x256xbf16>
    %29 = vector.shape_cast %28 : vector<2x8x8x256xbf16> to vector<128x256xbf16>
    %c1_33 = arith.constant 1 : index
    %c0_34 = arith.constant 0 : index
    %c0_35 = arith.constant 0 : index
    %c0_36 = arith.constant 0 : index
    %30 = vector.load %arg3[%c1_33, %c0_34, %c0_35, %c0_36] : memref<3x3x256x256xbf16, #tpu.memory_space<vmem>>, vector<1x1x256x256xbf16>
    %31 = vector.shape_cast %30 : vector<1x1x256x256xbf16> to vector<256x256xbf16>
    %cst_37 = arith.constant dense<0.000000e+00> : vector<128x256xf32>
    %32 = tpu.matmul %29, %31, %cst_37 {dimension_numbers = #tpu.dot_dimension_numbers<[1], [0], [0], [1], [0, 0, 1, 1], [], []>} : vector<128x256xbf16>, vector<256x256xbf16>, vector<128x256xf32> -> vector<128x256xf32>
    %c0_38 = arith.constant 0 : index
    %c0_39 = arith.constant 0 : index
    %33 = vector.load %arg6[%c0_38, %c0_39] : memref<128x256xf32, #tpu.memory_space<vmem>>, vector<128x256xf32>
    %34 = arith.addf %33, %32 : vector<128x256xf32>
    %c0_40 = arith.constant 0 : index
    %c0_41 = arith.constant 0 : index
    %35 = vector.load %arg6[%c0_40, %c0_41] : memref<128x256xf32, #tpu.memory_space<vmem>>, vector<128x256xf32>
    tpu.vector_store %arg6[%c0_40, %c0_41], %34 {strides = array<i32>} : memref<128x256xf32, #tpu.memory_space<vmem>>, vector<128x256xf32>,
    %36 = vector.extract_strided_slice %3 {offsets = [0, 1, 0, 0], sizes = [2, 8, 8, 256], strides = [1, 1, 1, 1]} : vector<2x10x8x256xbf16> to vector<2x8x8x256xbf16>
    %37 = vector.shape_cast %36 : vector<2x8x8x256xbf16> to vector<128x256xbf16>
    %c1_42 = arith.constant 1 : index
    %c1_43 = arith.constant 1 : index
    %c0_44 = arith.constant 0 : index
    %c0_45 = arith.constant 0 : index
    %38 = vector.load %arg3[%c1_42, %c1_43, %c0_44, %c0_45] : memref<3x3x256x256xbf16, #tpu.memory_space<vmem>>, vector<1x1x256x256xbf16>
    %39 = vector.shape_cast %38 : vector<1x1x256x256xbf16> to vector<256x256xbf16>
    %cst_46 = arith.constant dense<0.000000e+00> : vector<128x256xf32>
    %40 = tpu.matmul %37, %39, %cst_46 {dimension_numbers = #tpu.dot_dimension_numbers<[1], [0], [0], [1], [0, 0, 1, 1], [], []>} : vector<128x256xbf16>, vector<256x256xbf16>, vector<128x256xf32> -> vector<128x256xf32>
    %c0_47 = arith.constant 0 : index
    %c0_48 = arith.constant 0 : index
    %41 = vector.load %arg6[%c0_47, %c0_48] : memref<128x256xf32, #tpu.memory_space<vmem>>, vector<128x256xf32>
    %42 = arith.addf %41, %40 : vector<128x256xf32>
    %c0_49 = arith.constant 0 : index
    %c0_50 = arith.constant 0 : index
    %43 = vector.load %arg6[%c0_49, %c0_50] : memref<128x256xf32, #tpu.memory_space<vmem>>, vector<128x256xf32>
    tpu.vector_store %arg6[%c0_49, %c0_50], %42 {strides = array<i32>} : memref<128x256xf32, #tpu.memory_space<vmem>>, vector<128x256xf32>,
    %44 = vector.extract_strided_slice %5 {offsets = [0, 1, 0, 0], sizes = [2, 8, 8, 256], strides = [1, 1, 1, 1]} : vector<2x10x8x256xbf16> to vector<2x8x8x256xbf16>
    %45 = vector.shape_cast %44 : vector<2x8x8x256xbf16> to vector<128x256xbf16>
    %c1_51 = arith.constant 1 : index
    %c2_52 = arith.constant 2 : index
    %c0_53 = arith.constant 0 : index
    %c0_54 = arith.constant 0 : index
    %46 = vector.load %arg3[%c1_51, %c2_52, %c0_53, %c0_54] : memref<3x3x256x256xbf16, #tpu.memory_space<vmem>>, vector<1x1x256x256xbf16>
    %47 = vector.shape_cast %46 : vector<1x1x256x256xbf16> to vector<256x256xbf16>
    %cst_55 = arith.constant dense<0.000000e+00> : vector<128x256xf32>
    %48 = tpu.matmul %45, %47, %cst_55 {dimension_numbers = #tpu.dot_dimension_numbers<[1], [0], [0], [1], [0, 0, 1, 1], [], []>} : vector<128x256xbf16>, vector<256x256xbf16>, vector<128x256xf32> -> vector<128x256xf32>
    %c0_56 = arith.constant 0 : index
    %c0_57 = arith.constant 0 : index
    %49 = vector.load %arg6[%c0_56, %c0_57] : memref<128x256xf32, #tpu.memory_space<vmem>>, vector<128x256xf32>
    %50 = arith.addf %49, %48 : vector<128x256xf32>
    %c0_58 = arith.constant 0 : index
    %c0_59 = arith.constant 0 : index
    %51 = vector.load %arg6[%c0_58, %c0_59] : memref<128x256xf32, #tpu.memory_space<vmem>>, vector<128x256xf32>
    tpu.vector_store %arg6[%c0_58, %c0_59], %50 {strides = array<i32>} : memref<128x256xf32, #tpu.memory_space<vmem>>, vector<128x256xf32>,
    %52 = vector.extract_strided_slice %1 {offsets = [0, 2, 0, 0], sizes = [2, 8, 8, 256], strides = [1, 1, 1, 1]} : vector<2x10x8x256xbf16> to vector<2x8x8x256xbf16>
    %53 = vector.shape_cast %52 : vector<2x8x8x256xbf16> to vector<128x256xbf16>
    %c2_60 = arith.constant 2 : index
    %c0_61 = arith.constant 0 : index
    %c0_62 = arith.constant 0 : index
    %c0_63 = arith.constant 0 : index
    %54 = vector.load %arg3[%c2_60, %c0_61, %c0_62, %c0_63] : memref<3x3x256x256xbf16, #tpu.memory_space<vmem>>, vector<1x1x256x256xbf16>
    %55 = vector.shape_cast %54 : vector<1x1x256x256xbf16> to vector<256x256xbf16>
    %cst_64 = arith.constant dense<0.000000e+00> : vector<128x256xf32>
    %56 = tpu.matmul %53, %55, %cst_64 {dimension_numbers = #tpu.dot_dimension_numbers<[1], [0], [0], [1], [0, 0, 1, 1], [], []>} : vector<128x256xbf16>, vector<256x256xbf16>, vector<128x256xf32> -> vector<128x256xf32>
    %c0_65 = arith.constant 0 : index
    %c0_66 = arith.constant 0 : index
    %57 = vector.load %arg6[%c0_65, %c0_66] : memref<128x256xf32, #tpu.memory_space<vmem>>, vector<128x256xf32>
    %58 = arith.addf %57, %56 : vector<128x256xf32>
    %c0_67 = arith.constant 0 : index
    %c0_68 = arith.constant 0 : index
    %59 = vector.load %arg6[%c0_67, %c0_68] : memref<128x256xf32, #tpu.memory_space<vmem>>, vector<128x256xf32>
    tpu.vector_store %arg6[%c0_67, %c0_68], %58 {strides = array<i32>} : memref<128x256xf32, #tpu.memory_space<vmem>>, vector<128x256xf32>,
    %60 = vector.extract_strided_slice %3 {offsets = [0, 2, 0, 0], sizes = [2, 8, 8, 256], strides = [1, 1, 1, 1]} : vector<2x10x8x256xbf16> to vector<2x8x8x256xbf16>
    %61 = vector.shape_cast %60 : vector<2x8x8x256xbf16> to vector<128x256xbf16>
    %c2_69 = arith.constant 2 : index
    %c1_70 = arith.constant 1 : index
    %c0_71 = arith.constant 0 : index
    %c0_72 = arith.constant 0 : index
    %62 = vector.load %arg3[%c2_69, %c1_70, %c0_71, %c0_72] : memref<3x3x256x256xbf16, #tpu.memory_space<vmem>>, vector<1x1x256x256xbf16>
    %63 = vector.shape_cast %62 : vector<1x1x256x256xbf16> to vector<256x256xbf16>
    %cst_73 = arith.constant dense<0.000000e+00> : vector<128x256xf32>
    %64 = tpu.matmul %61, %63, %cst_73 {dimension_numbers = #tpu.dot_dimension_numbers<[1], [0], [0], [1], [0, 0, 1, 1], [], []>} : vector<128x256xbf16>, vector<256x256xbf16>, vector<128x256xf32> -> vector<128x256xf32>
    %c0_74 = arith.constant 0 : index
    %c0_75 = arith.constant 0 : index
    %65 = vector.load %arg6[%c0_74, %c0_75] : memref<128x256xf32, #tpu.memory_space<vmem>>, vector<128x256xf32>
    %66 = arith.addf %65, %64 : vector<128x256xf32>
    %c0_76 = arith.constant 0 : index
    %c0_77 = arith.constant 0 : index
    %67 = vector.load %arg6[%c0_76, %c0_77] : memref<128x256xf32, #tpu.memory_space<vmem>>, vector<128x256xf32>
    tpu.vector_store %arg6[%c0_76, %c0_77], %66 {strides = array<i32>} : memref<128x256xf32, #tpu.memory_space<vmem>>, vector<128x256xf32>,
    %68 = vector.extract_strided_slice %5 {offsets = [0, 2, 0, 0], sizes = [2, 8, 8, 256], strides = [1, 1, 1, 1]} : vector<2x10x8x256xbf16> to vector<2x8x8x256xbf16>
    %69 = vector.shape_cast %68 : vector<2x8x8x256xbf16> to vector<128x256xbf16>
    %c2_78 = arith.constant 2 : index
    %c2_79 = arith.constant 2 : index
    %c0_80 = arith.constant 0 : index
    %c0_81 = arith.constant 0 : index
    %70 = vector.load %arg3[%c2_78, %c2_79, %c0_80, %c0_81] : memref<3x3x256x256xbf16, #tpu.memory_space<vmem>>, vector<1x1x256x256xbf16>
    %71 = vector.shape_cast %70 : vector<1x1x256x256xbf16> to vector<256x256xbf16>
    %cst_82 = arith.constant dense<0.000000e+00> : vector<128x256xf32>
    %72 = tpu.matmul %69, %71, %cst_82 {dimension_numbers = #tpu.dot_dimension_numbers<[1], [0], [0], [1], [0, 0, 1, 1], [], []>} : vector<128x256xbf16>, vector<256x256xbf16>, vector<128x256xf32> -> vector<128x256xf32>
    %c0_83 = arith.constant 0 : index
    %c0_84 = arith.constant 0 : index
    %73 = vector.load %arg6[%c0_83, %c0_84] : memref<128x256xf32, #tpu.memory_space<vmem>>, vector<128x256xf32>
    %74 = arith.addf %73, %72 : vector<128x256xf32>
    %c0_85 = arith.constant 0 : index
    %c0_86 = arith.constant 0 : index
    %75 = vector.load %arg6[%c0_85, %c0_86] : memref<128x256xf32, #tpu.memory_space<vmem>>, vector<128x256xf32>
    tpu.vector_store %arg6[%c0_85, %c0_86], %74 {strides = array<i32>} : memref<128x256xf32, #tpu.memory_space<vmem>>, vector<128x256xf32>,
    %c0_87 = arith.constant 0 : index
    %c0_88 = arith.constant 0 : index
    %76 = vector.load %arg6[%c0_87, %c0_88] : memref<128x256xf32, #tpu.memory_space<vmem>>, vector<128x256xf32>
    %c0_89 = arith.constant 0 : index
    %c0_90 = arith.constant 0 : index
    %77 = vector.load %arg4[%c0_89, %c0_90] : memref<1x256xf32, #tpu.memory_space<vmem>>, vector<1x256xf32>
    %78 = vector.broadcast %77 : vector<1x256xf32> to vector<128x256xf32>
    %79 = arith.addf %76, %78 : vector<128x256xf32>
    %cst_91 = arith.constant 0.000000e+00 : f32
    %80 = vector.broadcast %cst_91 : f32 to vector<128x256xf32>
    %81 = arith.maximumf %79, %80 : vector<128x256xf32>
    %82 = vector.shape_cast %81 : vector<128x256xf32> to vector<2x8x8x256xf32>
    %c0_92 = arith.constant 0 : index
    %c0_93 = arith.constant 0 : index
    %c0_94 = arith.constant 0 : index
    %c0_95 = arith.constant 0 : index
    %83 = vector.load %arg5[%c0_92, %c0_93, %c0_94, %c0_95] : memref<2x8x8x256xf32, #tpu.memory_space<vmem>>, vector<2x8x8x256xf32>
    tpu.vector_store %arg5[%c0_92, %c0_93, %c0_94, %c0_95], %82 {strides = array<i32>} : memref<2x8x8x256xf32, #tpu.memory_space<vmem>>, vector<2x8x8x256xf32>,
    return
  }
  func.func @transform_0(%arg0: i32, %arg1: i32) -> (i32, i32, i32, i32) {
    %c0_i32 = arith.constant 0 : i32
    %c0_i32_0 = arith.constant 0 : i32
    %c0_i32_1 = arith.constant 0 : i32
    %c0_i32_2 = arith.constant 0 : i32
    return %arg0, %c0_i32, %c0_i32_0, %c0_i32_1 : i32, i32, i32, i32
  }
  func.func @transform_1(%arg0: i32, %arg1: i32) -> (i32, i32, i32, i32) {
    %c0_i32 = arith.constant 0 : i32
    %c0_i32_0 = arith.constant 0 : i32
    %c0_i32_1 = arith.constant 0 : i32
    %c0_i32_2 = arith.constant 0 : i32
    return %c0_i32, %c0_i32_0, %c0_i32_1, %arg1 : i32, i32, i32, i32
  }
  func.func @transform_2(%arg0: i32, %arg1: i32) -> (i32, i32) {
    %c0_i32 = arith.constant 0 : i32
    %c0_i32_0 = arith.constant 0 : i32
    return %c0_i32, %arg1 : i32, i32
  }
  func.func @transform_3(%arg0: i32, %arg1: i32) -> (i32, i32, i32, i32) {
    %c0_i32 = arith.constant 0 : i32
    %c0_i32_0 = arith.constant 0 : i32
    %c0_i32_1 = arith.constant 0 : i32
    return %arg0, %c0_i32, %c0_i32_0, %arg1 : i32, i32, i32, i32
  }
}

module attributes {stable_mosaic.version = 11 : i64} {
  func.func @_conv_bias_act_kernel(%arg0: i32, %arg1: i32, %arg2: memref<2x8x8x256xf32, #tpu.memory_space<vmem>>, %arg3: memref<1x1x256x256xbf16, #tpu.memory_space<vmem>>, %arg4: memref<1x256xf32, #tpu.memory_space<vmem>>, %arg5: memref<2x8x8x256xf32, #tpu.memory_space<vmem>>, %arg6: memref<128x256xf32, #tpu.memory_space<vmem>>) attributes {dimension_semantics = [#tpu.dimension_semantics<parallel>, #tpu.dimension_semantics<parallel>], iteration_bounds = array<i64: 1, 1>, scalar_prefetch = 0 : i64, scratch_operands = 1 : i64, tpu.core_type = #tpu.core_type<tc>, window_params = [{transform_indices = @transform_0, window_bounds = array<i64: 2, 8, 8, 256>}, {transform_indices = @transform_1, window_bounds = array<i64: 1, 1, 256, 256>}, {transform_indices = @transform_2, window_bounds = array<i64: 1, 256>}, {transform_indices = @transform_3, window_bounds = array<i64: 2, 8, 8, 256>}]} {
    %c0 = arith.constant 0 : index
    %c0_0 = arith.constant 0 : index
    %c0_1 = arith.constant 0 : index
    %c0_2 = arith.constant 0 : index
    %0 = vector.load %arg2[%c0, %c0_0, %c0_1, %c0_2] : memref<2x8x8x256xf32, #tpu.memory_space<vmem>>, vector<2x8x8x256xf32>
    %1 = arith.truncf %0 : vector<2x8x8x256xf32> to vector<2x8x8x256xbf16>
    %2 = vector.shape_cast %1 : vector<2x8x8x256xbf16> to vector<128x256xbf16>
    %c0_3 = arith.constant 0 : index
    %c0_4 = arith.constant 0 : index
    %c0_5 = arith.constant 0 : index
    %c0_6 = arith.constant 0 : index
    %3 = vector.load %arg3[%c0_3, %c0_4, %c0_5, %c0_6] : memref<1x1x256x256xbf16, #tpu.memory_space<vmem>>, vector<1x1x256x256xbf16>
    %4 = vector.shape_cast %3 : vector<1x1x256x256xbf16> to vector<256x256xbf16>
    %cst = arith.constant dense<0.000000e+00> : vector<128x256xf32>
    %5 = tpu.matmul %2, %4, %cst {dimension_numbers = #tpu.dot_dimension_numbers<[1], [0], [0], [1], [0, 0, 1, 1], [], []>} : vector<128x256xbf16>, vector<256x256xbf16>, vector<128x256xf32> -> vector<128x256xf32>
    %c0_7 = arith.constant 0 : index
    %c0_8 = arith.constant 0 : index
    %6 = vector.load %arg6[%c0_7, %c0_8] : memref<128x256xf32, #tpu.memory_space<vmem>>, vector<128x256xf32>
    tpu.vector_store %arg6[%c0_7, %c0_8], %5 {strides = array<i32>} : memref<128x256xf32, #tpu.memory_space<vmem>>, vector<128x256xf32>,
    %c0_9 = arith.constant 0 : index
    %c0_10 = arith.constant 0 : index
    %7 = vector.load %arg6[%c0_9, %c0_10] : memref<128x256xf32, #tpu.memory_space<vmem>>, vector<128x256xf32>
    %c0_11 = arith.constant 0 : index
    %c0_12 = arith.constant 0 : index
    %8 = vector.load %arg4[%c0_11, %c0_12] : memref<1x256xf32, #tpu.memory_space<vmem>>, vector<1x256xf32>
    %9 = vector.broadcast %8 : vector<1x256xf32> to vector<128x256xf32>
    %10 = arith.addf %7, %9 : vector<128x256xf32>
    %11 = vector.shape_cast %10 : vector<128x256xf32> to vector<2x8x8x256xf32>
    %c0_13 = arith.constant 0 : index
    %c0_14 = arith.constant 0 : index
    %c0_15 = arith.constant 0 : index
    %c0_16 = arith.constant 0 : index
    %12 = vector.load %arg5[%c0_13, %c0_14, %c0_15, %c0_16] : memref<2x8x8x256xf32, #tpu.memory_space<vmem>>, vector<2x8x8x256xf32>
    tpu.vector_store %arg5[%c0_13, %c0_14, %c0_15, %c0_16], %11 {strides = array<i32>} : memref<2x8x8x256xf32, #tpu.memory_space<vmem>>, vector<2x8x8x256xf32>,
    return
  }
  func.func @transform_0(%arg0: i32, %arg1: i32) -> (i32, i32, i32, i32) {
    %c0_i32 = arith.constant 0 : i32
    %c0_i32_0 = arith.constant 0 : i32
    %c0_i32_1 = arith.constant 0 : i32
    %c0_i32_2 = arith.constant 0 : i32
    return %arg0, %c0_i32, %c0_i32_0, %c0_i32_1 : i32, i32, i32, i32
  }
  func.func @transform_1(%arg0: i32, %arg1: i32) -> (i32, i32, i32, i32) {
    %c0_i32 = arith.constant 0 : i32
    %c0_i32_0 = arith.constant 0 : i32
    %c0_i32_1 = arith.constant 0 : i32
    %c0_i32_2 = arith.constant 0 : i32
    return %c0_i32, %c0_i32_0, %c0_i32_1, %arg1 : i32, i32, i32, i32
  }
  func.func @transform_2(%arg0: i32, %arg1: i32) -> (i32, i32) {
    %c0_i32 = arith.constant 0 : i32
    %c0_i32_0 = arith.constant 0 : i32
    return %c0_i32, %arg1 : i32, i32
  }
  func.func @transform_3(%arg0: i32, %arg1: i32) -> (i32, i32, i32, i32) {
    %c0_i32 = arith.constant 0 : i32
    %c0_i32_0 = arith.constant 0 : i32
    %c0_i32_1 = arith.constant 0 : i32
    return %arg0, %c0_i32, %c0_i32_0, %arg1 : i32, i32, i32, i32
  }
}

</mosaic_0001>

<llo_original>
// kernel: inference_forward.5
$region0: #{inference_forward.5}
  #allocation0 [shape = 'u32[]', space=smem, size = 0x4, offset = 0x4, fixed_abs, tag = 'smem constant byte address 0x4 - core index']
  #allocation1 [shape = 'u32[144,128]{1,0:T(1,128)}', space=vmem, size = 0x12000, scoped, tag = 'internal scratch']
  #allocation2 [shape = 'f32[128,256]{1,0:T(8,128)}', space=vmem, size = 0x20000, scoped, tag = 'scratch operand']
  %s0 = inlined_call_operand.vmem [shape: f32[2,8,8,256], index: 0, kind: input, shape index: {}]
  %s1 = inlined_call_operand.vmem [shape: bf16[1,1,256,256], index: 1, kind: input, shape index: {}]
  %s2 = inlined_call_operand.vmem [shape: f32[1,256], index: 2, kind: input, shape index: {}]
  %s3 = inlined_call_operand.vmem [shape: f32[2,8,8,256], index: 3, kind: output, shape index: {}]
  %s4 = sld [smem:[#allocation0]]
  $region22: #{inference_forward.5} parent=0
    _
  %s6 = ssub.s32 1, %s4
  %s7 = scalar_select 0, %s6, %s4
  // Predicated region
  $region2: #{inference_forward.5} parent=0 // pred_check
    _
  $region3: #{inference_forward.5} parent=0 // pred_check_branch
    %9 = sbr.rel (0) target = $region5
  $region4: #{inference_forward.5} parent=0 // pred_region
    _
  $region5: #{inference_forward.5} parent=0 // pred_fallthru
    _
  // Predicated region
  $region6: #{inference_forward.5} parent=0 // pred_check
    _
  $region7: #{inference_forward.5} parent=0 // pred_check_branch
    %11 = sbr.rel (0) target = $region9
  $region8: #{inference_forward.5} parent=0 // pred_region
    _
  $region9: #{inference_forward.5} parent=0 // pred_fallthru
    _
  // Predicated region
  $region10: #{inference_forward.5} parent=0 // pred_check
    _
  $region11: #{inference_forward.5} parent=0 // pred_check_branch
    %13 = sbr.rel (0) target = $region13
  $region12: #{inference_forward.5} parent=0 // pred_region
    _
  $region13: #{inference_forward.5} parent=0 // pred_fallthru
    _
  %v14 = vld [vmem:[%s0] sm:$0xff]
  %v15 = vld [vmem:[%s0 + $0x8] sm:$0xff]
  %v16 = vld [vmem:[%s0 + $0x10] sm:$0xff]
  %v17 = vld [vmem:[%s0 + $0x18] sm:$0xff]
  %v18 = vld [vmem:[%s0 + $0x20] sm:$0xff]
  %v19 = vld [vmem:[%s0 + $0x28] sm:$0xff]
  %v20 = vld [vmem:[%s0 + $0x30] sm:$0xff]
  %v21 = vld [vmem:[%s0 + $0x38] sm:$0xff]
  %v22 = vld [vmem:[%s0 + $0x40] sm:$0xff]
  %v23 = vld [vmem:[%s0 + $0x48] sm:$0xff]
  %v24 = vld [vmem:[%s0 + $0x50] sm:$0xff]
  %v25 = vld [vmem:[%s0 + $0x58] sm:$0xff]
  %v26 = vld [vmem:[%s0 + $0x60] sm:$0xff]
  %v27 = vld [vmem:[%s0 + $0x68] sm:$0xff]
  %v28 = vld [vmem:[%s0 + $0x70] sm:$0xff]
  %v29 = vld [vmem:[%s0 + $0x78] sm:$0xff]
  %v30 = vld [vmem:[%s0 + $0x80] sm:$0xff]
  %v31 = vld [vmem:[%s0 + $0x88] sm:$0xff]
  %v32 = vld [vmem:[%s0 + $0x90] sm:$0xff]
  %v33 = vld [vmem:[%s0 + $0x98] sm:$0xff]
  %v34 = vld [vmem:[%s0 + $0xa0] sm:$0xff]
  %v35 = vld [vmem:[%s0 + $0xa8] sm:$0xff]
  %v36 = vld [vmem:[%s0 + $0xb0] sm:$0xff]
  %v37 = vld [vmem:[%s0 + $0xb8] sm:$0xff]
  %v38 = vld [vmem:[%s0 + $0xc0] sm:$0xff]
  %v39 = vld [vmem:[%s0 + $0xc8] sm:$0xff]
  %v40 = vld [vmem:[%s0 + $0xd0] sm:$0xff]
  %v41 = vld [vmem:[%s0 + $0xd8] sm:$0xff]
  %v42 = vld [vmem:[%s0 + $0xe0] sm:$0xff]
  %v43 = vld [vmem:[%s0 + $0xe8] sm:$0xff]
  %v44 = vld [vmem:[%s0 + $0xf0] sm:$0xff]
  %v45 = vld [vmem:[%s0 + $0xf8] sm:$0xff]
  %v46 = vpack.c.bf16 %v14, %v14
  %v47 = vpack.c.bf16 %v15, %v15
  %v48 = vpack.c.bf16 %v16, %v16
  %v49 = vpack.c.bf16 %v17, %v17
  %v50 = vpack.c.bf16 %v18, %v18
  %v51 = vpack.c.bf16 %v19, %v19
  %v52 = vpack.c.bf16 %v20, %v20
  %v53 = vpack.c.bf16 %v21, %v21
  %v54 = vpack.c.bf16 %v22, %v22
  %v55 = vpack.c.bf16 %v23, %v23
  %v56 = vpack.c.bf16 %v24, %v24
  %v57 = vpack.c.bf16 %v25, %v25
  %v58 = vpack.c.bf16 %v26, %v26
  %v59 = vpack.c.bf16 %v27, %v27
  %v60 = vpack.c.bf16 %v28, %v28
  %v61 = vpack.c.bf16 %v29, %v29
  %v62 = vpack.c.bf16 %v30, %v30
  %v63 = vpack.c.bf16 %v31, %v31
  %v64 = vpack.c.bf16 %v32, %v32
  %v65 = vpack.c.bf16 %v33, %v33
  %v66 = vpack.c.bf16 %v34, %v34
  %v67 = vpack.c.bf16 %v35, %v35
  %v68 = vpack.c.bf16 %v36, %v36
  %v69 = vpack.c.bf16 %v37, %v37
  %v70 = vpack.c.bf16 %v38, %v38
  %v71 = vpack.c.bf16 %v39, %v39
  %v72 = vpack.c.bf16 %v40, %v40
  %v73 = vpack.c.bf16 %v41, %v41
  %v74 = vpack.c.bf16 %v42, %v42
  %v75 = vpack.c.bf16 %v43, %v43
  %v76 = vpack.c.bf16 %v44, %v44
  %v77 = vpack.c.bf16 %v45, %v45
  %v110 = vunpack.c.l.b16 %v46
  %v111 = vunpack.c.l.b16 %v47
  %v112 = vunpack.c.l.b16 %v48
  %v113 = vunpack.c.l.b16 %v49
  %v114 = vunpack.c.l.b16 %v50
  %v115 = vunpack.c.l.b16 %v51
  %v116 = vunpack.c.l.b16 %v52
  %v117 = vunpack.c.l.b16 %v53
  %v118 = vunpack.c.l.b16 %v54
  %v119 = vunpack.c.l.b16 %v55
  %v120 = vunpack.c.l.b16 %v56
  %v121 = vunpack.c.l.b16 %v57
  %v122 = vunpack.c.l.b16 %v58
  %v123 = vunpack.c.l.b16 %v59
  %v124 = vunpack.c.l.b16 %v60
  %v125 = vunpack.c.l.b16 %v61
  %v126 = vunpack.c.l.b16 %v62
  %v127 = vunpack.c.l.b16 %v63
  %v128 = vunpack.c.l.b16 %v64
  %v129 = vunpack.c.l.b16 %v65
  %v130 = vunpack.c.l.b16 %v66
  %v131 = vunpack.c.l.b16 %v67
  %v132 = vunpack.c.l.b16 %v68
  %v133 = vunpack.c.l.b16 %v69
  %v134 = vunpack.c.l.b16 %v70
  %v135 = vunpack.c.l.b16 %v71
  %v136 = vunpack.c.l.b16 %v72
  %v137 = vunpack.c.l.b16 %v73
  %v138 = vunpack.c.l.b16 %v74
  %v139 = vunpack.c.l.b16 %v75
  %v140 = vunpack.c.l.b16 %v76
  %v141 = vunpack.c.l.b16 %v77
  %v142 = vld [vmem:[%s1] sm:$0xff]
  %v143 = vld [vmem:[%s1 + $0x8] sm:$0xff]
  %v144 = vld [vmem:[%s1 + $0x10] sm:$0xff]
  %v145 = vld [vmem:[%s1 + $0x18] sm:$0xff]
  %v146 = vld [vmem:[%s1 + $0x20] sm:$0xff]
  %v147 = vld [vmem:[%s1 + $0x28] sm:$0xff]
  %v148 = vld [vmem:[%s1 + $0x30] sm:$0xff]
  %v149 = vld [vmem:[%s1 + $0x38] sm:$0xff]
  %v150 = vld [vmem:[%s1 + $0x40] sm:$0xff]
  %v151 = vld [vmem:[%s1 + $0x48] sm:$0xff]
  %v152 = vld [vmem:[%s1 + $0x50] sm:$0xff]
  %v153 = vld [vmem:[%s1 + $0x58] sm:$0xff]
  %v154 = vld [vmem:[%s1 + $0x60] sm:$0xff]
  %v155 = vld [vmem:[%s1 + $0x68] sm:$0xff]
  %v156 = vld [vmem:[%s1 + $0x70] sm:$0xff]
  %v157 = vld [vmem:[%s1 + $0x78] sm:$0xff]
  %v158 = vld [vmem:[%s1 + $0x80] sm:$0xff]
  %v159 = vld [vmem:[%s1 + $0x88] sm:$0xff]
  %v160 = vld [vmem:[%s1 + $0x90] sm:$0xff]
  %v161 = vld [vmem:[%s1 + $0x98] sm:$0xff]
  %v162 = vld [vmem:[%s1 + $0xa0] sm:$0xff]
  %v163 = vld [vmem:[%s1 + $0xa8] sm:$0xff]
  %v164 = vld [vmem:[%s1 + $0xb0] sm:$0xff]
  %v165 = vld [vmem:[%s1 + $0xb8] sm:$0xff]
  %v166 = vld [vmem:[%s1 + $0xc0] sm:$0xff]
  %v167 = vld [vmem:[%s1 + $0xc8] sm:$0xff]
  %v168 = vld [vmem:[%s1 + $0xd0] sm:$0xff]
  %v169 = vld [vmem:[%s1 + $0xd8] sm:$0xff]
  %v170 = vld [vmem:[%s1 + $0xe0] sm:$0xff]
  %v171 = vld [vmem:[%s1 + $0xe8] sm:$0xff]
  %v172 = vld [vmem:[%s1 + $0xf0] sm:$0xff]
  %v173 = vld [vmem:[%s1 + $0xf8] sm:$0xff]
  %v174 = vpack.c.b16 %v112, %v110
  %v175 = vpack.c.b16 %v113, %v111
  %v176 = vpack.c.b16 %v116, %v114
  %v177 = vpack.c.b16 %v117, %v115
  %v178 = vpack.c.b16 %v120, %v118
  %v179 = vpack.c.b16 %v121, %v119
  %v180 = vpack.c.b16 %v124, %v122
  %v181 = vpack.c.b16 %v125, %v123
  %v182 = vpack.c.b16 %v128, %v126
  %v183 = vpack.c.b16 %v129, %v127
  %v184 = vpack.c.b16 %v132, %v130
  %v185 = vpack.c.b16 %v133, %v131
  %v186 = vpack.c.b16 %v136, %v134
  %v187 = vpack.c.b16 %v137, %v135
  %v188 = vpack.c.b16 %v140, %v138
  %v189 = vpack.c.b16 %v141, %v139
  %v238 = vunpack.c.l.b16 %v142
  %v239 = vunpack.c.h.b16 %v142
  %v240 = vunpack.c.l.b16 %v143
  %v241 = vunpack.c.h.b16 %v143
  %v242 = vunpack.c.l.b16 %v144
  %v243 = vunpack.c.h.b16 %v144
  %v244 = vunpack.c.l.b16 %v145
  %v245 = vunpack.c.h.b16 %v145
  %v246 = vunpack.c.l.b16 %v146
  %v247 = vunpack.c.h.b16 %v146
  %v248 = vunpack.c.l.b16 %v147
  %v249 = vunpack.c.h.b16 %v147
  %v250 = vunpack.c.l.b16 %v148
  %v251 = vunpack.c.h.b16 %v148
  %v252 = vunpack.c.l.b16 %v149
  %v253 = vunpack.c.h.b16 %v149
  %v254 = vunpack.c.l.b16 %v150
  %v255 = vunpack.c.h.b16 %v150
  %v256 = vunpack.c.l.b16 %v151
  %v257 = vunpack.c.h.b16 %v151
  %v258 = vunpack.c.l.b16 %v152
  %v259 = vunpack.c.h.b16 %v152
  %v260 = vunpack.c.l.b16 %v153
  %v261 = vunpack.c.h.b16 %v153
  %v262 = vunpack.c.l.b16 %v154
  %v263 = vunpack.c.h.b16 %v154
  %v264 = vunpack.c.l.b16 %v155
  %v265 = vunpack.c.h.b16 %v155
  %v266 = vunpack.c.l.b16 %v156
  %v267 = vunpack.c.h.b16 %v156
  %v268 = vunpack.c.l.b16 %v157
  %v269 = vunpack.c.h.b16 %v157
  %v270 = vunpack.c.l.b16 %v158
  %v271 = vunpack.c.h.b16 %v158
  %v272 = vunpack.c.l.b16 %v159
  %v273 = vunpack.c.h.b16 %v159
  %v274 = vunpack.c.l.b16 %v160
  %v275 = vunpack.c.h.b16 %v160
  %v276 = vunpack.c.l.b16 %v161
  %v277 = vunpack.c.h.b16 %v161
  %v278 = vunpack.c.l.b16 %v162
  %v279 = vunpack.c.h.b16 %v162
  %v280 = vunpack.c.l.b16 %v163
  %v281 = vunpack.c.h.b16 %v163
  %v282 = vunpack.c.l.b16 %v164
  %v283 = vunpack.c.h.b16 %v164
  %v284 = vunpack.c.l.b16 %v165
  %v285 = vunpack.c.h.b16 %v165
  %v286 = vunpack.c.l.b16 %v166
  %v287 = vunpack.c.h.b16 %v166
  %v288 = vunpack.c.l.b16 %v167
  %v289 = vunpack.c.h.b16 %v167
  %v290 = vunpack.c.l.b16 %v168
  %v291 = vunpack.c.h.b16 %v168
  %v292 = vunpack.c.l.b16 %v169
  %v293 = vunpack.c.h.b16 %v169
  %v294 = vunpack.c.l.b16 %v170
  %v295 = vunpack.c.h.b16 %v170
  %v296 = vunpack.c.l.b16 %v171
  %v297 = vunpack.c.h.b16 %v171
  %v298 = vunpack.c.l.b16 %v172
  %v299 = vunpack.c.h.b16 %v172
  %v300 = vunpack.c.l.b16 %v173
  %v301 = vunpack.c.h.b16 %v173
  %v302 = vpack.c.b16 %v240, %v238
  %v303 = vpack.c.b16 %v241, %v239
  %v304 = vpack.c.b16 %v244, %v242
  %v305 = vpack.c.b16 %v245, %v243
  %v306 = vpack.c.b16 %v248, %v246
  %v307 = vpack.c.b16 %v249, %v247
  %v308 = vpack.c.b16 %v252, %v250
  %v309 = vpack.c.b16 %v253, %v251
  %v310 = vpack.c.b16 %v256, %v254
  %v311 = vpack.c.b16 %v257, %v255
  %v312 = vpack.c.b16 %v260, %v258
  %v313 = vpack.c.b16 %v261, %v259
  %v314 = vpack.c.b16 %v264, %v262
  %v315 = vpack.c.b16 %v265, %v263
  %v316 = vpack.c.b16 %v268, %v266
  %v317 = vpack.c.b16 %v269, %v267
  %v318 = vpack.c.b16 %v272, %v270
  %v319 = vpack.c.b16 %v273, %v271
  %v320 = vpack.c.b16 %v276, %v274
  %v321 = vpack.c.b16 %v277, %v275
  %v322 = vpack.c.b16 %v280, %v278
  %v323 = vpack.c.b16 %v281, %v279
  %v324 = vpack.c.b16 %v284, %v282
  %v325 = vpack.c.b16 %v285, %v283
  %v326 = vpack.c.b16 %v288, %v286
  %v327 = vpack.c.b16 %v289, %v287
  %v328 = vpack.c.b16 %v292, %v290
  %v329 = vpack.c.b16 %v293, %v291
  %v330 = vpack.c.b16 %v296, %v294
  %v331 = vpack.c.b16 %v297, %v295
  %v332 = vpack.c.b16 %v300, %v298
  %v333 = vpack.c.b16 %v301, %v299
  %366 = vmatprep.subr.bf16.mxu0 %v303
  %367 = vmatpush1.bf16.msra.mxu0 %v302
  %368 = vmatprep.subr.bf16.mxu0 %v305
  %369 = vmatpush1.bf16.msra.mxu0 %v304
  %370 = vmatprep.subr.bf16.mxu0 %v307
  %371 = vmatpush1.bf16.msra.mxu0 %v306
  %372 = vmatprep.subr.bf16.mxu0 %v309
  %373 = vmatpush1.bf16.msra.mxu0 %v308
  %374 = vmatprep.subr.bf16.mxu0 %v311
  %375 = vmatpush1.bf16.msra.mxu0 %v310
  %376 = vmatprep.subr.bf16.mxu0 %v313
  %377 = vmatpush1.bf16.msra.mxu0 %v312
  %378 = vmatprep.subr.bf16.mxu0 %v315
  %379 = vmatpush1.bf16.msra.mxu0 %v314
  %380 = vmatprep.subr.bf16.mxu0 %v317
  %381 = vmatpush1.bf16.msra.mxu0 %v316
  %382 = vmatprep.subr.bf16.mxu0 %v319
  %383 = vmatpush1.bf16.msra.mxu0 %v318
  %384 = vmatprep.subr.bf16.mxu0 %v321
  %385 = vmatpush1.bf16.msra.mxu0 %v320
  %386 = vmatprep.subr.bf16.mxu0 %v323
  %387 = vmatpush1.bf16.msra.mxu0 %v322
  %388 = vmatprep.subr.bf16.mxu0 %v325
  %389 = vmatpush1.bf16.msra.mxu0 %v324
  %390 = vmatprep.subr.bf16.mxu0 %v327
  %391 = vmatpush1.bf16.msra.mxu0 %v326
  %392 = vmatprep.subr.bf16.mxu0 %v329
  %393 = vmatpush1.bf16.msra.mxu0 %v328
  %394 = vmatprep.subr.bf16.mxu0 %v331
  %395 = vmatpush1.bf16.msra.mxu0 %v330
  %396 = vmatprep.subr.bf16.mxu0 %v333
  %397 = vmatpush1.bf16.msra.mxu0 %v332
  %398 = vmatprep.mubr.bf16.mxu0 %v175
  %399 = vmatmul.mubr.bf16.gmra.mrb[0].mxu0 %v174
  %v400 = vpop.f32.mrb[0].mxu0
  %v401 = vadd.f32 0.0, %v400
  %v402 = vpop.f32.mrb[0].mxu0
  %v403 = vadd.f32 0.0, %v402
  %v404 = vpop.f32.mrb[0].mxu0
  %v405 = vadd.f32 0.0, %v404
  %v406 = vpop.f32.mrb[0].mxu0
  %v407 = vadd.f32 0.0, %v406
  %408 = vmatprep.mubr.bf16.mxu0 %v177
  %409 = vmatmul.mubr.bf16.gmra.mrb[0].mxu0 %v176
  %v410 = vpop.f32.mrb[0].mxu0
  %v411 = vadd.f32 0.0, %v410
  %v412 = vpop.f32.mrb[0].mxu0
  %v413 = vadd.f32 0.0, %v412
  %v414 = vpop.f32.mrb[0].mxu0
  %v415 = vadd.f32 0.0, %v414
  %v416 = vpop.f32.mrb[0].mxu0
  %v417 = vadd.f32 0.0, %v416
  %418 = vmatprep.mubr.bf16.mxu0 %v179
  %419 = vmatmul.mubr.bf16.gmra.mrb[0].mxu0 %v178
  %v420 = vpop.f32.mrb[0].mxu0
  %v421 = vadd.f32 0.0, %v420
  %v422 = vpop.f32.mrb[0].mxu0
  %v423 = vadd.f32 0.0, %v422
  %v424 = vpop.f32.mrb[0].mxu0
  %v425 = vadd.f32 0.0, %v424
  %v426 = vpop.f32.mrb[0].mxu0
  %v427 = vadd.f32 0.0, %v426
  %428 = vmatprep.mubr.bf16.mxu0 %v181
  %429 = vmatmul.mubr.bf16.gmra.mrb[0].mxu0 %v180
  %v430 = vpop.f32.mrb[0].mxu0
  %v431 = vadd.f32 0.0, %v430
  %v432 = vpop.f32.mrb[0].mxu0
  %v433 = vadd.f32 0.0, %v432
  %v434 = vpop.f32.mrb[0].mxu0
  %v435 = vadd.f32 0.0, %v434
  %v436 = vpop.f32.mrb[0].mxu0
  %v437 = vadd.f32 0.0, %v436
  %438 = vmatprep.mubr.bf16.mxu0 %v183
  %439 = vmatmul.mubr.bf16.gmra.mrb[0].mxu0 %v182
  %v440 = vpop.f32.mrb[0].mxu0
  %v441 = vadd.f32 0.0, %v440
  %v442 = vpop.f32.mrb[0].mxu0
  %v443 = vadd.f32 0.0, %v442
  %v444 = vpop.f32.mrb[0].mxu0
  %v445 = vadd.f32 0.0, %v444
  %v446 = vpop.f32.mrb[0].mxu0
  %v447 = vadd.f32 0.0, %v446
  %448 = vmatprep.mubr.bf16.mxu0 %v185
  %449 = vmatmul.mubr.bf16.gmra.mrb[0].mxu0 %v184
  %v450 = vpop.f32.mrb[0].mxu0
  %v451 = vadd.f32 0.0, %v450
  %v452 = vpop.f32.mrb[0].mxu0
  %v453 = vadd.f32 0.0, %v452
  %v454 = vpop.f32.mrb[0].mxu0
  %v455 = vadd.f32 0.0, %v454
  %v456 = vpop.f32.mrb[0].mxu0
  %v457 = vadd.f32 0.0, %v456
  %458 = vmatprep.mubr.bf16.mxu0 %v187
  %459 = vmatmul.mubr.bf16.gmra.mrb[0].mxu0 %v186
  %v460 = vpop.f32.mrb[0].mxu0
  %v461 = vadd.f32 0.0, %v460
  %v462 = vpop.f32.mrb[0].mxu0
  %v463 = vadd.f32 0.0, %v462
  %v464 = vpop.f32.mrb[0].mxu0
  %v465 = vadd.f32 0.0, %v464
  %v466 = vpop.f32.mrb[0].mxu0
  %v467 = vadd.f32 0.0, %v466
  %468 = vmatprep.mubr.bf16.mxu0 %v189
  %469 = vmatmul.mubr.bf16.gmra.mrb[0].mxu0 %v188
  %v470 = vpop.f32.mrb[0].mxu0
  %v471 = vadd.f32 0.0, %v470
  %v472 = vpop.f32.mrb[0].mxu0
  %v473 = vadd.f32 0.0, %v472
  %v474 = vpop.f32.mrb[0].mxu0
  %v475 = vadd.f32 0.0, %v474
  %v476 = vpop.f32.mrb[0].mxu0
  %v477 = vadd.f32 0.0, %v476
  %478 = vdwg.mxu0
  %479 = vst [vmem:[#allocation2] sm:$0xff] %v401
  %480 = vst [vmem:[#allocation2 + $0x8] sm:$0xff] %v403
  %481 = vst [vmem:[#allocation2 + $0x10] sm:$0xff] %v405
  %482 = vst [vmem:[#allocation2 + $0x18] sm:$0xff] %v407
  %483 = vst [vmem:[#allocation2 + $0x20] sm:$0xff] %v411
  %484 = vst [vmem:[#allocation2 + $0x28] sm:$0xff] %v413
  %485 = vst [vmem:[#allocation2 + $0x30] sm:$0xff] %v415
  %486 = vst [vmem:[#allocation2 + $0x38] sm:$0xff] %v417
  %487 = vst [vmem:[#allocation2 + $0x40] sm:$0xff] %v421
  %488 = vst [vmem:[#allocation2 + $0x48] sm:$0xff] %v423
  %489 = vst [vmem:[#allocation2 + $0x50] sm:$0xff] %v425
  %490 = vst [vmem:[#allocation2 + $0x58] sm:$0xff] %v427
  %491 = vst [vmem:[#allocation2 + $0x60] sm:$0xff] %v431
  %492 = vst [vmem:[#allocation2 + $0x68] sm:$0xff] %v433
  %493 = vst [vmem:[#allocation2 + $0x70] sm:$0xff] %v435
  %494 = vst [vmem:[#allocation2 + $0x78] sm:$0xff] %v437
  %495 = vst [vmem:[#allocation2 + $0x80] sm:$0xff] %v441
  %496 = vst [vmem:[#allocation2 + $0x88] sm:$0xff] %v443
  %497 = vst [vmem:[#allocation2 + $0x90] sm:$0xff] %v445
  %498 = vst [vmem:[#allocation2 + $0x98] sm:$0xff] %v447
  %499 = vst [vmem:[#allocation2 + $0xa0] sm:$0xff] %v451
  %500 = vst [vmem:[#allocation2 + $0xa8] sm:$0xff] %v453
  %501 = vst [vmem:[#allocation2 + $0xb0] sm:$0xff] %v455
  %502 = vst [vmem:[#allocation2 + $0xb8] sm:$0xff] %v457
  %503 = vst [vmem:[#allocation2 + $0xc0] sm:$0xff] %v461
  %504 = vst [vmem:[#allocation2 + $0xc8] sm:$0xff] %v463
  %505 = vst [vmem:[#allocation2 + $0xd0] sm:$0xff] %v465
  %506 = vst [vmem:[#allocation2 + $0xd8] sm:$0xff] %v467
  %507 = vst [vmem:[#allocation2 + $0xe0] sm:$0xff] %v471
  %508 = vst [vmem:[#allocation2 + $0xe8] sm:$0xff] %v473
  %509 = vst [vmem:[#allocation2 + $0xf0] sm:$0xff] %v475
  %510 = vst [vmem:[#allocation2 + $0xf8] sm:$0xff] %v477
  %v511 = vld [vmem:[#allocation2] sm:$0xff]
  %v512 = vld [vmem:[#allocation2 + $0x8] sm:$0xff]
  %v513 = vld [vmem:[#allocation2 + $0x10] sm:$0xff]
  %v514 = vld [vmem:[#allocation2 + $0x18] sm:$0xff]
  %v515 = vld [vmem:[#allocation2 + $0x20] sm:$0xff]
  %v516 = vld [vmem:[#allocation2 + $0x28] sm:$0xff]
  %v517 = vld [vmem:[#allocation2 + $0x30] sm:$0xff]
  %v518 = vld [vmem:[#allocation2 + $0x38] sm:$0xff]
  %v519 = vld [vmem:[#allocation2 + $0x40] sm:$0xff]
  %v520 = vld [vmem:[#allocation2 + $0x48] sm:$0xff]
  %v521 = vld [vmem:[#allocation2 + $0x50] sm:$0xff]
  %v522 = vld [vmem:[#allocation2 + $0x58] sm:$0xff]
  %v523 = vld [vmem:[#allocation2 + $0x60] sm:$0xff]
  %v524 = vld [vmem:[#allocation2 + $0x68] sm:$0xff]
  %v525 = vld [vmem:[#allocation2 + $0x70] sm:$0xff]
  %v526 = vld [vmem:[#allocation2 + $0x78] sm:$0xff]
  %v527 = vld [vmem:[#allocation2 + $0x80] sm:$0xff]
  %v528 = vld [vmem:[#allocation2 + $0x88] sm:$0xff]
  %v529 = vld [vmem:[#allocation2 + $0x90] sm:$0xff]
  %v530 = vld [vmem:[#allocation2 + $0x98] sm:$0xff]
  %v531 = vld [vmem:[#allocation2 + $0xa0] sm:$0xff]
  %v532 = vld [vmem:[#allocation2 + $0xa8] sm:$0xff]
  %v533 = vld [vmem:[#allocation2 + $0xb0] sm:$0xff]
  %v534 = vld [vmem:[#allocation2 + $0xb8] sm:$0xff]
  %v535 = vld [vmem:[#allocation2 + $0xc0] sm:$0xff]
  %v536 = vld [vmem:[#allocation2 + $0xc8] sm:$0xff]
  %v537 = vld [vmem:[#allocation2 + $0xd0] sm:$0xff]
  %v538 = vld [vmem:[#allocation2 + $0xd8] sm:$0xff]
  %v539 = vld [vmem:[#allocation2 + $0xe0] sm:$0xff]
  %v540 = vld [vmem:[#allocation2 + $0xe8] sm:$0xff]
  %v541 = vld [vmem:[#allocation2 + $0xf0] sm:$0xff]
  %v542 = vld [vmem:[#allocation2 + $0xf8] sm:$0xff]
  %v543 = vld [vmem:[%s2] sm:$0x3]
  %v545 = vlaneseq
  %v546 = vshrl.u32 %v545, 7
  %v547 = vsub.s32 0, %v546
  %v548 = vrot.slane %v543, %v547
  %v549 = vlaneseq
  %v550 = vshrl.u32 %v549, 7
  %v551 = vsub.s32 1, %v550
  %v552 = vrot.slane %v543, %v551
  %v555 = vadd.f32 %v511, %v548
  %v556 = vadd.f32 %v512, %v552
  %v557 = vadd.f32 %v513, %v548
  %v558 = vadd.f32 %v514, %v552
  %v559 = vadd.f32 %v515, %v548
  %v560 = vadd.f32 %v516, %v552
  %v561 = vadd.f32 %v517, %v548
  %v562 = vadd.f32 %v518, %v552
  %v563 = vadd.f32 %v519, %v548
  %v564 = vadd.f32 %v520, %v552
  %v565 = vadd.f32 %v521, %v548
  %v566 = vadd.f32 %v522, %v552
  %v567 = vadd.f32 %v523, %v548
  %v568 = vadd.f32 %v524, %v552
  %v569 = vadd.f32 %v525, %v548
  %v570 = vadd.f32 %v526, %v552
  %v571 = vadd.f32 %v527, %v548
  %v572 = vadd.f32 %v528, %v552
  %v573 = vadd.f32 %v529, %v548
  %v574 = vadd.f32 %v530, %v552
  %v575 = vadd.f32 %v531, %v548
  %v576 = vadd.f32 %v532, %v552
  %v577 = vadd.f32 %v533, %v548
  %v578 = vadd.f32 %v534, %v552
  %v579 = vadd.f32 %v535, %v548
  %v580 = vadd.f32 %v536, %v552
  %v581 = vadd.f32 %v537, %v548
  %v582 = vadd.f32 %v538, %v552
  %v583 = vadd.f32 %v539, %v548
  %v584 = vadd.f32 %v540, %v552
  %v585 = vadd.f32 %v541, %v548
  %v586 = vadd.f32 %v542, %v552
  %587 = vst [vmem:[%s3] sm:$0xff] %v555
  %588 = vst [vmem:[%s3 + $0x8] sm:$0xff] %v556
  %589 = vst [vmem:[%s3 + $0x10] sm:$0xff] %v557
  %590 = vst [vmem:[%s3 + $0x18] sm:$0xff] %v558
  %591 = vst [vmem:[%s3 + $0x20] sm:$0xff] %v559
  %592 = vst [vmem:[%s3 + $0x28] sm:$0xff] %v560
  %593 = vst [vmem:[%s3 + $0x30] sm:$0xff] %v561
  %594 = vst [vmem:[%s3 + $0x38] sm:$0xff] %v562
  %595 = vst [vmem:[%s3 + $0x40] sm:$0xff] %v563
  %596 = vst [vmem:[%s3 + $0x48] sm:$0xff] %v564
  %597 = vst [vmem:[%s3 + $0x50] sm:$0xff] %v565
  %598 = vst [vmem:[%s3 + $0x58] sm:$0xff] %v566
  %599 = vst [vmem:[%s3 + $0x60] sm:$0xff] %v567
  %600 = vst [vmem:[%s3 + $0x68] sm:$0xff] %v568
  %601 = vst [vmem:[%s3 + $0x70] sm:$0xff] %v569
  %602 = vst [vmem:[%s3 + $0x78] sm:$0xff] %v570
  %603 = vst [vmem:[%s3 + $0x80] sm:$0xff] %v571
  %604 = vst [vmem:[%s3 + $0x88] sm:$0xff] %v572
  %605 = vst [vmem:[%s3 + $0x90] sm:$0xff] %v573
  %606 = vst [vmem:[%s3 + $0x98] sm:$0xff] %v574
  %607 = vst [vmem:[%s3 + $0xa0] sm:$0xff] %v575
  %608 = vst [vmem:[%s3 + $0xa8] sm:$0xff] %v576
  %609 = vst [vmem:[%s3 + $0xb0] sm:$0xff] %v577
  %610 = vst [vmem:[%s3 + $0xb8] sm:$0xff] %v578
  %611 = vst [vmem:[%s3 + $0xc0] sm:$0xff] %v579
  %612 = vst [vmem:[%s3 + $0xc8] sm:$0xff] %v580
  %613 = vst [vmem:[%s3 + $0xd0] sm:$0xff] %v581
  %614 = vst [vmem:[%s3 + $0xd8] sm:$0xff] %v582
  %615 = vst [vmem:[%s3 + $0xe0] sm:$0xff] %v583
  %616 = vst [vmem:[%s3 + $0xe8] sm:$0xff] %v584
  %617 = vst [vmem:[%s3 + $0xf0] sm:$0xff] %v585
  %618 = vst [vmem:[%s3 + $0xf8] sm:$0xff] %v586
  // Predicated region
  $region14: #{inference_forward.5} parent=0 // pred_check
    _
  $region15: #{inference_forward.5} parent=0 // pred_check_branch
    %620 = sbr.rel (0) target = $region17
  $region16: #{inference_forward.5} parent=0 // pred_region
    _
  $region17: #{inference_forward.5} parent=0 // pred_fallthru
    _
  // Predicated region
  $region18: #{inference_forward.5} parent=0 // pred_check
    _
  $region19: #{inference_forward.5} parent=0 // pred_check_branch
    %622 = sbr.rel (0) target = $region21
  $region20: #{inference_forward.5} parent=0 // pred_region
    _
  $region21: #{inference_forward.5} parent=0 // pred_fallthru
    _

// kernel: inference_forward.3
$region0: #{inference_forward.3}
  #allocation0 [shape = 'u32[]', space=smem, size = 0x4, offset = 0x4, fixed_abs, tag = 'smem constant byte address 0x4 - core index']
  #allocation1 [shape = 'u32[144,128]{1,0:T(1,128)}', space=vmem, size = 0x12000, scoped, tag = 'internal scratch']
  #allocation2 [shape = 'f32[128,256]{1,0:T(8,128)}', space=vmem, size = 0x20000, scoped, tag = 'scratch operand']
  %s0 = inlined_call_operand.vmem [shape: f32[2,10,10,128], index: 0, kind: input, shape index: {}]
  %s1 = inlined_call_operand.hbm [shape: bf16[3,3,128,256], index: 1, kind: input, shape index: {}]
  %s2 = inlined_call_operand.hbm [shape: f32[1,256], index: 2, kind: input, shape index: {}]
  %s3 = inlined_call_operand.vmem [shape: f32[2,8,8,256], index: 3, kind: output, shape index: {}]
  %s4 = sld [smem:[#allocation0]]
  $region30: #{inference_forward.3} parent=0
    _
  %s6 = ssub.s32 1, %s4
  %s7 = scalar_select 0, %s6, %s4
  $region1: #{inference_forward.3} parent=0
    #allocation3 [shape = 'u8[589824]{0}', space=vmem, size = 0x90000, scoped, tag = 'input window, operand 1, single buffered']
    #allocation4 [shape = 's32[1]{0}', space=sflag, size = 0x4, scoped, tag = 'scoped memory for inference_forward.3']
    #allocation5 [shape = 'u8[1024]{0}', space=vmem, size = 0x400, scoped, tag = 'input window, operand 2, single buffered']
    #allocation6 [shape = 's32[1]{0}', space=sflag, size = 0x4, scoped, tag = 'scoped memory for inference_forward.3']
    %8 = vsyncpa [#allocation4], 0
    %9 = vsyncpa [#allocation6], 0
    // Predicated region
    $region2: #{inference_forward.3} parent=1 // pred_check
      _
    $region3: #{inference_forward.3} parent=1 // pred_check_branch
      %11 = sbr.rel (0) target = $region5
    $region4: #{inference_forward.3} parent=1 // pred_region
      _
    $region5: #{inference_forward.3} parent=1 // pred_fallthru
      _
    // Predicated region
    $region6: #{inference_forward.3} parent=1 // pred_check
      _
    $region7: #{inference_forward.3} parent=1 // pred_check_branch
      %13 = sbr.rel (0) target = $region9
    $region8: #{inference_forward.3} parent=1 // pred_region
      %s15 = ssub.s32 18432, 18432
      %16 = vsyncadd [#allocation4], %s15
      %s17 = sshll.u32 [#allocation3], 4
      %s18 = int_to_ptr.vmem [resolvable:$true] %s17
      %23 = dma.hbm_to_vmem [thread:$0]  %s1, 18432, %s18, [#allocation4], 128, 128, 8
    $region9: #{inference_forward.3} parent=1 // pred_fallthru
      _
    // Predicated region
    $region10: #{inference_forward.3} parent=1 // pred_check
      _
    $region11: #{inference_forward.3} parent=1 // pred_check_branch
      %25 = sbr.rel (0) target = $region13
    $region12: #{inference_forward.3} parent=1 // pred_region
      %s27 = ssub.s32 32, 32
      %28 = vsyncadd [#allocation6], %s27
      %s30 = sshll.u32 [#allocation5], 4
      %s31 = int_to_ptr.vmem [resolvable:$true] %s30
      %33 = dma.hbm_to_vmem [thread:$0]  %s2, 32, %s31, [#allocation6]
    $region13: #{inference_forward.3} parent=1 // pred_fallthru
      _
    // Predicated region
    $region14: #{inference_forward.3} parent=1 // pred_check
      _
    $region15: #{inference_forward.3} parent=1 // pred_check_branch
      %35 = sbr.rel (0) target = $region17
    $region16: #{inference_forward.3} parent=1 // pred_region
      %36 = dma.done [#allocation4], 18432
    $region17: #{inference_forward.3} parent=1 // pred_fallthru
      _
    // Predicated region
    $region18: #{inference_forward.3} parent=1 // pred_check
      _
    $region19: #{inference_forward.3} parent=1 // pred_check_branch
      %38 = sbr.rel (0) target = $region21
    $region20: #{inference_forward.3} parent=1 // pred_region
      %39 = dma.done [#allocation6], 32
    $region21: #{inference_forward.3} parent=1 // pred_fallthru
      _
    %v41 = vld [vmem:[%s0] sm:$0xff]
    %v42 = vld [vmem:[%s0 + $0x10] sm:$0xff]
    %v43 = vld [vmem:[%s0 + $0x20] sm:$0xff]
    %v44 = vld [vmem:[%s0 + $0x30] sm:$0xff]
    %v45 = vld [vmem:[%s0 + $0x40] sm:$0xff]
    %v46 = vld [vmem:[%s0 + $0x50] sm:$0xff]
    %v47 = vld [vmem:[%s0 + $0x60] sm:$0xff]
    %v48 = vld [vmem:[%s0 + $0x70] sm:$0xff]
    %v49 = vld [vmem:[%s0 + $0x80] sm:$0xff]
    %v50 = vld [vmem:[%s0 + $0x90] sm:$0xff]
    %v51 = vld [vmem:[%s0 + $0xa0] sm:$0xff]
    %v52 = vld [vmem:[%s0 + $0xb0] sm:$0xff]
    %v53 = vld [vmem:[%s0 + $0xc0] sm:$0xff]
    %v54 = vld [vmem:[%s0 + $0xd0] sm:$0xff]
    %v55 = vld [vmem:[%s0 + $0xe0] sm:$0xff]
    %v56 = vld [vmem:[%s0 + $0xf0] sm:$0xff]
    %v57 = vld [vmem:[%s0 + $0x100] sm:$0xff]
    %v58 = vld [vmem:[%s0 + $0x110] sm:$0xff]
    %v59 = vld [vmem:[%s0 + $0x120] sm:$0xff]
    %v60 = vld [vmem:[%s0 + $0x130] sm:$0xff]
    %v61 = vpack.c.bf16 %v41, %v41
    %v62 = vpack.c.bf16 %v42, %v42
    %v63 = vpack.c.bf16 %v43, %v43
    %v64 = vpack.c.bf16 %v44, %v44
    %v65 = vpack.c.bf16 %v45, %v45
    %v66 = vpack.c.bf16 %v46, %v46
    %v67 = vpack.c.bf16 %v47, %v47
    %v68 = vpack.c.bf16 %v48, %v48
    %v69 = vpack.c.bf16 %v49, %v49
    %v70 = vpack.c.bf16 %v50, %v50
    %v71 = vpack.c.bf16 %v51, %v51
    %v72 = vpack.c.bf16 %v52, %v52
    %v73 = vpack.c.bf16 %v53, %v53
    %v74 = vpack.c.bf16 %v54, %v54
    %v75 = vpack.c.bf16 %v55, %v55
    %v76 = vpack.c.bf16 %v56, %v56
    %v77 = vpack.c.bf16 %v57, %v57
    %v78 = vpack.c.bf16 %v58, %v58
    %v79 = vpack.c.bf16 %v59, %v59
    %v80 = vpack.c.bf16 %v60, %v60
    %v81 = vld [vmem:[%s0 + $0x1] sm:$0xff]
    %v82 = vld [vmem:[%s0 + $0x11] sm:$0xff]
    %v83 = vld [vmem:[%s0 + $0x21] sm:$0xff]
    %v84 = vld [vmem:[%s0 + $0x31] sm:$0xff]
    %v85 = vld [vmem:[%s0 + $0x41] sm:$0xff]
    %v86 = vld [vmem:[%s0 + $0x51] sm:$0xff]
    %v87 = vld [vmem:[%s0 + $0x61] sm:$0xff]
    %v88 = vld [vmem:[%s0 + $0x71] sm:$0xff]
    %v89 = vld [vmem:[%s0 + $0x81] sm:$0xff]
    %v90 = vld [vmem:[%s0 + $0x91] sm:$0xff]
    %v91 = vld [vmem:[%s0 + $0xa1] sm:$0xff]
    %v92 = vld [vmem:[%s0 + $0xb1] sm:$0xff]
    %v93 = vld [vmem:[%s0 + $0xc1] sm:$0xff]
    %v94 = vld [vmem:[%s0 + $0xd1] sm:$0xff]
    %v95 = vld [vmem:[%s0 + $0xe1] sm:$0xff]
    %v96 = vld [vmem:[%s0 + $0xf1] sm:$0xff]
    %v97 = vld [vmem:[%s0 + $0x101] sm:$0xff]
    %v98 = vld [vmem:[%s0 + $0x111] sm:$0xff]
    %v99 = vld [vmem:[%s0 + $0x121] sm:$0xff]
    %v100 = vld [vmem:[%s0 + $0x131] sm:$0xff]
    %v101 = vpack.c.bf16 %v81, %v81
    %v102 = vpack.c.bf16 %v82, %v82
    %v103 = vpack.c.bf16 %v83, %v83
    %v104 = vpack.c.bf16 %v84, %v84
    %v105 = vpack.c.bf16 %v85, %v85
    %v106 = vpack.c.bf16 %v86, %v86
    %v107 = vpack.c.bf16 %v87, %v87
    %v108 = vpack.c.bf16 %v88, %v88
    %v109 = vpack.c.bf16 %v89, %v89
    %v110 = vpack.c.bf16 %v90, %v90
    %v111 = vpack.c.bf16 %v91, %v91
    %v112 = vpack.c.bf16 %v92, %v92
    %v113 = vpack.c.bf16 %v93, %v93
    %v114 = vpack.c.bf16 %v94, %v94
    %v115 = vpack.c.bf16 %v95, %v95
    %v116 = vpack.c.bf16 %v96, %v96
    %v117 = vpack.c.bf16 %v97, %v97
    %v118 = vpack.c.bf16 %v98, %v98
    %v119 = vpack.c.bf16 %v99, %v99
    %v120 = vpack.c.bf16 %v100, %v100
    %v121 = vld [vmem:[%s0 + $0x2] sm:$0xff]
    %v122 = vld [vmem:[%s0 + $0x12] sm:$0xff]
    %v123 = vld [vmem:[%s0 + $0x22] sm:$0xff]
    %v124 = vld [vmem:[%s0 + $0x32] sm:$0xff]
    %v125 = vld [vmem:[%s0 + $0x42] sm:$0xff]
    %v126 = vld [vmem:[%s0 + $0x52] sm:$0xff]
    %v127 = vld [vmem:[%s0 + $0x62] sm:$0xff]
    %v128 = vld [vmem:[%s0 + $0x72] sm:$0xff]
    %v129 = vld [vmem:[%s0 + $0x82] sm:$0xff]
    %v130 = vld [vmem:[%s0 + $0x92] sm:$0xff]
    %v131 = vld [vmem:[%s0 + $0xa2] sm:$0xff]
    %v132 = vld [vmem:[%s0 + $0xb2] sm:$0xff]
    %v133 = vld [vmem:[%s0 + $0xc2] sm:$0xff]
    %v134 = vld [vmem:[%s0 + $0xd2] sm:$0xff]
    %v135 = vld [vmem:[%s0 + $0xe2] sm:$0xff]
    %v136 = vld [vmem:[%s0 + $0xf2] sm:$0xff]
    %v137 = vld [vmem:[%s0 + $0x102] sm:$0xff]
    %v138 = vld [vmem:[%s0 + $0x112] sm:$0xff]
    %v139 = vld [vmem:[%s0 + $0x122] sm:$0xff]
    %v140 = vld [vmem:[%s0 + $0x132] sm:$0xff]
    %v141 = vpack.c.bf16 %v121, %v121
    %v142 = vpack.c.bf16 %v122, %v122
    %v143 = vpack.c.bf16 %v123, %v123
    %v144 = vpack.c.bf16 %v124, %v124
    %v145 = vpack.c.bf16 %v125, %v125
    %v146 = vpack.c.bf16 %v126, %v126
    %v147 = vpack.c.bf16 %v127, %v127
    %v148 = vpack.c.bf16 %v128, %v128
    %v149 = vpack.c.bf16 %v129, %v129
    %v150 = vpack.c.bf16 %v130, %v130
    %v151 = vpack.c.bf16 %v131, %v131
    %v152 = vpack.c.bf16 %v132, %v132
    %v153 = vpack.c.bf16 %v133, %v133
    %v154 = vpack.c.bf16 %v134, %v134
    %v155 = vpack.c.bf16 %v135, %v135
    %v156 = vpack.c.bf16 %v136, %v136
    %v157 = vpack.c.bf16 %v137, %v137
    %v158 = vpack.c.bf16 %v138, %v138
    %v159 = vpack.c.bf16 %v139, %v139
    %v160 = vpack.c.bf16 %v140, %v140
    %v161 = vld [vmem:[#allocation3] sm:$0xff]
    %v162 = vld [vmem:[#allocation3 + $0x8] sm:$0xff]
    %v163 = vld [vmem:[#allocation3 + $0x10] sm:$0xff]
    %v164 = vld [vmem:[#allocation3 + $0x18] sm:$0xff]
    %v165 = vld [vmem:[#allocation3 + $0x20] sm:$0xff]
    %v166 = vld [vmem:[#allocation3 + $0x28] sm:$0xff]
    %v167 = vld [vmem:[#allocation3 + $0x30] sm:$0xff]
    %v168 = vld [vmem:[#allocation3 + $0x38] sm:$0xff]
    %v169 = vld [vmem:[#allocation3 + $0x40] sm:$0xff]
    %v170 = vld [vmem:[#allocation3 + $0x48] sm:$0xff]
    %v171 = vld [vmem:[#allocation3 + $0x50] sm:$0xff]
    %v172 = vld [vmem:[#allocation3 + $0x58] sm:$0xff]
    %v173 = vld [vmem:[#allocation3 + $0x60] sm:$0xff]
    %v174 = vld [vmem:[#allocation3 + $0x68] sm:$0xff]
    %v175 = vld [vmem:[#allocation3 + $0x70] sm:$0xff]
    %v176 = vld [vmem:[#allocation3 + $0x78] sm:$0xff]
    %v193 = vunpack.c.l.b16 %v61
    %v194 = vunpack.c.l.b16 %v62
    %v195 = vunpack.c.l.b16 %v63
    %v196 = vunpack.c.l.b16 %v64
    %v197 = vunpack.c.l.b16 %v65
    %v198 = vunpack.c.l.b16 %v66
    %v199 = vunpack.c.l.b16 %v67
    %v200 = vunpack.c.l.b16 %v68
    %v201 = vunpack.c.l.b16 %v71
    %v202 = vunpack.c.l.b16 %v72
    %v203 = vunpack.c.l.b16 %v73
    %v204 = vunpack.c.l.b16 %v74
    %v205 = vunpack.c.l.b16 %v75
    %v206 = vunpack.c.l.b16 %v76
    %v207 = vunpack.c.l.b16 %v77
    %v208 = vunpack.c.l.b16 %v78
    %v209 = vpack.c.b16 %v194, %v193
    %v210 = vpack.c.b16 %v196, %v195
    %v211 = vpack.c.b16 %v198, %v197
    %v212 = vpack.c.b16 %v200, %v199
    %v213 = vpack.c.b16 %v202, %v201
    %v214 = vpack.c.b16 %v204, %v203
    %v215 = vpack.c.b16 %v206, %v205
    %v216 = vpack.c.b16 %v208, %v207
    %v241 = vunpack.c.l.b16 %v161
    %v242 = vunpack.c.h.b16 %v161
    %v243 = vunpack.c.l.b16 %v162
    %v244 = vunpack.c.h.b16 %v162
    %v245 = vunpack.c.l.b16 %v163
    %v246 = vunpack.c.h.b16 %v163
    %v247 = vunpack.c.l.b16 %v164
    %v248 = vunpack.c.h.b16 %v164
    %v249 = vunpack.c.l.b16 %v165
    %v250 = vunpack.c.h.b16 %v165
    %v251 = vunpack.c.l.b16 %v166
    %v252 = vunpack.c.h.b16 %v166
    %v253 = vunpack.c.l.b16 %v167
    %v254 = vunpack.c.h.b16 %v167
    %v255 = vunpack.c.l.b16 %v168
    %v256 = vunpack.c.h.b16 %v168
    %v257 = vunpack.c.l.b16 %v169
    %v258 = vunpack.c.h.b16 %v169
    %v259 = vunpack.c.l.b16 %v170
    %v260 = vunpack.c.h.b16 %v170
    %v261 = vunpack.c.l.b16 %v171
    %v262 = vunpack.c.h.b16 %v171
    %v263 = vunpack.c.l.b16 %v172
    %v264 = vunpack.c.h.b16 %v172
    %v265 = vunpack.c.l.b16 %v173
    %v266 = vunpack.c.h.b16 %v173
    %v267 = vunpack.c.l.b16 %v174
    %v268 = vunpack.c.h.b16 %v174
    %v269 = vunpack.c.l.b16 %v175
    %v270 = vunpack.c.h.b16 %v175
    %v271 = vunpack.c.l.b16 %v176
    %v272 = vunpack.c.h.b16 %v176
    %v273 = vpack.c.b16 %v243, %v241
    %v274 = vpack.c.b16 %v244, %v242
    %v275 = vpack.c.b16 %v247, %v245
    %v276 = vpack.c.b16 %v248, %v246
    %v277 = vpack.c.b16 %v251, %v249
    %v278 = vpack.c.b16 %v252, %v250
    %v279 = vpack.c.b16 %v255, %v253
    %v280 = vpack.c.b16 %v256, %v254
    %v281 = vpack.c.b16 %v259, %v257
    %v282 = vpack.c.b16 %v260, %v258
    %v283 = vpack.c.b16 %v263, %v261
    %v284 = vpack.c.b16 %v264, %v262
    %v285 = vpack.c.b16 %v267, %v265
    %v286 = vpack.c.b16 %v268, %v266
    %v287 = vpack.c.b16 %v271, %v269
    %v288 = vpack.c.b16 %v272, %v270
    %305 = vmatprep.subr.bf16.mxu0 %v274
    %306 = vmatpush1.bf16.msra.mxu0 %v273
    %307 = vmatprep.subr.bf16.mxu0 %v276
    %308 = vmatpush1.bf16.msra.mxu0 %v275
    %309 = vmatprep.subr.bf16.mxu0 %v278
    %310 = vmatpush1.bf16.msra.mxu0 %v277
    %311 = vmatprep.subr.bf16.mxu0 %v280
    %312 = vmatpush1.bf16.msra.mxu0 %v279
    %313 = vmatprep.subr.bf16.mxu0 %v282
    %314 = vmatpush1.bf16.msra.mxu0 %v281
    %315 = vmatprep.subr.bf16.mxu0 %v284
    %316 = vmatpush1.bf16.msra.mxu0 %v283
    %317 = vmatprep.subr.bf16.mxu0 %v286
    %318 = vmatpush1.bf16.msra.mxu0 %v285
    %319 = vmatprep.subr.bf16.mxu0 %v288
    %320 = vmatpush1.bf16.msra.mxu0 %v287
    %321 = vmatprep.subr.bf16.mxu0 0
    %322 = vmatpush1.bf16.msra.mxu0 0
    %323 = vmatprep.subr.bf16.mxu0 0
    %324 = vmatpush1.bf16.msra.mxu0 0
    %325 = vmatprep.subr.bf16.mxu0 0
    %326 = vmatpush1.bf16.msra.mxu0 0
    %327 = vmatprep.subr.bf16.mxu0 0
    %328 = vmatpush1.bf16.msra.mxu0 0
    %329 = vmatprep.subr.bf16.mxu0 0
    %330 = vmatpush1.bf16.msra.mxu0 0
    %331 = vmatprep.subr.bf16.mxu0 0
    %332 = vmatpush1.bf16.msra.mxu0 0
    %333 = vmatprep.subr.bf16.mxu0 0
    %334 = vmatpush1.bf16.msra.mxu0 0
    %335 = vmatprep.subr.bf16.mxu0 0
    %336 = vmatpush1.bf16.msra.mxu0 0
    %337 = vmatprep.mubr.bf16.mxu0 0
    %338 = vmatmul.mubr.bf16.gmra.mrb[0].mxu0 %v209
    %v339 = vpop.f32.mrb[0].mxu0
    %v340 = vadd.f32 0.0, %v339
    %v341 = vpop.f32.mrb[0].mxu0
    %v342 = vadd.f32 0.0, %v341
    %v343 = vpop.f32.mrb[0].mxu0
    %v344 = vadd.f32 0.0, %v343
    %v345 = vpop.f32.mrb[0].mxu0
    %v346 = vadd.f32 0.0, %v345
    %347 = vmatprep.mubr.bf16.mxu0 0
    %348 = vmatmul.mubr.bf16.gmra.mrb[0].mxu0 %v210
    %v349 = vpop.f32.mrb[0].mxu0
    %v350 = vadd.f32 0.0, %v349
    %v351 = vpop.f32.mrb[0].mxu0
    %v352 = vadd.f32 0.0, %v351
    %v353 = vpop.f32.mrb[0].mxu0
    %v354 = vadd.f32 0.0, %v353
    %v355 = vpop.f32.mrb[0].mxu0
    %v356 = vadd.f32 0.0, %v355
    %357 = vmatprep.mubr.bf16.mxu0 0
    %358 = vmatmul.mubr.bf16.gmra.mrb[0].mxu0 %v211
    %v359 = vpop.f32.mrb[0].mxu0
    %v360 = vadd.f32 0.0, %v359
    %v361 = vpop.f32.mrb[0].mxu0
    %v362 = vadd.f32 0.0, %v361
    %v363 = vpop.f32.mrb[0].mxu0
    %v364 = vadd.f32 0.0, %v363
    %v365 = vpop.f32.mrb[0].mxu0
    %v366 = vadd.f32 0.0, %v365
    %367 = vmatprep.mubr.bf16.mxu0 0
    %368 = vmatmul.mubr.bf16.gmra.mrb[0].mxu0 %v212
    %v369 = vpop.f32.mrb[0].mxu0
    %v370 = vadd.f32 0.0, %v369
    %v371 = vpop.f32.mrb[0].mxu0
    %v372 = vadd.f32 0.0, %v371
    %v373 = vpop.f32.mrb[0].mxu0
    %v374 = vadd.f32 0.0, %v373
    %v375 = vpop.f32.mrb[0].mxu0
    %v376 = vadd.f32 0.0, %v375
    %377 = vmatprep.mubr.bf16.mxu0 0
    %378 = vmatmul.mubr.bf16.gmra.mrb[0].mxu0 %v213
    %v379 = vpop.f32.mrb[0].mxu0
    %v380 = vadd.f32 0.0, %v379
    %v381 = vpop.f32.mrb[0].mxu0
    %v382 = vadd.f32 0.0, %v381
    %v383 = vpop.f32.mrb[0].mxu0
    %v384 = vadd.f32 0.0, %v383
    %v385 = vpop.f32.mrb[0].mxu0
    %v386 = vadd.f32 0.0, %v385
    %387 = vmatprep.mubr.bf16.mxu0 0
    %388 = vmatmul.mubr.bf16.gmra.mrb[0].mxu0 %v214
    %v389 = vpop.f32.mrb[0].mxu0
    %v390 = vadd.f32 0.0, %v389
    %v391 = vpop.f32.mrb[0].mxu0
    %v392 = vadd.f32 0.0, %v391
    %v393 = vpop.f32.mrb[0].mxu0
    %v394 = vadd.f32 0.0, %v393
    %v395 = vpop.f32.mrb[0].mxu0
    %v396 = vadd.f32 0.0, %v395
    %397 = vmatprep.mubr.bf16.mxu0 0
    %398 = vmatmul.mubr.bf16.gmra.mrb[0].mxu0 %v215
    %v399 = vpop.f32.mrb[0].mxu0
    %v400 = vadd.f32 0.0, %v399
    %v401 = vpop.f32.mrb[0].mxu0
    %v402 = vadd.f32 0.0, %v401
    %v403 = vpop.f32.mrb[0].mxu0
    %v404 = vadd.f32 0.0, %v403
    %v405 = vpop.f32.mrb[0].mxu0
    %v406 = vadd.f32 0.0, %v405
    %407 = vmatprep.mubr.bf16.mxu0 0
    %408 = vmatmul.mubr.bf16.gmra.mrb[0].mxu0 %v216
    %v409 = vpop.f32.mrb[0].mxu0
    %v410 = vadd.f32 0.0, %v409
    %v411 = vpop.f32.mrb[0].mxu0
    %v412 = vadd.f32 0.0, %v411
    %v413 = vpop.f32.mrb[0].mxu0
    %v414 = vadd.f32 0.0, %v413
    %v415 = vpop.f32.mrb[0].mxu0
    %v416 = vadd.f32 0.0, %v415
    %417 = vdwg.mxu0
    %418 = vst [vmem:[#allocation2] sm:$0xff] %v340
    %419 = vst [vmem:[#allocation2 + $0x8] sm:$0xff] %v342
    %420 = vst [vmem:[#allocation2 + $0x10] sm:$0xff] %v344
    %421 = vst [vmem:[#allocation2 + $0x18] sm:$0xff] %v346
    %422 = vst [vmem:[#allocation2 + $0x20] sm:$0xff] %v350
    %423 = vst [vmem:[#allocation2 + $0x28] sm:$0xff] %v352
    %424 = vst [vmem:[#allocation2 + $0x30] sm:$0xff] %v354
    %425 = vst [vmem:[#allocation2 + $0x38] sm:$0xff] %v356
    %426 = vst [vmem:[#allocation2 + $0x40] sm:$0xff] %v360
    %427 = vst [vmem:[#allocation2 + $0x48] sm:$0xff] %v362
    %428 = vst [vmem:[#allocation2 + $0x50] sm:$0xff] %v364
    %429 = vst [vmem:[#allocation2 + $0x58] sm:$0xff] %v366
    %430 = vst [vmem:[#allocation2 + $0x60] sm:$0xff] %v370
    %431 = vst [vmem:[#allocation2 + $0x68] sm:$0xff] %v372
    %432 = vst [vmem:[#allocation2 + $0x70] sm:$0xff] %v374
    %433 = vst [vmem:[#allocation2 + $0x78] sm:$0xff] %v376
    %434 = vst [vmem:[#allocation2 + $0x80] sm:$0xff] %v380
    %435 = vst [vmem:[#allocation2 + $0x88] sm:$0xff] %v382
    %436 = vst [vmem:[#allocation2 + $0x90] sm:$0xff] %v384
    %437 = vst [vmem:[#allocation2 + $0x98] sm:$0xff] %v386
    %438 = vst [vmem:[#allocation2 + $0xa0] sm:$0xff] %v390
    %439 = vst [vmem:[#allocation2 + $0xa8] sm:$0xff] %v392
    %440 = vst [vmem:[#allocation2 + $0xb0] sm:$0xff] %v394
    %441 = vst [vmem:[#allocation2 + $0xb8] sm:$0xff] %v396
    %442 = vst [vmem:[#allocation2 + $0xc0] sm:$0xff] %v400
    %443 = vst [vmem:[#allocation2 + $0xc8] sm:$0xff] %v402
    %444 = vst [vmem:[#allocation2 + $0xd0] sm:$0xff] %v404
    %445 = vst [vmem:[#allocation2 + $0xd8] sm:$0xff] %v406
    %446 = vst [vmem:[#allocation2 + $0xe0] sm:$0xff] %v410
    %447 = vst [vmem:[#allocation2 + $0xe8] sm:$0xff] %v412
    %448 = vst [vmem:[#allocation2 + $0xf0] sm:$0xff] %v414
    %449 = vst [vmem:[#allocation2 + $0xf8] sm:$0xff] %v416
    %s450 = scalar_lea.vmem [#allocation3], 128
    %v451 = vld [vmem:[%s450] sm:$0xff]
    %v452 = vld [vmem:[%s450 + $0x8] sm:$0xff]
    %v453 = vld [vmem:[%s450 + $0x10] sm:$0xff]
    %v454 = vld [vmem:[%s450 + $0x18] sm:$0xff]
    %v455 = vld [vmem:[%s450 + $0x20] sm:$0xff]
    %v456 = vld [vmem:[%s450 + $0x28] sm:$0xff]
    %v457 = vld [vmem:[%s450 + $0x30] sm:$0xff]
    %v458 = vld [vmem:[%s450 + $0x38] sm:$0xff]
    %v459 = vld [vmem:[%s450 + $0x40] sm:$0xff]
    %v460 = vld [vmem:[%s450 + $0x48] sm:$0xff]
    %v461 = vld [vmem:[%s450 + $0x50] sm:$0xff]
    %v462 = vld [vmem:[%s450 + $0x58] sm:$0xff]
    %v463 = vld [vmem:[%s450 + $0x60] sm:$0xff]
    %v464 = vld [vmem:[%s450 + $0x68] sm:$0xff]
    %v465 = vld [vmem:[%s450 + $0x70] sm:$0xff]
    %v466 = vld [vmem:[%s450 + $0x78] sm:$0xff]
    %v483 = vunpack.c.l.b16 %v101
    %v484 = vunpack.c.l.b16 %v102
    %v485 = vunpack.c.l.b16 %v103
    %v486 = vunpack.c.l.b16 %v104
    %v487 = vunpack.c.l.b16 %v105
    %v488 = vunpack.c.l.b16 %v106
    %v489 = vunpack.c.l.b16 %v107
    %v490 = vunpack.c.l.b16 %v108
    %v491 = vunpack.c.l.b16 %v111
    %v492 = vunpack.c.l.b16 %v112
    %v493 = vunpack.c.l.b16 %v113
    %v494 = vunpack.c.l.b16 %v114
    %v495 = vunpack.c.l.b16 %v115
    %v496 = vunpack.c.l.b16 %v116
    %v497 = vunpack.c.l.b16 %v117
    %v498 = vunpack.c.l.b16 %v118
    %v499 = vpack.c.b16 %v484, %v483
    %v500 = vpack.c.b16 %v486, %v485
    %v501 = vpack.c.b16 %v488, %v487
    %v502 = vpack.c.b16 %v490, %v489
    %v503 = vpack.c.b16 %v492, %v491
    %v504 = vpack.c.b16 %v494, %v493
    %v505 = vpack.c.b16 %v496, %v495
    %v506 = vpack.c.b16 %v498, %v497
    %v531 = vunpack.c.l.b16 %v451
    %v532 = vunpack.c.h.b16 %v451
    %v533 = vunpack.c.l.b16 %v452
    %v534 = vunpack.c.h.b16 %v452
    %v535 = vunpack.c.l.b16 %v453
    %v536 = vunpack.c.h.b16 %v453
    %v537 = vunpack.c.l.b16 %v454
    %v538 = vunpack.c.h.b16 %v454
    %v539 = vunpack.c.l.b16 %v455
    %v540 = vunpack.c.h.b16 %v455
    %v541 = vunpack.c.l.b16 %v456
    %v542 = vunpack.c.h.b16 %v456
    %v543 = vunpack.c.l.b16 %v457
    %v544 = vunpack.c.h.b16 %v457
    %v545 = vunpack.c.l.b16 %v458
    %v546 = vunpack.c.h.b16 %v458
    %v547 = vunpack.c.l.b16 %v459
    %v548 = vunpack.c.h.b16 %v459
    %v549 = vunpack.c.l.b16 %v460
    %v550 = vunpack.c.h.b16 %v460
    %v551 = vunpack.c.l.b16 %v461
    %v552 = vunpack.c.h.b16 %v461
    %v553 = vunpack.c.l.b16 %v462
    %v554 = vunpack.c.h.b16 %v462
    %v555 = vunpack.c.l.b16 %v463
    %v556 = vunpack.c.h.b16 %v463
    %v557 = vunpack.c.l.b16 %v464
    %v558 = vunpack.c.h.b16 %v464
    %v559 = vunpack.c.l.b16 %v465
    %v560 = vunpack.c.h.b16 %v465
    %v561 = vunpack.c.l.b16 %v466
    %v562 = vunpack.c.h.b16 %v466
    %v563 = vpack.c.b16 %v533, %v531
    %v564 = vpack.c.b16 %v534, %v532
    %v565 = vpack.c.b16 %v537, %v535
    %v566 = vpack.c.b16 %v538, %v536
    %v567 = vpack.c.b16 %v541, %v539
    %v568 = vpack.c.b16 %v542, %v540
    %v569 = vpack.c.b16 %v545, %v543
    %v570 = vpack.c.b16 %v546, %v544
    %v571 = vpack.c.b16 %v549, %v547
    %v572 = vpack.c.b16 %v550, %v548
    %v573 = vpack.c.b16 %v553, %v551
    %v574 = vpack.c.b16 %v554, %v552
    %v575 = vpack.c.b16 %v557, %v555
    %v576 = vpack.c.b16 %v558, %v556
    %v577 = vpack.c.b16 %v561, %v559
    %v578 = vpack.c.b16 %v562, %v560
    %595 = vmatprep.subr.bf16.mxu0 %v564
    %596 = vmatpush1.bf16.msra.mxu0 %v563
    %597 = vmatprep.subr.bf16.mxu0 %v566
    %598 = vmatpush1.bf16.msra.mxu0 %v565
    %599 = vmatprep.subr.bf16.mxu0 %v568
    %600 = vmatpush1.bf16.msra.mxu0 %v567
    %601 = vmatprep.subr.bf16.mxu0 %v570
    %602 = vmatpush1.bf16.msra.mxu0 %v569
    %603 = vmatprep.subr.bf16.mxu0 %v572
    %604 = vmatpush1.bf16.msra.mxu0 %v571
    %605 = vmatprep.subr.bf16.mxu0 %v574
    %606 = vmatpush1.bf16.msra.mxu0 %v573
    %607 = vmatprep.subr.bf16.mxu0 %v576
    %608 = vmatpush1.bf16.msra.mxu0 %v575
    %609 = vmatprep.subr.bf16.mxu0 %v578
    %610 = vmatpush1.bf16.msra.mxu0 %v577
    %611 = vmatprep.subr.bf16.mxu0 0
    %612 = vmatpush1.bf16.msra.mxu0 0
    %613 = vmatprep.subr.bf16.mxu0 0
    %614 = vmatpush1.bf16.msra.mxu0 0
    %615 = vmatprep.subr.bf16.mxu0 0
    %616 = vmatpush1.bf16.msra.mxu0 0
    %617 = vmatprep.subr.bf16.mxu0 0
    %618 = vmatpush1.bf16.msra.mxu0 0
    %619 = vmatprep.subr.bf16.mxu0 0
    %620 = vmatpush1.bf16.msra.mxu0 0
    %621 = vmatprep.subr.bf16.mxu0 0
    %622 = vmatpush1.bf16.msra.mxu0 0
    %623 = vmatprep.subr.bf16.mxu0 0
    %624 = vmatpush1.bf16.msra.mxu0 0
    %625 = vmatprep.subr.bf16.mxu0 0
    %626 = vmatpush1.bf16.msra.mxu0 0
    %627 = vmatprep.mubr.bf16.mxu0 0
    %628 = vmatmul.mubr.bf16.gmra.mrb[0].mxu0 %v499
    %v629 = vpop.f32.mrb[0].mxu0
    %v630 = vadd.f32 0.0, %v629
    %v631 = vpop.f32.mrb[0].mxu0
    %v632 = vadd.f32 0.0, %v631
    %v633 = vpop.f32.mrb[0].mxu0
    %v634 = vadd.f32 0.0, %v633
    %v635 = vpop.f32.mrb[0].mxu0
    %v636 = vadd.f32 0.0, %v635
    %637 = vmatprep.mubr.bf16.mxu0 0
    %638 = vmatmul.mubr.bf16.gmra.mrb[0].mxu0 %v500
    %v639 = vpop.f32.mrb[0].mxu0
    %v640 = vadd.f32 0.0, %v639
    %v641 = vpop.f32.mrb[0].mxu0
    %v642 = vadd.f32 0.0, %v641
    %v643 = vpop.f32.mrb[0].mxu0
    %v644 = vadd.f32 0.0, %v643
    %v645 = vpop.f32.mrb[0].mxu0
    %v646 = vadd.f32 0.0, %v645
    %647 = vmatprep.mubr.bf16.mxu0 0
    %648 = vmatmul.mubr.bf16.gmra.mrb[0].mxu0 %v501
    %v649 = vpop.f32.mrb[0].mxu0
    %v650 = vadd.f32 0.0, %v649
    %v651 = vpop.f32.mrb[0].mxu0
    %v652 = vadd.f32 0.0, %v651
    %v653 = vpop.f32.mrb[0].mxu0
    %v654 = vadd.f32 0.0, %v653
    %v655 = vpop.f32.mrb[0].mxu0
    %v656 = vadd.f32 0.0, %v655
    %657 = vmatprep.mubr.bf16.mxu0 0
    %658 = vmatmul.mubr.bf16.gmra.mrb[0].mxu0 %v502
    %v659 = vpop.f32.mrb[0].mxu0
    %v660 = vadd.f32 0.0, %v659
    %v661 = vpop.f32.mrb[0].mxu0
    %v662 = vadd.f32 0.0, %v661
    %v663 = vpop.f32.mrb[0].mxu0
    %v664 = vadd.f32 0.0, %v663
    %v665 = vpop.f32.mrb[0].mxu0
    %v666 = vadd.f32 0.0, %v665
    %667 = vmatprep.mubr.bf16.mxu0 0
    %668 = vmatmul.mubr.bf16.gmra.mrb[0].mxu0 %v503
    %v669 = vpop.f32.mrb[0].mxu0
    %v670 = vadd.f32 0.0, %v669
    %v671 = vpop.f32.mrb[0].mxu0
    %v672 = vadd.f32 0.0, %v671
    %v673 = vpop.f32.mrb[0].mxu0
    %v674 = vadd.f32 0.0, %v673
    %v675 = vpop.f32.mrb[0].mxu0
    %v676 = vadd.f32 0.0, %v675
    %677 = vmatprep.mubr.bf16.mxu0 0
    %678 = vmatmul.mubr.bf16.gmra.mrb[0].mxu0 %v504
    %v679 = vpop.f32.mrb[0].mxu0
    %v680 = vadd.f32 0.0, %v679
    %v681 = vpop.f32.mrb[0].mxu0
    %v682 = vadd.f32 0.0, %v681
    %v683 = vpop.f32.mrb[0].mxu0
    %v684 = vadd.f32 0.0, %v683
    %v685 = vpop.f32.mrb[0].mxu0
    %v686 = vadd.f32 0.0, %v685
    %687 = vmatprep.mubr.bf16.mxu0 0
    %688 = vmatmul.mubr.bf16.gmra.mrb[0].mxu0 %v505
    %v689 = vpop.f32.mrb[0].mxu0
    %v690 = vadd.f32 0.0, %v689
    %v691 = vpop.f32.mrb[0].mxu0
    %v692 = vadd.f32 0.0, %v691
    %v693 = vpop.f32.mrb[0].mxu0
    %v694 = vadd.f32 0.0, %v693
    %v695 = vpop.f32.mrb[0].mxu0
    %v696 = vadd.f32 0.0, %v695
    %697 = vmatprep.mubr.bf16.mxu0 0
    %698 = vmatmul.mubr.bf16.gmra.mrb[0].mxu0 %v506
    %v699 = vpop.f32.mrb[0].mxu0
    %v700 = vadd.f32 0.0, %v699
    %v701 = vpop.f32.mrb[0].mxu0
    %v702 = vadd.f32 0.0, %v701
    %v703 = vpop.f32.mrb[0].mxu0
    %v704 = vadd.f32 0.0, %v703
    %v705 = vpop.f32.mrb[0].mxu0
    %v706 = vadd.f32 0.0, %v705
    %707 = vdwg.mxu0
    %v708 = vld [vmem:[#allocation2] sm:$0xff]
    %v709 = vld [vmem:[#allocation2 + $0x8] sm:$0xff]
    %v710 = vld [vmem:[#allocation2 + $0x10] sm:$0xff]
    %v711 = vld [vmem:[#allocation2 + $0x18] sm:$0xff]
    %v712 = vld [vmem:[#allocation2 + $0x20] sm:$0xff]
    %v713 = vld [vmem:[#allocation2 + $0x28] sm:$0xff]
    %v714 = vld [vmem:[#allocation2 + $0x30] sm:$0xff]
    %v715 = vld [vmem:[#allocation2 + $0x38] sm:$0xff]
    %v716 = vld [vmem:[#allocation2 + $0x40] sm:$0xff]
    %v717 = vld [vmem:[#allocation2 + $0x48] sm:$0xff]
    %v718 = vld [vmem:[#allocation2 + $0x50] sm:$0xff]
    %v719 = vld [vmem:[#allocation2 + $0x58] sm:$0xff]
    %v720 = vld [vmem:[#allocation2 + $0x60] sm:$0xff]
    %v721 = vld [vmem:[#allocation2 + $0x68] sm:$0xff]
    %v722 = vld [vmem:[#allocation2 + $0x70] sm:$0xff]
    %v723 = vld [vmem:[#allocation2 + $0x78] sm:$0xff]
    %v724 = vld [vmem:[#allocation2 + $0x80] sm:$0xff]
    %v725 = vld [vmem:[#allocation2 + $0x88] sm:$0xff]
    %v726 = vld [vmem:[#allocation2 + $0x90] sm:$0xff]
    %v727 = vld [vmem:[#allocation2 + $0x98] sm:$0xff]
    %v728 = vld [vmem:[#allocation2 + $0xa0] sm:$0xff]
    %v729 = vld [vmem:[#allocation2 + $0xa8] sm:$0xff]
    %v730 = vld [vmem:[#allocation2 + $0xb0] sm:$0xff]
    %v731 = vld [vmem:[#allocation2 + $0xb8] sm:$0xff]
    %v732 = vld [vmem:[#allocation2 + $0xc0] sm:$0xff]
    %v733 = vld [vmem:[#allocation2 + $0xc8] sm:$0xff]
    %v734 = vld [vmem:[#allocation2 + $0xd0] sm:$0xff]
    %v735 = vld [vmem:[#allocation2 + $0xd8] sm:$0xff]
    %v736 = vld [vmem:[#allocation2 + $0xe0] sm:$0xff]
    %v737 = vld [vmem:[#allocation2 + $0xe8] sm:$0xff]
    %v738 = vld [vmem:[#allocation2 + $0xf0] sm:$0xff]
    %v739 = vld [vmem:[#allocation2 + $0xf8] sm:$0xff]
    %v740 = vadd.f32 %v708, %v630
    %v741 = vadd.f32 %v709, %v632
    %v742 = vadd.f32 %v710, %v634
    %v743 = vadd.f32 %v711, %v636
    %v744 = vadd.f32 %v712, %v640
    %v745 = vadd.f32 %v713, %v642
    %v746 = vadd.f32 %v714, %v644
    %v747 = vadd.f32 %v715, %v646
    %v748 = vadd.f32 %v716, %v650
    %v749 = vadd.f32 %v717, %v652
    %v750 = vadd.f32 %v718, %v654
    %v751 = vadd.f32 %v719, %v656
    %v752 = vadd.f32 %v720, %v660
    %v753 = vadd.f32 %v721, %v662
    %v754 = vadd.f32 %v722, %v664
    %v755 = vadd.f32 %v723, %v666
    %v756 = vadd.f32 %v724, %v670
    %v757 = vadd.f32 %v725, %v672
    %v758 = vadd.f32 %v726, %v674
    %v759 = vadd.f32 %v727, %v676
    %v760 = vadd.f32 %v728, %v680
    %v761 = vadd.f32 %v729, %v682
    %v762 = vadd.f32 %v730, %v684
    %v763 = vadd.f32 %v731, %v686
    %v764 = vadd.f32 %v732, %v690
    %v765 = vadd.f32 %v733, %v692
    %v766 = vadd.f32 %v734, %v694
    %v767 = vadd.f32 %v735, %v696
    %v768 = vadd.f32 %v736, %v700
    %v769 = vadd.f32 %v737, %v702
    %v770 = vadd.f32 %v738, %v704
    %v771 = vadd.f32 %v739, %v706
    %772 = vst [vmem:[#allocation2] sm:$0xff] %v740
    %773 = vst [vmem:[#allocation2 + $0x8] sm:$0xff] %v741
    %774 = vst [vmem:[#allocation2 + $0x10] sm:$0xff] %v742
    %775 = vst [vmem:[#allocation2 + $0x18] sm:$0xff] %v743
    %776 = vst [vmem:[#allocation2 + $0x20] sm:$0xff] %v744
    %777 = vst [vmem:[#allocation2 + $0x28] sm:$0xff] %v745
    %778 = vst [vmem:[#allocation2 + $0x30] sm:$0xff] %v746
    %779 = vst [vmem:[#allocation2 + $0x38] sm:$0xff] %v747
    %780 = vst [vmem:[#allocation2 + $0x40] sm:$0xff] %v748
    %781 = vst [vmem:[#allocation2 + $0x48] sm:$0xff] %v749
    %782 = vst [vmem:[#allocation2 + $0x50] sm:$0xff] %v750
    %783 = vst [vmem:[#allocation2 + $0x58] sm:$0xff] %v751
    %784 = vst [vmem:[#allocation2 + $0x60] sm:$0xff] %v752
    %785 = vst [vmem:[#allocation2 + $0x68] sm:$0xff] %v753
    %786 = vst [vmem:[#allocation2 + $0x70] sm:$0xff] %v754
    %787 = vst [vmem:[#allocation2 + $0x78] sm:$0xff] %v755
    %788 = vst [vmem:[#allocation2 + $0x80] sm:$0xff] %v756
    %789 = vst [vmem:[#allocation2 + $0x88] sm:$0xff] %v757
    %790 = vst [vmem:[#allocation2 + $0x90] sm:$0xff] %v758
    %791 = vst [vmem:[#allocation2 + $0x98] sm:$0xff] %v759
    %792 = vst [vmem:[#allocation2 + $0xa0] sm:$0xff] %v760
    %793 = vst [vmem:[#allocation2 + $0xa8] sm:$0xff] %v761
    %794 = vst [vmem:[#allocation2 + $0xb0] sm:$0xff] %v762
    %795 = vst [vmem:[#allocation2 + $0xb8] sm:$0xff] %v763
    %796 = vst [vmem:[#allocation2 + $0xc0] sm:$0xff] %v764
    %797 = vst [vmem:[#allocation2 + $0xc8] sm:$0xff] %v765
    %798 = vst [vmem:[#allocation2 + $0xd0] sm:$0xff] %v766
    %799 = vst [vmem:[#allocation2 + $0xd8] sm:$0xff] %v767
    %800 = vst [vmem:[#allocation2 + $0xe0] sm:$0xff] %v768
    %801 = vst [vmem:[#allocation2 + $0xe8] sm:$0xff] %v769
    %802 = vst [vmem:[#allocation2 + $0xf0] sm:$0xff] %v770
    %803 = vst [vmem:[#allocation2 + $0xf8] sm:$0xff] %v771
    %s804 = scalar_lea.vmem [#allocation3], 256
    %v805 = vld [vmem:[%s804] sm:$0xff]
    %v806 = vld [vmem:[%s804 + $0x8] sm:$0xff]
    %v807 = vld [vmem:[%s804 + $0x10] sm:$0xff]
    %v808 = vld [vmem:[%s804 + $0x18] sm:$0xff]
    %v809 = vld [vmem:[%s804 + $0x20] sm:$0xff]
    %v810 = vld [vmem:[%s804 + $0x28] sm:$0xff]
    %v811 = vld [vmem:[%s804 + $0x30] sm:$0xff]
    %v812 = vld [vmem:[%s804 + $0x38] sm:$0xff]
    %v813 = vld [vmem:[%s804 + $0x40] sm:$0xff]
    %v814 = vld [vmem:[%s804 + $0x48] sm:$0xff]
    %v815 = vld [vmem:[%s804 + $0x50] sm:$0xff]
    %v816 = vld [vmem:[%s804 + $0x58] sm:$0xff]
    %v817 = vld [vmem:[%s804 + $0x60] sm:$0xff]
    %v818 = vld [vmem:[%s804 + $0x68] sm:$0xff]
    %v819 = vld [vmem:[%s804 + $0x70] sm:$0xff]
    %v820 = vld [vmem:[%s804 + $0x78] sm:$0xff]
    %v837 = vunpack.c.l.b16 %v141
    %v838 = vunpack.c.l.b16 %v142
    %v839 = vunpack.c.l.b16 %v143
    %v840 = vunpack.c.l.b16 %v144
    %v841 = vunpack.c.l.b16 %v145
    %v842 = vunpack.c.l.b16 %v146
    %v843 = vunpack.c.l.b16 %v147
    %v844 = vunpack.c.l.b16 %v148
    %v845 = vunpack.c.l.b16 %v151
    %v846 = vunpack.c.l.b16 %v152
    %v847 = vunpack.c.l.b16 %v153
    %v848 = vunpack.c.l.b16 %v154
    %v849 = vunpack.c.l.b16 %v155
    %v850 = vunpack.c.l.b16 %v156
    %v851 = vunpack.c.l.b16 %v157
    %v852 = vunpack.c.l.b16 %v158
    %v853 = vpack.c.b16 %v838, %v837
    %v854 = vpack.c.b16 %v840, %v839
    %v855 = vpack.c.b16 %v842, %v841
    %v856 = vpack.c.b16 %v844, %v843
    %v857 = vpack.c.b16 %v846, %v845
    %v858 = vpack.c.b16 %v848, %v847
    %v859 = vpack.c.b16 %v850, %v849
    %v860 = vpack.c.b16 %v852, %v851
    %v885 = vunpack.c.l.b16 %v805
    %v886 = vunpack.c.h.b16 %v805
    %v887 = vunpack.c.l.b16 %v806
    %v888 = vunpack.c.h.b16 %v806
    %v889 = vunpack.c.l.b16 %v807
    %v890 = vunpack.c.h.b16 %v807
    %v891 = vunpack.c.l.b16 %v808
    %v892 = vunpack.c.h.b16 %v808
    %v893 = vunpack.c.l.b16 %v809
    %v894 = vunpack.c.h.b16 %v809
    %v895 = vunpack.c.l.b16 %v810
    %v896 = vunpack.c.h.b16 %v810
    %v897 = vunpack.c.l.b16 %v811
    %v898 = vunpack.c.h.b16 %v811
    %v899 = vunpack.c.l.b16 %v812
    %v900 = vunpack.c.h.b16 %v812
    %v901 = vunpack.c.l.b16 %v813
    %v902 = vunpack.c.h.b16 %v813
    %v903 = vunpack.c.l.b16 %v814
    %v904 = vunpack.c.h.b16 %v814
    %v905 = vunpack.c.l.b16 %v815
    %v906 = vunpack.c.h.b16 %v815
    %v907 = vunpack.c.l.b16 %v816
    %v908 = vunpack.c.h.b16 %v816
    %v909 = vunpack.c.l.b16 %v817
    %v910 = vunpack.c.h.b16 %v817
    %v911 = vunpack.c.l.b16 %v818
    %v912 = vunpack.c.h.b16 %v818
    %v913 = vunpack.c.l.b16 %v819
    %v914 = vunpack.c.h.b16 %v819
    %v915 = vunpack.c.l.b16 %v820
    %v916 = vunpack.c.h.b16 %v820
    %v917 = vpack.c.b16 %v887, %v885
    %v918 = vpack.c.b16 %v888, %v886
    %v919 = vpack.c.b16 %v891, %v889
    %v920 = vpack.c.b16 %v892, %v890
    %v921 = vpack.c.b16 %v895, %v893
    %v922 = vpack.c.b16 %v896, %v894
    %v923 = vpack.c.b16 %v899, %v897
    %v924 = vpack.c.b16 %v900, %v898
    %v925 = vpack.c.b16 %v903, %v901
    %v926 = vpack.c.b16 %v904, %v902
    %v927 = vpack.c.b16 %v907, %v905
    %v928 = vpack.c.b16 %v908, %v906
    %v929 = vpack.c.b16 %v911, %v909
    %v930 = vpack.c.b16 %v912, %v910
    %v931 = vpack.c.b16 %v915, %v913
    %v932 = vpack.c.b16 %v916, %v914
    %949 = vmatprep.subr.bf16.mxu0 %v918
    %950 = vmatpush1.bf16.msra.mxu0 %v917
    %951 = vmatprep.subr.bf16.mxu0 %v920
    %952 = vmatpush1.bf16.msra.mxu0 %v919
    %953 = vmatprep.subr.bf16.mxu0 %v922
    %954 = vmatpush1.bf16.msra.mxu0 %v921
    %955 = vmatprep.subr.bf16.mxu0 %v924
    %956 = vmatpush1.bf16.msra.mxu0 %v923
    %957 = vmatprep.subr.bf16.mxu0 %v926
    %958 = vmatpush1.bf16.msra.mxu0 %v925
    %959 = vmatprep.subr.bf16.mxu0 %v928
    %960 = vmatpush1.bf16.msra.mxu0 %v927
    %961 = vmatprep.subr.bf16.mxu0 %v930
    %962 = vmatpush1.bf16.msra.mxu0 %v929
    %963 = vmatprep.subr.bf16.mxu0 %v932
    %964 = vmatpush1.bf16.msra.mxu0 %v931
    %965 = vmatprep.subr.bf16.mxu0 0
    %966 = vmatpush1.bf16.msra.mxu0 0
    %967 = vmatprep.subr.bf16.mxu0 0
    %968 = vmatpush1.bf16.msra.mxu0 0
    %969 = vmatprep.subr.bf16.mxu0 0
    %970 = vmatpush1.bf16.msra.mxu0 0
    %971 = vmatprep.subr.bf16.mxu0 0
    %972 = vmatpush1.bf16.msra.mxu0 0
    %973 = vmatprep.subr.bf16.mxu0 0
    %974 = vmatpush1.bf16.msra.mxu0 0
    %975 = vmatprep.subr.bf16.mxu0 0
    %976 = vmatpush1.bf16.msra.mxu0 0
    %977 = vmatprep.subr.bf16.mxu0 0
    %978 = vmatpush1.bf16.msra.mxu0 0
    %979 = vmatprep.subr.bf16.mxu0 0
    %980 = vmatpush1.bf16.msra.mxu0 0
    %981 = vmatprep.mubr.bf16.mxu0 0
    %982 = vmatmul.mubr.bf16.gmra.mrb[0].mxu0 %v853
    %v983 = vpop.f32.mrb[0].mxu0
    %v984 = vadd.f32 0.0, %v983
    %v985 = vpop.f32.mrb[0].mxu0
    %v986 = vadd.f32 0.0, %v985
    %v987 = vpop.f32.mrb[0].mxu0
    %v988 = vadd.f32 0.0, %v987
    %v989 = vpop.f32.mrb[0].mxu0
    %v990 = vadd.f32 0.0, %v989
    %991 = vmatprep.mubr.bf16.mxu0 0
    %992 = vmatmul.mubr.bf16.gmra.mrb[0].mxu0 %v854
    %v993 = vpop.f32.mrb[0].mxu0
    %v994 = vadd.f32 0.0, %v993
    %v995 = vpop.f32.mrb[0].mxu0
    %v996 = vadd.f32 0.0, %v995
    %v997 = vpop.f32.mrb[0].mxu0
    %v998 = vadd.f32 0.0, %v997
    %v999 = vpop.f32.mrb[0].mxu0
    %v1000 = vadd.f32 0.0, %v999
    %1001 = vmatprep.mubr.bf16.mxu0 0
    %1002 = vmatmul.mubr.bf16.gmra.mrb[0].mxu0 %v855
    %v1003 = vpop.f32.mrb[0].mxu0
    %v1004 = vadd.f32 0.0, %v1003
    %v1005 = vpop.f32.mrb[0].mxu0
    %v1006 = vadd.f32 0.0, %v1005
    %v1007 = vpop.f32.mrb[0].mxu0
    %v1008 = vadd.f32 0.0, %v1007
    %v1009 = vpop.f32.mrb[0].mxu0
    %v1010 = vadd.f32 0.0, %v1009
    %1011 = vmatprep.mubr.bf16.mxu0 0
    %1012 = vmatmul.mubr.bf16.gmra.mrb[0].mxu0 %v856
    %v1013 = vpop.f32.mrb[0].mxu0
    %v1014 = vadd.f32 0.0, %v1013
    %v1015 = vpop.f32.mrb[0].mxu0
    %v1016 = vadd.f32 0.0, %v1015
    %v1017 = vpop.f32.mrb[0].mxu0
    %v1018 = vadd.f32 0.0, %v1017
    %v1019 = vpop.f32.mrb[0].mxu0
    %v1020 = vadd.f32 0.0, %v1019
    %1021 = vmatprep.mubr.bf16.mxu0 0
    %1022 = vmatmul.mubr.bf16.gmra.mrb[0].mxu0 %v857
    %v1023 = vpop.f32.mrb[0].mxu0
    %v1024 = vadd.f32 0.0, %v1023
    %v1025 = vpop.f32.mrb[0].mxu0
    %v1026 = vadd.f32 0.0, %v1025
    %v1027 = vpop.f32.mrb[0].mxu0
    %v1028 = vadd.f32 0.0, %v1027
    %v1029 = vpop.f32.mrb[0].mxu0
    %v1030 = vadd.f32 0.0, %v1029
    %1031 = vmatprep.mubr.bf16.mxu0 0
    %1032 = vmatmul.mubr.bf16.gmra.mrb[0].mxu0 %v858
    %v1033 = vpop.f32.mrb[0].mxu0
    %v1034 = vadd.f32 0.0, %v1033
    %v1035 = vpop.f32.mrb[0].mxu0
    %v1036 = vadd.f32 0.0, %v1035
    %v1037 = vpop.f32.mrb[0].mxu0
    %v1038 = vadd.f32 0.0, %v1037
    %v1039 = vpop.f32.mrb[0].mxu0
    %v1040 = vadd.f32 0.0, %v1039
    %1041 = vmatprep.mubr.bf16.mxu0 0
    %1042 = vmatmul.mubr.bf16.gmra.mrb[0].mxu0 %v859
    %v1043 = vpop.f32.mrb[0].mxu0
    %v1044 = vadd.f32 0.0, %v1043
    %v1045 = vpop.f32.mrb[0].mxu0
    %v1046 = vadd.f32 0.0, %v1045
    %v1047 = vpop.f32.mrb[0].mxu0
    %v1048 = vadd.f32 0.0, %v1047
    %v1049 = vpop.f32.mrb[0].mxu0
    %v1050 = vadd.f32 0.0, %v1049
    %1051 = vmatprep.mubr.bf16.mxu0 0
    %1052 = vmatmul.mubr.bf16.gmra.mrb[0].mxu0 %v860
    %v1053 = vpop.f32.mrb[0].mxu0
    %v1054 = vadd.f32 0.0, %v1053
    %v1055 = vpop.f32.mrb[0].mxu0
    %v1056 = vadd.f32 0.0, %v1055
    %v1057 = vpop.f32.mrb[0].mxu0
    %v1058 = vadd.f32 0.0, %v1057
    %v1059 = vpop.f32.mrb[0].mxu0
    %v1060 = vadd.f32 0.0, %v1059
    %1061 = vdwg.mxu0
    %v1062 = vld [vmem:[#allocation2] sm:$0xff]
    %v1063 = vld [vmem:[#allocation2 + $0x8] sm:$0xff]
    %v1064 = vld [vmem:[#allocation2 + $0x10] sm:$0xff]
    %v1065 = vld [vmem:[#allocation2 + $0x18] sm:$0xff]
    %v1066 = vld [vmem:[#allocation2 + $0x20] sm:$0xff]
    %v1067 = vld [vmem:[#allocation2 + $0x28] sm:$0xff]
    %v1068 = vld [vmem:[#allocation2 + $0x30] sm:$0xff]
    %v1069 = vld [vmem:[#allocation2 + $0x38] sm:$0xff]
    %v1070 = vld [vmem:[#allocation2 + $0x40] sm:$0xff]
    %v1071 = vld [vmem:[#allocation2 + $0x48] sm:$0xff]
    %v1072 = vld [vmem:[#allocation2 + $0x50] sm:$0xff]
    %v1073 = vld [vmem:[#allocation2 + $0x58] sm:$0xff]
    %v1074 = vld [vmem:[#allocation2 + $0x60] sm:$0xff]
    %v1075 = vld [vmem:[#allocation2 + $0x68] sm:$0xff]
    %v1076 = vld [vmem:[#allocation2 + $0x70] sm:$0xff]
    %v1077 = vld [vmem:[#allocation2 + $0x78] sm:$0xff]
    %v1078 = vld [vmem:[#allocation2 + $0x80] sm:$0xff]
    %v1079 = vld [vmem:[#allocation2 + $0x88] sm:$0xff]
    %v1080 = vld [vmem:[#allocation2 + $0x90] sm:$0xff]
    %v1081 = vld [vmem:[#allocation2 + $0x98] sm:$0xff]
    %v1082 = vld [vmem:[#allocation2 + $0xa0] sm:$0xff]
    %v1083 = vld [vmem:[#allocation2 + $0xa8] sm:$0xff]
    %v1084 = vld [vmem:[#allocation2 + $0xb0] sm:$0xff]
    %v1085 = vld [vmem:[#allocation2 + $0xb8] sm:$0xff]
    %v1086 = vld [vmem:[#allocation2 + $0xc0] sm:$0xff]
    %v1087 = vld [vmem:[#allocation2 + $0xc8] sm:$0xff]
    %v1088 = vld [vmem:[#allocation2 + $0xd0] sm:$0xff]
    %v1089 = vld [vmem:[#allocation2 + $0xd8] sm:$0xff]
    %v1090 = vld [vmem:[#allocation2 + $0xe0] sm:$0xff]
    %v1091 = vld [vmem:[#allocation2 + $0xe8] sm:$0xff]
    %v1092 = vld [vmem:[#allocation2 + $0xf0] sm:$0xff]
    %v1093 = vld [vmem:[#allocation2 + $0xf8] sm:$0xff]
    %v1094 = vadd.f32 %v1062, %v984
    %v1095 = vadd.f32 %v1063, %v986
    %v1096 = vadd.f32 %v1064, %v988
    %v1097 = vadd.f32 %v1065, %v990
    %v1098 = vadd.f32 %v1066, %v994
    %v1099 = vadd.f32 %v1067, %v996
    %v1100 = vadd.f32 %v1068, %v998
    %v1101 = vadd.f32 %v1069, %v1000
    %v1102 = vadd.f32 %v1070, %v1004
    %v1103 = vadd.f32 %v1071, %v1006
    %v1104 = vadd.f32 %v1072, %v1008
    %v1105 = vadd.f32 %v1073, %v1010
    %v1106 = vadd.f32 %v1074, %v1014
    %v1107 = vadd.f32 %v1075, %v1016
    %v1108 = vadd.f32 %v1076, %v1018
    %v1109 = vadd.f32 %v1077, %v1020
    %v1110 = vadd.f32 %v1078, %v1024
    %v1111 = vadd.f32 %v1079, %v1026
    %v1112 = vadd.f32 %v1080, %v1028
    %v1113 = vadd.f32 %v1081, %v1030
    %v1114 = vadd.f32 %v1082, %v1034
    %v1115 = vadd.f32 %v1083, %v1036
    %v1116 = vadd.f32 %v1084, %v1038
    %v1117 = vadd.f32 %v1085, %v1040
    %v1118 = vadd.f32 %v1086, %v1044
    %v1119 = vadd.f32 %v1087, %v1046
    %v1120 = vadd.f32 %v1088, %v1048
    %v1121 = vadd.f32 %v1089, %v1050
    %v1122 = vadd.f32 %v1090, %v1054
    %v1123 = vadd.f32 %v1091, %v1056
    %v1124 = vadd.f32 %v1092, %v1058
    %v1125 = vadd.f32 %v1093, %v1060
    %1126 = vst [vmem:[#allocation2] sm:$0xff] %v1094
    %1127 = vst [vmem:[#allocation2 + $0x8] sm:$0xff] %v1095
    %1128 = vst [vmem:[#allocation2 + $0x10] sm:$0xff] %v1096
    %1129 = vst [vmem:[#allocation2 + $0x18] sm:$0xff] %v1097
    %1130 = vst [vmem:[#allocation2 + $0x20] sm:$0xff] %v1098
    %1131 = vst [vmem:[#allocation2 + $0x28] sm:$0xff] %v1099
    %1132 = vst [vmem:[#allocation2 + $0x30] sm:$0xff] %v1100
    %1133 = vst [vmem:[#allocation2 + $0x38] sm:$0xff] %v1101
    %1134 = vst [vmem:[#allocation2 + $0x40] sm:$0xff] %v1102
    %1135 = vst [vmem:[#allocation2 + $0x48] sm:$0xff] %v1103
    %1136 = vst [vmem:[#allocation2 + $0x50] sm:$0xff] %v1104
    %1137 = vst [vmem:[#allocation2 + $0x58] sm:$0xff] %v1105
    %1138 = vst [vmem:[#allocation2 + $0x60] sm:$0xff] %v1106
    %1139 = vst [vmem:[#allocation2 + $0x68] sm:$0xff] %v1107
    %1140 = vst [vmem:[#allocation2 + $0x70] sm:$0xff] %v1108
    %1141 = vst [vmem:[#allocation2 + $0x78] sm:$0xff] %v1109
    %1142 = vst [vmem:[#allocation2 + $0x80] sm:$0xff] %v1110
    %1143 = vst [vmem:[#allocation2 + $0x88] sm:$0xff] %v1111
    %1144 = vst [vmem:[#allocation2 + $0x90] sm:$0xff] %v1112
    %1145 = vst [vmem:[#allocation2 + $0x98] sm:$0xff] %v1113
    %1146 = vst [vmem:[#allocation2 + $0xa0] sm:$0xff] %v1114
    %1147 = vst [vmem:[#allocation2 + $0xa8] sm:$0xff] %v1115
    %1148 = vst [vmem:[#allocation2 + $0xb0] sm:$0xff] %v1116
    %1149 = vst [vmem:[#allocation2 + $0xb8] sm:$0xff] %v1117
    %1150 = vst [vmem:[#allocation2 + $0xc0] sm:$0xff] %v1118
    %1151 = vst [vmem:[#allocation2 + $0xc8] sm:$0xff] %v1119
    %1152 = vst [vmem:[#allocation2 + $0xd0] sm:$0xff] %v1120
    %1153 = vst [vmem:[#allocation2 + $0xd8] sm:$0xff] %v1121
    %1154 = vst [vmem:[#allocation2 + $0xe0] sm:$0xff] %v1122
    %1155 = vst [vmem:[#allocation2 + $0xe8] sm:$0xff] %v1123
    %1156 = vst [vmem:[#allocation2 + $0xf0] sm:$0xff] %v1124
    %1157 = vst [vmem:[#allocation2 + $0xf8] sm:$0xff] %v1125
    %s1158 = scalar_lea.vmem [#allocation3], 384
    %v1159 = vld [vmem:[%s1158] sm:$0xff]
    %v1160 = vld [vmem:[%s1158 + $0x8] sm:$0xff]
    %v1161 = vld [vmem:[%s1158 + $0x10] sm:$0xff]
    %v1162 = vld [vmem:[%s1158 + $0x18] sm:$0xff]
    %v1163 = vld [vmem:[%s1158 + $0x20] sm:$0xff]
    %v1164 = vld [vmem:[%s1158 + $0x28] sm:$0xff]
    %v1165 = vld [vmem:[%s1158 + $0x30] sm:$0xff]
    %v1166 = vld [vmem:[%s1158 + $0x38] sm:$0xff]
    %v1167 = vld [vmem:[%s1158 + $0x40] sm:$0xff]
    %v1168 = vld [vmem:[%s1158 + $0x48] sm:$0xff]
    %v1169 = vld [vmem:[%s1158 + $0x50] sm:$0xff]
    %v1170 = vld [vmem:[%s1158 + $0x58] sm:$0xff]
    %v1171 = vld [vmem:[%s1158 + $0x60] sm:$0xff]
    %v1172 = vld [vmem:[%s1158 + $0x68] sm:$0xff]
    %v1173 = vld [vmem:[%s1158 + $0x70] sm:$0xff]
    %v1174 = vld [vmem:[%s1158 + $0x78] sm:$0xff]
    %v1177 = vunpack.c.l.b16 %v69
    %v1178 = vunpack.c.l.b16 %v79
    %v1179 = vpack.c.b16 %v195, %v194
    %v1180 = vpack.c.b16 %v197, %v196
    %v1181 = vpack.c.b16 %v199, %v198
    %v1182 = vpack.c.b16 %v1177, %v200
    %v1183 = vpack.c.b16 %v203, %v202
    %v1184 = vpack.c.b16 %v205, %v204
    %v1185 = vpack.c.b16 %v207, %v206
    %v1186 = vpack.c.b16 %v1178, %v208
    %v1211 = vunpack.c.l.b16 %v1159
    %v1212 = vunpack.c.h.b16 %v1159
    %v1213 = vunpack.c.l.b16 %v1160
    %v1214 = vunpack.c.h.b16 %v1160
    %v1215 = vunpack.c.l.b16 %v1161
    %v1216 = vunpack.c.h.b16 %v1161
    %v1217 = vunpack.c.l.b16 %v1162
    %v1218 = vunpack.c.h.b16 %v1162
    %v1219 = vunpack.c.l.b16 %v1163
    %v1220 = vunpack.c.h.b16 %v1163
    %v1221 = vunpack.c.l.b16 %v1164
    %v1222 = vunpack.c.h.b16 %v1164
    %v1223 = vunpack.c.l.b16 %v1165
    %v1224 = vunpack.c.h.b16 %v1165
    %v1225 = vunpack.c.l.b16 %v1166
    %v1226 = vunpack.c.h.b16 %v1166
    %v1227 = vunpack.c.l.b16 %v1167
    %v1228 = vunpack.c.h.b16 %v1167
    %v1229 = vunpack.c.l.b16 %v1168
    %v1230 = vunpack.c.h.b16 %v1168
    %v1231 = vunpack.c.l.b16 %v1169
    %v1232 = vunpack.c.h.b16 %v1169
    %v1233 = vunpack.c.l.b16 %v1170
    %v1234 = vunpack.c.h.b16 %v1170
    %v1235 = vunpack.c.l.b16 %v1171
    %v1236 = vunpack.c.h.b16 %v1171
    %v1237 = vunpack.c.l.b16 %v1172
    %v1238 = vunpack.c.h.b16 %v1172
    %v1239 = vunpack.c.l.b16 %v1173
    %v1240 = vunpack.c.h.b16 %v1173
    %v1241 = vunpack.c.l.b16 %v1174
    %v1242 = vunpack.c.h.b16 %v1174
    %v1243 = vpack.c.b16 %v1213, %v1211
    %v1244 = vpack.c.b16 %v1214, %v1212
    %v1245 = vpack.c.b16 %v1217, %v1215
    %v1246 = vpack.c.b16 %v1218, %v1216
    %v1247 = vpack.c.b16 %v1221, %v1219
    %v1248 = vpack.c.b16 %v1222, %v1220
    %v1249 = vpack.c.b16 %v1225, %v1223
    %v1250 = vpack.c.b16 %v1226, %v1224
    %v1251 = vpack.c.b16 %v1229, %v1227
    %v1252 = vpack.c.b16 %v1230, %v1228
    %v1253 = vpack.c.b16 %v1233, %v1231
    %v1254 = vpack.c.b16 %v1234, %v1232
    %v1255 = vpack.c.b16 %v1237, %v1235
    %v1256 = vpack.c.b16 %v1238, %v1236
    %v1257 = vpack.c.b16 %v1241, %v1239
    %v1258 = vpack.c.b16 %v1242, %v1240
    %1275 = vmatprep.subr.bf16.mxu0 %v1244
    %1276 = vmatpush1.bf16.msra.mxu0 %v1243
    %1277 = vmatprep.subr.bf16.mxu0 %v1246
    %1278 = vmatpush1.bf16.msra.mxu0 %v1245
    %1279 = vmatprep.subr.bf16.mxu0 %v1248
    %1280 = vmatpush1.bf16.msra.mxu0 %v1247
    %1281 = vmatprep.subr.bf16.mxu0 %v1250
    %1282 = vmatpush1.bf16.msra.mxu0 %v1249
    %1283 = vmatprep.subr.bf16.mxu0 %v1252
    %1284 = vmatpush1.bf16.msra.mxu0 %v1251
    %1285 = vmatprep.subr.bf16.mxu0 %v1254
    %1286 = vmatpush1.bf16.msra.mxu0 %v1253
    %1287 = vmatprep.subr.bf16.mxu0 %v1256
    %1288 = vmatpush1.bf16.msra.mxu0 %v1255
    %1289 = vmatprep.subr.bf16.mxu0 %v1258
    %1290 = vmatpush1.bf16.msra.mxu0 %v1257
    %1291 = vmatprep.subr.bf16.mxu0 0
    %1292 = vmatpush1.bf16.msra.mxu0 0
    %1293 = vmatprep.subr.bf16.mxu0 0
    %1294 = vmatpush1.bf16.msra.mxu0 0
    %1295 = vmatprep.subr.bf16.mxu0 0
    %1296 = vmatpush1.bf16.msra.mxu0 0
    %1297 = vmatprep.subr.bf16.mxu0 0
    %1298 = vmatpush1.bf16.msra.mxu0 0
    %1299 = vmatprep.subr.bf16.mxu0 0
    %1300 = vmatpush1.bf16.msra.mxu0 0
    %1301 = vmatprep.subr.bf16.mxu0 0
    %1302 = vmatpush1.bf16.msra.mxu0 0
    %1303 = vmatprep.subr.bf16.mxu0 0
    %1304 = vmatpush1.bf16.msra.mxu0 0
    %1305 = vmatprep.subr.bf16.mxu0 0
    %1306 = vmatpush1.bf16.msra.mxu0 0
    %1307 = vmatprep.mubr.bf16.mxu0 0
    %1308 = vmatmul.mubr.bf16.gmra.mrb[0].mxu0 %v1179
    %v1309 = vpop.f32.mrb[0].mxu0
    %v1310 = vadd.f32 0.0, %v1309
    %v1311 = vpop.f32.mrb[0].mxu0
    %v1312 = vadd.f32 0.0, %v1311
    %v1313 = vpop.f32.mrb[0].mxu0
    %v1314 = vadd.f32 0.0, %v1313
    %v1315 = vpop.f32.mrb[0].mxu0
    %v1316 = vadd.f32 0.0, %v1315
    %1317 = vmatprep.mubr.bf16.mxu0 0
    %1318 = vmatmul.mubr.bf16.gmra.mrb[0].mxu0 %v1180
    %v1319 = vpop.f32.mrb[0].mxu0
    %v1320 = vadd.f32 0.0, %v1319
    %v1321 = vpop.f32.mrb[0].mxu0
    %v1322 = vadd.f32 0.0, %v1321
    %v1323 = vpop.f32.mrb[0].mxu0
    %v1324 = vadd.f32 0.0, %v1323
    %v1325 = vpop.f32.mrb[0].mxu0
    %v1326 = vadd.f32 0.0, %v1325
    %1327 = vmatprep.mubr.bf16.mxu0 0
    %1328 = vmatmul.mubr.bf16.gmra.mrb[0].mxu0 %v1181
    %v1329 = vpop.f32.mrb[0].mxu0
    %v1330 = vadd.f32 0.0, %v1329
    %v1331 = vpop.f32.mrb[0].mxu0
    %v1332 = vadd.f32 0.0, %v1331
    %v1333 = vpop.f32.mrb[0].mxu0
    %v1334 = vadd.f32 0.0, %v1333
    %v1335 = vpop.f32.mrb[0].mxu0
    %v1336 = vadd.f32 0.0, %v1335
    %1337 = vmatprep.mubr.bf16.mxu0 0
    %1338 = vmatmul.mubr.bf16.gmra.mrb[0].mxu0 %v1182
    %v1339 = vpop.f32.mrb[0].mxu0
    %v1340 = vadd.f32 0.0, %v1339
    %v1341 = vpop.f32.mrb[0].mxu0
    %v1342 = vadd.f32 0.0, %v1341
    %v1343 = vpop.f32.mrb[0].mxu0
    %v1344 = vadd.f32 0.0, %v1343
    %v1345 = vpop.f32.mrb[0].mxu0
    %v1346 = vadd.f32 0.0, %v1345
    %1347 = vmatprep.mubr.bf16.mxu0 0
    %1348 = vmatmul.mubr.bf16.gmra.mrb[0].mxu0 %v1183
    %v1349 = vpop.f32.mrb[0].mxu0
    %v1350 = vadd.f32 0.0, %v1349
    %v1351 = vpop.f32.mrb[0].mxu0
    %v1352 = vadd.f32 0.0, %v1351
    %v1353 = vpop.f32.mrb[0].mxu0
    %v1354 = vadd.f32 0.0, %v1353
    %v1355 = vpop.f32.mrb[0].mxu0
    %v1356 = vadd.f32 0.0, %v1355
    %1357 = vmatprep.mubr.bf16.mxu0 0
    %1358 = vmatmul.mubr.bf16.gmra.mrb[0].mxu0 %v1184
    %v1359 = vpop.f32.mrb[0].mxu0
    %v1360 = vadd.f32 0.0, %v1359
    %v1361 = vpop.f32.mrb[0].mxu0
    %v1362 = vadd.f32 0.0, %v1361
    %v1363 = vpop.f32.mrb[0].mxu0
    %v1364 = vadd.f32 0.0, %v1363
    %v1365 = vpop.f32.mrb[0].mxu0
    %v1366 = vadd.f32 0.0, %v1365
    %1367 = vmatprep.mubr.bf16.mxu0 0
    %1368 = vmatmul.mubr.bf16.gmra.mrb[0].mxu0 %v1185
    %v1369 = vpop.f32.mrb[0].mxu0
    %v1370 = vadd.f32 0.0, %v1369
    %v1371 = vpop.f32.mrb[0].mxu0
    %v1372 = vadd.f32 0.0, %v1371
    %v1373 = vpop.f32.mrb[0].mxu0
    %v1374 = vadd.f32 0.0, %v1373
    %v1375 = vpop.f32.mrb[0].mxu0
    %v1376 = vadd.f32 0.0, %v1375
    %1377 = vmatprep.mubr.bf16.mxu0 0
    %1378 = vmatmul.mubr.bf16.gmra.mrb[0].mxu0 %v1186
    %v1379 = vpop.f32.mrb[0].mxu0
    %v1380 = vadd.f32 0.0, %v1379
    %v1381 = vpop.f32.mrb[0].mxu0
    %v1382 = vadd.f32 0.0, %v1381
    %v1383 = vpop.f32.mrb[0].mxu0
    %v1384 = vadd.f32 0.0, %v1383
    %v1385 = vpop.f32.mrb[0].mxu0
    %v1386 = vadd.f32 0.0, %v1385
    %1387 = vdwg.mxu0
    %v1388 = vld [vmem:[#allocation2] sm:$0xff]
    %v1389 = vld [vmem:[#allocation2 + $0x8] sm:$0xff]
    %v1390 = vld [vmem:[#allocation2 + $0x10] sm:$0xff]
    %v1391 = vld [vmem:[#allocation2 + $0x18] sm:$0xff]
    %v1392 = vld [vmem:[#allocation2 + $0x20] sm:$0xff]
    %v1393 = vld [vmem:[#allocation2 + $0x28] sm:$0xff]
    %v1394 = vld [vmem:[#allocation2 + $0x30] sm:$0xff]
    %v1395 = vld [vmem:[#allocation2 + $0x38] sm:$0xff]
    %v1396 = vld [vmem:[#allocation2 + $0x40] sm:$0xff]
    %v1397 = vld [vmem:[#allocation2 + $0x48] sm:$0xff]
    %v1398 = vld [vmem:[#allocation2 + $0x50] sm:$0xff]
    %v1399 = vld [vmem:[#allocation2 + $0x58] sm:$0xff]
    %v1400 = vld [vmem:[#allocation2 + $0x60] sm:$0xff]
    %v1401 = vld [vmem:[#allocation2 + $0x68] sm:$0xff]
    %v1402 = vld [vmem:[#allocation2 + $0x70] sm:$0xff]
    %v1403 = vld [vmem:[#allocation2 + $0x78] sm:$0xff]
    %v1404 = vld [vmem:[#allocation2 + $0x80] sm:$0xff]
    %v1405 = vld [vmem:[#allocation2 + $0x88] sm:$0xff]
    %v1406 = vld [vmem:[#allocation2 + $0x90] sm:$0xff]
    %v1407 = vld [vmem:[#allocation2 + $0x98] sm:$0xff]
    %v1408 = vld [vmem:[#allocation2 + $0xa0] sm:$0xff]
    %v1409 = vld [vmem:[#allocation2 + $0xa8] sm:$0xff]
    %v1410 = vld [vmem:[#allocation2 + $0xb0] sm:$0xff]
    %v1411 = vld [vmem:[#allocation2 + $0xb8] sm:$0xff]
    %v1412 = vld [vmem:[#allocation2 + $0xc0] sm:$0xff]
    %v1413 = vld [vmem:[#allocation2 + $0xc8] sm:$0xff]
    %v1414 = vld [vmem:[#allocation2 + $0xd0] sm:$0xff]
    %v1415 = vld [vmem:[#allocation2 + $0xd8] sm:$0xff]
    %v1416 = vld [vmem:[#allocation2 + $0xe0] sm:$0xff]
    %v1417 = vld [vmem:[#allocation2 + $0xe8] sm:$0xff]
    %v1418 = vld [vmem:[#allocation2 + $0xf0] sm:$0xff]
    %v1419 = vld [vmem:[#allocation2 + $0xf8] sm:$0xff]
    %v1420 = vadd.f32 %v1388, %v1310
    %v1421 = vadd.f32 %v1389, %v1312
    %v1422 = vadd.f32 %v1390, %v1314
    %v1423 = vadd.f32 %v1391, %v1316
    %v1424 = vadd.f32 %v1392, %v1320
    %v1425 = vadd.f32 %v1393, %v1322
    %v1426 = vadd.f32 %v1394, %v1324
    %v1427 = vadd.f32 %v1395, %v1326
    %v1428 = vadd.f32 %v1396, %v1330
    %v1429 = vadd.f32 %v1397, %v1332
    %v1430 = vadd.f32 %v1398, %v1334
    %v1431 = vadd.f32 %v1399, %v1336
    %v1432 = vadd.f32 %v1400, %v1340
    %v1433 = vadd.f32 %v1401, %v1342
    %v1434 = vadd.f32 %v1402, %v1344
    %v1435 = vadd.f32 %v1403, %v1346
    %v1436 = vadd.f32 %v1404, %v1350
    %v1437 = vadd.f32 %v1405, %v1352
    %v1438 = vadd.f32 %v1406, %v1354
    %v1439 = vadd.f32 %v1407, %v1356
    %v1440 = vadd.f32 %v1408, %v1360
    %v1441 = vadd.f32 %v1409, %v1362
    %v1442 = vadd.f32 %v1410, %v1364
    %v1443 = vadd.f32 %v1411, %v1366
    %v1444 = vadd.f32 %v1412, %v1370
    %v1445 = vadd.f32 %v1413, %v1372
    %v1446 = vadd.f32 %v1414, %v1374
    %v1447 = vadd.f32 %v1415, %v1376
    %v1448 = vadd.f32 %v1416, %v1380
    %v1449 = vadd.f32 %v1417, %v1382
    %v1450 = vadd.f32 %v1418, %v1384
    %v1451 = vadd.f32 %v1419, %v1386
    %1452 = vst [vmem:[#allocation2] sm:$0xff] %v1420
    %1453 = vst [vmem:[#allocation2 + $0x8] sm:$0xff] %v1421
    %1454 = vst [vmem:[#allocation2 + $0x10] sm:$0xff] %v1422
    %1455 = vst [vmem:[#allocation2 + $0x18] sm:$0xff] %v1423
    %1456 = vst [vmem:[#allocation2 + $0x20] sm:$0xff] %v1424
    %1457 = vst [vmem:[#allocation2 + $0x28] sm:$0xff] %v1425
    %1458 = vst [vmem:[#allocation2 + $0x30] sm:$0xff] %v1426
    %1459 = vst [vmem:[#allocation2 + $0x38] sm:$0xff] %v1427
    %1460 = vst [vmem:[#allocation2 + $0x40] sm:$0xff] %v1428
    %1461 = vst [vmem:[#allocation2 + $0x48] sm:$0xff] %v1429
    %1462 = vst [vmem:[#allocation2 + $0x50] sm:$0xff] %v1430
    %1463 = vst [vmem:[#allocation2 + $0x58] sm:$0xff] %v1431
    %1464 = vst [vmem:[#allocation2 + $0x60] sm:$0xff] %v1432
    %1465 = vst [vmem:[#allocation2 + $0x68] sm:$0xff] %v1433
    %1466 = vst [vmem:[#allocation2 + $0x70] sm:$0xff] %v1434
    %1467 = vst [vmem:[#allocation2 + $0x78] sm:$0xff] %v1435
    %1468 = vst [vmem:[#allocation2 + $0x80] sm:$0xff] %v1436
    %1469 = vst [vmem:[#allocation2 + $0x88] sm:$0xff] %v1437
    %1470 = vst [vmem:[#allocation2 + $0x90] sm:$0xff] %v1438
    %1471 = vst [vmem:[#allocation2 + $0x98] sm:$0xff] %v1439
    %1472 = vst [vmem:[#allocation2 + $0xa0] sm:$0xff] %v1440
    %1473 = vst [vmem:[#allocation2 + $0xa8] sm:$0xff] %v1441
    %1474 = vst [vmem:[#allocation2 + $0xb0] sm:$0xff] %v1442
    %1475 = vst [vmem:[#allocation2 + $0xb8] sm:$0xff] %v1443
    %1476 = vst [vmem:[#allocation2 + $0xc0] sm:$0xff] %v1444
    %1477 = vst [vmem:[#allocation2 + $0xc8] sm:$0xff] %v1445
    %1478 = vst [vmem:[#allocation2 + $0xd0] sm:$0xff] %v1446
    %1479 = vst [vmem:[#allocation2 + $0xd8] sm:$0xff] %v1447
    %1480 = vst [vmem:[#allocation2 + $0xe0] sm:$0xff] %v1448
    %1481 = vst [vmem:[#allocation2 + $0xe8] sm:$0xff] %v1449
    %1482 = vst [vmem:[#allocation2 + $0xf0] sm:$0xff] %v1450
    %1483 = vst [vmem:[#allocation2 + $0xf8] sm:$0xff] %v1451
    %s1484 = scalar_lea.vmem [#allocation3], 512
    %v1485 = vld [vmem:[%s1484] sm:$0xff]
    %v1486 = vld [vmem:[%s1484 + $0x8] sm:$0xff]
    %v1487 = vld [vmem:[%s1484 + $0x10] sm:$0xff]
    %v1488 = vld [vmem:[%s1484 + $0x18] sm:$0xff]
    %v1489 = vld [vmem:[%s1484 + $0x20] sm:$0xff]
    %v1490 = vld [vmem:[%s1484 + $0x28] sm:$0xff]
    %v1491 = vld [vmem:[%s1484 + $0x30] sm:$0xff]
    %v1492 = vld [vmem:[%s1484 + $0x38] sm:$0xff]
    %v1493 = vld [vmem:[%s1484 + $0x40] sm:$0xff]
    %v1494 = vld [vmem:[%s1484 + $0x48] sm:$0xff]
    %v1495 = vld [vmem:[%s1484 + $0x50] sm:$0xff]
    %v1496 = vld [vmem:[%s1484 + $0x58] sm:$0xff]
    %v1497 = vld [vmem:[%s1484 + $0x60] sm:$0xff]
    %v1498 = vld [vmem:[%s1484 + $0x68] sm:$0xff]
    %v1499 = vld [vmem:[%s1484 + $0x70] sm:$0xff]
    %v1500 = vld [vmem:[%s1484 + $0x78] sm:$0xff]
    %v1503 = vunpack.c.l.b16 %v109
    %v1504 = vunpack.c.l.b16 %v119
    %v1505 = vpack.c.b16 %v485, %v484
    %v1506 = vpack.c.b16 %v487, %v486
    %v1507 = vpack.c.b16 %v489, %v488
    %v1508 = vpack.c.b16 %v1503, %v490
    %v1509 = vpack.c.b16 %v493, %v492
    %v1510 = vpack.c.b16 %v495, %v494
    %v1511 = vpack.c.b16 %v497, %v496
    %v1512 = vpack.c.b16 %v1504, %v498
    %v1537 = vunpack.c.l.b16 %v1485
    %v1538 = vunpack.c.h.b16 %v1485
    %v1539 = vunpack.c.l.b16 %v1486
    %v1540 = vunpack.c.h.b16 %v1486
    %v1541 = vunpack.c.l.b16 %v1487
    %v1542 = vunpack.c.h.b16 %v1487
    %v1543 = vunpack.c.l.b16 %v1488
    %v1544 = vunpack.c.h.b16 %v1488
    %v1545 = vunpack.c.l.b16 %v1489
    %v1546 = vunpack.c.h.b16 %v1489
    %v1547 = vunpack.c.l.b16 %v1490
    %v1548 = vunpack.c.h.b16 %v1490
    %v1549 = vunpack.c.l.b16 %v1491
    %v1550 = vunpack.c.h.b16 %v1491
    %v1551 = vunpack.c.l.b16 %v1492
    %v1552 = vunpack.c.h.b16 %v1492
    %v1553 = vunpack.c.l.b16 %v1493
    %v1554 = vunpack.c.h.b16 %v1493
    %v1555 = vunpack.c.l.b16 %v1494
    %v1556 = vunpack.c.h.b16 %v1494
    %v1557 = vunpack.c.l.b16 %v1495
    %v1558 = vunpack.c.h.b16 %v1495
    %v1559 = vunpack.c.l.b16 %v1496
    %v1560 = vunpack.c.h.b16 %v1496
    %v1561 = vunpack.c.l.b16 %v1497
    %v1562 = vunpack.c.h.b16 %v1497
    %v1563 = vunpack.c.l.b16 %v1498
    %v1564 = vunpack.c.h.b16 %v1498
    %v1565 = vunpack.c.l.b16 %v1499
    %v1566 = vunpack.c.h.b16 %v1499
    %v1567 = vunpack.c.l.b16 %v1500
    %v1568 = vunpack.c.h.b16 %v1500
    %v1569 = vpack.c.b16 %v1539, %v1537
    %v1570 = vpack.c.b16 %v1540, %v1538
    %v1571 = vpack.c.b16 %v1543, %v1541
    %v1572 = vpack.c.b16 %v1544, %v1542
    %v1573 = vpack.c.b16 %v1547, %v1545
    %v1574 = vpack.c.b16 %v1548, %v1546
    %v1575 = vpack.c.b16 %v1551, %v1549
    %v1576 = vpack.c.b16 %v1552, %v1550
    %v1577 = vpack.c.b16 %v1555, %v1553
    %v1578 = vpack.c.b16 %v1556, %v1554
    %v1579 = vpack.c.b16 %v1559, %v1557
    %v1580 = vpack.c.b16 %v1560, %v1558
    %v1581 = vpack.c.b16 %v1563, %v1561
    %v1582 = vpack.c.b16 %v1564, %v1562
    %v1583 = vpack.c.b16 %v1567, %v1565
    %v1584 = vpack.c.b16 %v1568, %v1566
    %1601 = vmatprep.subr.bf16.mxu0 %v1570
    %1602 = vmatpush1.bf16.msra.mxu0 %v1569
    %1603 = vmatprep.subr.bf16.mxu0 %v1572
    %1604 = vmatpush1.bf16.msra.mxu0 %v1571
    %1605 = vmatprep.subr.bf16.mxu0 %v1574
    %1606 = vmatpush1.bf16.msra.mxu0 %v1573
    %1607 = vmatprep.subr.bf16.mxu0 %v1576
    %1608 = vmatpush1.bf16.msra.mxu0 %v1575
    %1609 = vmatprep.subr.bf16.mxu0 %v1578
    %1610 = vmatpush1.bf16.msra.mxu0 %v1577
    %1611 = vmatprep.subr.bf16.mxu0 %v1580
    %1612 = vmatpush1.bf16.msra.mxu0 %v1579
    %1613 = vmatprep.subr.bf16.mxu0 %v1582
    %1614 = vmatpush1.bf16.msra.mxu0 %v1581
    %1615 = vmatprep.subr.bf16.mxu0 %v1584
    %1616 = vmatpush1.bf16.msra.mxu0 %v1583
    %1617 = vmatprep.subr.bf16.mxu0 0
    %1618 = vmatpush1.bf16.msra.mxu0 0
    %1619 = vmatprep.subr.bf16.mxu0 0
    %1620 = vmatpush1.bf16.msra.mxu0 0
    %1621 = vmatprep.subr.bf16.mxu0 0
    %1622 = vmatpush1.bf16.msra.mxu0 0
    %1623 = vmatprep.subr.bf16.mxu0 0
    %1624 = vmatpush1.bf16.msra.mxu0 0
    %1625 = vmatprep.subr.bf16.mxu0 0
    %1626 = vmatpush1.bf16.msra.mxu0 0
    %1627 = vmatprep.subr.bf16.mxu0 0
    %1628 = vmatpush1.bf16.msra.mxu0 0
    %1629 = vmatprep.subr.bf16.mxu0 0
    %1630 = vmatpush1.bf16.msra.mxu0 0
    %1631 = vmatprep.subr.bf16.mxu0 0
    %1632 = vmatpush1.bf16.msra.mxu0 0
    %1633 = vmatprep.mubr.bf16.mxu0 0
    %1634 = vmatmul.mubr.bf16.gmra.mrb[0].mxu0 %v1505
    %v1635 = vpop.f32.mrb[0].mxu0
    %v1636 = vadd.f32 0.0, %v1635
    %v1637 = vpop.f32.mrb[0].mxu0
    %v1638 = vadd.f32 0.0, %v1637
    %v1639 = vpop.f32.mrb[0].mxu0
    %v1640 = vadd.f32 0.0, %v1639
    %v1641 = vpop.f32.mrb[0].mxu0
    %v1642 = vadd.f32 0.0, %v1641
    %1643 = vmatprep.mubr.bf16.mxu0 0
    %1644 = vmatmul.mubr.bf16.gmra.mrb[0].mxu0 %v1506
    %v1645 = vpop.f32.mrb[0].mxu0
    %v1646 = vadd.f32 0.0, %v1645
    %v1647 = vpop.f32.mrb[0].mxu0
    %v1648 = vadd.f32 0.0, %v1647
    %v1649 = vpop.f32.mrb[0].mxu0
    %v1650 = vadd.f32 0.0, %v1649
    %v1651 = vpop.f32.mrb[0].mxu0
    %v1652 = vadd.f32 0.0, %v1651
    %1653 = vmatprep.mubr.bf16.mxu0 0
    %1654 = vmatmul.mubr.bf16.gmra.mrb[0].mxu0 %v1507
    %v1655 = vpop.f32.mrb[0].mxu0
    %v1656 = vadd.f32 0.0, %v1655
    %v1657 = vpop.f32.mrb[0].mxu0
    %v1658 = vadd.f32 0.0, %v1657
    %v1659 = vpop.f32.mrb[0].mxu0
    %v1660 = vadd.f32 0.0, %v1659
    %v1661 = vpop.f32.mrb[0].mxu0
    %v1662 = vadd.f32 0.0, %v1661
    %1663 = vmatprep.mubr.bf16.mxu0 0
    %1664 = vmatmul.mubr.bf16.gmra.mrb[0].mxu0 %v1508
    %v1665 = vpop.f32.mrb[0].mxu0
    %v1666 = vadd.f32 0.0, %v1665
    %v1667 = vpop.f32.mrb[0].mxu0
    %v1668 = vadd.f32 0.0, %v1667
    %v1669 = vpop.f32.mrb[0].mxu0
    %v1670 = vadd.f32 0.0, %v1669
    %v1671 = vpop.f32.mrb[0].mxu0
    %v1672 = vadd.f32 0.0, %v1671
    %1673 = vmatprep.mubr.bf16.mxu0 0
    %1674 = vmatmul.mubr.bf16.gmra.mrb[0].mxu0 %v1509
    %v1675 = vpop.f32.mrb[0].mxu0
    %v1676 = vadd.f32 0.0, %v1675
    %v1677 = vpop.f32.mrb[0].mxu0
    %v1678 = vadd.f32 0.0, %v1677
    %v1679 = vpop.f32.mrb[0].mxu0
    %v1680 = vadd.f32 0.0, %v1679
    %v1681 = vpop.f32.mrb[0].mxu0
    %v1682 = vadd.f32 0.0, %v1681
    %1683 = vmatprep.mubr.bf16.mxu0 0
    %1684 = vmatmul.mubr.bf16.gmra.mrb[0].mxu0 %v1510
    %v1685 = vpop.f32.mrb[0].mxu0
    %v1686 = vadd.f32 0.0, %v1685
    %v1687 = vpop.f32.mrb[0].mxu0
    %v1688 = vadd.f32 0.0, %v1687
    %v1689 = vpop.f32.mrb[0].mxu0
    %v1690 = vadd.f32 0.0, %v1689
    %v1691 = vpop.f32.mrb[0].mxu0
    %v1692 = vadd.f32 0.0, %v1691
    %1693 = vmatprep.mubr.bf16.mxu0 0
    %1694 = vmatmul.mubr.bf16.gmra.mrb[0].mxu0 %v1511
    %v1695 = vpop.f32.mrb[0].mxu0
    %v1696 = vadd.f32 0.0, %v1695
    %v1697 = vpop.f32.mrb[0].mxu0
    %v1698 = vadd.f32 0.0, %v1697
    %v1699 = vpop.f32.mrb[0].mxu0
    %v1700 = vadd.f32 0.0, %v1699
    %v1701 = vpop.f32.mrb[0].mxu0
    %v1702 = vadd.f32 0.0, %v1701
    %1703 = vmatprep.mubr.bf16.mxu0 0
    %1704 = vmatmul.mubr.bf16.gmra.mrb[0].mxu0 %v1512
    %v1705 = vpop.f32.mrb[0].mxu0
    %v1706 = vadd.f32 0.0, %v1705
    %v1707 = vpop.f32.mrb[0].mxu0
    %v1708 = vadd.f32 0.0, %v1707
    %v1709 = vpop.f32.mrb[0].mxu0
    %v1710 = vadd.f32 0.0, %v1709
    %v1711 = vpop.f32.mrb[0].mxu0
    %v1712 = vadd.f32 0.0, %v1711
    %1713 = vdwg.mxu0
    %v1714 = vld [vmem:[#allocation2] sm:$0xff]
    %v1715 = vld [vmem:[#allocation2 + $0x8] sm:$0xff]
    %v1716 = vld [vmem:[#allocation2 + $0x10] sm:$0xff]
    %v1717 = vld [vmem:[#allocation2 + $0x18] sm:$0xff]
    %v1718 = vld [vmem:[#allocation2 + $0x20] sm:$0xff]
    %v1719 = vld [vmem:[#allocation2 + $0x28] sm:$0xff]
    %v1720 = vld [vmem:[#allocation2 + $0x30] sm:$0xff]
    %v1721 = vld [vmem:[#allocation2 + $0x38] sm:$0xff]
    %v1722 = vld [vmem:[#allocation2 + $0x40] sm:$0xff]
    %v1723 = vld [vmem:[#allocation2 + $0x48] sm:$0xff]
    %v1724 = vld [vmem:[#allocation2 + $0x50] sm:$0xff]
    %v1725 = vld [vmem:[#allocation2 + $0x58] sm:$0xff]
    %v1726 = vld [vmem:[#allocation2 + $0x60] sm:$0xff]
    %v1727 = vld [vmem:[#allocation2 + $0x68] sm:$0xff]
    %v1728 = vld [vmem:[#allocation2 + $0x70] sm:$0xff]
    %v1729 = vld [vmem:[#allocation2 + $0x78] sm:$0xff]
    %v1730 = vld [vmem:[#allocation2 + $0x80] sm:$0xff]
    %v1731 = vld [vmem:[#allocation2 + $0x88] sm:$0xff]
    %v1732 = vld [vmem:[#allocation2 + $0x90] sm:$0xff]
    %v1733 = vld [vmem:[#allocation2 + $0x98] sm:$0xff]
    %v1734 = vld [vmem:[#allocation2 + $0xa0] sm:$0xff]
    %v1735 = vld [vmem:[#allocation2 + $0xa8] sm:$0xff]
    %v1736 = vld [vmem:[#allocation2 + $0xb0] sm:$0xff]
    %v1737 = vld [vmem:[#allocation2 + $0xb8] sm:$0xff]
    %v1738 = vld [vmem:[#allocation2 + $0xc0] sm:$0xff]
    %v1739 = vld [vmem:[#allocation2 + $0xc8] sm:$0xff]
    %v1740 = vld [vmem:[#allocation2 + $0xd0] sm:$0xff]
    %v1741 = vld [vmem:[#allocation2 + $0xd8] sm:$0xff]
    %v1742 = vld [vmem:[#allocation2 + $0xe0] sm:$0xff]
    %v1743 = vld [vmem:[#allocation2 + $0xe8] sm:$0xff]
    %v1744 = vld [vmem:[#allocation2 + $0xf0] sm:$0xff]
    %v1745 = vld [vmem:[#allocation2 + $0xf8] sm:$0xff]
    %v1746 = vadd.f32 %v1714, %v1636
    %v1747 = vadd.f32 %v1715, %v1638
    %v1748 = vadd.f32 %v1716, %v1640
    %v1749 = vadd.f32 %v1717, %v1642
    %v1750 = vadd.f32 %v1718, %v1646
    %v1751 = vadd.f32 %v1719, %v1648
    %v1752 = vadd.f32 %v1720, %v1650
    %v1753 = vadd.f32 %v1721, %v1652
    %v1754 = vadd.f32 %v1722, %v1656
    %v1755 = vadd.f32 %v1723, %v1658
    %v1756 = vadd.f32 %v1724, %v1660
    %v1757 = vadd.f32 %v1725, %v1662
    %v1758 = vadd.f32 %v1726, %v1666
    %v1759 = vadd.f32 %v1727, %v1668
    %v1760 = vadd.f32 %v1728, %v1670
    %v1761 = vadd.f32 %v1729, %v1672
    %v1762 = vadd.f32 %v1730, %v1676
    %v1763 = vadd.f32 %v1731, %v1678
    %v1764 = vadd.f32 %v1732, %v1680
    %v1765 = vadd.f32 %v1733, %v1682
    %v1766 = vadd.f32 %v1734, %v1686
    %v1767 = vadd.f32 %v1735, %v1688
    %v1768 = vadd.f32 %v1736, %v1690
    %v1769 = vadd.f32 %v1737, %v1692
    %v1770 = vadd.f32 %v1738, %v1696
    %v1771 = vadd.f32 %v1739, %v1698
    %v1772 = vadd.f32 %v1740, %v1700
    %v1773 = vadd.f32 %v1741, %v1702
    %v1774 = vadd.f32 %v1742, %v1706
    %v1775 = vadd.f32 %v1743, %v1708
    %v1776 = vadd.f32 %v1744, %v1710
    %v1777 = vadd.f32 %v1745, %v1712
    %1778 = vst [vmem:[#allocation2] sm:$0xff] %v1746
    %1779 = vst [vmem:[#allocation2 + $0x8] sm:$0xff] %v1747
    %1780 = vst [vmem:[#allocation2 + $0x10] sm:$0xff] %v1748
    %1781 = vst [vmem:[#allocation2 + $0x18] sm:$0xff] %v1749
    %1782 = vst [vmem:[#allocation2 + $0x20] sm:$0xff] %v1750
    %1783 = vst [vmem:[#allocation2 + $0x28] sm:$0xff] %v1751
    %1784 = vst [vmem:[#allocation2 + $0x30] sm:$0xff] %v1752
    %1785 = vst [vmem:[#allocation2 + $0x38] sm:$0xff] %v1753
    %1786 = vst [vmem:[#allocation2 + $0x40] sm:$0xff] %v1754
    %1787 = vst [vmem:[#allocation2 + $0x48] sm:$0xff] %v1755
    %1788 = vst [vmem:[#allocation2 + $0x50] sm:$0xff] %v1756
    %1789 = vst [vmem:[#allocation2 + $0x58] sm:$0xff] %v1757
    %1790 = vst [vmem:[#allocation2 + $0x60] sm:$0xff] %v1758
    %1791 = vst [vmem:[#allocation2 + $0x68] sm:$0xff] %v1759
    %1792 = vst [vmem:[#allocation2 + $0x70] sm:$0xff] %v1760
    %1793 = vst [vmem:[#allocation2 + $0x78] sm:$0xff] %v1761
    %1794 = vst [vmem:[#allocation2 + $0x80] sm:$0xff] %v1762
    %1795 = vst [vmem:[#allocation2 + $0x88] sm:$0xff] %v1763
    %1796 = vst [vmem:[#allocation2 + $0x90] sm:$0xff] %v1764
    %1797 = vst [vmem:[#allocation2 + $0x98] sm:$0xff] %v1765
    %1798 = vst [vmem:[#allocation2 + $0xa0] sm:$0xff] %v1766
    %1799 = vst [vmem:[#allocation2 + $0xa8] sm:$0xff] %v1767
    %1800 = vst [vmem:[#allocation2 + $0xb0] sm:$0xff] %v1768
    %1801 = vst [vmem:[#allocation2 + $0xb8] sm:$0xff] %v1769
    %1802 = vst [vmem:[#allocation2 + $0xc0] sm:$0xff] %v1770
    %1803 = vst [vmem:[#allocation2 + $0xc8] sm:$0xff] %v1771
    %1804 = vst [vmem:[#allocation2 + $0xd0] sm:$0xff] %v1772
    %1805 = vst [vmem:[#allocation2 + $0xd8] sm:$0xff] %v1773
    %1806 = vst [vmem:[#allocation2 + $0xe0] sm:$0xff] %v1774
    %1807 = vst [vmem:[#allocation2 + $0xe8] sm:$0xff] %v1775
    %1808 = vst [vmem:[#allocation2 + $0xf0] sm:$0xff] %v1776
    %1809 = vst [vmem:[#allocation2 + $0xf8] sm:$0xff] %v1777
    %s1810 = scalar_lea.vmem [#allocation3], 640
    %v1811 = vld [vmem:[%s1810] sm:$0xff]
    %v1812 = vld [vmem:[%s1810 + $0x8] sm:$0xff]
    %v1813 = vld [vmem:[%s1810 + $0x10] sm:$0xff]
    %v1814 = vld [vmem:[%s1810 + $0x18] sm:$0xff]
    %v1815 = vld [vmem:[%s1810 + $0x20] sm:$0xff]
    %v1816 = vld [vmem:[%s1810 + $0x28] sm:$0xff]
    %v1817 = vld [vmem:[%s1810 + $0x30] sm:$0xff]
    %v1818 = vld [vmem:[%s1810 + $0x38] sm:$0xff]
    %v1819 = vld [vmem:[%s1810 + $0x40] sm:$0xff]
    %v1820 = vld [vmem:[%s1810 + $0x48] sm:$0xff]
    %v1821 = vld [vmem:[%s1810 + $0x50] sm:$0xff]
    %v1822 = vld [vmem:[%s1810 + $0x58] sm:$0xff]
    %v1823 = vld [vmem:[%s1810 + $0x60] sm:$0xff]
    %v1824 = vld [vmem:[%s1810 + $0x68] sm:$0xff]
    %v1825 = vld [vmem:[%s1810 + $0x70] sm:$0xff]
    %v1826 = vld [vmem:[%s1810 + $0x78] sm:$0xff]
    %v1829 = vunpack.c.l.b16 %v149
    %v1830 = vunpack.c.l.b16 %v159
    %v1831 = vpack.c.b16 %v839, %v838
    %v1832 = vpack.c.b16 %v841, %v840
    %v1833 = vpack.c.b16 %v843, %v842
    %v1834 = vpack.c.b16 %v1829, %v844
    %v1835 = vpack.c.b16 %v847, %v846
    %v1836 = vpack.c.b16 %v849, %v848
    %v1837 = vpack.c.b16 %v851, %v850
    %v1838 = vpack.c.b16 %v1830, %v852
    %v1863 = vunpack.c.l.b16 %v1811
    %v1864 = vunpack.c.h.b16 %v1811
    %v1865 = vunpack.c.l.b16 %v1812
    %v1866 = vunpack.c.h.b16 %v1812
    %v1867 = vunpack.c.l.b16 %v1813
    %v1868 = vunpack.c.h.b16 %v1813
    %v1869 = vunpack.c.l.b16 %v1814
    %v1870 = vunpack.c.h.b16 %v1814
    %v1871 = vunpack.c.l.b16 %v1815
    %v1872 = vunpack.c.h.b16 %v1815
    %v1873 = vunpack.c.l.b16 %v1816
    %v1874 = vunpack.c.h.b16 %v1816
    %v1875 = vunpack.c.l.b16 %v1817
    %v1876 = vunpack.c.h.b16 %v1817
    %v1877 = vunpack.c.l.b16 %v1818
    %v1878 = vunpack.c.h.b16 %v1818
    %v1879 = vunpack.c.l.b16 %v1819
    %v1880 = vunpack.c.h.b16 %v1819
    %v1881 = vunpack.c.l.b16 %v1820
    %v1882 = vunpack.c.h.b16 %v1820
    %v1883 = vunpack.c.l.b16 %v1821
    %v1884 = vunpack.c.h.b16 %v1821
    %v1885 = vunpack.c.l.b16 %v1822
    %v1886 = vunpack.c.h.b16 %v1822
    %v1887 = vunpack.c.l.b16 %v1823
    %v1888 = vunpack.c.h.b16 %v1823
    %v1889 = vunpack.c.l.b16 %v1824
    %v1890 = vunpack.c.h.b16 %v1824
    %v1891 = vunpack.c.l.b16 %v1825
    %v1892 = vunpack.c.h.b16 %v1825
    %v1893 = vunpack.c.l.b16 %v1826
    %v1894 = vunpack.c.h.b16 %v1826
    %v1895 = vpack.c.b16 %v1865, %v1863
    %v1896 = vpack.c.b16 %v1866, %v1864
    %v1897 = vpack.c.b16 %v1869, %v1867
    %v1898 = vpack.c.b16 %v1870, %v1868
    %v1899 = vpack.c.b16 %v1873, %v1871
    %v1900 = vpack.c.b16 %v1874, %v1872
    %v1901 = vpack.c.b16 %v1877, %v1875
    %v1902 = vpack.c.b16 %v1878, %v1876
    %v1903 = vpack.c.b16 %v1881, %v1879
    %v1904 = vpack.c.b16 %v1882, %v1880
    %v1905 = vpack.c.b16 %v1885, %v1883
    %v1906 = vpack.c.b16 %v1886, %v1884
    %v1907 = vpack.c.b16 %v1889, %v1887
    %v1908 = vpack.c.b16 %v1890, %v1888
    %v1909 = vpack.c.b16 %v1893, %v1891
    %v1910 = vpack.c.b16 %v1894, %v1892
    %1927 = vmatprep.subr.bf16.mxu0 %v1896
    %1928 = vmatpush1.bf16.msra.mxu0 %v1895
    %1929 = vmatprep.subr.bf16.mxu0 %v1898
    %1930 = vmatpush1.bf16.msra.mxu0 %v1897
    %1931 = vmatprep.subr.bf16.mxu0 %v1900
    %1932 = vmatpush1.bf16.msra.mxu0 %v1899
    %1933 = vmatprep.subr.bf16.mxu0 %v1902
    %1934 = vmatpush1.bf16.msra.mxu0 %v1901
    %1935 = vmatprep.subr.bf16.mxu0 %v1904
    %1936 = vmatpush1.bf16.msra.mxu0 %v1903
    %1937 = vmatprep.subr.bf16.mxu0 %v1906
    %1938 = vmatpush1.bf16.msra.mxu0 %v1905
    %1939 = vmatprep.subr.bf16.mxu0 %v1908
    %1940 = vmatpush1.bf16.msra.mxu0 %v1907
    %1941 = vmatprep.subr.bf16.mxu0 %v1910
    %1942 = vmatpush1.bf16.msra.mxu0 %v1909
    %1943 = vmatprep.subr.bf16.mxu0 0
    %1944 = vmatpush1.bf16.msra.mxu0 0
    %1945 = vmatprep.subr.bf16.mxu0 0
    %1946 = vmatpush1.bf16.msra.mxu0 0
    %1947 = vmatprep.subr.bf16.mxu0 0
    %1948 = vmatpush1.bf16.msra.mxu0 0
    %1949 = vmatprep.subr.bf16.mxu0 0
    %1950 = vmatpush1.bf16.msra.mxu0 0
    %1951 = vmatprep.subr.bf16.mxu0 0
    %1952 = vmatpush1.bf16.msra.mxu0 0
    %1953 = vmatprep.subr.bf16.mxu0 0
    %1954 = vmatpush1.bf16.msra.mxu0 0
    %1955 = vmatprep.subr.bf16.mxu0 0
    %1956 = vmatpush1.bf16.msra.mxu0 0
    %1957 = vmatprep.subr.bf16.mxu0 0
    %1958 = vmatpush1.bf16.msra.mxu0 0
    %1959 = vmatprep.mubr.bf16.mxu0 0
    %1960 = vmatmul.mubr.bf16.gmra.mrb[0].mxu0 %v1831
    %v1961 = vpop.f32.mrb[0].mxu0
    %v1962 = vadd.f32 0.0, %v1961
    %v1963 = vpop.f32.mrb[0].mxu0
    %v1964 = vadd.f32 0.0, %v1963
    %v1965 = vpop.f32.mrb[0].mxu0
    %v1966 = vadd.f32 0.0, %v1965
    %v1967 = vpop.f32.mrb[0].mxu0
    %v1968 = vadd.f32 0.0, %v1967
    %1969 = vmatprep.mubr.bf16.mxu0 0
    %1970 = vmatmul.mubr.bf16.gmra.mrb[0].mxu0 %v1832
    %v1971 = vpop.f32.mrb[0].mxu0
    %v1972 = vadd.f32 0.0, %v1971
    %v1973 = vpop.f32.mrb[0].mxu0
    %v1974 = vadd.f32 0.0, %v1973
    %v1975 = vpop.f32.mrb[0].mxu0
    %v1976 = vadd.f32 0.0, %v1975
    %v1977 = vpop.f32.mrb[0].mxu0
    %v1978 = vadd.f32 0.0, %v1977
    %1979 = vmatprep.mubr.bf16.mxu0 0
    %1980 = vmatmul.mubr.bf16.gmra.mrb[0].mxu0 %v1833
    %v1981 = vpop.f32.mrb[0].mxu0
    %v1982 = vadd.f32 0.0, %v1981
    %v1983 = vpop.f32.mrb[0].mxu0
    %v1984 = vadd.f32 0.0, %v1983
    %v1985 = vpop.f32.mrb[0].mxu0
    %v1986 = vadd.f32 0.0, %v1985
    %v1987 = vpop.f32.mrb[0].mxu0
    %v1988 = vadd.f32 0.0, %v1987
    %1989 = vmatprep.mubr.bf16.mxu0 0
    %1990 = vmatmul.mubr.bf16.gmra.mrb[0].mxu0 %v1834
    %v1991 = vpop.f32.mrb[0].mxu0
    %v1992 = vadd.f32 0.0, %v1991
    %v1993 = vpop.f32.mrb[0].mxu0
    %v1994 = vadd.f32 0.0, %v1993
    %v1995 = vpop.f32.mrb[0].mxu0
    %v1996 = vadd.f32 0.0, %v1995
    %v1997 = vpop.f32.mrb[0].mxu0
    %v1998 = vadd.f32 0.0, %v1997
    %1999 = vmatprep.mubr.bf16.mxu0 0
    %2000 = vmatmul.mubr.bf16.gmra.mrb[0].mxu0 %v1835
    %v2001 = vpop.f32.mrb[0].mxu0
    %v2002 = vadd.f32 0.0, %v2001
    %v2003 = vpop.f32.mrb[0].mxu0
    %v2004 = vadd.f32 0.0, %v2003
    %v2005 = vpop.f32.mrb[0].mxu0
    %v2006 = vadd.f32 0.0, %v2005
    %v2007 = vpop.f32.mrb[0].mxu0
    %v2008 = vadd.f32 0.0, %v2007
    %2009 = vmatprep.mubr.bf16.mxu0 0
    %2010 = vmatmul.mubr.bf16.gmra.mrb[0].mxu0 %v1836
    %v2011 = vpop.f32.mrb[0].mxu0
    %v2012 = vadd.f32 0.0, %v2011
    %v2013 = vpop.f32.mrb[0].mxu0
    %v2014 = vadd.f32 0.0, %v2013
    %v2015 = vpop.f32.mrb[0].mxu0
    %v2016 = vadd.f32 0.0, %v2015
    %v2017 = vpop.f32.mrb[0].mxu0
    %v2018 = vadd.f32 0.0, %v2017
    %2019 = vmatprep.mubr.bf16.mxu0 0
    %2020 = vmatmul.mubr.bf16.gmra.mrb[0].mxu0 %v1837
    %v2021 = vpop.f32.mrb[0].mxu0
    %v2022 = vadd.f32 0.0, %v2021
    %v2023 = vpop.f32.mrb[0].mxu0
    %v2024 = vadd.f32 0.0, %v2023
    %v2025 = vpop.f32.mrb[0].mxu0
    %v2026 = vadd.f32 0.0, %v2025
    %v2027 = vpop.f32.mrb[0].mxu0
    %v2028 = vadd.f32 0.0, %v2027
    %2029 = vmatprep.mubr.bf16.mxu0 0
    %2030 = vmatmul.mubr.bf16.gmra.mrb[0].mxu0 %v1838
    %v2031 = vpop.f32.mrb[0].mxu0
    %v2032 = vadd.f32 0.0, %v2031
    %v2033 = vpop.f32.mrb[0].mxu0
    %v2034 = vadd.f32 0.0, %v2033
    %v2035 = vpop.f32.mrb[0].mxu0
    %v2036 = vadd.f32 0.0, %v2035
    %v2037 = vpop.f32.mrb[0].mxu0
    %v2038 = vadd.f32 0.0, %v2037
    %2039 = vdwg.mxu0
    %v2040 = vld [vmem:[#allocation2] sm:$0xff]
    %v2041 = vld [vmem:[#allocation2 + $0x8] sm:$0xff]
    %v2042 = vld [vmem:[#allocation2 + $0x10] sm:$0xff]
    %v2043 = vld [vmem:[#allocation2 + $0x18] sm:$0xff]
    %v2044 = vld [vmem:[#allocation2 + $0x20] sm:$0xff]
    %v2045 = vld [vmem:[#allocation2 + $0x28] sm:$0xff]
    %v2046 = vld [vmem:[#allocation2 + $0x30] sm:$0xff]
    %v2047 = vld [vmem:[#allocation2 + $0x38] sm:$0xff]
    %v2048 = vld [vmem:[#allocation2 + $0x40] sm:$0xff]
    %v2049 = vld [vmem:[#allocation2 + $0x48] sm:$0xff]
    %v2050 = vld [vmem:[#allocation2 + $0x50] sm:$0xff]
    %v2051 = vld [vmem:[#allocation2 + $0x58] sm:$0xff]
    %v2052 = vld [vmem:[#allocation2 + $0x60] sm:$0xff]
    %v2053 = vld [vmem:[#allocation2 + $0x68] sm:$0xff]
    %v2054 = vld [vmem:[#allocation2 + $0x70] sm:$0xff]
    %v2055 = vld [vmem:[#allocation2 + $0x78] sm:$0xff]
    %v2056 = vld [vmem:[#allocation2 + $0x80] sm:$0xff]
    %v2057 = vld [vmem:[#allocation2 + $0x88] sm:$0xff]
    %v2058 = vld [vmem:[#allocation2 + $0x90] sm:$0xff]
    %v2059 = vld [vmem:[#allocation2 + $0x98] sm:$0xff]
    %v2060 = vld [vmem:[#allocation2 + $0xa0] sm:$0xff]
    %v2061 = vld [vmem:[#allocation2 + $0xa8] sm:$0xff]
    %v2062 = vld [vmem:[#allocation2 + $0xb0] sm:$0xff]
    %v2063 = vld [vmem:[#allocation2 + $0xb8] sm:$0xff]
    %v2064 = vld [vmem:[#allocation2 + $0xc0] sm:$0xff]
    %v2065 = vld [vmem:[#allocation2 + $0xc8] sm:$0xff]
    %v2066 = vld [vmem:[#allocation2 + $0xd0] sm:$0xff]
    %v2067 = vld [vmem:[#allocation2 + $0xd8] sm:$0xff]
    %v2068 = vld [vmem:[#allocation2 + $0xe0] sm:$0xff]
    %v2069 = vld [vmem:[#allocation2 + $0xe8] sm:$0xff]
    %v2070 = vld [vmem:[#allocation2 + $0xf0] sm:$0xff]
    %v2071 = vld [vmem:[#allocation2 + $0xf8] sm:$0xff]
    %v2072 = vadd.f32 %v2040, %v1962
    %v2073 = vadd.f32 %v2041, %v1964
    %v2074 = vadd.f32 %v2042, %v1966
    %v2075 = vadd.f32 %v2043, %v1968
    %v2076 = vadd.f32 %v2044, %v1972
    %v2077 = vadd.f32 %v2045, %v1974
    %v2078 = vadd.f32 %v2046, %v1976
    %v2079 = vadd.f32 %v2047, %v1978
    %v2080 = vadd.f32 %v2048, %v1982
    %v2081 = vadd.f32 %v2049, %v1984
    %v2082 = vadd.f32 %v2050, %v1986
    %v2083 = vadd.f32 %v2051, %v1988
    %v2084 = vadd.f32 %v2052, %v1992
    %v2085 = vadd.f32 %v2053, %v1994
    %v2086 = vadd.f32 %v2054, %v1996
    %v2087 = vadd.f32 %v2055, %v1998
    %v2088 = vadd.f32 %v2056, %v2002
    %v2089 = vadd.f32 %v2057, %v2004
    %v2090 = vadd.f32 %v2058, %v2006
    %v2091 = vadd.f32 %v2059, %v2008
    %v2092 = vadd.f32 %v2060, %v2012
    %v2093 = vadd.f32 %v2061, %v2014
    %v2094 = vadd.f32 %v2062, %v2016
    %v2095 = vadd.f32 %v2063, %v2018
    %v2096 = vadd.f32 %v2064, %v2022
    %v2097 = vadd.f32 %v2065, %v2024
    %v2098 = vadd.f32 %v2066, %v2026
    %v2099 = vadd.f32 %v2067, %v2028
    %v2100 = vadd.f32 %v2068, %v2032
    %v2101 = vadd.f32 %v2069, %v2034
    %v2102 = vadd.f32 %v2070, %v2036
    %v2103 = vadd.f32 %v2071, %v2038
    %2104 = vst [vmem:[#allocation2] sm:$0xff] %v2072
    %2105 = vst [vmem:[#allocation2 + $0x8] sm:$0xff] %v2073
    %2106 = vst [vmem:[#allocation2 + $0x10] sm:$0xff] %v2074
    %2107 = vst [vmem:[#allocation2 + $0x18] sm:$0xff] %v2075
    %2108 = vst [vmem:[#allocation2 + $0x20] sm:$0xff] %v2076
    %2109 = vst [vmem:[#allocation2 + $0x28] sm:$0xff] %v2077
    %2110 = vst [vmem:[#allocation2 + $0x30] sm:$0xff] %v2078
    %2111 = vst [vmem:[#allocation2 + $0x38] sm:$0xff] %v2079
    %2112 = vst [vmem:[#allocation2 + $0x40] sm:$0xff] %v2080
    %2113 = vst [vmem:[#allocation2 + $0x48] sm:$0xff] %v2081
    %2114 = vst [vmem:[#allocation2 + $0x50] sm:$0xff] %v2082
    %2115 = vst [vmem:[#allocation2 + $0x58] sm:$0xff] %v2083
    %2116 = vst [vmem:[#allocation2 + $0x60] sm:$0xff] %v2084
    %2117 = vst [vmem:[#allocation2 + $0x68] sm:$0xff] %v2085
    %2118 = vst [vmem:[#allocation2 + $0x70] sm:$0xff] %v2086
    %2119 = vst [vmem:[#allocation2 + $0x78] sm:$0xff] %v2087
    %2120 = vst [vmem:[#allocation2 + $0x80] sm:$0xff] %v2088
    %2121 = vst [vmem:[#allocation2 + $0x88] sm:$0xff] %v2089
    %2122 = vst [vmem:[#allocation2 + $0x90] sm:$0xff] %v2090
    %2123 = vst [vmem:[#allocation2 + $0x98] sm:$0xff] %v2091
    %2124 = vst [vmem:[#allocation2 + $0xa0] sm:$0xff] %v2092
    %2125 = vst [vmem:[#allocation2 + $0xa8] sm:$0xff] %v2093
    %2126 = vst [vmem:[#allocation2 + $0xb0] sm:$0xff] %v2094
    %2127 = vst [vmem:[#allocation2 + $0xb8] sm:$0xff] %v2095
    %2128 = vst [vmem:[#allocation2 + $0xc0] sm:$0xff] %v2096
    %2129 = vst [vmem:[#allocation2 + $0xc8] sm:$0xff] %v2097
    %2130 = vst [vmem:[#allocation2 + $0xd0] sm:$0xff] %v2098
    %2131 = vst [vmem:[#allocation2 + $0xd8] sm:$0xff] %v2099
    %2132 = vst [vmem:[#allocation2 + $0xe0] sm:$0xff] %v2100
    %2133 = vst [vmem:[#allocation2 + $0xe8] sm:$0xff] %v2101
    %2134 = vst [vmem:[#allocation2 + $0xf0] sm:$0xff] %v2102
    %2135 = vst [vmem:[#allocation2 + $0xf8] sm:$0xff] %v2103
    %s2136 = scalar_lea.vmem [#allocation3], 768
    %v2137 = vld [vmem:[%s2136] sm:$0xff]
    %v2138 = vld [vmem:[%s2136 + $0x8] sm:$0xff]
    %v2139 = vld [vmem:[%s2136 + $0x10] sm:$0xff]
    %v2140 = vld [vmem:[%s2136 + $0x18] sm:$0xff]
    %v2141 = vld [vmem:[%s2136 + $0x20] sm:$0xff]
    %v2142 = vld [vmem:[%s2136 + $0x28] sm:$0xff]
    %v2143 = vld [vmem:[%s2136 + $0x30] sm:$0xff]
    %v2144 = vld [vmem:[%s2136 + $0x38] sm:$0xff]
    %v2145 = vld [vmem:[%s2136 + $0x40] sm:$0xff]
    %v2146 = vld [vmem:[%s2136 + $0x48] sm:$0xff]
    %v2147 = vld [vmem:[%s2136 + $0x50] sm:$0xff]
    %v2148 = vld [vmem:[%s2136 + $0x58] sm:$0xff]
    %v2149 = vld [vmem:[%s2136 + $0x60] sm:$0xff]
    %v2150 = vld [vmem:[%s2136 + $0x68] sm:$0xff]
    %v2151 = vld [vmem:[%s2136 + $0x70] sm:$0xff]
    %v2152 = vld [vmem:[%s2136 + $0x78] sm:$0xff]
    %v2155 = vunpack.c.l.b16 %v70
    %v2156 = vunpack.c.l.b16 %v80
    %v2157 = vpack.c.b16 %v2155, %v1177
    %v2158 = vpack.c.b16 %v2156, %v1178
    %v2177 = vunpack.c.l.b16 %v2137
    %v2178 = vunpack.c.h.b16 %v2137
    %v2179 = vunpack.c.l.b16 %v2138
    %v2180 = vunpack.c.h.b16 %v2138
    %v2181 = vunpack.c.l.b16 %v2139
    %v2182 = vunpack.c.h.b16 %v2139
    %v2183 = vunpack.c.l.b16 %v2140
    %v2184 = vunpack.c.h.b16 %v2140
    %v2185 = vunpack.c.l.b16 %v2141
    %v2186 = vunpack.c.h.b16 %v2141
    %v2187 = vunpack.c.l.b16 %v2142
    %v2188 = vunpack.c.h.b16 %v2142
    %v2189 = vunpack.c.l.b16 %v2143
    %v2190 = vunpack.c.h.b16 %v2143
    %v2191 = vunpack.c.l.b16 %v2144
    %v2192 = vunpack.c.h.b16 %v2144
    %v2193 = vunpack.c.l.b16 %v2145
    %v2194 = vunpack.c.h.b16 %v2145
    %v2195 = vunpack.c.l.b16 %v2146
    %v2196 = vunpack.c.h.b16 %v2146
    %v2197 = vunpack.c.l.b16 %v2147
    %v2198 = vunpack.c.h.b16 %v2147
    %v2199 = vunpack.c.l.b16 %v2148
    %v2200 = vunpack.c.h.b16 %v2148
    %v2201 = vunpack.c.l.b16 %v2149
    %v2202 = vunpack.c.h.b16 %v2149
    %v2203 = vunpack.c.l.b16 %v2150
    %v2204 = vunpack.c.h.b16 %v2150
    %v2205 = vunpack.c.l.b16 %v2151
    %v2206 = vunpack.c.h.b16 %v2151
    %v2207 = vunpack.c.l.b16 %v2152
    %v2208 = vunpack.c.h.b16 %v2152
    %v2209 = vpack.c.b16 %v2179, %v2177
    %v2210 = vpack.c.b16 %v2180, %v2178
    %v2211 = vpack.c.b16 %v2183, %v2181
    %v2212 = vpack.c.b16 %v2184, %v2182
    %v2213 = vpack.c.b16 %v2187, %v2185
    %v2214 = vpack.c.b16 %v2188, %v2186
    %v2215 = vpack.c.b16 %v2191, %v2189
    %v2216 = vpack.c.b16 %v2192, %v2190
    %v2217 = vpack.c.b16 %v2195, %v2193
    %v2218 = vpack.c.b16 %v2196, %v2194
    %v2219 = vpack.c.b16 %v2199, %v2197
    %v2220 = vpack.c.b16 %v2200, %v2198
    %v2221 = vpack.c.b16 %v2203, %v2201
    %v2222 = vpack.c.b16 %v2204, %v2202
    %v2223 = vpack.c.b16 %v2207, %v2205
    %v2224 = vpack.c.b16 %v2208, %v2206
    %2241 = vmatprep.subr.bf16.mxu0 %v2210
    %2242 = vmatpush1.bf16.msra.mxu0 %v2209
    %2243 = vmatprep.subr.bf16.mxu0 %v2212
    %2244 = vmatpush1.bf16.msra.mxu0 %v2211
    %2245 = vmatprep.subr.bf16.mxu0 %v2214
    %2246 = vmatpush1.bf16.msra.mxu0 %v2213
    %2247 = vmatprep.subr.bf16.mxu0 %v2216
    %2248 = vmatpush1.bf16.msra.mxu0 %v2215
    %2249 = vmatprep.subr.bf16.mxu0 %v2218
    %2250 = vmatpush1.bf16.msra.mxu0 %v2217
    %2251 = vmatprep.subr.bf16.mxu0 %v2220
    %2252 = vmatpush1.bf16.msra.mxu0 %v2219
    %2253 = vmatprep.subr.bf16.mxu0 %v2222
    %2254 = vmatpush1.bf16.msra.mxu0 %v2221
    %2255 = vmatprep.subr.bf16.mxu0 %v2224
    %2256 = vmatpush1.bf16.msra.mxu0 %v2223
    %2257 = vmatprep.subr.bf16.mxu0 0
    %2258 = vmatpush1.bf16.msra.mxu0 0
    %2259 = vmatprep.subr.bf16.mxu0 0
    %2260 = vmatpush1.bf16.msra.mxu0 0
    %2261 = vmatprep.subr.bf16.mxu0 0
    %2262 = vmatpush1.bf16.msra.mxu0 0
    %2263 = vmatprep.subr.bf16.mxu0 0
    %2264 = vmatpush1.bf16.msra.mxu0 0
    %2265 = vmatprep.subr.bf16.mxu0 0
    %2266 = vmatpush1.bf16.msra.mxu0 0
    %2267 = vmatprep.subr.bf16.mxu0 0
    %2268 = vmatpush1.bf16.msra.mxu0 0
    %2269 = vmatprep.subr.bf16.mxu0 0
    %2270 = vmatpush1.bf16.msra.mxu0 0
    %2271 = vmatprep.subr.bf16.mxu0 0
    %2272 = vmatpush1.bf16.msra.mxu0 0
    %2273 = vmatprep.mubr.bf16.mxu0 0
    %2274 = vmatmul.mubr.bf16.gmra.mrb[0].mxu0 %v210
    %v2275 = vpop.f32.mrb[0].mxu0
    %v2276 = vadd.f32 0.0, %v2275
    %v2277 = vpop.f32.mrb[0].mxu0
    %v2278 = vadd.f32 0.0, %v2277
    %v2279 = vpop.f32.mrb[0].mxu0
    %v2280 = vadd.f32 0.0, %v2279
    %v2281 = vpop.f32.mrb[0].mxu0
    %v2282 = vadd.f32 0.0, %v2281
    %2283 = vmatprep.mubr.bf16.mxu0 0
    %2284 = vmatmul.mubr.bf16.gmra.mrb[0].mxu0 %v211
    %v2285 = vpop.f32.mrb[0].mxu0
    %v2286 = vadd.f32 0.0, %v2285
    %v2287 = vpop.f32.mrb[0].mxu0
    %v2288 = vadd.f32 0.0, %v2287
    %v2289 = vpop.f32.mrb[0].mxu0
    %v2290 = vadd.f32 0.0, %v2289
    %v2291 = vpop.f32.mrb[0].mxu0
    %v2292 = vadd.f32 0.0, %v2291
    %2293 = vmatprep.mubr.bf16.mxu0 0
    %2294 = vmatmul.mubr.bf16.gmra.mrb[0].mxu0 %v212
    %v2295 = vpop.f32.mrb[0].mxu0
    %v2296 = vadd.f32 0.0, %v2295
    %v2297 = vpop.f32.mrb[0].mxu0
    %v2298 = vadd.f32 0.0, %v2297
    %v2299 = vpop.f32.mrb[0].mxu0
    %v2300 = vadd.f32 0.0, %v2299
    %v2301 = vpop.f32.mrb[0].mxu0
    %v2302 = vadd.f32 0.0, %v2301
    %2303 = vmatprep.mubr.bf16.mxu0 0
    %2304 = vmatmul.mubr.bf16.gmra.mrb[0].mxu0 %v2157
    %v2305 = vpop.f32.mrb[0].mxu0
    %v2306 = vadd.f32 0.0, %v2305
    %v2307 = vpop.f32.mrb[0].mxu0
    %v2308 = vadd.f32 0.0, %v2307
    %v2309 = vpop.f32.mrb[0].mxu0
    %v2310 = vadd.f32 0.0, %v2309
    %v2311 = vpop.f32.mrb[0].mxu0
    %v2312 = vadd.f32 0.0, %v2311
    %2313 = vmatprep.mubr.bf16.mxu0 0
    %2314 = vmatmul.mubr.bf16.gmra.mrb[0].mxu0 %v214
    %v2315 = vpop.f32.mrb[0].mxu0
    %v2316 = vadd.f32 0.0, %v2315
    %v2317 = vpop.f32.mrb[0].mxu0
    %v2318 = vadd.f32 0.0, %v2317
    %v2319 = vpop.f32.mrb[0].mxu0
    %v2320 = vadd.f32 0.0, %v2319
    %v2321 = vpop.f32.mrb[0].mxu0
    %v2322 = vadd.f32 0.0, %v2321
    %2323 = vmatprep.mubr.bf16.mxu0 0
    %2324 = vmatmul.mubr.bf16.gmra.mrb[0].mxu0 %v215
    %v2325 = vpop.f32.mrb[0].mxu0
    %v2326 = vadd.f32 0.0, %v2325
    %v2327 = vpop.f32.mrb[0].mxu0
    %v2328 = vadd.f32 0.0, %v2327
    %v2329 = vpop.f32.mrb[0].mxu0
    %v2330 = vadd.f32 0.0, %v2329
    %v2331 = vpop.f32.mrb[0].mxu0
    %v2332 = vadd.f32 0.0, %v2331
    %2333 = vmatprep.mubr.bf16.mxu0 0
    %2334 = vmatmul.mubr.bf16.gmra.mrb[0].mxu0 %v216
    %v2335 = vpop.f32.mrb[0].mxu0
    %v2336 = vadd.f32 0.0, %v2335
    %v2337 = vpop.f32.mrb[0].mxu0
    %v2338 = vadd.f32 0.0, %v2337
    %v2339 = vpop.f32.mrb[0].mxu0
    %v2340 = vadd.f32 0.0, %v2339
    %v2341 = vpop.f32.mrb[0].mxu0
    %v2342 = vadd.f32 0.0, %v2341
    %2343 = vmatprep.mubr.bf16.mxu0 0
    %2344 = vmatmul.mubr.bf16.gmra.mrb[0].mxu0 %v2158
    %v2345 = vpop.f32.mrb[0].mxu0
    %v2346 = vadd.f32 0.0, %v2345
    %v2347 = vpop.f32.mrb[0].mxu0
    %v2348 = vadd.f32 0.0, %v2347
    %v2349 = vpop.f32.mrb[0].mxu0
    %v2350 = vadd.f32 0.0, %v2349
    %v2351 = vpop.f32.mrb[0].mxu0
    %v2352 = vadd.f32 0.0, %v2351
    %2353 = vdwg.mxu0
    %v2354 = vld [vmem:[#allocation2] sm:$0xff]
    %v2355 = vld [vmem:[#allocation2 + $0x8] sm:$0xff]
    %v2356 = vld [vmem:[#allocation2 + $0x10] sm:$0xff]
    %v2357 = vld [vmem:[#allocation2 + $0x18] sm:$0xff]
    %v2358 = vld [vmem:[#allocation2 + $0x20] sm:$0xff]
    %v2359 = vld [vmem:[#allocation2 + $0x28] sm:$0xff]
    %v2360 = vld [vmem:[#allocation2 + $0x30] sm:$0xff]
    %v2361 = vld [vmem:[#allocation2 + $0x38] sm:$0xff]
    %v2362 = vld [vmem:[#allocation2 + $0x40] sm:$0xff]
    %v2363 = vld [vmem:[#allocation2 + $0x48] sm:$0xff]
    %v2364 = vld [vmem:[#allocation2 + $0x50] sm:$0xff]
    %v2365 = vld [vmem:[#allocation2 + $0x58] sm:$0xff]
    %v2366 = vld [vmem:[#allocation2 + $0x60] sm:$0xff]
    %v2367 = vld [vmem:[#allocation2 + $0x68] sm:$0xff]
    %v2368 = vld [vmem:[#allocation2 + $0x70] sm:$0xff]
    %v2369 = vld [vmem:[#allocation2 + $0x78] sm:$0xff]
    %v2370 = vld [vmem:[#allocation2 + $0x80] sm:$0xff]
    %v2371 = vld [vmem:[#allocation2 + $0x88] sm:$0xff]
    %v2372 = vld [vmem:[#allocation2 + $0x90] sm:$0xff]
    %v2373 = vld [vmem:[#allocation2 + $0x98] sm:$0xff]
    %v2374 = vld [vmem:[#allocation2 + $0xa0] sm:$0xff]
    %v2375 = vld [vmem:[#allocation2 + $0xa8] sm:$0xff]
    %v2376 = vld [vmem:[#allocation2 + $0xb0] sm:$0xff]
    %v2377 = vld [vmem:[#allocation2 + $0xb8] sm:$0xff]
    %v2378 = vld [vmem:[#allocation2 + $0xc0] sm:$0xff]
    %v2379 = vld [vmem:[#allocation2 + $0xc8] sm:$0xff]
    %v2380 = vld [vmem:[#allocation2 + $0xd0] sm:$0xff]
    %v2381 = vld [vmem:[#allocation2 + $0xd8] sm:$0xff]
    %v2382 = vld [vmem:[#allocation2 + $0xe0] sm:$0xff]
    %v2383 = vld [vmem:[#allocation2 + $0xe8] sm:$0xff]
    %v2384 = vld [vmem:[#allocation2 + $0xf0] sm:$0xff]
    %v2385 = vld [vmem:[#allocation2 + $0xf8] sm:$0xff]
    %v2386 = vadd.f32 %v2354, %v2276
    %v2387 = vadd.f32 %v2355, %v2278
    %v2388 = vadd.f32 %v2356, %v2280
    %v2389 = vadd.f32 %v2357, %v2282
    %v2390 = vadd.f32 %v2358, %v2286
    %v2391 = vadd.f32 %v2359, %v2288
    %v2392 = vadd.f32 %v2360, %v2290
    %v2393 = vadd.f32 %v2361, %v2292
    %v2394 = vadd.f32 %v2362, %v2296
    %v2395 = vadd.f32 %v2363, %v2298
    %v2396 = vadd.f32 %v2364, %v2300
    %v2397 = vadd.f32 %v2365, %v2302
    %v2398 = vadd.f32 %v2366, %v2306
    %v2399 = vadd.f32 %v2367, %v2308
    %v2400 = vadd.f32 %v2368, %v2310
    %v2401 = vadd.f32 %v2369, %v2312
    %v2402 = vadd.f32 %v2370, %v2316
    %v2403 = vadd.f32 %v2371, %v2318
    %v2404 = vadd.f32 %v2372, %v2320
    %v2405 = vadd.f32 %v2373, %v2322
    %v2406 = vadd.f32 %v2374, %v2326
    %v2407 = vadd.f32 %v2375, %v2328
    %v2408 = vadd.f32 %v2376, %v2330
    %v2409 = vadd.f32 %v2377, %v2332
    %v2410 = vadd.f32 %v2378, %v2336
    %v2411 = vadd.f32 %v2379, %v2338
    %v2412 = vadd.f32 %v2380, %v2340
    %v2413 = vadd.f32 %v2381, %v2342
    %v2414 = vadd.f32 %v2382, %v2346
    %v2415 = vadd.f32 %v2383, %v2348
    %v2416 = vadd.f32 %v2384, %v2350
    %v2417 = vadd.f32 %v2385, %v2352
    %2418 = vst [vmem:[#allocation2] sm:$0xff] %v2386
    %2419 = vst [vmem:[#allocation2 + $0x8] sm:$0xff] %v2387
    %2420 = vst [vmem:[#allocation2 + $0x10] sm:$0xff] %v2388
    %2421 = vst [vmem:[#allocation2 + $0x18] sm:$0xff] %v2389
    %2422 = vst [vmem:[#allocation2 + $0x20] sm:$0xff] %v2390
    %2423 = vst [vmem:[#allocation2 + $0x28] sm:$0xff] %v2391
    %2424 = vst [vmem:[#allocation2 + $0x30] sm:$0xff] %v2392
    %2425 = vst [vmem:[#allocation2 + $0x38] sm:$0xff] %v2393
    %2426 = vst [vmem:[#allocation2 + $0x40] sm:$0xff] %v2394
    %2427 = vst [vmem:[#allocation2 + $0x48] sm:$0xff] %v2395
    %2428 = vst [vmem:[#allocation2 + $0x50] sm:$0xff] %v2396
    %2429 = vst [vmem:[#allocation2 + $0x58] sm:$0xff] %v2397
    %2430 = vst [vmem:[#allocation2 + $0x60] sm:$0xff] %v2398
    %2431 = vst [vmem:[#allocation2 + $0x68] sm:$0xff] %v2399
    %2432 = vst [vmem:[#allocation2 + $0x70] sm:$0xff] %v2400
    %2433 = vst [vmem:[#allocation2 + $0x78] sm:$0xff] %v2401
    %2434 = vst [vmem:[#allocation2 + $0x80] sm:$0xff] %v2402
    %2435 = vst [vmem:[#allocation2 + $0x88] sm:$0xff] %v2403
    %2436 = vst [vmem:[#allocation2 + $0x90] sm:$0xff] %v2404
    %2437 = vst [vmem:[#allocation2 + $0x98] sm:$0xff] %v2405
    %2438 = vst [vmem:[#allocation2 + $0xa0] sm:$0xff] %v2406
    %2439 = vst [vmem:[#allocation2 + $0xa8] sm:$0xff] %v2407
    %2440 = vst [vmem:[#allocation2 + $0xb0] sm:$0xff] %v2408
    %2441 = vst [vmem:[#allocation2 + $0xb8] sm:$0xff] %v2409
    %2442 = vst [vmem:[#allocation2 + $0xc0] sm:$0xff] %v2410
    %2443 = vst [vmem:[#allocation2 + $0xc8] sm:$0xff] %v2411
    %2444 = vst [vmem:[#allocation2 + $0xd0] sm:$0xff] %v2412
    %2445 = vst [vmem:[#allocation2 + $0xd8] sm:$0xff] %v2413
    %2446 = vst [vmem:[#allocation2 + $0xe0] sm:$0xff] %v2414
    %2447 = vst [vmem:[#allocation2 + $0xe8] sm:$0xff] %v2415
    %2448 = vst [vmem:[#allocation2 + $0xf0] sm:$0xff] %v2416
    %2449 = vst [vmem:[#allocation2 + $0xf8] sm:$0xff] %v2417
    %s2450 = scalar_lea.vmem [#allocation3], 896
    %v2451 = vld [vmem:[%s2450] sm:$0xff]
    %v2452 = vld [vmem:[%s2450 + $0x8] sm:$0xff]
    %v2453 = vld [vmem:[%s2450 + $0x10] sm:$0xff]
    %v2454 = vld [vmem:[%s2450 + $0x18] sm:$0xff]
    %v2455 = vld [vmem:[%s2450 + $0x20] sm:$0xff]
    %v2456 = vld [vmem:[%s2450 + $0x28] sm:$0xff]
    %v2457 = vld [vmem:[%s2450 + $0x30] sm:$0xff]
    %v2458 = vld [vmem:[%s2450 + $0x38] sm:$0xff]
    %v2459 = vld [vmem:[%s2450 + $0x40] sm:$0xff]
    %v2460 = vld [vmem:[%s2450 + $0x48] sm:$0xff]
    %v2461 = vld [vmem:[%s2450 + $0x50] sm:$0xff]
    %v2462 = vld [vmem:[%s2450 + $0x58] sm:$0xff]
    %v2463 = vld [vmem:[%s2450 + $0x60] sm:$0xff]
    %v2464 = vld [vmem:[%s2450 + $0x68] sm:$0xff]
    %v2465 = vld [vmem:[%s2450 + $0x70] sm:$0xff]
    %v2466 = vld [vmem:[%s2450 + $0x78] sm:$0xff]
    %v2469 = vunpack.c.l.b16 %v110
    %v2470 = vunpack.c.l.b16 %v120
    %v2471 = vpack.c.b16 %v2469, %v1503
    %v2472 = vpack.c.b16 %v2470, %v1504
    %v2491 = vunpack.c.l.b16 %v2451
    %v2492 = vunpack.c.h.b16 %v2451
    %v2493 = vunpack.c.l.b16 %v2452
    %v2494 = vunpack.c.h.b16 %v2452
    %v2495 = vunpack.c.l.b16 %v2453
    %v2496 = vunpack.c.h.b16 %v2453
    %v2497 = vunpack.c.l.b16 %v2454
    %v2498 = vunpack.c.h.b16 %v2454
    %v2499 = vunpack.c.l.b16 %v2455
    %v2500 = vunpack.c.h.b16 %v2455
    %v2501 = vunpack.c.l.b16 %v2456
    %v2502 = vunpack.c.h.b16 %v2456
    %v2503 = vunpack.c.l.b16 %v2457
    %v2504 = vunpack.c.h.b16 %v2457
    %v2505 = vunpack.c.l.b16 %v2458
    %v2506 = vunpack.c.h.b16 %v2458
    %v2507 = vunpack.c.l.b16 %v2459
    %v2508 = vunpack.c.h.b16 %v2459
    %v2509 = vunpack.c.l.b16 %v2460
    %v2510 = vunpack.c.h.b16 %v2460
    %v2511 = vunpack.c.l.b16 %v2461
    %v2512 = vunpack.c.h.b16 %v2461
    %v2513 = vunpack.c.l.b16 %v2462
    %v2514 = vunpack.c.h.b16 %v2462
    %v2515 = vunpack.c.l.b16 %v2463
    %v2516 = vunpack.c.h.b16 %v2463
    %v2517 = vunpack.c.l.b16 %v2464
    %v2518 = vunpack.c.h.b16 %v2464
    %v2519 = vunpack.c.l.b16 %v2465
    %v2520 = vunpack.c.h.b16 %v2465
    %v2521 = vunpack.c.l.b16 %v2466
    %v2522 = vunpack.c.h.b16 %v2466
    %v2523 = vpack.c.b16 %v2493, %v2491
    %v2524 = vpack.c.b16 %v2494, %v2492
    %v2525 = vpack.c.b16 %v2497, %v2495
    %v2526 = vpack.c.b16 %v2498, %v2496
    %v2527 = vpack.c.b16 %v2501, %v2499
    %v2528 = vpack.c.b16 %v2502, %v2500
    %v2529 = vpack.c.b16 %v2505, %v2503
    %v2530 = vpack.c.b16 %v2506, %v2504
    %v2531 = vpack.c.b16 %v2509, %v2507
    %v2532 = vpack.c.b16 %v2510, %v2508
    %v2533 = vpack.c.b16 %v2513, %v2511
    %v2534 = vpack.c.b16 %v2514, %v2512
    %v2535 = vpack.c.b16 %v2517, %v2515
    %v2536 = vpack.c.b16 %v2518, %v2516
    %v2537 = vpack.c.b16 %v2521, %v2519
    %v2538 = vpack.c.b16 %v2522, %v2520
    %2555 = vmatprep.subr.bf16.mxu0 %v2524
    %2556 = vmatpush1.bf16.msra.mxu0 %v2523
    %2557 = vmatprep.subr.bf16.mxu0 %v2526
    %2558 = vmatpush1.bf16.msra.mxu0 %v2525
    %2559 = vmatprep.subr.bf16.mxu0 %v2528
    %2560 = vmatpush1.bf16.msra.mxu0 %v2527
    %2561 = vmatprep.subr.bf16.mxu0 %v2530
    %2562 = vmatpush1.bf16.msra.mxu0 %v2529
    %2563 = vmatprep.subr.bf16.mxu0 %v2532
    %2564 = vmatpush1.bf16.msra.mxu0 %v2531
    %2565 = vmatprep.subr.bf16.mxu0 %v2534
    %2566 = vmatpush1.bf16.msra.mxu0 %v2533
    %2567 = vmatprep.subr.bf16.mxu0 %v2536
    %2568 = vmatpush1.bf16.msra.mxu0 %v2535
    %2569 = vmatprep.subr.bf16.mxu0 %v2538
    %2570 = vmatpush1.bf16.msra.mxu0 %v2537
    %2571 = vmatprep.subr.bf16.mxu0 0
    %2572 = vmatpush1.bf16.msra.mxu0 0
    %2573 = vmatprep.subr.bf16.mxu0 0
    %2574 = vmatpush1.bf16.msra.mxu0 0
    %2575 = vmatprep.subr.bf16.mxu0 0
    %2576 = vmatpush1.bf16.msra.mxu0 0
    %2577 = vmatprep.subr.bf16.mxu0 0
    %2578 = vmatpush1.bf16.msra.mxu0 0
    %2579 = vmatprep.subr.bf16.mxu0 0
    %2580 = vmatpush1.bf16.msra.mxu0 0
    %2581 = vmatprep.subr.bf16.mxu0 0
    %2582 = vmatpush1.bf16.msra.mxu0 0
    %2583 = vmatprep.subr.bf16.mxu0 0
    %2584 = vmatpush1.bf16.msra.mxu0 0
    %2585 = vmatprep.subr.bf16.mxu0 0
    %2586 = vmatpush1.bf16.msra.mxu0 0
    %2587 = vmatprep.mubr.bf16.mxu0 0
    %2588 = vmatmul.mubr.bf16.gmra.mrb[0].mxu0 %v500
    %v2589 = vpop.f32.mrb[0].mxu0
    %v2590 = vadd.f32 0.0, %v2589
    %v2591 = vpop.f32.mrb[0].mxu0
    %v2592 = vadd.f32 0.0, %v2591
    %v2593 = vpop.f32.mrb[0].mxu0
    %v2594 = vadd.f32 0.0, %v2593
    %v2595 = vpop.f32.mrb[0].mxu0
    %v2596 = vadd.f32 0.0, %v2595
    %2597 = vmatprep.mubr.bf16.mxu0 0
    %2598 = vmatmul.mubr.bf16.gmra.mrb[0].mxu0 %v501
    %v2599 = vpop.f32.mrb[0].mxu0
    %v2600 = vadd.f32 0.0, %v2599
    %v2601 = vpop.f32.mrb[0].mxu0
    %v2602 = vadd.f32 0.0, %v2601
    %v2603 = vpop.f32.mrb[0].mxu0
    %v2604 = vadd.f32 0.0, %v2603
    %v2605 = vpop.f32.mrb[0].mxu0
    %v2606 = vadd.f32 0.0, %v2605
    %2607 = vmatprep.mubr.bf16.mxu0 0
    %2608 = vmatmul.mubr.bf16.gmra.mrb[0].mxu0 %v502
    %v2609 = vpop.f32.mrb[0].mxu0
    %v2610 = vadd.f32 0.0, %v2609
    %v2611 = vpop.f32.mrb[0].mxu0
    %v2612 = vadd.f32 0.0, %v2611
    %v2613 = vpop.f32.mrb[0].mxu0
    %v2614 = vadd.f32 0.0, %v2613
    %v2615 = vpop.f32.mrb[0].mxu0
    %v2616 = vadd.f32 0.0, %v2615
    %2617 = vmatprep.mubr.bf16.mxu0 0
    %2618 = vmatmul.mubr.bf16.gmra.mrb[0].mxu0 %v2471
    %v2619 = vpop.f32.mrb[0].mxu0
    %v2620 = vadd.f32 0.0, %v2619
    %v2621 = vpop.f32.mrb[0].mxu0
    %v2622 = vadd.f32 0.0, %v2621
    %v2623 = vpop.f32.mrb[0].mxu0
    %v2624 = vadd.f32 0.0, %v2623
    %v2625 = vpop.f32.mrb[0].mxu0
    %v2626 = vadd.f32 0.0, %v2625
    %2627 = vmatprep.mubr.bf16.mxu0 0
    %2628 = vmatmul.mubr.bf16.gmra.mrb[0].mxu0 %v504
    %v2629 = vpop.f32.mrb[0].mxu0
    %v2630 = vadd.f32 0.0, %v2629
    %v2631 = vpop.f32.mrb[0].mxu0
    %v2632 = vadd.f32 0.0, %v2631
    %v2633 = vpop.f32.mrb[0].mxu0
    %v2634 = vadd.f32 0.0, %v2633
    %v2635 = vpop.f32.mrb[0].mxu0
    %v2636 = vadd.f32 0.0, %v2635
    %2637 = vmatprep.mubr.bf16.mxu0 0
    %2638 = vmatmul.mubr.bf16.gmra.mrb[0].mxu0 %v505
    %v2639 = vpop.f32.mrb[0].mxu0
    %v2640 = vadd.f32 0.0, %v2639
    %v2641 = vpop.f32.mrb[0].mxu0
    %v2642 = vadd.f32 0.0, %v2641
    %v2643 = vpop.f32.mrb[0].mxu0
    %v2644 = vadd.f32 0.0, %v2643
    %v2645 = vpop.f32.mrb[0].mxu0
    %v2646 = vadd.f32 0.0, %v2645
    %2647 = vmatprep.mubr.bf16.mxu0 0
    %2648 = vmatmul.mubr.bf16.gmra.mrb[0].mxu0 %v506
    %v2649 = vpop.f32.mrb[0].mxu0
    %v2650 = vadd.f32 0.0, %v2649
    %v2651 = vpop.f32.mrb[0].mxu0
    %v2652 = vadd.f32 0.0, %v2651
    %v2653 = vpop.f32.mrb[0].mxu0
    %v2654 = vadd.f32 0.0, %v2653
    %v2655 = vpop.f32.mrb[0].mxu0
    %v2656 = vadd.f32 0.0, %v2655
    %2657 = vmatprep.mubr.bf16.mxu0 0
    %2658 = vmatmul.mubr.bf16.gmra.mrb[0].mxu0 %v2472
    %v2659 = vpop.f32.mrb[0].mxu0
    %v2660 = vadd.f32 0.0, %v2659
    %v2661 = vpop.f32.mrb[0].mxu0
    %v2662 = vadd.f32 0.0, %v2661
    %v2663 = vpop.f32.mrb[0].mxu0
    %v2664 = vadd.f32 0.0, %v2663
    %v2665 = vpop.f32.mrb[0].mxu0
    %v2666 = vadd.f32 0.0, %v2665
    %2667 = vdwg.mxu0
    %v2668 = vld [vmem:[#allocation2] sm:$0xff]
    %v2669 = vld [vmem:[#allocation2 + $0x8] sm:$0xff]
    %v2670 = vld [vmem:[#allocation2 + $0x10] sm:$0xff]
    %v2671 = vld [vmem:[#allocation2 + $0x18] sm:$0xff]
    %v2672 = vld [vmem:[#allocation2 + $0x20] sm:$0xff]
    %v2673 = vld [vmem:[#allocation2 + $0x28] sm:$0xff]
    %v2674 = vld [vmem:[#allocation2 + $0x30] sm:$0xff]
    %v2675 = vld [vmem:[#allocation2 + $0x38] sm:$0xff]
    %v2676 = vld [vmem:[#allocation2 + $0x40] sm:$0xff]
    %v2677 = vld [vmem:[#allocation2 + $0x48] sm:$0xff]
    %v2678 = vld [vmem:[#allocation2 + $0x50] sm:$0xff]
    %v2679 = vld [vmem:[#allocation2 + $0x58] sm:$0xff]
    %v2680 = vld [vmem:[#allocation2 + $0x60] sm:$0xff]
    %v2681 = vld [vmem:[#allocation2 + $0x68] sm:$0xff]
    %v2682 = vld [vmem:[#allocation2 + $0x70] sm:$0xff]
    %v2683 = vld [vmem:[#allocation2 + $0x78] sm:$0xff]
    %v2684 = vld [vmem:[#allocation2 + $0x80] sm:$0xff]
    %v2685 = vld [vmem:[#allocation2 + $0x88] sm:$0xff]
    %v2686 = vld [vmem:[#allocation2 + $0x90] sm:$0xff]
    %v2687 = vld [vmem:[#allocation2 + $0x98] sm:$0xff]
    %v2688 = vld [vmem:[#allocation2 + $0xa0] sm:$0xff]
    %v2689 = vld [vmem:[#allocation2 + $0xa8] sm:$0xff]
    %v2690 = vld [vmem:[#allocation2 + $0xb0] sm:$0xff]
    %v2691 = vld [vmem:[#allocation2 + $0xb8] sm:$0xff]
    %v2692 = vld [vmem:[#allocation2 + $0xc0] sm:$0xff]
    %v2693 = vld [vmem:[#allocation2 + $0xc8] sm:$0xff]
    %v2694 = vld [vmem:[#allocation2 + $0xd0] sm:$0xff]
    %v2695 = vld [vmem:[#allocation2 + $0xd8] sm:$0xff]
    %v2696 = vld [vmem:[#allocation2 + $0xe0] sm:$0xff]
    %v2697 = vld [vmem:[#allocation2 + $0xe8] sm:$0xff]
    %v2698 = vld [vmem:[#allocation2 + $0xf0] sm:$0xff]
    %v2699 = vld [vmem:[#allocation2 + $0xf8] sm:$0xff]
    %v2700 = vadd.f32 %v2668, %v2590
    %v2701 = vadd.f32 %v2669, %v2592
    %v2702 = vadd.f32 %v2670, %v2594
    %v2703 = vadd.f32 %v2671, %v2596
    %v2704 = vadd.f32 %v2672, %v2600
    %v2705 = vadd.f32 %v2673, %v2602
    %v2706 = vadd.f32 %v2674, %v2604
    %v2707 = vadd.f32 %v2675, %v2606
    %v2708 = vadd.f32 %v2676, %v2610
    %v2709 = vadd.f32 %v2677, %v2612
    %v2710 = vadd.f32 %v2678, %v2614
    %v2711 = vadd.f32 %v2679, %v2616
    %v2712 = vadd.f32 %v2680, %v2620
    %v2713 = vadd.f32 %v2681, %v2622
    %v2714 = vadd.f32 %v2682, %v2624
    %v2715 = vadd.f32 %v2683, %v2626
    %v2716 = vadd.f32 %v2684, %v2630
    %v2717 = vadd.f32 %v2685, %v2632
    %v2718 = vadd.f32 %v2686, %v2634
    %v2719 = vadd.f32 %v2687, %v2636
    %v2720 = vadd.f32 %v2688, %v2640
    %v2721 = vadd.f32 %v2689, %v2642
    %v2722 = vadd.f32 %v2690, %v2644
    %v2723 = vadd.f32 %v2691, %v2646
    %v2724 = vadd.f32 %v2692, %v2650
    %v2725 = vadd.f32 %v2693, %v2652
    %v2726 = vadd.f32 %v2694, %v2654
    %v2727 = vadd.f32 %v2695, %v2656
    %v2728 = vadd.f32 %v2696, %v2660
    %v2729 = vadd.f32 %v2697, %v2662
    %v2730 = vadd.f32 %v2698, %v2664
    %v2731 = vadd.f32 %v2699, %v2666
    %2732 = vst [vmem:[#allocation2] sm:$0xff] %v2700
    %2733 = vst [vmem:[#allocation2 + $0x8] sm:$0xff] %v2701
    %2734 = vst [vmem:[#allocation2 + $0x10] sm:$0xff] %v2702
    %2735 = vst [vmem:[#allocation2 + $0x18] sm:$0xff] %v2703
    %2736 = vst [vmem:[#allocation2 + $0x20] sm:$0xff] %v2704
    %2737 = vst [vmem:[#allocation2 + $0x28] sm:$0xff] %v2705
    %2738 = vst [vmem:[#allocation2 + $0x30] sm:$0xff] %v2706
    %2739 = vst [vmem:[#allocation2 + $0x38] sm:$0xff] %v2707
    %2740 = vst [vmem:[#allocation2 + $0x40] sm:$0xff] %v2708
    %2741 = vst [vmem:[#allocation2 + $0x48] sm:$0xff] %v2709
    %2742 = vst [vmem:[#allocation2 + $0x50] sm:$0xff] %v2710
    %2743 = vst [vmem:[#allocation2 + $0x58] sm:$0xff] %v2711
    %2744 = vst [vmem:[#allocation2 + $0x60] sm:$0xff] %v2712
    %2745 = vst [vmem:[#allocation2 + $0x68] sm:$0xff] %v2713
    %2746 = vst [vmem:[#allocation2 + $0x70] sm:$0xff] %v2714
    %2747 = vst [vmem:[#allocation2 + $0x78] sm:$0xff] %v2715
    %2748 = vst [vmem:[#allocation2 + $0x80] sm:$0xff] %v2716
    %2749 = vst [vmem:[#allocation2 + $0x88] sm:$0xff] %v2717
    %2750 = vst [vmem:[#allocation2 + $0x90] sm:$0xff] %v2718
    %2751 = vst [vmem:[#allocation2 + $0x98] sm:$0xff] %v2719
    %2752 = vst [vmem:[#allocation2 + $0xa0] sm:$0xff] %v2720
    %2753 = vst [vmem:[#allocation2 + $0xa8] sm:$0xff] %v2721
    %2754 = vst [vmem:[#allocation2 + $0xb0] sm:$0xff] %v2722
    %2755 = vst [vmem:[#allocation2 + $0xb8] sm:$0xff] %v2723
    %2756 = vst [vmem:[#allocation2 + $0xc0] sm:$0xff] %v2724
    %2757 = vst [vmem:[#allocation2 + $0xc8] sm:$0xff] %v2725
    %2758 = vst [vmem:[#allocation2 + $0xd0] sm:$0xff] %v2726
    %2759 = vst [vmem:[#allocation2 + $0xd8] sm:$0xff] %v2727
    %2760 = vst [vmem:[#allocation2 + $0xe0] sm:$0xff] %v2728
    %2761 = vst [vmem:[#allocation2 + $0xe8] sm:$0xff] %v2729
    %2762 = vst [vmem:[#allocation2 + $0xf0] sm:$0xff] %v2730
    %2763 = vst [vmem:[#allocation2 + $0xf8] sm:$0xff] %v2731
    %s2764 = scalar_lea.vmem [#allocation3], 1024
    %v2765 = vld [vmem:[%s2764] sm:$0xff]
    %v2766 = vld [vmem:[%s2764 + $0x8] sm:$0xff]
    %v2767 = vld [vmem:[%s2764 + $0x10] sm:$0xff]
    %v2768 = vld [vmem:[%s2764 + $0x18] sm:$0xff]
    %v2769 = vld [vmem:[%s2764 + $0x20] sm:$0xff]
    %v2770 = vld [vmem:[%s2764 + $0x28] sm:$0xff]
    %v2771 = vld [vmem:[%s2764 + $0x30] sm:$0xff]
    %v2772 = vld [vmem:[%s2764 + $0x38] sm:$0xff]
    %v2773 = vld [vmem:[%s2764 + $0x40] sm:$0xff]
    %v2774 = vld [vmem:[%s2764 + $0x48] sm:$0xff]
    %v2775 = vld [vmem:[%s2764 + $0x50] sm:$0xff]
    %v2776 = vld [vmem:[%s2764 + $0x58] sm:$0xff]
    %v2777 = vld [vmem:[%s2764 + $0x60] sm:$0xff]
    %v2778 = vld [vmem:[%s2764 + $0x68] sm:$0xff]
    %v2779 = vld [vmem:[%s2764 + $0x70] sm:$0xff]
    %v2780 = vld [vmem:[%s2764 + $0x78] sm:$0xff]
    %v2783 = vunpack.c.l.b16 %v150
    %v2784 = vunpack.c.l.b16 %v160
    %v2785 = vpack.c.b16 %v2783, %v1829
    %v2786 = vpack.c.b16 %v2784, %v1830
    %v2805 = vunpack.c.l.b16 %v2765
    %v2806 = vunpack.c.h.b16 %v2765
    %v2807 = vunpack.c.l.b16 %v2766
    %v2808 = vunpack.c.h.b16 %v2766
    %v2809 = vunpack.c.l.b16 %v2767
    %v2810 = vunpack.c.h.b16 %v2767
    %v2811 = vunpack.c.l.b16 %v2768
    %v2812 = vunpack.c.h.b16 %v2768
    %v2813 = vunpack.c.l.b16 %v2769
    %v2814 = vunpack.c.h.b16 %v2769
    %v2815 = vunpack.c.l.b16 %v2770
    %v2816 = vunpack.c.h.b16 %v2770
    %v2817 = vunpack.c.l.b16 %v2771
    %v2818 = vunpack.c.h.b16 %v2771
    %v2819 = vunpack.c.l.b16 %v2772
    %v2820 = vunpack.c.h.b16 %v2772
    %v2821 = vunpack.c.l.b16 %v2773
    %v2822 = vunpack.c.h.b16 %v2773
    %v2823 = vunpack.c.l.b16 %v2774
    %v2824 = vunpack.c.h.b16 %v2774
    %v2825 = vunpack.c.l.b16 %v2775
    %v2826 = vunpack.c.h.b16 %v2775
    %v2827 = vunpack.c.l.b16 %v2776
    %v2828 = vunpack.c.h.b16 %v2776
    %v2829 = vunpack.c.l.b16 %v2777
    %v2830 = vunpack.c.h.b16 %v2777
    %v2831 = vunpack.c.l.b16 %v2778
    %v2832 = vunpack.c.h.b16 %v2778
    %v2833 = vunpack.c.l.b16 %v2779
    %v2834 = vunpack.c.h.b16 %v2779
    %v2835 = vunpack.c.l.b16 %v2780
    %v2836 = vunpack.c.h.b16 %v2780
    %v2837 = vpack.c.b16 %v2807, %v2805
    %v2838 = vpack.c.b16 %v2808, %v2806
    %v2839 = vpack.c.b16 %v2811, %v2809
    %v2840 = vpack.c.b16 %v2812, %v2810
    %v2841 = vpack.c.b16 %v2815, %v2813
    %v2842 = vpack.c.b16 %v2816, %v2814
    %v2843 = vpack.c.b16 %v2819, %v2817
    %v2844 = vpack.c.b16 %v2820, %v2818
    %v2845 = vpack.c.b16 %v2823, %v2821
    %v2846 = vpack.c.b16 %v2824, %v2822
    %v2847 = vpack.c.b16 %v2827, %v2825
    %v2848 = vpack.c.b16 %v2828, %v2826
    %v2849 = vpack.c.b16 %v2831, %v2829
    %v2850 = vpack.c.b16 %v2832, %v2830
    %v2851 = vpack.c.b16 %v2835, %v2833
    %v2852 = vpack.c.b16 %v2836, %v2834
    %2869 = vmatprep.subr.bf16.mxu0 %v2838
    %2870 = vmatpush1.bf16.msra.mxu0 %v2837
    %2871 = vmatprep.subr.bf16.mxu0 %v2840
    %2872 = vmatpush1.bf16.msra.mxu0 %v2839
    %2873 = vmatprep.subr.bf16.mxu0 %v2842
    %2874 = vmatpush1.bf16.msra.mxu0 %v2841
    %2875 = vmatprep.subr.bf16.mxu0 %v2844
    %2876 = vmatpush1.bf16.msra.mxu0 %v2843
    %2877 = vmatprep.subr.bf16.mxu0 %v2846
    %2878 = vmatpush1.bf16.msra.mxu0 %v2845
    %2879 = vmatprep.subr.bf16.mxu0 %v2848
    %2880 = vmatpush1.bf16.msra.mxu0 %v2847
    %2881 = vmatprep.subr.bf16.mxu0 %v2850
    %2882 = vmatpush1.bf16.msra.mxu0 %v2849
    %2883 = vmatprep.subr.bf16.mxu0 %v2852
    %2884 = vmatpush1.bf16.msra.mxu0 %v2851
    %2885 = vmatprep.subr.bf16.mxu0 0
    %2886 = vmatpush1.bf16.msra.mxu0 0
    %2887 = vmatprep.subr.bf16.mxu0 0
    %2888 = vmatpush1.bf16.msra.mxu0 0
    %2889 = vmatprep.subr.bf16.mxu0 0
    %2890 = vmatpush1.bf16.msra.mxu0 0
    %2891 = vmatprep.subr.bf16.mxu0 0
    %2892 = vmatpush1.bf16.msra.mxu0 0
    %2893 = vmatprep.subr.bf16.mxu0 0
    %2894 = vmatpush1.bf16.msra.mxu0 0
    %2895 = vmatprep.subr.bf16.mxu0 0
    %2896 = vmatpush1.bf16.msra.mxu0 0
    %2897 = vmatprep.subr.bf16.mxu0 0
    %2898 = vmatpush1.bf16.msra.mxu0 0
    %2899 = vmatprep.subr.bf16.mxu0 0
    %2900 = vmatpush1.bf16.msra.mxu0 0
    %2901 = vmatprep.mubr.bf16.mxu0 0
    %2902 = vmatmul.mubr.bf16.gmra.mrb[0].mxu0 %v854
    %v2903 = vpop.f32.mrb[0].mxu0
    %v2904 = vadd.f32 0.0, %v2903
    %v2905 = vpop.f32.mrb[0].mxu0
    %v2906 = vadd.f32 0.0, %v2905
    %v2907 = vpop.f32.mrb[0].mxu0
    %v2908 = vadd.f32 0.0, %v2907
    %v2909 = vpop.f32.mrb[0].mxu0
    %v2910 = vadd.f32 0.0, %v2909
    %2911 = vmatprep.mubr.bf16.mxu0 0
    %2912 = vmatmul.mubr.bf16.gmra.mrb[0].mxu0 %v855
    %v2913 = vpop.f32.mrb[0].mxu0
    %v2914 = vadd.f32 0.0, %v2913
    %v2915 = vpop.f32.mrb[0].mxu0
    %v2916 = vadd.f32 0.0, %v2915
    %v2917 = vpop.f32.mrb[0].mxu0
    %v2918 = vadd.f32 0.0, %v2917
    %v2919 = vpop.f32.mrb[0].mxu0
    %v2920 = vadd.f32 0.0, %v2919
    %2921 = vmatprep.mubr.bf16.mxu0 0
    %2922 = vmatmul.mubr.bf16.gmra.mrb[0].mxu0 %v856
    %v2923 = vpop.f32.mrb[0].mxu0
    %v2924 = vadd.f32 0.0, %v2923
    %v2925 = vpop.f32.mrb[0].mxu0
    %v2926 = vadd.f32 0.0, %v2925
    %v2927 = vpop.f32.mrb[0].mxu0
    %v2928 = vadd.f32 0.0, %v2927
    %v2929 = vpop.f32.mrb[0].mxu0
    %v2930 = vadd.f32 0.0, %v2929
    %2931 = vmatprep.mubr.bf16.mxu0 0
    %2932 = vmatmul.mubr.bf16.gmra.mrb[0].mxu0 %v2785
    %v2933 = vpop.f32.mrb[0].mxu0
    %v2934 = vadd.f32 0.0, %v2933
    %v2935 = vpop.f32.mrb[0].mxu0
    %v2936 = vadd.f32 0.0, %v2935
    %v2937 = vpop.f32.mrb[0].mxu0
    %v2938 = vadd.f32 0.0, %v2937
    %v2939 = vpop.f32.mrb[0].mxu0
    %v2940 = vadd.f32 0.0, %v2939
    %2941 = vmatprep.mubr.bf16.mxu0 0
    %2942 = vmatmul.mubr.bf16.gmra.mrb[0].mxu0 %v858
    %v2943 = vpop.f32.mrb[0].mxu0
    %v2944 = vadd.f32 0.0, %v2943
    %v2945 = vpop.f32.mrb[0].mxu0
    %v2946 = vadd.f32 0.0, %v2945
    %v2947 = vpop.f32.mrb[0].mxu0
    %v2948 = vadd.f32 0.0, %v2947
    %v2949 = vpop.f32.mrb[0].mxu0
    %v2950 = vadd.f32 0.0, %v2949
    %2951 = vmatprep.mubr.bf16.mxu0 0
    %2952 = vmatmul.mubr.bf16.gmra.mrb[0].mxu0 %v859
    %v2953 = vpop.f32.mrb[0].mxu0
    %v2954 = vadd.f32 0.0, %v2953
    %v2955 = vpop.f32.mrb[0].mxu0
    %v2956 = vadd.f32 0.0, %v2955
    %v2957 = vpop.f32.mrb[0].mxu0
    %v2958 = vadd.f32 0.0, %v2957
    %v2959 = vpop.f32.mrb[0].mxu0
    %v2960 = vadd.f32 0.0, %v2959
    %2961 = vmatprep.mubr.bf16.mxu0 0
    %2962 = vmatmul.mubr.bf16.gmra.mrb[0].mxu0 %v860
    %v2963 = vpop.f32.mrb[0].mxu0
    %v2964 = vadd.f32 0.0, %v2963
    %v2965 = vpop.f32.mrb[0].mxu0
    %v2966 = vadd.f32 0.0, %v2965
    %v2967 = vpop.f32.mrb[0].mxu0
    %v2968 = vadd.f32 0.0, %v2967
    %v2969 = vpop.f32.mrb[0].mxu0
    %v2970 = vadd.f32 0.0, %v2969
    %2971 = vmatprep.mubr.bf16.mxu0 0
    %2972 = vmatmul.mubr.bf16.gmra.mrb[0].mxu0 %v2786
    %v2973 = vpop.f32.mrb[0].mxu0
    %v2974 = vadd.f32 0.0, %v2973
    %v2975 = vpop.f32.mrb[0].mxu0
    %v2976 = vadd.f32 0.0, %v2975
    %v2977 = vpop.f32.mrb[0].mxu0
    %v2978 = vadd.f32 0.0, %v2977
    %v2979 = vpop.f32.mrb[0].mxu0
    %v2980 = vadd.f32 0.0, %v2979
    %2981 = vdwg.mxu0
    %v2982 = vld [vmem:[#allocation2] sm:$0xff]
    %v2983 = vld [vmem:[#allocation2 + $0x8] sm:$0xff]
    %v2984 = vld [vmem:[#allocation2 + $0x10] sm:$0xff]
    %v2985 = vld [vmem:[#allocation2 + $0x18] sm:$0xff]
    %v2986 = vld [vmem:[#allocation2 + $0x20] sm:$0xff]
    %v2987 = vld [vmem:[#allocation2 + $0x28] sm:$0xff]
    %v2988 = vld [vmem:[#allocation2 + $0x30] sm:$0xff]
    %v2989 = vld [vmem:[#allocation2 + $0x38] sm:$0xff]
    %v2990 = vld [vmem:[#allocation2 + $0x40] sm:$0xff]
    %v2991 = vld [vmem:[#allocation2 + $0x48] sm:$0xff]
    %v2992 = vld [vmem:[#allocation2 + $0x50] sm:$0xff]
    %v2993 = vld [vmem:[#allocation2 + $0x58] sm:$0xff]
    %v2994 = vld [vmem:[#allocation2 + $0x60] sm:$0xff]
    %v2995 = vld [vmem:[#allocation2 + $0x68] sm:$0xff]
    %v2996 = vld [vmem:[#allocation2 + $0x70] sm:$0xff]
    %v2997 = vld [vmem:[#allocation2 + $0x78] sm:$0xff]
    %v2998 = vld [vmem:[#allocation2 + $0x80] sm:$0xff]
    %v2999 = vld [vmem:[#allocation2 + $0x88] sm:$0xff]
    %v3000 = vld [vmem:[#allocation2 + $0x90] sm:$0xff]
    %v3001 = vld [vmem:[#allocation2 + $0x98] sm:$0xff]
    %v3002 = vld [vmem:[#allocation2 + $0xa0] sm:$0xff]
    %v3003 = vld [vmem:[#allocation2 + $0xa8] sm:$0xff]
    %v3004 = vld [vmem:[#allocation2 + $0xb0] sm:$0xff]
    %v3005 = vld [vmem:[#allocation2 + $0xb8] sm:$0xff]
    %v3006 = vld [vmem:[#allocation2 + $0xc0] sm:$0xff]
    %v3007 = vld [vmem:[#allocation2 + $0xc8] sm:$0xff]
    %v3008 = vld [vmem:[#allocation2 + $0xd0] sm:$0xff]
    %v3009 = vld [vmem:[#allocation2 + $0xd8] sm:$0xff]
    %v3010 = vld [vmem:[#allocation2 + $0xe0] sm:$0xff]
    %v3011 = vld [vmem:[#allocation2 + $0xe8] sm:$0xff]
    %v3012 = vld [vmem:[#allocation2 + $0xf0] sm:$0xff]
    %v3013 = vld [vmem:[#allocation2 + $0xf8] sm:$0xff]
    %v3014 = vadd.f32 %v2982, %v2904
    %v3015 = vadd.f32 %v2983, %v2906
    %v3016 = vadd.f32 %v2984, %v2908
    %v3017 = vadd.f32 %v2985, %v2910
    %v3018 = vadd.f32 %v2986, %v2914
    %v3019 = vadd.f32 %v2987, %v2916
    %v3020 = vadd.f32 %v2988, %v2918
    %v3021 = vadd.f32 %v2989, %v2920
    %v3022 = vadd.f32 %v2990, %v2924
    %v3023 = vadd.f32 %v2991, %v2926
    %v3024 = vadd.f32 %v2992, %v2928
    %v3025 = vadd.f32 %v2993, %v2930
    %v3026 = vadd.f32 %v2994, %v2934
    %v3027 = vadd.f32 %v2995, %v2936
    %v3028 = vadd.f32 %v2996, %v2938
    %v3029 = vadd.f32 %v2997, %v2940
    %v3030 = vadd.f32 %v2998, %v2944
    %v3031 = vadd.f32 %v2999, %v2946
    %v3032 = vadd.f32 %v3000, %v2948
    %v3033 = vadd.f32 %v3001, %v2950
    %v3034 = vadd.f32 %v3002, %v2954
    %v3035 = vadd.f32 %v3003, %v2956
    %v3036 = vadd.f32 %v3004, %v2958
    %v3037 = vadd.f32 %v3005, %v2960
    %v3038 = vadd.f32 %v3006, %v2964
    %v3039 = vadd.f32 %v3007, %v2966
    %v3040 = vadd.f32 %v3008, %v2968
    %v3041 = vadd.f32 %v3009, %v2970
    %v3042 = vadd.f32 %v3010, %v2974
    %v3043 = vadd.f32 %v3011, %v2976
    %v3044 = vadd.f32 %v3012, %v2978
    %v3045 = vadd.f32 %v3013, %v2980
    %3046 = vst [vmem:[#allocation2] sm:$0xff] %v3014
    %3047 = vst [vmem:[#allocation2 + $0x8] sm:$0xff] %v3015
    %3048 = vst [vmem:[#allocation2 + $0x10] sm:$0xff] %v3016
    %3049 = vst [vmem:[#allocation2 + $0x18] sm:$0xff] %v3017
    %3050 = vst [vmem:[#allocation2 + $0x20] sm:$0xff] %v3018
    %3051 = vst [vmem:[#allocation2 + $0x28] sm:$0xff] %v3019
    %3052 = vst [vmem:[#allocation2 + $0x30] sm:$0xff] %v3020
    %3053 = vst [vmem:[#allocation2 + $0x38] sm:$0xff] %v3021
    %3054 = vst [vmem:[#allocation2 + $0x40] sm:$0xff] %v3022
    %3055 = vst [vmem:[#allocation2 + $0x48] sm:$0xff] %v3023
    %3056 = vst [vmem:[#allocation2 + $0x50] sm:$0xff] %v3024
    %3057 = vst [vmem:[#allocation2 + $0x58] sm:$0xff] %v3025
    %3058 = vst [vmem:[#allocation2 + $0x60] sm:$0xff] %v3026
    %3059 = vst [vmem:[#allocation2 + $0x68] sm:$0xff] %v3027
    %3060 = vst [vmem:[#allocation2 + $0x70] sm:$0xff] %v3028
    %3061 = vst [vmem:[#allocation2 + $0x78] sm:$0xff] %v3029
    %3062 = vst [vmem:[#allocation2 + $0x80] sm:$0xff] %v3030
    %3063 = vst [vmem:[#allocation2 + $0x88] sm:$0xff] %v3031
    %3064 = vst [vmem:[#allocation2 + $0x90] sm:$0xff] %v3032
    %3065 = vst [vmem:[#allocation2 + $0x98] sm:$0xff] %v3033
    %3066 = vst [vmem:[#allocation2 + $0xa0] sm:$0xff] %v3034
    %3067 = vst [vmem:[#allocation2 + $0xa8] sm:$0xff] %v3035
    %3068 = vst [vmem:[#allocation2 + $0xb0] sm:$0xff] %v3036
    %3069 = vst [vmem:[#allocation2 + $0xb8] sm:$0xff] %v3037
    %3070 = vst [vmem:[#allocation2 + $0xc0] sm:$0xff] %v3038
    %3071 = vst [vmem:[#allocation2 + $0xc8] sm:$0xff] %v3039
    %3072 = vst [vmem:[#allocation2 + $0xd0] sm:$0xff] %v3040
    %3073 = vst [vmem:[#allocation2 + $0xd8] sm:$0xff] %v3041
    %3074 = vst [vmem:[#allocation2 + $0xe0] sm:$0xff] %v3042
    %3075 = vst [vmem:[#allocation2 + $0xe8] sm:$0xff] %v3043
    %3076 = vst [vmem:[#allocation2 + $0xf0] sm:$0xff] %v3044
    %3077 = vst [vmem:[#allocation2 + $0xf8] sm:$0xff] %v3045
    %v3078 = vld [vmem:[#allocation2] sm:$0xff]
    %v3079 = vld [vmem:[#allocation2 + $0x8] sm:$0xff]
    %v3080 = vld [vmem:[#allocation2 + $0x10] sm:$0xff]
    %v3081 = vld [vmem:[#allocation2 + $0x18] sm:$0xff]
    %v3082 = vld [vmem:[#allocation2 + $0x20] sm:$0xff]
    %v3083 = vld [vmem:[#allocation2 + $0x28] sm:$0xff]
    %v3084 = vld [vmem:[#allocation2 + $0x30] sm:$0xff]
    %v3085 = vld [vmem:[#allocation2 + $0x38] sm:$0xff]
    %v3086 = vld [vmem:[#allocation2 + $0x40] sm:$0xff]
    %v3087 = vld [vmem:[#allocation2 + $0x48] sm:$0xff]
    %v3088 = vld [vmem:[#allocation2 + $0x50] sm:$0xff]
    %v3089 = vld [vmem:[#allocation2 + $0x58] sm:$0xff]
    %v3090 = vld [vmem:[#allocation2 + $0x60] sm:$0xff]
    %v3091 = vld [vmem:[#allocation2 + $0x68] sm:$0xff]
    %v3092 = vld [vmem:[#allocation2 + $0x70] sm:$0xff]
    %v3093 = vld [vmem:[#allocation2 + $0x78] sm:$0xff]
    %v3094 = vld [vmem:[#allocation2 + $0x80] sm:$0xff]
    %v3095 = vld [vmem:[#allocation2 + $0x88] sm:$0xff]
    %v3096 = vld [vmem:[#allocation2 + $0x90] sm:$0xff]
    %v3097 = vld [vmem:[#allocation2 + $0x98] sm:$0xff]
    %v3098 = vld [vmem:[#allocation2 + $0xa0] sm:$0xff]
    %v3099 = vld [vmem:[#allocation2 + $0xa8] sm:$0xff]
    %v3100 = vld [vmem:[#allocation2 + $0xb0] sm:$0xff]
    %v3101 = vld [vmem:[#allocation2 + $0xb8] sm:$0xff]
    %v3102 = vld [vmem:[#allocation2 + $0xc0] sm:$0xff]
    %v3103 = vld [vmem:[#allocation2 + $0xc8] sm:$0xff]
    %v3104 = vld [vmem:[#allocation2 + $0xd0] sm:$0xff]
    %v3105 = vld [vmem:[#allocation2 + $0xd8] sm:$0xff]
    %v3106 = vld [vmem:[#allocation2 + $0xe0] sm:$0xff]
    %v3107 = vld [vmem:[#allocation2 + $0xe8] sm:$0xff]
    %v3108 = vld [vmem:[#allocation2 + $0xf0] sm:$0xff]
    %v3109 = vld [vmem:[#allocation2 + $0xf8] sm:$0xff]
    %v3110 = vld [vmem:[#allocation5] sm:$0x3]
    %v3112 = vlaneseq
    %v3113 = vshrl.u32 %v3112, 7
    %v3114 = vsub.s32 0, %v3113
    %v3115 = vrot.slane %v3110, %v3114
    %v3116 = vlaneseq
    %v3117 = vshrl.u32 %v3116, 7
    %v3118 = vsub.s32 1, %v3117
    %v3119 = vrot.slane %v3110, %v3118
    %v3122 = vadd.f32 %v3078, %v3115
    %v3123 = vadd.f32 %v3079, %v3119
    %v3124 = vadd.f32 %v3080, %v3115
    %v3125 = vadd.f32 %v3081, %v3119
    %v3126 = vadd.f32 %v3082, %v3115
    %v3127 = vadd.f32 %v3083, %v3119
    %v3128 = vadd.f32 %v3084, %v3115
    %v3129 = vadd.f32 %v3085, %v3119
    %v3130 = vadd.f32 %v3086, %v3115
    %v3131 = vadd.f32 %v3087, %v3119
    %v3132 = vadd.f32 %v3088, %v3115
    %v3133 = vadd.f32 %v3089, %v3119
    %v3134 = vadd.f32 %v3090, %v3115
    %v3135 = vadd.f32 %v3091, %v3119
    %v3136 = vadd.f32 %v3092, %v3115
    %v3137 = vadd.f32 %v3093, %v3119
    %v3138 = vadd.f32 %v3094, %v3115
    %v3139 = vadd.f32 %v3095, %v3119
    %v3140 = vadd.f32 %v3096, %v3115
    %v3141 = vadd.f32 %v3097, %v3119
    %v3142 = vadd.f32 %v3098, %v3115
    %v3143 = vadd.f32 %v3099, %v3119
    %v3144 = vadd.f32 %v3100, %v3115
    %v3145 = vadd.f32 %v3101, %v3119
    %v3146 = vadd.f32 %v3102, %v3115
    %v3147 = vadd.f32 %v3103, %v3119
    %v3148 = vadd.f32 %v3104, %v3115
    %v3149 = vadd.f32 %v3105, %v3119
    %v3150 = vadd.f32 %v3106, %v3115
    %v3151 = vadd.f32 %v3107, %v3119
    %v3152 = vadd.f32 %v3108, %v3115
    %v3153 = vadd.f32 %v3109, %v3119
    %v3154 = vmax.f32 %v3122, 0.0
    %v3155 = vmax.f32 %v3123, 0.0
    %v3156 = vmax.f32 %v3124, 0.0
    %v3157 = vmax.f32 %v3125, 0.0
    %v3158 = vmax.f32 %v3126, 0.0
    %v3159 = vmax.f32 %v3127, 0.0
    %v3160 = vmax.f32 %v3128, 0.0
    %v3161 = vmax.f32 %v3129, 0.0
    %v3162 = vmax.f32 %v3130, 0.0
    %v3163 = vmax.f32 %v3131, 0.0
    %v3164 = vmax.f32 %v3132, 0.0
    %v3165 = vmax.f32 %v3133, 0.0
    %v3166 = vmax.f32 %v3134, 0.0
    %v3167 = vmax.f32 %v3135, 0.0
    %v3168 = vmax.f32 %v3136, 0.0
    %v3169 = vmax.f32 %v3137, 0.0
    %v3170 = vmax.f32 %v3138, 0.0
    %v3171 = vmax.f32 %v3139, 0.0
    %v3172 = vmax.f32 %v3140, 0.0
    %v3173 = vmax.f32 %v3141, 0.0
    %v3174 = vmax.f32 %v3142, 0.0
    %v3175 = vmax.f32 %v3143, 0.0
    %v3176 = vmax.f32 %v3144, 0.0
    %v3177 = vmax.f32 %v3145, 0.0
    %v3178 = vmax.f32 %v3146, 0.0
    %v3179 = vmax.f32 %v3147, 0.0
    %v3180 = vmax.f32 %v3148, 0.0
    %v3181 = vmax.f32 %v3149, 0.0
    %v3182 = vmax.f32 %v3150, 0.0
    %v3183 = vmax.f32 %v3151, 0.0
    %v3184 = vmax.f32 %v3152, 0.0
    %v3185 = vmax.f32 %v3153, 0.0
    %3186 = vst [vmem:[%s3] sm:$0xff] %v3154
    %3187 = vst [vmem:[%s3 + $0x8] sm:$0xff] %v3155
    %3188 = vst [vmem:[%s3 + $0x10] sm:$0xff] %v3156
    %3189 = vst [vmem:[%s3 + $0x18] sm:$0xff] %v3157
    %3190 = vst [vmem:[%s3 + $0x20] sm:$0xff] %v3158
    %3191 = vst [vmem:[%s3 + $0x28] sm:$0xff] %v3159
    %3192 = vst [vmem:[%s3 + $0x30] sm:$0xff] %v3160
    %3193 = vst [vmem:[%s3 + $0x38] sm:$0xff] %v3161
    %3194 = vst [vmem:[%s3 + $0x40] sm:$0xff] %v3162
    %3195 = vst [vmem:[%s3 + $0x48] sm:$0xff] %v3163
    %3196 = vst [vmem:[%s3 + $0x50] sm:$0xff] %v3164
    %3197 = vst [vmem:[%s3 + $0x58] sm:$0xff] %v3165
    %3198 = vst [vmem:[%s3 + $0x60] sm:$0xff] %v3166
    %3199 = vst [vmem:[%s3 + $0x68] sm:$0xff] %v3167
    %3200 = vst [vmem:[%s3 + $0x70] sm:$0xff] %v3168
    %3201 = vst [vmem:[%s3 + $0x78] sm:$0xff] %v3169
    %3202 = vst [vmem:[%s3 + $0x80] sm:$0xff] %v3170
    %3203 = vst [vmem:[%s3 + $0x88] sm:$0xff] %v3171
    %3204 = vst [vmem:[%s3 + $0x90] sm:$0xff] %v3172
    %3205 = vst [vmem:[%s3 + $0x98] sm:$0xff] %v3173
    %3206 = vst [vmem:[%s3 + $0xa0] sm:$0xff] %v3174
    %3207 = vst [vmem:[%s3 + $0xa8] sm:$0xff] %v3175
    %3208 = vst [vmem:[%s3 + $0xb0] sm:$0xff] %v3176
    %3209 = vst [vmem:[%s3 + $0xb8] sm:$0xff] %v3177
    %3210 = vst [vmem:[%s3 + $0xc0] sm:$0xff] %v3178
    %3211 = vst [vmem:[%s3 + $0xc8] sm:$0xff] %v3179
    %3212 = vst [vmem:[%s3 + $0xd0] sm:$0xff] %v3180
    %3213 = vst [vmem:[%s3 + $0xd8] sm:$0xff] %v3181
    %3214 = vst [vmem:[%s3 + $0xe0] sm:$0xff] %v3182
    %3215 = vst [vmem:[%s3 + $0xe8] sm:$0xff] %v3183
    %3216 = vst [vmem:[%s3 + $0xf0] sm:$0xff] %v3184
    %3217 = vst [vmem:[%s3 + $0xf8] sm:$0xff] %v3185
    // Predicated region
    $region22: #{inference_forward.3} parent=1 // pred_check
      _
    $region23: #{inference_forward.3} parent=1 // pred_check_branch
      %3219 = sbr.rel (0) target = $region25
    $region24: #{inference_forward.3} parent=1 // pred_region
      _
    $region25: #{inference_forward.3} parent=1 // pred_fallthru
      _
    // Predicated region
    $region26: #{inference_forward.3} parent=1 // pred_check
      _
    $region27: #{inference_forward.3} parent=1 // pred_check_branch
      %3221 = sbr.rel (0) target = $region29
    $region28: #{inference_forward.3} parent=1 // pred_region
      _
    $region29: #{inference_forward.3} parent=1 // pred_fallthru
      _
    %3222 = vsyncpa [#allocation4], 1
    %3223 = vsyncpa [#allocation6], 1

// kernel: inference_forward.4
$region0: #{inference_forward.4}
  #allocation0 [shape = 'u32[]', space=smem, size = 0x4, offset = 0x4, fixed_abs, tag = 'smem constant byte address 0x4 - core index']
  #allocation1 [shape = 'u32[144,128]{1,0:T(1,128)}', space=vmem, size = 0x12000, scoped, tag = 'internal scratch']
  #allocation2 [shape = 'f32[128,256]{1,0:T(8,128)}', space=vmem, size = 0x20000, scoped, tag = 'scratch operand']
  %s0 = inlined_call_operand.vmem [shape: f32[2,10,10,256], index: 0, kind: input, shape index: {}]
  %s1 = inlined_call_operand.vmem [shape: bf16[3,3,256,256], index: 1, kind: input, shape index: {}]
  %s2 = inlined_call_operand.vmem [shape: f32[1,256], index: 2, kind: input, shape index: {}]
  %s3 = inlined_call_operand.vmem [shape: f32[2,8,8,256], index: 3, kind: output, shape index: {}]
  %s4 = sld [smem:[#allocation0]]
  $region22: #{inference_forward.4} parent=0
    _
  %s6 = ssub.s32 1, %s4
  %s7 = scalar_select 0, %s6, %s4
  // Predicated region
  $region2: #{inference_forward.4} parent=0 // pred_check
    _
  $region3: #{inference_forward.4} parent=0 // pred_check_branch
    %9 = sbr.rel (0) target = $region5
  $region4: #{inference_forward.4} parent=0 // pred_region
    _
  $region5: #{inference_forward.4} parent=0 // pred_fallthru
    _
  // Predicated region
  $region6: #{inference_forward.4} parent=0 // pred_check
    _
  $region7: #{inference_forward.4} parent=0 // pred_check_branch
    %11 = sbr.rel (0) target = $region9
  $region8: #{inference_forward.4} parent=0 // pred_region
    _
  $region9: #{inference_forward.4} parent=0 // pred_fallthru
    _
  // Predicated region
  $region10: #{inference_forward.4} parent=0 // pred_check
    _
  $region11: #{inference_forward.4} parent=0 // pred_check_branch
    %13 = sbr.rel (0) target = $region13
  $region12: #{inference_forward.4} parent=0 // pred_region
    _
  $region13: #{inference_forward.4} parent=0 // pred_fallthru
    _
  %v14 = vld [vmem:[%s0] sm:$0xff]
  %v15 = vld [vmem:[%s0 + $0x8] sm:$0xff]
  %v16 = vld [vmem:[%s0 + $0x20] sm:$0xff]
  %v17 = vld [vmem:[%s0 + $0x28] sm:$0xff]
  %v18 = vld [vmem:[%s0 + $0x40] sm:$0xff]
  %v19 = vld [vmem:[%s0 + $0x48] sm:$0xff]
  %v20 = vld [vmem:[%s0 + $0x60] sm:$0xff]
  %v21 = vld [vmem:[%s0 + $0x68] sm:$0xff]
  %v22 = vld [vmem:[%s0 + $0x80] sm:$0xff]
  %v23 = vld [vmem:[%s0 + $0x88] sm:$0xff]
  %v24 = vld [vmem:[%s0 + $0xa0] sm:$0xff]
  %v25 = vld [vmem:[%s0 + $0xa8] sm:$0xff]
  %v26 = vld [vmem:[%s0 + $0xc0] sm:$0xff]
  %v27 = vld [vmem:[%s0 + $0xc8] sm:$0xff]
  %v28 = vld [vmem:[%s0 + $0xe0] sm:$0xff]
  %v29 = vld [vmem:[%s0 + $0xe8] sm:$0xff]
  %v30 = vld [vmem:[%s0 + $0x100] sm:$0xff]
  %v31 = vld [vmem:[%s0 + $0x108] sm:$0xff]
  %v32 = vld [vmem:[%s0 + $0x120] sm:$0xff]
  %v33 = vld [vmem:[%s0 + $0x128] sm:$0xff]
  %v34 = vld [vmem:[%s0 + $0x140] sm:$0xff]
  %v35 = vld [vmem:[%s0 + $0x148] sm:$0xff]
  %v36 = vld [vmem:[%s0 + $0x160] sm:$0xff]
  %v37 = vld [vmem:[%s0 + $0x168] sm:$0xff]
  %v38 = vld [vmem:[%s0 + $0x180] sm:$0xff]
  %v39 = vld [vmem:[%s0 + $0x188] sm:$0xff]
  %v40 = vld [vmem:[%s0 + $0x1a0] sm:$0xff]
  %v41 = vld [vmem:[%s0 + $0x1a8] sm:$0xff]
  %v42 = vld [vmem:[%s0 + $0x1c0] sm:$0xff]
  %v43 = vld [vmem:[%s0 + $0x1c8] sm:$0xff]
  %v44 = vld [vmem:[%s0 + $0x1e0] sm:$0xff]
  %v45 = vld [vmem:[%s0 + $0x1e8] sm:$0xff]
  %v46 = vld [vmem:[%s0 + $0x200] sm:$0xff]
  %v47 = vld [vmem:[%s0 + $0x208] sm:$0xff]
  %v48 = vld [vmem:[%s0 + $0x220] sm:$0xff]
  %v49 = vld [vmem:[%s0 + $0x228] sm:$0xff]
  %v50 = vld [vmem:[%s0 + $0x240] sm:$0xff]
  %v51 = vld [vmem:[%s0 + $0x248] sm:$0xff]
  %v52 = vld [vmem:[%s0 + $0x260] sm:$0xff]
  %v53 = vld [vmem:[%s0 + $0x268] sm:$0xff]
  %v54 = vpack.c.bf16 %v14, %v14
  %v55 = vpack.c.bf16 %v15, %v15
  %v56 = vpack.c.bf16 %v16, %v16
  %v57 = vpack.c.bf16 %v17, %v17
  %v58 = vpack.c.bf16 %v18, %v18
  %v59 = vpack.c.bf16 %v19, %v19
  %v60 = vpack.c.bf16 %v20, %v20
  %v61 = vpack.c.bf16 %v21, %v21
  %v62 = vpack.c.bf16 %v22, %v22
  %v63 = vpack.c.bf16 %v23, %v23
  %v64 = vpack.c.bf16 %v24, %v24
  %v65 = vpack.c.bf16 %v25, %v25
  %v66 = vpack.c.bf16 %v26, %v26
  %v67 = vpack.c.bf16 %v27, %v27
  %v68 = vpack.c.bf16 %v28, %v28
  %v69 = vpack.c.bf16 %v29, %v29
  %v70 = vpack.c.bf16 %v30, %v30
  %v71 = vpack.c.bf16 %v31, %v31
  %v72 = vpack.c.bf16 %v32, %v32
  %v73 = vpack.c.bf16 %v33, %v33
  %v74 = vpack.c.bf16 %v34, %v34
  %v75 = vpack.c.bf16 %v35, %v35
  %v76 = vpack.c.bf16 %v36, %v36
  %v77 = vpack.c.bf16 %v37, %v37
  %v78 = vpack.c.bf16 %v38, %v38
  %v79 = vpack.c.bf16 %v39, %v39
  %v80 = vpack.c.bf16 %v40, %v40
  %v81 = vpack.c.bf16 %v41, %v41
  %v82 = vpack.c.bf16 %v42, %v42
  %v83 = vpack.c.bf16 %v43, %v43
  %v84 = vpack.c.bf16 %v44, %v44
  %v85 = vpack.c.bf16 %v45, %v45
  %v86 = vpack.c.bf16 %v46, %v46
  %v87 = vpack.c.bf16 %v47, %v47
  %v88 = vpack.c.bf16 %v48, %v48
  %v89 = vpack.c.bf16 %v49, %v49
  %v90 = vpack.c.bf16 %v50, %v50
  %v91 = vpack.c.bf16 %v51, %v51
  %v92 = vpack.c.bf16 %v52, %v52
  %v93 = vpack.c.bf16 %v53, %v53
  %v94 = vld [vmem:[%s0] sm:$0xfe]
  %v95 = vld [vmem:[%s0 + $0x8] sm:$0xfe]
  %v96 = vld [vmem:[%s0 + $0x10] sm:$0x1]
  %v97 = vld [vmem:[%s0 + $0x18] sm:$0x1]
  %v98 = vld [vmem:[%s0 + $0x20] sm:$0xfe]
  %v99 = vld [vmem:[%s0 + $0x28] sm:$0xfe]
  %v100 = vld [vmem:[%s0 + $0x30] sm:$0x1]
  %v101 = vld [vmem:[%s0 + $0x38] sm:$0x1]
  %v102 = vld [vmem:[%s0 + $0x40] sm:$0xfe]
  %v103 = vld [vmem:[%s0 + $0x48] sm:$0xfe]
  %v104 = vld [vmem:[%s0 + $0x50] sm:$0x1]
  %v105 = vld [vmem:[%s0 + $0x58] sm:$0x1]
  %v106 = vld [vmem:[%s0 + $0x60] sm:$0xfe]
  %v107 = vld [vmem:[%s0 + $0x68] sm:$0xfe]
  %v108 = vld [vmem:[%s0 + $0x70] sm:$0x1]
  %v109 = vld [vmem:[%s0 + $0x78] sm:$0x1]
  %v110 = vld [vmem:[%s0 + $0x80] sm:$0xfe]
  %v111 = vld [vmem:[%s0 + $0x88] sm:$0xfe]
  %v112 = vld [vmem:[%s0 + $0x90] sm:$0x1]
  %v113 = vld [vmem:[%s0 + $0x98] sm:$0x1]
  %v114 = vld [vmem:[%s0 + $0xa0] sm:$0xfe]
  %v115 = vld [vmem:[%s0 + $0xa8] sm:$0xfe]
  %v116 = vld [vmem:[%s0 + $0xb0] sm:$0x1]
  %v117 = vld [vmem:[%s0 + $0xb8] sm:$0x1]
  %v118 = vld [vmem:[%s0 + $0xc0] sm:$0xfe]
  %v119 = vld [vmem:[%s0 + $0xc8] sm:$0xfe]
  %v120 = vld [vmem:[%s0 + $0xd0] sm:$0x1]
  %v121 = vld [vmem:[%s0 + $0xd8] sm:$0x1]
  %v122 = vld [vmem:[%s0 + $0xe0] sm:$0xfe]
  %v123 = vld [vmem:[%s0 + $0xe8] sm:$0xfe]
  %v124 = vld [vmem:[%s0 + $0xf0] sm:$0x1]
  %v125 = vld [vmem:[%s0 + $0xf8] sm:$0x1]
  %v126 = vld [vmem:[%s0 + $0x100] sm:$0xfe]
  %v127 = vld [vmem:[%s0 + $0x108] sm:$0xfe]
  %v128 = vld [vmem:[%s0 + $0x110] sm:$0x1]
  %v129 = vld [vmem:[%s0 + $0x118] sm:$0x1]
  %v130 = vld [vmem:[%s0 + $0x120] sm:$0xfe]
  %v131 = vld [vmem:[%s0 + $0x128] sm:$0xfe]
  %v132 = vld [vmem:[%s0 + $0x130] sm:$0x1]
  %v133 = vld [vmem:[%s0 + $0x138] sm:$0x1]
  %v134 = vld [vmem:[%s0 + $0x140] sm:$0xfe]
  %v135 = vld [vmem:[%s0 + $0x148] sm:$0xfe]
  %v136 = vld [vmem:[%s0 + $0x150] sm:$0x1]
  %v137 = vld [vmem:[%s0 + $0x158] sm:$0x1]
  %v138 = vld [vmem:[%s0 + $0x160] sm:$0xfe]
  %v139 = vld [vmem:[%s0 + $0x168] sm:$0xfe]
  %v140 = vld [vmem:[%s0 + $0x170] sm:$0x1]
  %v141 = vld [vmem:[%s0 + $0x178] sm:$0x1]
  %v142 = vld [vmem:[%s0 + $0x180] sm:$0xfe]
  %v143 = vld [vmem:[%s0 + $0x188] sm:$0xfe]
  %v144 = vld [vmem:[%s0 + $0x190] sm:$0x1]
  %v145 = vld [vmem:[%s0 + $0x198] sm:$0x1]
  %v146 = vld [vmem:[%s0 + $0x1a0] sm:$0xfe]
  %v147 = vld [vmem:[%s0 + $0x1a8] sm:$0xfe]
  %v148 = vld [vmem:[%s0 + $0x1b0] sm:$0x1]
  %v149 = vld [vmem:[%s0 + $0x1b8] sm:$0x1]
  %v150 = vld [vmem:[%s0 + $0x1c0] sm:$0xfe]
  %v151 = vld [vmem:[%s0 + $0x1c8] sm:$0xfe]
  %v152 = vld [vmem:[%s0 + $0x1d0] sm:$0x1]
  %v153 = vld [vmem:[%s0 + $0x1d8] sm:$0x1]
  %v154 = vld [vmem:[%s0 + $0x1e0] sm:$0xfe]
  %v155 = vld [vmem:[%s0 + $0x1e8] sm:$0xfe]
  %v156 = vld [vmem:[%s0 + $0x1f0] sm:$0x1]
  %v157 = vld [vmem:[%s0 + $0x1f8] sm:$0x1]
  %v158 = vld [vmem:[%s0 + $0x200] sm:$0xfe]
  %v159 = vld [vmem:[%s0 + $0x208] sm:$0xfe]
  %v160 = vld [vmem:[%s0 + $0x210] sm:$0x1]
  %v161 = vld [vmem:[%s0 + $0x218] sm:$0x1]
  %v162 = vld [vmem:[%s0 + $0x220] sm:$0xfe]
  %v163 = vld [vmem:[%s0 + $0x228] sm:$0xfe]
  %v164 = vld [vmem:[%s0 + $0x230] sm:$0x1]
  %v165 = vld [vmem:[%s0 + $0x238] sm:$0x1]
  %v166 = vld [vmem:[%s0 + $0x240] sm:$0xfe]
  %v167 = vld [vmem:[%s0 + $0x248] sm:$0xfe]
  %v168 = vld [vmem:[%s0 + $0x250] sm:$0x1]
  %v169 = vld [vmem:[%s0 + $0x258] sm:$0x1]
  %v170 = vld [vmem:[%s0 + $0x260] sm:$0xfe]
  %v171 = vld [vmem:[%s0 + $0x268] sm:$0xfe]
  %v172 = vld [vmem:[%s0 + $0x270] sm:$0x1]
  %v173 = vld [vmem:[%s0 + $0x278] sm:$0x1]
  %v174 = vpack.c.bf16 %v96, %v94
  %v175 = vpack.c.bf16 %v97, %v95
  %v176 = vpack.c.bf16 %v100, %v98
  %v177 = vpack.c.bf16 %v101, %v99
  %v178 = vpack.c.bf16 %v104, %v102
  %v179 = vpack.c.bf16 %v105, %v103
  %v180 = vpack.c.bf16 %v108, %v106
  %v181 = vpack.c.bf16 %v109, %v107
  %v182 = vpack.c.bf16 %v112, %v110
  %v183 = vpack.c.bf16 %v113, %v111
  %v184 = vpack.c.bf16 %v116, %v114
  %v185 = vpack.c.bf16 %v117, %v115
  %v186 = vpack.c.bf16 %v120, %v118
  %v187 = vpack.c.bf16 %v121, %v119
  %v188 = vpack.c.bf16 %v124, %v122
  %v189 = vpack.c.bf16 %v125, %v123
  %v190 = vpack.c.bf16 %v128, %v126
  %v191 = vpack.c.bf16 %v129, %v127
  %v192 = vpack.c.bf16 %v132, %v130
  %v193 = vpack.c.bf16 %v133, %v131
  %v194 = vpack.c.bf16 %v136, %v134
  %v195 = vpack.c.bf16 %v137, %v135
  %v196 = vpack.c.bf16 %v140, %v138
  %v197 = vpack.c.bf16 %v141, %v139
  %v198 = vpack.c.bf16 %v144, %v142
  %v199 = vpack.c.bf16 %v145, %v143
  %v200 = vpack.c.bf16 %v148, %v146
  %v201 = vpack.c.bf16 %v149, %v147
  %v202 = vpack.c.bf16 %v152, %v150
  %v203 = vpack.c.bf16 %v153, %v151
  %v204 = vpack.c.bf16 %v156, %v154
  %v205 = vpack.c.bf16 %v157, %v155
  %v206 = vpack.c.bf16 %v160, %v158
  %v207 = vpack.c.bf16 %v161, %v159
  %v208 = vpack.c.bf16 %v164, %v162
  %v209 = vpack.c.bf16 %v165, %v163
  %v210 = vpack.c.bf16 %v168, %v166
  %v211 = vpack.c.bf16 %v169, %v167
  %v212 = vpack.c.bf16 %v172, %v170
  %v213 = vpack.c.bf16 %v173, %v171
  %v214 = vld [vmem:[%s0] sm:$0xfc]
  %v215 = vld [vmem:[%s0 + $0x8] sm:$0xfc]
  %v216 = vld [vmem:[%s0 + $0x10] sm:$0x3]
  %v217 = vld [vmem:[%s0 + $0x18] sm:$0x3]
  %v218 = vld [vmem:[%s0 + $0x20] sm:$0xfc]
  %v219 = vld [vmem:[%s0 + $0x28] sm:$0xfc]
  %v220 = vld [vmem:[%s0 + $0x30] sm:$0x3]
  %v221 = vld [vmem:[%s0 + $0x38] sm:$0x3]
  %v222 = vld [vmem:[%s0 + $0x40] sm:$0xfc]
  %v223 = vld [vmem:[%s0 + $0x48] sm:$0xfc]
  %v224 = vld [vmem:[%s0 + $0x50] sm:$0x3]
  %v225 = vld [vmem:[%s0 + $0x58] sm:$0x3]
  %v226 = vld [vmem:[%s0 + $0x60] sm:$0xfc]
  %v227 = vld [vmem:[%s0 + $0x68] sm:$0xfc]
  %v228 = vld [vmem:[%s0 + $0x70] sm:$0x3]
  %v229 = vld [vmem:[%s0 + $0x78] sm:$0x3]
  %v230 = vld [vmem:[%s0 + $0x80] sm:$0xfc]
  %v231 = vld [vmem:[%s0 + $0x88] sm:$0xfc]
  %v232 = vld [vmem:[%s0 + $0x90] sm:$0x3]
  %v233 = vld [vmem:[%s0 + $0x98] sm:$0x3]
  %v234 = vld [vmem:[%s0 + $0xa0] sm:$0xfc]
  %v235 = vld [vmem:[%s0 + $0xa8] sm:$0xfc]
  %v236 = vld [vmem:[%s0 + $0xb0] sm:$0x3]
  %v237 = vld [vmem:[%s0 + $0xb8] sm:$0x3]
  %v238 = vld [vmem:[%s0 + $0xc0] sm:$0xfc]
  %v239 = vld [vmem:[%s0 + $0xc8] sm:$0xfc]
  %v240 = vld [vmem:[%s0 + $0xd0] sm:$0x3]
  %v241 = vld [vmem:[%s0 + $0xd8] sm:$0x3]
  %v242 = vld [vmem:[%s0 + $0xe0] sm:$0xfc]
  %v243 = vld [vmem:[%s0 + $0xe8] sm:$0xfc]
  %v244 = vld [vmem:[%s0 + $0xf0] sm:$0x3]
  %v245 = vld [vmem:[%s0 + $0xf8] sm:$0x3]
  %v246 = vld [vmem:[%s0 + $0x100] sm:$0xfc]
  %v247 = vld [vmem:[%s0 + $0x108] sm:$0xfc]
  %v248 = vld [vmem:[%s0 + $0x110] sm:$0x3]
  %v249 = vld [vmem:[%s0 + $0x118] sm:$0x3]
  %v250 = vld [vmem:[%s0 + $0x120] sm:$0xfc]
  %v251 = vld [vmem:[%s0 + $0x128] sm:$0xfc]
  %v252 = vld [vmem:[%s0 + $0x130] sm:$0x3]
  %v253 = vld [vmem:[%s0 + $0x138] sm:$0x3]
  %v254 = vld [vmem:[%s0 + $0x140] sm:$0xfc]
  %v255 = vld [vmem:[%s0 + $0x148] sm:$0xfc]
  %v256 = vld [vmem:[%s0 + $0x150] sm:$0x3]
  %v257 = vld [vmem:[%s0 + $0x158] sm:$0x3]
  %v258 = vld [vmem:[%s0 + $0x160] sm:$0xfc]
  %v259 = vld [vmem:[%s0 + $0x168] sm:$0xfc]
  %v260 = vld [vmem:[%s0 + $0x170] sm:$0x3]
  %v261 = vld [vmem:[%s0 + $0x178] sm:$0x3]
  %v262 = vld [vmem:[%s0 + $0x180] sm:$0xfc]
  %v263 = vld [vmem:[%s0 + $0x188] sm:$0xfc]
  %v264 = vld [vmem:[%s0 + $0x190] sm:$0x3]
  %v265 = vld [vmem:[%s0 + $0x198] sm:$0x3]
  %v266 = vld [vmem:[%s0 + $0x1a0] sm:$0xfc]
  %v267 = vld [vmem:[%s0 + $0x1a8] sm:$0xfc]
  %v268 = vld [vmem:[%s0 + $0x1b0] sm:$0x3]
  %v269 = vld [vmem:[%s0 + $0x1b8] sm:$0x3]
  %v270 = vld [vmem:[%s0 + $0x1c0] sm:$0xfc]
  %v271 = vld [vmem:[%s0 + $0x1c8] sm:$0xfc]
  %v272 = vld [vmem:[%s0 + $0x1d0] sm:$0x3]
  %v273 = vld [vmem:[%s0 + $0x1d8] sm:$0x3]
  %v274 = vld [vmem:[%s0 + $0x1e0] sm:$0xfc]
  %v275 = vld [vmem:[%s0 + $0x1e8] sm:$0xfc]
  %v276 = vld [vmem:[%s0 + $0x1f0] sm:$0x3]
  %v277 = vld [vmem:[%s0 + $0x1f8] sm:$0x3]
  %v278 = vld [vmem:[%s0 + $0x200] sm:$0xfc]
  %v279 = vld [vmem:[%s0 + $0x208] sm:$0xfc]
  %v280 = vld [vmem:[%s0 + $0x210] sm:$0x3]
  %v281 = vld [vmem:[%s0 + $0x218] sm:$0x3]
  %v282 = vld [vmem:[%s0 + $0x220] sm:$0xfc]
  %v283 = vld [vmem:[%s0 + $0x228] sm:$0xfc]
  %v284 = vld [vmem:[%s0 + $0x230] sm:$0x3]
  %v285 = vld [vmem:[%s0 + $0x238] sm:$0x3]
  %v286 = vld [vmem:[%s0 + $0x240] sm:$0xfc]
  %v287 = vld [vmem:[%s0 + $0x248] sm:$0xfc]
  %v288 = vld [vmem:[%s0 + $0x250] sm:$0x3]
  %v289 = vld [vmem:[%s0 + $0x258] sm:$0x3]
  %v290 = vld [vmem:[%s0 + $0x260] sm:$0xfc]
  %v291 = vld [vmem:[%s0 + $0x268] sm:$0xfc]
  %v292 = vld [vmem:[%s0 + $0x270] sm:$0x3]
  %v293 = vld [vmem:[%s0 + $0x278] sm:$0x3]
  %v294 = vpack.c.bf16 %v216, %v214
  %v295 = vpack.c.bf16 %v217, %v215
  %v296 = vpack.c.bf16 %v220, %v218
  %v297 = vpack.c.bf16 %v221, %v219
  %v298 = vpack.c.bf16 %v224, %v222
  %v299 = vpack.c.bf16 %v225, %v223
  %v300 = vpack.c.bf16 %v228, %v226
  %v301 = vpack.c.bf16 %v229, %v227
  %v302 = vpack.c.bf16 %v232, %v230
  %v303 = vpack.c.bf16 %v233, %v231
  %v304 = vpack.c.bf16 %v236, %v234
  %v305 = vpack.c.bf16 %v237, %v235
  %v306 = vpack.c.bf16 %v240, %v238
  %v307 = vpack.c.bf16 %v241, %v239
  %v308 = vpack.c.bf16 %v244, %v242
  %v309 = vpack.c.bf16 %v245, %v243
  %v310 = vpack.c.bf16 %v248, %v246
  %v311 = vpack.c.bf16 %v249, %v247
  %v312 = vpack.c.bf16 %v252, %v250
  %v313 = vpack.c.bf16 %v253, %v251
  %v314 = vpack.c.bf16 %v256, %v254
  %v315 = vpack.c.bf16 %v257, %v255
  %v316 = vpack.c.bf16 %v260, %v258
  %v317 = vpack.c.bf16 %v261, %v259
  %v318 = vpack.c.bf16 %v264, %v262
  %v319 = vpack.c.bf16 %v265, %v263
  %v320 = vpack.c.bf16 %v268, %v266
  %v321 = vpack.c.bf16 %v269, %v267
  %v322 = vpack.c.bf16 %v272, %v270
  %v323 = vpack.c.bf16 %v273, %v271
  %v324 = vpack.c.bf16 %v276, %v274
  %v325 = vpack.c.bf16 %v277, %v275
  %v326 = vpack.c.bf16 %v280, %v278
  %v327 = vpack.c.bf16 %v281, %v279
  %v328 = vpack.c.bf16 %v284, %v282
  %v329 = vpack.c.bf16 %v285, %v283
  %v330 = vpack.c.bf16 %v288, %v286
  %v331 = vpack.c.bf16 %v289, %v287
  %v332 = vpack.c.bf16 %v292, %v290
  %v333 = vpack.c.bf16 %v293, %v291
  %v366 = vunpack.c.l.b16 %v54
  %v367 = vunpack.c.l.b16 %v55
  %v368 = vunpack.c.l.b16 %v56
  %v369 = vunpack.c.l.b16 %v57
  %v370 = vunpack.c.l.b16 %v58
  %v371 = vunpack.c.l.b16 %v59
  %v372 = vunpack.c.l.b16 %v60
  %v373 = vunpack.c.l.b16 %v61
  %v374 = vunpack.c.l.b16 %v62
  %v375 = vunpack.c.l.b16 %v63
  %v376 = vunpack.c.l.b16 %v64
  %v377 = vunpack.c.l.b16 %v65
  %v378 = vunpack.c.l.b16 %v66
  %v379 = vunpack.c.l.b16 %v67
  %v380 = vunpack.c.l.b16 %v68
  %v381 = vunpack.c.l.b16 %v69
  %v382 = vunpack.c.l.b16 %v74
  %v383 = vunpack.c.l.b16 %v75
  %v384 = vunpack.c.l.b16 %v76
  %v385 = vunpack.c.l.b16 %v77
  %v386 = vunpack.c.l.b16 %v78
  %v387 = vunpack.c.l.b16 %v79
  %v388 = vunpack.c.l.b16 %v80
  %v389 = vunpack.c.l.b16 %v81
  %v390 = vunpack.c.l.b16 %v82
  %v391 = vunpack.c.l.b16 %v83
  %v392 = vunpack.c.l.b16 %v84
  %v393 = vunpack.c.l.b16 %v85
  %v394 = vunpack.c.l.b16 %v86
  %v395 = vunpack.c.l.b16 %v87
  %v396 = vunpack.c.l.b16 %v88
  %v397 = vunpack.c.l.b16 %v89
  %v398 = vld [vmem:[%s1] sm:$0xff]
  %v399 = vld [vmem:[%s1 + $0x8] sm:$0xff]
  %v400 = vld [vmem:[%s1 + $0x10] sm:$0xff]
  %v401 = vld [vmem:[%s1 + $0x18] sm:$0xff]
  %v402 = vld [vmem:[%s1 + $0x20] sm:$0xff]
  %v403 = vld [vmem:[%s1 + $0x28] sm:$0xff]
  %v404 = vld [vmem:[%s1 + $0x30] sm:$0xff]
  %v405 = vld [vmem:[%s1 + $0x38] sm:$0xff]
  %v406 = vld [vmem:[%s1 + $0x40] sm:$0xff]
  %v407 = vld [vmem:[%s1 + $0x48] sm:$0xff]
  %v408 = vld [vmem:[%s1 + $0x50] sm:$0xff]
  %v409 = vld [vmem:[%s1 + $0x58] sm:$0xff]
  %v410 = vld [vmem:[%s1 + $0x60] sm:$0xff]
  %v411 = vld [vmem:[%s1 + $0x68] sm:$0xff]
  %v412 = vld [vmem:[%s1 + $0x70] sm:$0xff]
  %v413 = vld [vmem:[%s1 + $0x78] sm:$0xff]
  %v414 = vld [vmem:[%s1 + $0x80] sm:$0xff]
  %v415 = vld [vmem:[%s1 + $0x88] sm:$0xff]
  %v416 = vld [vmem:[%s1 + $0x90] sm:$0xff]
  %v417 = vld [vmem:[%s1 + $0x98] sm:$0xff]
  %v418 = vld [vmem:[%s1 + $0xa0] sm:$0xff]
  %v419 = vld [vmem:[%s1 + $0xa8] sm:$0xff]
  %v420 = vld [vmem:[%s1 + $0xb0] sm:$0xff]
  %v421 = vld [vmem:[%s1 + $0xb8] sm:$0xff]
  %v422 = vld [vmem:[%s1 + $0xc0] sm:$0xff]
  %v423 = vld [vmem:[%s1 + $0xc8] sm:$0xff]
  %v424 = vld [vmem:[%s1 + $0xd0] sm:$0xff]
  %v425 = vld [vmem:[%s1 + $0xd8] sm:$0xff]
  %v426 = vld [vmem:[%s1 + $0xe0] sm:$0xff]
  %v427 = vld [vmem:[%s1 + $0xe8] sm:$0xff]
  %v428 = vld [vmem:[%s1 + $0xf0] sm:$0xff]
  %v429 = vld [vmem:[%s1 + $0xf8] sm:$0xff]
  %v430 = vpack.c.b16 %v368, %v366
  %v431 = vpack.c.b16 %v369, %v367
  %v432 = vpack.c.b16 %v372, %v370
  %v433 = vpack.c.b16 %v373, %v371
  %v434 = vpack.c.b16 %v376, %v374
  %v435 = vpack.c.b16 %v377, %v375
  %v436 = vpack.c.b16 %v380, %v378
  %v437 = vpack.c.b16 %v381, %v379
  %v438 = vpack.c.b16 %v384, %v382
  %v439 = vpack.c.b16 %v385, %v383
  %v440 = vpack.c.b16 %v388, %v386
  %v441 = vpack.c.b16 %v389, %v387
  %v442 = vpack.c.b16 %v392, %v390
  %v443 = vpack.c.b16 %v393, %v391
  %v444 = vpack.c.b16 %v396, %v394
  %v445 = vpack.c.b16 %v397, %v395
  %v494 = vunpack.c.l.b16 %v398
  %v495 = vunpack.c.h.b16 %v398
  %v496 = vunpack.c.l.b16 %v399
  %v497 = vunpack.c.h.b16 %v399
  %v498 = vunpack.c.l.b16 %v400
  %v499 = vunpack.c.h.b16 %v400
  %v500 = vunpack.c.l.b16 %v401
  %v501 = vunpack.c.h.b16 %v401
  %v502 = vunpack.c.l.b16 %v402
  %v503 = vunpack.c.h.b16 %v402
  %v504 = vunpack.c.l.b16 %v403
  %v505 = vunpack.c.h.b16 %v403
  %v506 = vunpack.c.l.b16 %v404
  %v507 = vunpack.c.h.b16 %v404
  %v508 = vunpack.c.l.b16 %v405
  %v509 = vunpack.c.h.b16 %v405
  %v510 = vunpack.c.l.b16 %v406
  %v511 = vunpack.c.h.b16 %v406
  %v512 = vunpack.c.l.b16 %v407
  %v513 = vunpack.c.h.b16 %v407
  %v514 = vunpack.c.l.b16 %v408
  %v515 = vunpack.c.h.b16 %v408
  %v516 = vunpack.c.l.b16 %v409
  %v517 = vunpack.c.h.b16 %v409
  %v518 = vunpack.c.l.b16 %v410
  %v519 = vunpack.c.h.b16 %v410
  %v520 = vunpack.c.l.b16 %v411
  %v521 = vunpack.c.h.b16 %v411
  %v522 = vunpack.c.l.b16 %v412
  %v523 = vunpack.c.h.b16 %v412
  %v524 = vunpack.c.l.b16 %v413
  %v525 = vunpack.c.h.b16 %v413
  %v526 = vunpack.c.l.b16 %v414
  %v527 = vunpack.c.h.b16 %v414
  %v528 = vunpack.c.l.b16 %v415
  %v529 = vunpack.c.h.b16 %v415
  %v530 = vunpack.c.l.b16 %v416
  %v531 = vunpack.c.h.b16 %v416
  %v532 = vunpack.c.l.b16 %v417
  %v533 = vunpack.c.h.b16 %v417
  %v534 = vunpack.c.l.b16 %v418
  %v535 = vunpack.c.h.b16 %v418
  %v536 = vunpack.c.l.b16 %v419
  %v537 = vunpack.c.h.b16 %v419
  %v538 = vunpack.c.l.b16 %v420
  %v539 = vunpack.c.h.b16 %v420
  %v540 = vunpack.c.l.b16 %v421
  %v541 = vunpack.c.h.b16 %v421
  %v542 = vunpack.c.l.b16 %v422
  %v543 = vunpack.c.h.b16 %v422
  %v544 = vunpack.c.l.b16 %v423
  %v545 = vunpack.c.h.b16 %v423
  %v546 = vunpack.c.l.b16 %v424
  %v547 = vunpack.c.h.b16 %v424
  %v548 = vunpack.c.l.b16 %v425
  %v549 = vunpack.c.h.b16 %v425
  %v550 = vunpack.c.l.b16 %v426
  %v551 = vunpack.c.h.b16 %v426
  %v552 = vunpack.c.l.b16 %v427
  %v553 = vunpack.c.h.b16 %v427
  %v554 = vunpack.c.l.b16 %v428
  %v555 = vunpack.c.h.b16 %v428
  %v556 = vunpack.c.l.b16 %v429
  %v557 = vunpack.c.h.b16 %v429
  %v558 = vpack.c.b16 %v496, %v494
  %v559 = vpack.c.b16 %v497, %v495
  %v560 = vpack.c.b16 %v500, %v498
  %v561 = vpack.c.b16 %v501, %v499
  %v562 = vpack.c.b16 %v504, %v502
  %v563 = vpack.c.b16 %v505, %v503
  %v564 = vpack.c.b16 %v508, %v506
  %v565 = vpack.c.b16 %v509, %v507
  %v566 = vpack.c.b16 %v512, %v510
  %v567 = vpack.c.b16 %v513, %v511
  %v568 = vpack.c.b16 %v516, %v514
  %v569 = vpack.c.b16 %v517, %v515
  %v570 = vpack.c.b16 %v520, %v518
  %v571 = vpack.c.b16 %v521, %v519
  %v572 = vpack.c.b16 %v524, %v522
  %v573 = vpack.c.b16 %v525, %v523
  %v574 = vpack.c.b16 %v528, %v526
  %v575 = vpack.c.b16 %v529, %v527
  %v576 = vpack.c.b16 %v532, %v530
  %v577 = vpack.c.b16 %v533, %v531
  %v578 = vpack.c.b16 %v536, %v534
  %v579 = vpack.c.b16 %v537, %v535
  %v580 = vpack.c.b16 %v540, %v538
  %v581 = vpack.c.b16 %v541, %v539
  %v582 = vpack.c.b16 %v544, %v542
  %v583 = vpack.c.b16 %v545, %v543
  %v584 = vpack.c.b16 %v548, %v546
  %v585 = vpack.c.b16 %v549, %v547
  %v586 = vpack.c.b16 %v552, %v550
  %v587 = vpack.c.b16 %v553, %v551
  %v588 = vpack.c.b16 %v556, %v554
  %v589 = vpack.c.b16 %v557, %v555
  %622 = vmatprep.subr.bf16.mxu0 %v559
  %623 = vmatpush1.bf16.msra.mxu0 %v558
  %624 = vmatprep.subr.bf16.mxu0 %v561
  %625 = vmatpush1.bf16.msra.mxu0 %v560
  %626 = vmatprep.subr.bf16.mxu0 %v563
  %627 = vmatpush1.bf16.msra.mxu0 %v562
  %628 = vmatprep.subr.bf16.mxu0 %v565
  %629 = vmatpush1.bf16.msra.mxu0 %v564
  %630 = vmatprep.subr.bf16.mxu0 %v567
  %631 = vmatpush1.bf16.msra.mxu0 %v566
  %632 = vmatprep.subr.bf16.mxu0 %v569
  %633 = vmatpush1.bf16.msra.mxu0 %v568
  %634 = vmatprep.subr.bf16.mxu0 %v571
  %635 = vmatpush1.bf16.msra.mxu0 %v570
  %636 = vmatprep.subr.bf16.mxu0 %v573
  %637 = vmatpush1.bf16.msra.mxu0 %v572
  %638 = vmatprep.subr.bf16.mxu0 %v575
  %639 = vmatpush1.bf16.msra.mxu0 %v574
  %640 = vmatprep.subr.bf16.mxu0 %v577
  %641 = vmatpush1.bf16.msra.mxu0 %v576
  %642 = vmatprep.subr.bf16.mxu0 %v579
  %643 = vmatpush1.bf16.msra.mxu0 %v578
  %644 = vmatprep.subr.bf16.mxu0 %v581
  %645 = vmatpush1.bf16.msra.mxu0 %v580
  %646 = vmatprep.subr.bf16.mxu0 %v583
  %647 = vmatpush1.bf16.msra.mxu0 %v582
  %648 = vmatprep.subr.bf16.mxu0 %v585
  %649 = vmatpush1.bf16.msra.mxu0 %v584
  %650 = vmatprep.subr.bf16.mxu0 %v587
  %651 = vmatpush1.bf16.msra.mxu0 %v586
  %652 = vmatprep.subr.bf16.mxu0 %v589
  %653 = vmatpush1.bf16.msra.mxu0 %v588
  %654 = vmatprep.mubr.bf16.mxu0 %v431
  %655 = vmatmul.mubr.bf16.gmra.mrb[0].mxu0 %v430
  %v656 = vpop.f32.mrb[0].mxu0
  %v657 = vadd.f32 0.0, %v656
  %v658 = vpop.f32.mrb[0].mxu0
  %v659 = vadd.f32 0.0, %v658
  %v660 = vpop.f32.mrb[0].mxu0
  %v661 = vadd.f32 0.0, %v660
  %v662 = vpop.f32.mrb[0].mxu0
  %v663 = vadd.f32 0.0, %v662
  %664 = vmatprep.mubr.bf16.mxu0 %v433
  %665 = vmatmul.mubr.bf16.gmra.mrb[0].mxu0 %v432
  %v666 = vpop.f32.mrb[0].mxu0
  %v667 = vadd.f32 0.0, %v666
  %v668 = vpop.f32.mrb[0].mxu0
  %v669 = vadd.f32 0.0, %v668
  %v670 = vpop.f32.mrb[0].mxu0
  %v671 = vadd.f32 0.0, %v670
  %v672 = vpop.f32.mrb[0].mxu0
  %v673 = vadd.f32 0.0, %v672
  %674 = vmatprep.mubr.bf16.mxu0 %v435
  %675 = vmatmul.mubr.bf16.gmra.mrb[0].mxu0 %v434
  %v676 = vpop.f32.mrb[0].mxu0
  %v677 = vadd.f32 0.0, %v676
  %v678 = vpop.f32.mrb[0].mxu0
  %v679 = vadd.f32 0.0, %v678
  %v680 = vpop.f32.mrb[0].mxu0
  %v681 = vadd.f32 0.0, %v680
  %v682 = vpop.f32.mrb[0].mxu0
  %v683 = vadd.f32 0.0, %v682
  %684 = vmatprep.mubr.bf16.mxu0 %v437
  %685 = vmatmul.mubr.bf16.gmra.mrb[0].mxu0 %v436
  %v686 = vpop.f32.mrb[0].mxu0
  %v687 = vadd.f32 0.0, %v686
  %v688 = vpop.f32.mrb[0].mxu0
  %v689 = vadd.f32 0.0, %v688
  %v690 = vpop.f32.mrb[0].mxu0
  %v691 = vadd.f32 0.0, %v690
  %v692 = vpop.f32.mrb[0].mxu0
  %v693 = vadd.f32 0.0, %v692
  %694 = vmatprep.mubr.bf16.mxu0 %v439
  %695 = vmatmul.mubr.bf16.gmra.mrb[0].mxu0 %v438
  %v696 = vpop.f32.mrb[0].mxu0
  %v697 = vadd.f32 0.0, %v696
  %v698 = vpop.f32.mrb[0].mxu0
  %v699 = vadd.f32 0.0, %v698
  %v700 = vpop.f32.mrb[0].mxu0
  %v701 = vadd.f32 0.0, %v700
  %v702 = vpop.f32.mrb[0].mxu0
  %v703 = vadd.f32 0.0, %v702
  %704 = vmatprep.mubr.bf16.mxu0 %v441
  %705 = vmatmul.mubr.bf16.gmra.mrb[0].mxu0 %v440
  %v706 = vpop.f32.mrb[0].mxu0
  %v707 = vadd.f32 0.0, %v706
  %v708 = vpop.f32.mrb[0].mxu0
  %v709 = vadd.f32 0.0, %v708
  %v710 = vpop.f32.mrb[0].mxu0
  %v711 = vadd.f32 0.0, %v710
  %v712 = vpop.f32.mrb[0].mxu0
  %v713 = vadd.f32 0.0, %v712
  %714 = vmatprep.mubr.bf16.mxu0 %v443
  %715 = vmatmul.mubr.bf16.gmra.mrb[0].mxu0 %v442
  %v716 = vpop.f32.mrb[0].mxu0
  %v717 = vadd.f32 0.0, %v716
  %v718 = vpop.f32.mrb[0].mxu0
  %v719 = vadd.f32 0.0, %v718
  %v720 = vpop.f32.mrb[0].mxu0
  %v721 = vadd.f32 0.0, %v720
  %v722 = vpop.f32.mrb[0].mxu0
  %v723 = vadd.f32 0.0, %v722
  %724 = vmatprep.mubr.bf16.mxu0 %v445
  %725 = vmatmul.mubr.bf16.gmra.mrb[0].mxu0 %v444
  %v726 = vpop.f32.mrb[0].mxu0
  %v727 = vadd.f32 0.0, %v726
  %v728 = vpop.f32.mrb[0].mxu0
  %v729 = vadd.f32 0.0, %v728
  %v730 = vpop.f32.mrb[0].mxu0
  %v731 = vadd.f32 0.0, %v730
  %v732 = vpop.f32.mrb[0].mxu0
  %v733 = vadd.f32 0.0, %v732
  %734 = vdwg.mxu0
  %735 = vst [vmem:[#allocation2] sm:$0xff] %v657
  %736 = vst [vmem:[#allocation2 + $0x8] sm:$0xff] %v659
  %737 = vst [vmem:[#allocation2 + $0x10] sm:$0xff] %v661
  %738 = vst [vmem:[#allocation2 + $0x18] sm:$0xff] %v663
  %739 = vst [vmem:[#allocation2 + $0x20] sm:$0xff] %v667
  %740 = vst [vmem:[#allocation2 + $0x28] sm:$0xff] %v669
  %741 = vst [vmem:[#allocation2 + $0x30] sm:$0xff] %v671
  %742 = vst [vmem:[#allocation2 + $0x38] sm:$0xff] %v673
  %743 = vst [vmem:[#allocation2 + $0x40] sm:$0xff] %v677
  %744 = vst [vmem:[#allocation2 + $0x48] sm:$0xff] %v679
  %745 = vst [vmem:[#allocation2 + $0x50] sm:$0xff] %v681
  %746 = vst [vmem:[#allocation2 + $0x58] sm:$0xff] %v683
  %747 = vst [vmem:[#allocation2 + $0x60] sm:$0xff] %v687
  %748 = vst [vmem:[#allocation2 + $0x68] sm:$0xff] %v689
  %749 = vst [vmem:[#allocation2 + $0x70] sm:$0xff] %v691
  %750 = vst [vmem:[#allocation2 + $0x78] sm:$0xff] %v693
  %751 = vst [vmem:[#allocation2 + $0x80] sm:$0xff] %v697
  %752 = vst [vmem:[#allocation2 + $0x88] sm:$0xff] %v699
  %753 = vst [vmem:[#allocation2 + $0x90] sm:$0xff] %v701
  %754 = vst [vmem:[#allocation2 + $0x98] sm:$0xff] %v703
  %755 = vst [vmem:[#allocation2 + $0xa0] sm:$0xff] %v707
  %756 = vst [vmem:[#allocation2 + $0xa8] sm:$0xff] %v709
  %757 = vst [vmem:[#allocation2 + $0xb0] sm:$0xff] %v711
  %758 = vst [vmem:[#allocation2 + $0xb8] sm:$0xff] %v713
  %759 = vst [vmem:[#allocation2 + $0xc0] sm:$0xff] %v717
  %760 = vst [vmem:[#allocation2 + $0xc8] sm:$0xff] %v719
  %761 = vst [vmem:[#allocation2 + $0xd0] sm:$0xff] %v721
  %762 = vst [vmem:[#allocation2 + $0xd8] sm:$0xff] %v723
  %763 = vst [vmem:[#allocation2 + $0xe0] sm:$0xff] %v727
  %764 = vst [vmem:[#allocation2 + $0xe8] sm:$0xff] %v729
  %765 = vst [vmem:[#allocation2 + $0xf0] sm:$0xff] %v731
  %766 = vst [vmem:[#allocation2 + $0xf8] sm:$0xff] %v733
  %v799 = vunpack.c.l.b16 %v174
  %v800 = vunpack.c.l.b16 %v175
  %v801 = vunpack.c.h.b16 %v174
  %v802 = vunpack.c.h.b16 %v175
  %v803 = vunpack.c.l.b16 %v176
  %v804 = vunpack.c.l.b16 %v177
  %v805 = vunpack.c.h.b16 %v176
  %v806 = vunpack.c.h.b16 %v177
  %v807 = vunpack.c.l.b16 %v178
  %v808 = vunpack.c.l.b16 %v179
  %v809 = vunpack.c.h.b16 %v178
  %v810 = vunpack.c.h.b16 %v179
  %v811 = vunpack.c.l.b16 %v180
  %v812 = vunpack.c.l.b16 %v181
  %v813 = vunpack.c.h.b16 %v180
  %v814 = vunpack.c.h.b16 %v181
  %v815 = vunpack.c.l.b16 %v182
  %v816 = vunpack.c.l.b16 %v183
  %v817 = vunpack.c.h.b16 %v182
  %v818 = vunpack.c.h.b16 %v183
  %v819 = vunpack.c.l.b16 %v184
  %v820 = vunpack.c.l.b16 %v185
  %v821 = vunpack.c.h.b16 %v184
  %v822 = vunpack.c.h.b16 %v185
  %v823 = vunpack.c.l.b16 %v186
  %v824 = vunpack.c.l.b16 %v187
  %v825 = vunpack.c.h.b16 %v186
  %v826 = vunpack.c.h.b16 %v187
  %v827 = vunpack.c.l.b16 %v188
  %v828 = vunpack.c.l.b16 %v189
  %v829 = vunpack.c.h.b16 %v188
  %v830 = vunpack.c.h.b16 %v189
  %v831 = vunpack.c.l.b16 %v194
  %v832 = vunpack.c.l.b16 %v195
  %v833 = vunpack.c.h.b16 %v194
  %v834 = vunpack.c.h.b16 %v195
  %v835 = vunpack.c.l.b16 %v196
  %v836 = vunpack.c.l.b16 %v197
  %v837 = vunpack.c.h.b16 %v196
  %v838 = vunpack.c.h.b16 %v197
  %v839 = vunpack.c.l.b16 %v198
  %v840 = vunpack.c.l.b16 %v199
  %v841 = vunpack.c.h.b16 %v198
  %v842 = vunpack.c.h.b16 %v199
  %v843 = vunpack.c.l.b16 %v200
  %v844 = vunpack.c.l.b16 %v201
  %v845 = vunpack.c.h.b16 %v200
  %v846 = vunpack.c.h.b16 %v201
  %v847 = vunpack.c.l.b16 %v202
  %v848 = vunpack.c.l.b16 %v203
  %v849 = vunpack.c.h.b16 %v202
  %v850 = vunpack.c.h.b16 %v203
  %v851 = vunpack.c.l.b16 %v204
  %v852 = vunpack.c.l.b16 %v205
  %v853 = vunpack.c.h.b16 %v204
  %v854 = vunpack.c.h.b16 %v205
  %v855 = vunpack.c.l.b16 %v206
  %v856 = vunpack.c.l.b16 %v207
  %v857 = vunpack.c.h.b16 %v206
  %v858 = vunpack.c.h.b16 %v207
  %v859 = vunpack.c.l.b16 %v208
  %v860 = vunpack.c.l.b16 %v209
  %v861 = vunpack.c.h.b16 %v208
  %v862 = vunpack.c.h.b16 %v209
  %v863 = vpack.c.b16 %v800, %v799
  %v864 = vpack.c.b16 %v802, %v801
  %v865 = vpack.c.b16 %v804, %v803
  %v866 = vpack.c.b16 %v806, %v805
  %v867 = vpack.c.b16 %v808, %v807
  %v868 = vpack.c.b16 %v810, %v809
  %v869 = vpack.c.b16 %v812, %v811
  %v870 = vpack.c.b16 %v814, %v813
  %v871 = vpack.c.b16 %v816, %v815
  %v872 = vpack.c.b16 %v818, %v817
  %v873 = vpack.c.b16 %v820, %v819
  %v874 = vpack.c.b16 %v822, %v821
  %v875 = vpack.c.b16 %v824, %v823
  %v876 = vpack.c.b16 %v826, %v825
  %v877 = vpack.c.b16 %v828, %v827
  %v878 = vpack.c.b16 %v830, %v829
  %v879 = vpack.c.b16 %v832, %v831
  %v880 = vpack.c.b16 %v834, %v833
  %v881 = vpack.c.b16 %v836, %v835
  %v882 = vpack.c.b16 %v838, %v837
  %v883 = vpack.c.b16 %v840, %v839
  %v884 = vpack.c.b16 %v842, %v841
  %v885 = vpack.c.b16 %v844, %v843
  %v886 = vpack.c.b16 %v846, %v845
  %v887 = vpack.c.b16 %v848, %v847
  %v888 = vpack.c.b16 %v850, %v849
  %v889 = vpack.c.b16 %v852, %v851
  %v890 = vpack.c.b16 %v854, %v853
  %v891 = vpack.c.b16 %v856, %v855
  %v892 = vpack.c.b16 %v858, %v857
  %v893 = vpack.c.b16 %v860, %v859
  %v894 = vpack.c.b16 %v862, %v861
  %vm895 = vsmask.f32 3328
  %vm896 = vsmask.f32 7440
  %vm897 = vmor %vm895, %vm896
  %v899 = vshrl.u32 %v863, 16
  %v901 = vrot.slane %v899, 4
  %v902 = vshll.u32 %v863, 16
  %v904 = vrot.slane %v902, 5
  %v905 = vor.u32 %v901, %v904
  %v906 = vrot.slane %v905, 4
  %v908 = vshll.u32 %v864, 16
  %v910 = vrot.slane %v908, 5
  %v911 = vsel %vm897, %v906, %v910
  %v913 = vshrl.u32 %v865, 16
  %v915 = vrot.slane %v913, 4
  %v916 = vshll.u32 %v865, 16
  %v918 = vrot.slane %v916, 5
  %v919 = vor.u32 %v915, %v918
  %v920 = vrot.slane %v919, 4
  %v922 = vshll.u32 %v866, 16
  %v924 = vrot.slane %v922, 5
  %v925 = vsel %vm897, %v920, %v924
  %v927 = vshrl.u32 %v867, 16
  %v929 = vrot.slane %v927, 4
  %v930 = vshll.u32 %v867, 16
  %v932 = vrot.slane %v930, 5
  %v933 = vor.u32 %v929, %v932
  %v934 = vrot.slane %v933, 4
  %v936 = vshll.u32 %v868, 16
  %v938 = vrot.slane %v936, 5
  %v939 = vsel %vm897, %v934, %v938
  %v941 = vshrl.u32 %v869, 16
  %v943 = vrot.slane %v941, 4
  %v944 = vshll.u32 %v869, 16
  %v946 = vrot.slane %v944, 5
  %v947 = vor.u32 %v943, %v946
  %v948 = vrot.slane %v947, 4
  %v950 = vshll.u32 %v870, 16
  %v952 = vrot.slane %v950, 5
  %v953 = vsel %vm897, %v948, %v952
  %v955 = vshrl.u32 %v871, 16
  %v957 = vrot.slane %v955, 4
  %v958 = vshll.u32 %v871, 16
  %v960 = vrot.slane %v958, 5
  %v961 = vor.u32 %v957, %v960
  %v962 = vrot.slane %v961, 4
  %v964 = vshll.u32 %v872, 16
  %v966 = vrot.slane %v964, 5
  %v967 = vsel %vm897, %v962, %v966
  %v969 = vshrl.u32 %v873, 16
  %v971 = vrot.slane %v969, 4
  %v972 = vshll.u32 %v873, 16
  %v974 = vrot.slane %v972, 5
  %v975 = vor.u32 %v971, %v974
  %v976 = vrot.slane %v975, 4
  %v978 = vshll.u32 %v874, 16
  %v980 = vrot.slane %v978, 5
  %v981 = vsel %vm897, %v976, %v980
  %v983 = vshrl.u32 %v875, 16
  %v985 = vrot.slane %v983, 4
  %v986 = vshll.u32 %v875, 16
  %v988 = vrot.slane %v986, 5
  %v989 = vor.u32 %v985, %v988
  %v990 = vrot.slane %v989, 4
  %v992 = vshll.u32 %v876, 16
  %v994 = vrot.slane %v992, 5
  %v995 = vsel %vm897, %v990, %v994
  %v997 = vshrl.u32 %v877, 16
  %v999 = vrot.slane %v997, 4
  %v1000 = vshll.u32 %v877, 16
  %v1002 = vrot.slane %v1000, 5
  %v1003 = vor.u32 %v999, %v1002
  %v1004 = vrot.slane %v1003, 4
  %v1006 = vshll.u32 %v878, 16
  %v1008 = vrot.slane %v1006, 5
  %v1009 = vsel %vm897, %v1004, %v1008
  %v1011 = vshrl.u32 %v879, 16
  %v1013 = vrot.slane %v1011, 4
  %v1014 = vshll.u32 %v879, 16
  %v1016 = vrot.slane %v1014, 5
  %v1017 = vor.u32 %v1013, %v1016
  %v1018 = vrot.slane %v1017, 4
  %v1020 = vshll.u32 %v880, 16
  %v1022 = vrot.slane %v1020, 5
  %v1023 = vsel %vm897, %v1018, %v1022
  %v1025 = vshrl.u32 %v881, 16
  %v1027 = vrot.slane %v1025, 4
  %v1028 = vshll.u32 %v881, 16
  %v1030 = vrot.slane %v1028, 5
  %v1031 = vor.u32 %v1027, %v1030
  %v1032 = vrot.slane %v1031, 4
  %v1034 = vshll.u32 %v882, 16
  %v1036 = vrot.slane %v1034, 5
  %v1037 = vsel %vm897, %v1032, %v1036
  %v1039 = vshrl.u32 %v883, 16
  %v1041 = vrot.slane %v1039, 4
  %v1042 = vshll.u32 %v883, 16
  %v1044 = vrot.slane %v1042, 5
  %v1045 = vor.u32 %v1041, %v1044
  %v1046 = vrot.slane %v1045, 4
  %v1048 = vshll.u32 %v884, 16
  %v1050 = vrot.slane %v1048, 5
  %v1051 = vsel %vm897, %v1046, %v1050
  %v1053 = vshrl.u32 %v885, 16
  %v1055 = vrot.slane %v1053, 4
  %v1056 = vshll.u32 %v885, 16
  %v1058 = vrot.slane %v1056, 5
  %v1059 = vor.u32 %v1055, %v1058
  %v1060 = vrot.slane %v1059, 4
  %v1062 = vshll.u32 %v886, 16
  %v1064 = vrot.slane %v1062, 5
  %v1065 = vsel %vm897, %v1060, %v1064
  %v1067 = vshrl.u32 %v887, 16
  %v1069 = vrot.slane %v1067, 4
  %v1070 = vshll.u32 %v887, 16
  %v1072 = vrot.slane %v1070, 5
  %v1073 = vor.u32 %v1069, %v1072
  %v1074 = vrot.slane %v1073, 4
  %v1076 = vshll.u32 %v888, 16
  %v1078 = vrot.slane %v1076, 5
  %v1079 = vsel %vm897, %v1074, %v1078
  %v1081 = vshrl.u32 %v889, 16
  %v1083 = vrot.slane %v1081, 4
  %v1084 = vshll.u32 %v889, 16
  %v1086 = vrot.slane %v1084, 5
  %v1087 = vor.u32 %v1083, %v1086
  %v1088 = vrot.slane %v1087, 4
  %v1090 = vshll.u32 %v890, 16
  %v1092 = vrot.slane %v1090, 5
  %v1093 = vsel %vm897, %v1088, %v1092
  %v1095 = vshrl.u32 %v891, 16
  %v1097 = vrot.slane %v1095, 4
  %v1098 = vshll.u32 %v891, 16
  %v1100 = vrot.slane %v1098, 5
  %v1101 = vor.u32 %v1097, %v1100
  %v1102 = vrot.slane %v1101, 4
  %v1104 = vshll.u32 %v892, 16
  %v1106 = vrot.slane %v1104, 5
  %v1107 = vsel %vm897, %v1102, %v1106
  %v1109 = vshrl.u32 %v893, 16
  %v1111 = vrot.slane %v1109, 4
  %v1112 = vshll.u32 %v893, 16
  %v1114 = vrot.slane %v1112, 5
  %v1115 = vor.u32 %v1111, %v1114
  %v1116 = vrot.slane %v1115, 4
  %v1118 = vshll.u32 %v894, 16
  %v1120 = vrot.slane %v1118, 5
  %v1121 = vsel %vm897, %v1116, %v1120
  %s1122 = scalar_lea.vmem %s1, 256
  %v1123 = vld [vmem:[%s1122] sm:$0xff]
  %v1124 = vld [vmem:[%s1122 + $0x8] sm:$0xff]
  %v1125 = vld [vmem:[%s1122 + $0x10] sm:$0xff]
  %v1126 = vld [vmem:[%s1122 + $0x18] sm:$0xff]
  %v1127 = vld [vmem:[%s1122 + $0x20] sm:$0xff]
  %v1128 = vld [vmem:[%s1122 + $0x28] sm:$0xff]
  %v1129 = vld [vmem:[%s1122 + $0x30] sm:$0xff]
  %v1130 = vld [vmem:[%s1122 + $0x38] sm:$0xff]
  %v1131 = vld [vmem:[%s1122 + $0x40] sm:$0xff]
  %v1132 = vld [vmem:[%s1122 + $0x48] sm:$0xff]
  %v1133 = vld [vmem:[%s1122 + $0x50] sm:$0xff]
  %v1134 = vld [vmem:[%s1122 + $0x58] sm:$0xff]
  %v1135 = vld [vmem:[%s1122 + $0x60] sm:$0xff]
  %v1136 = vld [vmem:[%s1122 + $0x68] sm:$0xff]
  %v1137 = vld [vmem:[%s1122 + $0x70] sm:$0xff]
  %v1138 = vld [vmem:[%s1122 + $0x78] sm:$0xff]
  %v1139 = vld [vmem:[%s1122 + $0x80] sm:$0xff]
  %v1140 = vld [vmem:[%s1122 + $0x88] sm:$0xff]
  %v1141 = vld [vmem:[%s1122 + $0x90] sm:$0xff]
  %v1142 = vld [vmem:[%s1122 + $0x98] sm:$0xff]
  %v1143 = vld [vmem:[%s1122 + $0xa0] sm:$0xff]
  %v1144 = vld [vmem:[%s1122 + $0xa8] sm:$0xff]
  %v1145 = vld [vmem:[%s1122 + $0xb0] sm:$0xff]
  %v1146 = vld [vmem:[%s1122 + $0xb8] sm:$0xff]
  %v1147 = vld [vmem:[%s1122 + $0xc0] sm:$0xff]
  %v1148 = vld [vmem:[%s1122 + $0xc8] sm:$0xff]
  %v1149 = vld [vmem:[%s1122 + $0xd0] sm:$0xff]
  %v1150 = vld [vmem:[%s1122 + $0xd8] sm:$0xff]
  %v1151 = vld [vmem:[%s1122 + $0xe0] sm:$0xff]
  %v1152 = vld [vmem:[%s1122 + $0xe8] sm:$0xff]
  %v1153 = vld [vmem:[%s1122 + $0xf0] sm:$0xff]
  %v1154 = vld [vmem:[%s1122 + $0xf8] sm:$0xff]
  %v1155 = vunpack.c.l.b16 %v911
  %v1156 = vunpack.c.h.b16 %v911
  %v1157 = vunpack.c.l.b16 %v925
  %v1158 = vunpack.c.h.b16 %v925
  %v1159 = vunpack.c.l.b16 %v939
  %v1160 = vunpack.c.h.b16 %v939
  %v1161 = vunpack.c.l.b16 %v953
  %v1162 = vunpack.c.h.b16 %v953
  %v1163 = vunpack.c.l.b16 %v967
  %v1164 = vunpack.c.h.b16 %v967
  %v1165 = vunpack.c.l.b16 %v981
  %v1166 = vunpack.c.h.b16 %v981
  %v1167 = vunpack.c.l.b16 %v995
  %v1168 = vunpack.c.h.b16 %v995
  %v1169 = vunpack.c.l.b16 %v1009
  %v1170 = vunpack.c.h.b16 %v1009
  %v1171 = vunpack.c.l.b16 %v1023
  %v1172 = vunpack.c.h.b16 %v1023
  %v1173 = vunpack.c.l.b16 %v1037
  %v1174 = vunpack.c.h.b16 %v1037
  %v1175 = vunpack.c.l.b16 %v1051
  %v1176 = vunpack.c.h.b16 %v1051
  %v1177 = vunpack.c.l.b16 %v1065
  %v1178 = vunpack.c.h.b16 %v1065
  %v1179 = vunpack.c.l.b16 %v1079
  %v1180 = vunpack.c.h.b16 %v1079
  %v1181 = vunpack.c.l.b16 %v1093
  %v1182 = vunpack.c.h.b16 %v1093
  %v1183 = vunpack.c.l.b16 %v1107
  %v1184 = vunpack.c.h.b16 %v1107
  %v1185 = vunpack.c.l.b16 %v1121
  %v1186 = vunpack.c.h.b16 %v1121
  %v1187 = vpack.c.b16 %v1157, %v1155
  %v1188 = vpack.c.b16 %v1158, %v1156
  %v1189 = vpack.c.b16 %v1161, %v1159
  %v1190 = vpack.c.b16 %v1162, %v1160
  %v1191 = vpack.c.b16 %v1165, %v1163
  %v1192 = vpack.c.b16 %v1166, %v1164
  %v1193 = vpack.c.b16 %v1169, %v1167
  %v1194 = vpack.c.b16 %v1170, %v1168
  %v1195 = vpack.c.b16 %v1173, %v1171
  %v1196 = vpack.c.b16 %v1174, %v1172
  %v1197 = vpack.c.b16 %v1177, %v1175
  %v1198 = vpack.c.b16 %v1178, %v1176
  %v1199 = vpack.c.b16 %v1181, %v1179
  %v1200 = vpack.c.b16 %v1182, %v1180
  %v1201 = vpack.c.b16 %v1185, %v1183
  %v1202 = vpack.c.b16 %v1186, %v1184
  %v1251 = vunpack.c.l.b16 %v1123
  %v1252 = vunpack.c.h.b16 %v1123
  %v1253 = vunpack.c.l.b16 %v1124
  %v1254 = vunpack.c.h.b16 %v1124
  %v1255 = vunpack.c.l.b16 %v1125
  %v1256 = vunpack.c.h.b16 %v1125
  %v1257 = vunpack.c.l.b16 %v1126
  %v1258 = vunpack.c.h.b16 %v1126
  %v1259 = vunpack.c.l.b16 %v1127
  %v1260 = vunpack.c.h.b16 %v1127
  %v1261 = vunpack.c.l.b16 %v1128
  %v1262 = vunpack.c.h.b16 %v1128
  %v1263 = vunpack.c.l.b16 %v1129
  %v1264 = vunpack.c.h.b16 %v1129
  %v1265 = vunpack.c.l.b16 %v1130
  %v1266 = vunpack.c.h.b16 %v1130
  %v1267 = vunpack.c.l.b16 %v1131
  %v1268 = vunpack.c.h.b16 %v1131
  %v1269 = vunpack.c.l.b16 %v1132
  %v1270 = vunpack.c.h.b16 %v1132
  %v1271 = vunpack.c.l.b16 %v1133
  %v1272 = vunpack.c.h.b16 %v1133
  %v1273 = vunpack.c.l.b16 %v1134
  %v1274 = vunpack.c.h.b16 %v1134
  %v1275 = vunpack.c.l.b16 %v1135
  %v1276 = vunpack.c.h.b16 %v1135
  %v1277 = vunpack.c.l.b16 %v1136
  %v1278 = vunpack.c.h.b16 %v1136
  %v1279 = vunpack.c.l.b16 %v1137
  %v1280 = vunpack.c.h.b16 %v1137
  %v1281 = vunpack.c.l.b16 %v1138
  %v1282 = vunpack.c.h.b16 %v1138
  %v1283 = vunpack.c.l.b16 %v1139
  %v1284 = vunpack.c.h.b16 %v1139
  %v1285 = vunpack.c.l.b16 %v1140
  %v1286 = vunpack.c.h.b16 %v1140
  %v1287 = vunpack.c.l.b16 %v1141
  %v1288 = vunpack.c.h.b16 %v1141
  %v1289 = vunpack.c.l.b16 %v1142
  %v1290 = vunpack.c.h.b16 %v1142
  %v1291 = vunpack.c.l.b16 %v1143
  %v1292 = vunpack.c.h.b16 %v1143
  %v1293 = vunpack.c.l.b16 %v1144
  %v1294 = vunpack.c.h.b16 %v1144
  %v1295 = vunpack.c.l.b16 %v1145
  %v1296 = vunpack.c.h.b16 %v1145
  %v1297 = vunpack.c.l.b16 %v1146
  %v1298 = vunpack.c.h.b16 %v1146
  %v1299 = vunpack.c.l.b16 %v1147
  %v1300 = vunpack.c.h.b16 %v1147
  %v1301 = vunpack.c.l.b16 %v1148
  %v1302 = vunpack.c.h.b16 %v1148
  %v1303 = vunpack.c.l.b16 %v1149
  %v1304 = vunpack.c.h.b16 %v1149
  %v1305 = vunpack.c.l.b16 %v1150
  %v1306 = vunpack.c.h.b16 %v1150
  %v1307 = vunpack.c.l.b16 %v1151
  %v1308 = vunpack.c.h.b16 %v1151
  %v1309 = vunpack.c.l.b16 %v1152
  %v1310 = vunpack.c.h.b16 %v1152
  %v1311 = vunpack.c.l.b16 %v1153
  %v1312 = vunpack.c.h.b16 %v1153
  %v1313 = vunpack.c.l.b16 %v1154
  %v1314 = vunpack.c.h.b16 %v1154
  %v1315 = vpack.c.b16 %v1253, %v1251
  %v1316 = vpack.c.b16 %v1254, %v1252
  %v1317 = vpack.c.b16 %v1257, %v1255
  %v1318 = vpack.c.b16 %v1258, %v1256
  %v1319 = vpack.c.b16 %v1261, %v1259
  %v1320 = vpack.c.b16 %v1262, %v1260
  %v1321 = vpack.c.b16 %v1265, %v1263
  %v1322 = vpack.c.b16 %v1266, %v1264
  %v1323 = vpack.c.b16 %v1269, %v1267
  %v1324 = vpack.c.b16 %v1270, %v1268
  %v1325 = vpack.c.b16 %v1273, %v1271
  %v1326 = vpack.c.b16 %v1274, %v1272
  %v1327 = vpack.c.b16 %v1277, %v1275
  %v1328 = vpack.c.b16 %v1278, %v1276
  %v1329 = vpack.c.b16 %v1281, %v1279
  %v1330 = vpack.c.b16 %v1282, %v1280
  %v1331 = vpack.c.b16 %v1285, %v1283
  %v1332 = vpack.c.b16 %v1286, %v1284
  %v1333 = vpack.c.b16 %v1289, %v1287
  %v1334 = vpack.c.b16 %v1290, %v1288
  %v1335 = vpack.c.b16 %v1293, %v1291
  %v1336 = vpack.c.b16 %v1294, %v1292
  %v1337 = vpack.c.b16 %v1297, %v1295
  %v1338 = vpack.c.b16 %v1298, %v1296
  %v1339 = vpack.c.b16 %v1301, %v1299
  %v1340 = vpack.c.b16 %v1302, %v1300
  %v1341 = vpack.c.b16 %v1305, %v1303
  %v1342 = vpack.c.b16 %v1306, %v1304
  %v1343 = vpack.c.b16 %v1309, %v1307
  %v1344 = vpack.c.b16 %v1310, %v1308
  %v1345 = vpack.c.b16 %v1313, %v1311
  %v1346 = vpack.c.b16 %v1314, %v1312
  %1379 = vmatprep.subr.bf16.mxu0 %v1316
  %1380 = vmatpush1.bf16.msra.mxu0 %v1315
  %1381 = vmatprep.subr.bf16.mxu0 %v1318
  %1382 = vmatpush1.bf16.msra.mxu0 %v1317
  %1383 = vmatprep.subr.bf16.mxu0 %v1320
  %1384 = vmatpush1.bf16.msra.mxu0 %v1319
  %1385 = vmatprep.subr.bf16.mxu0 %v1322
  %1386 = vmatpush1.bf16.msra.mxu0 %v1321
  %1387 = vmatprep.subr.bf16.mxu0 %v1324
  %1388 = vmatpush1.bf16.msra.mxu0 %v1323
  %1389 = vmatprep.subr.bf16.mxu0 %v1326
  %1390 = vmatpush1.bf16.msra.mxu0 %v1325
  %1391 = vmatprep.subr.bf16.mxu0 %v1328
  %1392 = vmatpush1.bf16.msra.mxu0 %v1327
  %1393 = vmatprep.subr.bf16.mxu0 %v1330
  %1394 = vmatpush1.bf16.msra.mxu0 %v1329
  %1395 = vmatprep.subr.bf16.mxu0 %v1332
  %1396 = vmatpush1.bf16.msra.mxu0 %v1331
  %1397 = vmatprep.subr.bf16.mxu0 %v1334
  %1398 = vmatpush1.bf16.msra.mxu0 %v1333
  %1399 = vmatprep.subr.bf16.mxu0 %v1336
  %1400 = vmatpush1.bf16.msra.mxu0 %v1335
  %1401 = vmatprep.subr.bf16.mxu0 %v1338
  %1402 = vmatpush1.bf16.msra.mxu0 %v1337
  %1403 = vmatprep.subr.bf16.mxu0 %v1340
  %1404 = vmatpush1.bf16.msra.mxu0 %v1339
  %1405 = vmatprep.subr.bf16.mxu0 %v1342
  %1406 = vmatpush1.bf16.msra.mxu0 %v1341
  %1407 = vmatprep.subr.bf16.mxu0 %v1344
  %1408 = vmatpush1.bf16.msra.mxu0 %v1343
  %1409 = vmatprep.subr.bf16.mxu0 %v1346
  %1410 = vmatpush1.bf16.msra.mxu0 %v1345
  %1411 = vmatprep.mubr.bf16.mxu0 %v1188
  %1412 = vmatmul.mubr.bf16.gmra.mrb[0].mxu0 %v1187
  %v1413 = vpop.f32.mrb[0].mxu0
  %v1414 = vadd.f32 0.0, %v1413
  %v1415 = vpop.f32.mrb[0].mxu0
  %v1416 = vadd.f32 0.0, %v1415
  %v1417 = vpop.f32.mrb[0].mxu0
  %v1418 = vadd.f32 0.0, %v1417
  %v1419 = vpop.f32.mrb[0].mxu0
  %v1420 = vadd.f32 0.0, %v1419
  %1421 = vmatprep.mubr.bf16.mxu0 %v1190
  %1422 = vmatmul.mubr.bf16.gmra.mrb[0].mxu0 %v1189
  %v1423 = vpop.f32.mrb[0].mxu0
  %v1424 = vadd.f32 0.0, %v1423
  %v1425 = vpop.f32.mrb[0].mxu0
  %v1426 = vadd.f32 0.0, %v1425
  %v1427 = vpop.f32.mrb[0].mxu0
  %v1428 = vadd.f32 0.0, %v1427
  %v1429 = vpop.f32.mrb[0].mxu0
  %v1430 = vadd.f32 0.0, %v1429
  %1431 = vmatprep.mubr.bf16.mxu0 %v1192
  %1432 = vmatmul.mubr.bf16.gmra.mrb[0].mxu0 %v1191
  %v1433 = vpop.f32.mrb[0].mxu0
  %v1434 = vadd.f32 0.0, %v1433
  %v1435 = vpop.f32.mrb[0].mxu0
  %v1436 = vadd.f32 0.0, %v1435
  %v1437 = vpop.f32.mrb[0].mxu0
  %v1438 = vadd.f32 0.0, %v1437
  %v1439 = vpop.f32.mrb[0].mxu0
  %v1440 = vadd.f32 0.0, %v1439
  %1441 = vmatprep.mubr.bf16.mxu0 %v1194
  %1442 = vmatmul.mubr.bf16.gmra.mrb[0].mxu0 %v1193
  %v1443 = vpop.f32.mrb[0].mxu0
  %v1444 = vadd.f32 0.0, %v1443
  %v1445 = vpop.f32.mrb[0].mxu0
  %v1446 = vadd.f32 0.0, %v1445
  %v1447 = vpop.f32.mrb[0].mxu0
  %v1448 = vadd.f32 0.0, %v1447
  %v1449 = vpop.f32.mrb[0].mxu0
  %v1450 = vadd.f32 0.0, %v1449
  %1451 = vmatprep.mubr.bf16.mxu0 %v1196
  %1452 = vmatmul.mubr.bf16.gmra.mrb[0].mxu0 %v1195
  %v1453 = vpop.f32.mrb[0].mxu0
  %v1454 = vadd.f32 0.0, %v1453
  %v1455 = vpop.f32.mrb[0].mxu0
  %v1456 = vadd.f32 0.0, %v1455
  %v1457 = vpop.f32.mrb[0].mxu0
  %v1458 = vadd.f32 0.0, %v1457
  %v1459 = vpop.f32.mrb[0].mxu0
  %v1460 = vadd.f32 0.0, %v1459
  %1461 = vmatprep.mubr.bf16.mxu0 %v1198
  %1462 = vmatmul.mubr.bf16.gmra.mrb[0].mxu0 %v1197
  %v1463 = vpop.f32.mrb[0].mxu0
  %v1464 = vadd.f32 0.0, %v1463
  %v1465 = vpop.f32.mrb[0].mxu0
  %v1466 = vadd.f32 0.0, %v1465
  %v1467 = vpop.f32.mrb[0].mxu0
  %v1468 = vadd.f32 0.0, %v1467
  %v1469 = vpop.f32.mrb[0].mxu0
  %v1470 = vadd.f32 0.0, %v1469
  %1471 = vmatprep.mubr.bf16.mxu0 %v1200
  %1472 = vmatmul.mubr.bf16.gmra.mrb[0].mxu0 %v1199
  %v1473 = vpop.f32.mrb[0].mxu0
  %v1474 = vadd.f32 0.0, %v1473
  %v1475 = vpop.f32.mrb[0].mxu0
  %v1476 = vadd.f32 0.0, %v1475
  %v1477 = vpop.f32.mrb[0].mxu0
  %v1478 = vadd.f32 0.0, %v1477
  %v1479 = vpop.f32.mrb[0].mxu0
  %v1480 = vadd.f32 0.0, %v1479
  %1481 = vmatprep.mubr.bf16.mxu0 %v1202
  %1482 = vmatmul.mubr.bf16.gmra.mrb[0].mxu0 %v1201
  %v1483 = vpop.f32.mrb[0].mxu0
  %v1484 = vadd.f32 0.0, %v1483
  %v1485 = vpop.f32.mrb[0].mxu0
  %v1486 = vadd.f32 0.0, %v1485
  %v1487 = vpop.f32.mrb[0].mxu0
  %v1488 = vadd.f32 0.0, %v1487
  %v1489 = vpop.f32.mrb[0].mxu0
  %v1490 = vadd.f32 0.0, %v1489
  %1491 = vdwg.mxu0
  %v1492 = vld [vmem:[#allocation2] sm:$0xff]
  %v1493 = vld [vmem:[#allocation2 + $0x8] sm:$0xff]
  %v1494 = vld [vmem:[#allocation2 + $0x10] sm:$0xff]
  %v1495 = vld [vmem:[#allocation2 + $0x18] sm:$0xff]
  %v1496 = vld [vmem:[#allocation2 + $0x20] sm:$0xff]
  %v1497 = vld [vmem:[#allocation2 + $0x28] sm:$0xff]
  %v1498 = vld [vmem:[#allocation2 + $0x30] sm:$0xff]
  %v1499 = vld [vmem:[#allocation2 + $0x38] sm:$0xff]
  %v1500 = vld [vmem:[#allocation2 + $0x40] sm:$0xff]
  %v1501 = vld [vmem:[#allocation2 + $0x48] sm:$0xff]
  %v1502 = vld [vmem:[#allocation2 + $0x50] sm:$0xff]
  %v1503 = vld [vmem:[#allocation2 + $0x58] sm:$0xff]
  %v1504 = vld [vmem:[#allocation2 + $0x60] sm:$0xff]
  %v1505 = vld [vmem:[#allocation2 + $0x68] sm:$0xff]
  %v1506 = vld [vmem:[#allocation2 + $0x70] sm:$0xff]
  %v1507 = vld [vmem:[#allocation2 + $0x78] sm:$0xff]
  %v1508 = vld [vmem:[#allocation2 + $0x80] sm:$0xff]
  %v1509 = vld [vmem:[#allocation2 + $0x88] sm:$0xff]
  %v1510 = vld [vmem:[#allocation2 + $0x90] sm:$0xff]
  %v1511 = vld [vmem:[#allocation2 + $0x98] sm:$0xff]
  %v1512 = vld [vmem:[#allocation2 + $0xa0] sm:$0xff]
  %v1513 = vld [vmem:[#allocation2 + $0xa8] sm:$0xff]
  %v1514 = vld [vmem:[#allocation2 + $0xb0] sm:$0xff]
  %v1515 = vld [vmem:[#allocation2 + $0xb8] sm:$0xff]
  %v1516 = vld [vmem:[#allocation2 + $0xc0] sm:$0xff]
  %v1517 = vld [vmem:[#allocation2 + $0xc8] sm:$0xff]
  %v1518 = vld [vmem:[#allocation2 + $0xd0] sm:$0xff]
  %v1519 = vld [vmem:[#allocation2 + $0xd8] sm:$0xff]
  %v1520 = vld [vmem:[#allocation2 + $0xe0] sm:$0xff]
  %v1521 = vld [vmem:[#allocation2 + $0xe8] sm:$0xff]
  %v1522 = vld [vmem:[#allocation2 + $0xf0] sm:$0xff]
  %v1523 = vld [vmem:[#allocation2 + $0xf8] sm:$0xff]
  %v1524 = vadd.f32 %v1492, %v1414
  %v1525 = vadd.f32 %v1493, %v1416
  %v1526 = vadd.f32 %v1494, %v1418
  %v1527 = vadd.f32 %v1495, %v1420
  %v1528 = vadd.f32 %v1496, %v1424
  %v1529 = vadd.f32 %v1497, %v1426
  %v1530 = vadd.f32 %v1498, %v1428
  %v1531 = vadd.f32 %v1499, %v1430
  %v1532 = vadd.f32 %v1500, %v1434
  %v1533 = vadd.f32 %v1501, %v1436
  %v1534 = vadd.f32 %v1502, %v1438
  %v1535 = vadd.f32 %v1503, %v1440
  %v1536 = vadd.f32 %v1504, %v1444
  %v1537 = vadd.f32 %v1505, %v1446
  %v1538 = vadd.f32 %v1506, %v1448
  %v1539 = vadd.f32 %v1507, %v1450
  %v1540 = vadd.f32 %v1508, %v1454
  %v1541 = vadd.f32 %v1509, %v1456
  %v1542 = vadd.f32 %v1510, %v1458
  %v1543 = vadd.f32 %v1511, %v1460
  %v1544 = vadd.f32 %v1512, %v1464
  %v1545 = vadd.f32 %v1513, %v1466
  %v1546 = vadd.f32 %v1514, %v1468
  %v1547 = vadd.f32 %v1515, %v1470
  %v1548 = vadd.f32 %v1516, %v1474
  %v1549 = vadd.f32 %v1517, %v1476
  %v1550 = vadd.f32 %v1518, %v1478
  %v1551 = vadd.f32 %v1519, %v1480
  %v1552 = vadd.f32 %v1520, %v1484
  %v1553 = vadd.f32 %v1521, %v1486
  %v1554 = vadd.f32 %v1522, %v1488
  %v1555 = vadd.f32 %v1523, %v1490
  %1556 = vst [vmem:[#allocation2] sm:$0xff] %v1524
  %1557 = vst [vmem:[#allocation2 + $0x8] sm:$0xff] %v1525
  %1558 = vst [vmem:[#allocation2 + $0x10] sm:$0xff] %v1526
  %1559 = vst [vmem:[#allocation2 + $0x18] sm:$0xff] %v1527
  %1560 = vst [vmem:[#allocation2 + $0x20] sm:$0xff] %v1528
  %1561 = vst [vmem:[#allocation2 + $0x28] sm:$0xff] %v1529
  %1562 = vst [vmem:[#allocation2 + $0x30] sm:$0xff] %v1530
  %1563 = vst [vmem:[#allocation2 + $0x38] sm:$0xff] %v1531
  %1564 = vst [vmem:[#allocation2 + $0x40] sm:$0xff] %v1532
  %1565 = vst [vmem:[#allocation2 + $0x48] sm:$0xff] %v1533
  %1566 = vst [vmem:[#allocation2 + $0x50] sm:$0xff] %v1534
  %1567 = vst [vmem:[#allocation2 + $0x58] sm:$0xff] %v1535
  %1568 = vst [vmem:[#allocation2 + $0x60] sm:$0xff] %v1536
  %1569 = vst [vmem:[#allocation2 + $0x68] sm:$0xff] %v1537
  %1570 = vst [vmem:[#allocation2 + $0x70] sm:$0xff] %v1538
  %1571 = vst [vmem:[#allocation2 + $0x78] sm:$0xff] %v1539
  %1572 = vst [vmem:[#allocation2 + $0x80] sm:$0xff] %v1540
  %1573 = vst [vmem:[#allocation2 + $0x88] sm:$0xff] %v1541
  %1574 = vst [vmem:[#allocation2 + $0x90] sm:$0xff] %v1542
  %1575 = vst [vmem:[#allocation2 + $0x98] sm:$0xff] %v1543
  %1576 = vst [vmem:[#allocation2 + $0xa0] sm:$0xff] %v1544
  %1577 = vst [vmem:[#allocation2 + $0xa8] sm:$0xff] %v1545
  %1578 = vst [vmem:[#allocation2 + $0xb0] sm:$0xff] %v1546
  %1579 = vst [vmem:[#allocation2 + $0xb8] sm:$0xff] %v1547
  %1580 = vst [vmem:[#allocation2 + $0xc0] sm:$0xff] %v1548
  %1581 = vst [vmem:[#allocation2 + $0xc8] sm:$0xff] %v1549
  %1582 = vst [vmem:[#allocation2 + $0xd0] sm:$0xff] %v1550
  %1583 = vst [vmem:[#allocation2 + $0xd8] sm:$0xff] %v1551
  %1584 = vst [vmem:[#allocation2 + $0xe0] sm:$0xff] %v1552
  %1585 = vst [vmem:[#allocation2 + $0xe8] sm:$0xff] %v1553
  %1586 = vst [vmem:[#allocation2 + $0xf0] sm:$0xff] %v1554
  %1587 = vst [vmem:[#allocation2 + $0xf8] sm:$0xff] %v1555
  %v1620 = vunpack.c.l.b16 %v294
  %v1621 = vunpack.c.l.b16 %v295
  %v1622 = vunpack.c.h.b16 %v294
  %v1623 = vunpack.c.h.b16 %v295
  %v1624 = vunpack.c.l.b16 %v296
  %v1625 = vunpack.c.l.b16 %v297
  %v1626 = vunpack.c.h.b16 %v296
  %v1627 = vunpack.c.h.b16 %v297
  %v1628 = vunpack.c.l.b16 %v298
  %v1629 = vunpack.c.l.b16 %v299
  %v1630 = vunpack.c.h.b16 %v298
  %v1631 = vunpack.c.h.b16 %v299
  %v1632 = vunpack.c.l.b16 %v300
  %v1633 = vunpack.c.l.b16 %v301
  %v1634 = vunpack.c.h.b16 %v300
  %v1635 = vunpack.c.h.b16 %v301
  %v1636 = vunpack.c.l.b16 %v302
  %v1637 = vunpack.c.l.b16 %v303
  %v1638 = vunpack.c.h.b16 %v302
  %v1639 = vunpack.c.h.b16 %v303
  %v1640 = vunpack.c.l.b16 %v304
  %v1641 = vunpack.c.l.b16 %v305
  %v1642 = vunpack.c.h.b16 %v304
  %v1643 = vunpack.c.h.b16 %v305
  %v1644 = vunpack.c.l.b16 %v306
  %v1645 = vunpack.c.l.b16 %v307
  %v1646 = vunpack.c.h.b16 %v306
  %v1647 = vunpack.c.h.b16 %v307
  %v1648 = vunpack.c.l.b16 %v308
  %v1649 = vunpack.c.l.b16 %v309
  %v1650 = vunpack.c.h.b16 %v308
  %v1651 = vunpack.c.h.b16 %v309
  %v1652 = vunpack.c.l.b16 %v314
  %v1653 = vunpack.c.l.b16 %v315
  %v1654 = vunpack.c.h.b16 %v314
  %v1655 = vunpack.c.h.b16 %v315
  %v1656 = vunpack.c.l.b16 %v316
  %v1657 = vunpack.c.l.b16 %v317
  %v1658 = vunpack.c.h.b16 %v316
  %v1659 = vunpack.c.h.b16 %v317
  %v1660 = vunpack.c.l.b16 %v318
  %v1661 = vunpack.c.l.b16 %v319
  %v1662 = vunpack.c.h.b16 %v318
  %v1663 = vunpack.c.h.b16 %v319
  %v1664 = vunpack.c.l.b16 %v320
  %v1665 = vunpack.c.l.b16 %v321
  %v1666 = vunpack.c.h.b16 %v320
  %v1667 = vunpack.c.h.b16 %v321
  %v1668 = vunpack.c.l.b16 %v322
  %v1669 = vunpack.c.l.b16 %v323
  %v1670 = vunpack.c.h.b16 %v322
  %v1671 = vunpack.c.h.b16 %v323
  %v1672 = vunpack.c.l.b16 %v324
  %v1673 = vunpack.c.l.b16 %v325
  %v1674 = vunpack.c.h.b16 %v324
  %v1675 = vunpack.c.h.b16 %v325
  %v1676 = vunpack.c.l.b16 %v326
  %v1677 = vunpack.c.l.b16 %v327
  %v1678 = vunpack.c.h.b16 %v326
  %v1679 = vunpack.c.h.b16 %v327
  %v1680 = vunpack.c.l.b16 %v328
  %v1681 = vunpack.c.l.b16 %v329
  %v1682 = vunpack.c.h.b16 %v328
  %v1683 = vunpack.c.h.b16 %v329
  %v1684 = vpack.c.b16 %v1621, %v1620
  %v1685 = vpack.c.b16 %v1623, %v1622
  %v1686 = vpack.c.b16 %v1625, %v1624
  %v1687 = vpack.c.b16 %v1627, %v1626
  %v1688 = vpack.c.b16 %v1629, %v1628
  %v1689 = vpack.c.b16 %v1631, %v1630
  %v1690 = vpack.c.b16 %v1633, %v1632
  %v1691 = vpack.c.b16 %v1635, %v1634
  %v1692 = vpack.c.b16 %v1637, %v1636
  %v1693 = vpack.c.b16 %v1639, %v1638
  %v1694 = vpack.c.b16 %v1641, %v1640
  %v1695 = vpack.c.b16 %v1643, %v1642
  %v1696 = vpack.c.b16 %v1645, %v1644
  %v1697 = vpack.c.b16 %v1647, %v1646
  %v1698 = vpack.c.b16 %v1649, %v1648
  %v1699 = vpack.c.b16 %v1651, %v1650
  %v1700 = vpack.c.b16 %v1653, %v1652
  %v1701 = vpack.c.b16 %v1655, %v1654
  %v1702 = vpack.c.b16 %v1657, %v1656
  %v1703 = vpack.c.b16 %v1659, %v1658
  %v1704 = vpack.c.b16 %v1661, %v1660
  %v1705 = vpack.c.b16 %v1663, %v1662
  %v1706 = vpack.c.b16 %v1665, %v1664
  %v1707 = vpack.c.b16 %v1667, %v1666
  %v1708 = vpack.c.b16 %v1669, %v1668
  %v1709 = vpack.c.b16 %v1671, %v1670
  %v1710 = vpack.c.b16 %v1673, %v1672
  %v1711 = vpack.c.b16 %v1675, %v1674
  %v1712 = vpack.c.b16 %v1677, %v1676
  %v1713 = vpack.c.b16 %v1679, %v1678
  %v1714 = vpack.c.b16 %v1681, %v1680
  %v1715 = vpack.c.b16 %v1683, %v1682
  %vm1716 = vcmask 1042432
  %vm1717 = vcmask 1046532
  %vm1718 = vmor %vm1716, %vm1717
  %v1719 = vrot.slane %v1684, 5
  %v1720 = vrot.slane %v1719, 4
  %v1721 = vrot.slane %v1685, 5
  %v1722 = vsel %vm1718, %v1720, %v1721
  %v1723 = vrot.slane %v1686, 5
  %v1724 = vrot.slane %v1723, 4
  %v1725 = vrot.slane %v1687, 5
  %v1726 = vsel %vm1718, %v1724, %v1725
  %v1727 = vrot.slane %v1688, 5
  %v1728 = vrot.slane %v1727, 4
  %v1729 = vrot.slane %v1689, 5
  %v1730 = vsel %vm1718, %v1728, %v1729
  %v1731 = vrot.slane %v1690, 5
  %v1732 = vrot.slane %v1731, 4
  %v1733 = vrot.slane %v1691, 5
  %v1734 = vsel %vm1718, %v1732, %v1733
  %v1735 = vrot.slane %v1692, 5
  %v1736 = vrot.slane %v1735, 4
  %v1737 = vrot.slane %v1693, 5
  %v1738 = vsel %vm1718, %v1736, %v1737
  %v1739 = vrot.slane %v1694, 5
  %v1740 = vrot.slane %v1739, 4
  %v1741 = vrot.slane %v1695, 5
  %v1742 = vsel %vm1718, %v1740, %v1741
  %v1743 = vrot.slane %v1696, 5
  %v1744 = vrot.slane %v1743, 4
  %v1745 = vrot.slane %v1697, 5
  %v1746 = vsel %vm1718, %v1744, %v1745
  %v1747 = vrot.slane %v1698, 5
  %v1748 = vrot.slane %v1747, 4
  %v1749 = vrot.slane %v1699, 5
  %v1750 = vsel %vm1718, %v1748, %v1749
  %v1751 = vrot.slane %v1700, 5
  %v1752 = vrot.slane %v1751, 4
  %v1753 = vrot.slane %v1701, 5
  %v1754 = vsel %vm1718, %v1752, %v1753
  %v1755 = vrot.slane %v1702, 5
  %v1756 = vrot.slane %v1755, 4
  %v1757 = vrot.slane %v1703, 5
  %v1758 = vsel %vm1718, %v1756, %v1757
  %v1759 = vrot.slane %v1704, 5
  %v1760 = vrot.slane %v1759, 4
  %v1761 = vrot.slane %v1705, 5
  %v1762 = vsel %vm1718, %v1760, %v1761
  %v1763 = vrot.slane %v1706, 5
  %v1764 = vrot.slane %v1763, 4
  %v1765 = vrot.slane %v1707, 5
  %v1766 = vsel %vm1718, %v1764, %v1765
  %v1767 = vrot.slane %v1708, 5
  %v1768 = vrot.slane %v1767, 4
  %v1769 = vrot.slane %v1709, 5
  %v1770 = vsel %vm1718, %v1768, %v1769
  %v1771 = vrot.slane %v1710, 5
  %v1772 = vrot.slane %v1771, 4
  %v1773 = vrot.slane %v1711, 5
  %v1774 = vsel %vm1718, %v1772, %v1773
  %v1775 = vrot.slane %v1712, 5
  %v1776 = vrot.slane %v1775, 4
  %v1777 = vrot.slane %v1713, 5
  %v1778 = vsel %vm1718, %v1776, %v1777
  %v1779 = vrot.slane %v1714, 5
  %v1780 = vrot.slane %v1779, 4
  %v1781 = vrot.slane %v1715, 5
  %v1782 = vsel %vm1718, %v1780, %v1781
  %s1783 = scalar_lea.vmem %s1, 512
  %v1784 = vld [vmem:[%s1783] sm:$0xff]
  %v1785 = vld [vmem:[%s1783 + $0x8] sm:$0xff]
  %v1786 = vld [vmem:[%s1783 + $0x10] sm:$0xff]
  %v1787 = vld [vmem:[%s1783 + $0x18] sm:$0xff]
  %v1788 = vld [vmem:[%s1783 + $0x20] sm:$0xff]
  %v1789 = vld [vmem:[%s1783 + $0x28] sm:$0xff]
  %v1790 = vld [vmem:[%s1783 + $0x30] sm:$0xff]
  %v1791 = vld [vmem:[%s1783 + $0x38] sm:$0xff]
  %v1792 = vld [vmem:[%s1783 + $0x40] sm:$0xff]
  %v1793 = vld [vmem:[%s1783 + $0x48] sm:$0xff]
  %v1794 = vld [vmem:[%s1783 + $0x50] sm:$0xff]
  %v1795 = vld [vmem:[%s1783 + $0x58] sm:$0xff]
  %v1796 = vld [vmem:[%s1783 + $0x60] sm:$0xff]
  %v1797 = vld [vmem:[%s1783 + $0x68] sm:$0xff]
  %v1798 = vld [vmem:[%s1783 + $0x70] sm:$0xff]
  %v1799 = vld [vmem:[%s1783 + $0x78] sm:$0xff]
  %v1800 = vld [vmem:[%s1783 + $0x80] sm:$0xff]
  %v1801 = vld [vmem:[%s1783 + $0x88] sm:$0xff]
  %v1802 = vld [vmem:[%s1783 + $0x90] sm:$0xff]
  %v1803 = vld [vmem:[%s1783 + $0x98] sm:$0xff]
  %v1804 = vld [vmem:[%s1783 + $0xa0] sm:$0xff]
  %v1805 = vld [vmem:[%s1783 + $0xa8] sm:$0xff]
  %v1806 = vld [vmem:[%s1783 + $0xb0] sm:$0xff]
  %v1807 = vld [vmem:[%s1783 + $0xb8] sm:$0xff]
  %v1808 = vld [vmem:[%s1783 + $0xc0] sm:$0xff]
  %v1809 = vld [vmem:[%s1783 + $0xc8] sm:$0xff]
  %v1810 = vld [vmem:[%s1783 + $0xd0] sm:$0xff]
  %v1811 = vld [vmem:[%s1783 + $0xd8] sm:$0xff]
  %v1812 = vld [vmem:[%s1783 + $0xe0] sm:$0xff]
  %v1813 = vld [vmem:[%s1783 + $0xe8] sm:$0xff]
  %v1814 = vld [vmem:[%s1783 + $0xf0] sm:$0xff]
  %v1815 = vld [vmem:[%s1783 + $0xf8] sm:$0xff]
  %v1816 = vunpack.c.l.b16 %v1722
  %v1817 = vunpack.c.h.b16 %v1722
  %v1818 = vunpack.c.l.b16 %v1726
  %v1819 = vunpack.c.h.b16 %v1726
  %v1820 = vunpack.c.l.b16 %v1730
  %v1821 = vunpack.c.h.b16 %v1730
  %v1822 = vunpack.c.l.b16 %v1734
  %v1823 = vunpack.c.h.b16 %v1734
  %v1824 = vunpack.c.l.b16 %v1738
  %v1825 = vunpack.c.h.b16 %v1738
  %v1826 = vunpack.c.l.b16 %v1742
  %v1827 = vunpack.c.h.b16 %v1742
  %v1828 = vunpack.c.l.b16 %v1746
  %v1829 = vunpack.c.h.b16 %v1746
  %v1830 = vunpack.c.l.b16 %v1750
  %v1831 = vunpack.c.h.b16 %v1750
  %v1832 = vunpack.c.l.b16 %v1754
  %v1833 = vunpack.c.h.b16 %v1754
  %v1834 = vunpack.c.l.b16 %v1758
  %v1835 = vunpack.c.h.b16 %v1758
  %v1836 = vunpack.c.l.b16 %v1762
  %v1837 = vunpack.c.h.b16 %v1762
  %v1838 = vunpack.c.l.b16 %v1766
  %v1839 = vunpack.c.h.b16 %v1766
  %v1840 = vunpack.c.l.b16 %v1770
  %v1841 = vunpack.c.h.b16 %v1770
  %v1842 = vunpack.c.l.b16 %v1774
  %v1843 = vunpack.c.h.b16 %v1774
  %v1844 = vunpack.c.l.b16 %v1778
  %v1845 = vunpack.c.h.b16 %v1778
  %v1846 = vunpack.c.l.b16 %v1782
  %v1847 = vunpack.c.h.b16 %v1782
  %v1848 = vpack.c.b16 %v1818, %v1816
  %v1849 = vpack.c.b16 %v1819, %v1817
  %v1850 = vpack.c.b16 %v1822, %v1820
  %v1851 = vpack.c.b16 %v1823, %v1821
  %v1852 = vpack.c.b16 %v1826, %v1824
  %v1853 = vpack.c.b16 %v1827, %v1825
  %v1854 = vpack.c.b16 %v1830, %v1828
  %v1855 = vpack.c.b16 %v1831, %v1829
  %v1856 = vpack.c.b16 %v1834, %v1832
  %v1857 = vpack.c.b16 %v1835, %v1833
  %v1858 = vpack.c.b16 %v1838, %v1836
  %v1859 = vpack.c.b16 %v1839, %v1837
  %v1860 = vpack.c.b16 %v1842, %v1840
  %v1861 = vpack.c.b16 %v1843, %v1841
  %v1862 = vpack.c.b16 %v1846, %v1844
  %v1863 = vpack.c.b16 %v1847, %v1845
  %v1912 = vunpack.c.l.b16 %v1784
  %v1913 = vunpack.c.h.b16 %v1784
  %v1914 = vunpack.c.l.b16 %v1785
  %v1915 = vunpack.c.h.b16 %v1785
  %v1916 = vunpack.c.l.b16 %v1786
  %v1917 = vunpack.c.h.b16 %v1786
  %v1918 = vunpack.c.l.b16 %v1787
  %v1919 = vunpack.c.h.b16 %v1787
  %v1920 = vunpack.c.l.b16 %v1788
  %v1921 = vunpack.c.h.b16 %v1788
  %v1922 = vunpack.c.l.b16 %v1789
  %v1923 = vunpack.c.h.b16 %v1789
  %v1924 = vunpack.c.l.b16 %v1790
  %v1925 = vunpack.c.h.b16 %v1790
  %v1926 = vunpack.c.l.b16 %v1791
  %v1927 = vunpack.c.h.b16 %v1791
  %v1928 = vunpack.c.l.b16 %v1792
  %v1929 = vunpack.c.h.b16 %v1792
  %v1930 = vunpack.c.l.b16 %v1793
  %v1931 = vunpack.c.h.b16 %v1793
  %v1932 = vunpack.c.l.b16 %v1794
  %v1933 = vunpack.c.h.b16 %v1794
  %v1934 = vunpack.c.l.b16 %v1795
  %v1935 = vunpack.c.h.b16 %v1795
  %v1936 = vunpack.c.l.b16 %v1796
  %v1937 = vunpack.c.h.b16 %v1796
  %v1938 = vunpack.c.l.b16 %v1797
  %v1939 = vunpack.c.h.b16 %v1797
  %v1940 = vunpack.c.l.b16 %v1798
  %v1941 = vunpack.c.h.b16 %v1798
  %v1942 = vunpack.c.l.b16 %v1799
  %v1943 = vunpack.c.h.b16 %v1799
  %v1944 = vunpack.c.l.b16 %v1800
  %v1945 = vunpack.c.h.b16 %v1800
  %v1946 = vunpack.c.l.b16 %v1801
  %v1947 = vunpack.c.h.b16 %v1801
  %v1948 = vunpack.c.l.b16 %v1802
  %v1949 = vunpack.c.h.b16 %v1802
  %v1950 = vunpack.c.l.b16 %v1803
  %v1951 = vunpack.c.h.b16 %v1803
  %v1952 = vunpack.c.l.b16 %v1804
  %v1953 = vunpack.c.h.b16 %v1804
  %v1954 = vunpack.c.l.b16 %v1805
  %v1955 = vunpack.c.h.b16 %v1805
  %v1956 = vunpack.c.l.b16 %v1806
  %v1957 = vunpack.c.h.b16 %v1806
  %v1958 = vunpack.c.l.b16 %v1807
  %v1959 = vunpack.c.h.b16 %v1807
  %v1960 = vunpack.c.l.b16 %v1808
  %v1961 = vunpack.c.h.b16 %v1808
  %v1962 = vunpack.c.l.b16 %v1809
  %v1963 = vunpack.c.h.b16 %v1809
  %v1964 = vunpack.c.l.b16 %v1810
  %v1965 = vunpack.c.h.b16 %v1810
  %v1966 = vunpack.c.l.b16 %v1811
  %v1967 = vunpack.c.h.b16 %v1811
  %v1968 = vunpack.c.l.b16 %v1812
  %v1969 = vunpack.c.h.b16 %v1812
  %v1970 = vunpack.c.l.b16 %v1813
  %v1971 = vunpack.c.h.b16 %v1813
  %v1972 = vunpack.c.l.b16 %v1814
  %v1973 = vunpack.c.h.b16 %v1814
  %v1974 = vunpack.c.l.b16 %v1815
  %v1975 = vunpack.c.h.b16 %v1815
  %v1976 = vpack.c.b16 %v1914, %v1912
  %v1977 = vpack.c.b16 %v1915, %v1913
  %v1978 = vpack.c.b16 %v1918, %v1916
  %v1979 = vpack.c.b16 %v1919, %v1917
  %v1980 = vpack.c.b16 %v1922, %v1920
  %v1981 = vpack.c.b16 %v1923, %v1921
  %v1982 = vpack.c.b16 %v1926, %v1924
  %v1983 = vpack.c.b16 %v1927, %v1925
  %v1984 = vpack.c.b16 %v1930, %v1928
  %v1985 = vpack.c.b16 %v1931, %v1929
  %v1986 = vpack.c.b16 %v1934, %v1932
  %v1987 = vpack.c.b16 %v1935, %v1933
  %v1988 = vpack.c.b16 %v1938, %v1936
  %v1989 = vpack.c.b16 %v1939, %v1937
  %v1990 = vpack.c.b16 %v1942, %v1940
  %v1991 = vpack.c.b16 %v1943, %v1941
  %v1992 = vpack.c.b16 %v1946, %v1944
  %v1993 = vpack.c.b16 %v1947, %v1945
  %v1994 = vpack.c.b16 %v1950, %v1948
  %v1995 = vpack.c.b16 %v1951, %v1949
  %v1996 = vpack.c.b16 %v1954, %v1952
  %v1997 = vpack.c.b16 %v1955, %v1953
  %v1998 = vpack.c.b16 %v1958, %v1956
  %v1999 = vpack.c.b16 %v1959, %v1957
  %v2000 = vpack.c.b16 %v1962, %v1960
  %v2001 = vpack.c.b16 %v1963, %v1961
  %v2002 = vpack.c.b16 %v1966, %v1964
  %v2003 = vpack.c.b16 %v1967, %v1965
  %v2004 = vpack.c.b16 %v1970, %v1968
  %v2005 = vpack.c.b16 %v1971, %v1969
  %v2006 = vpack.c.b16 %v1974, %v1972
  %v2007 = vpack.c.b16 %v1975, %v1973
  %2040 = vmatprep.subr.bf16.mxu0 %v1977
  %2041 = vmatpush1.bf16.msra.mxu0 %v1976
  %2042 = vmatprep.subr.bf16.mxu0 %v1979
  %2043 = vmatpush1.bf16.msra.mxu0 %v1978
  %2044 = vmatprep.subr.bf16.mxu0 %v1981
  %2045 = vmatpush1.bf16.msra.mxu0 %v1980
  %2046 = vmatprep.subr.bf16.mxu0 %v1983
  %2047 = vmatpush1.bf16.msra.mxu0 %v1982
  %2048 = vmatprep.subr.bf16.mxu0 %v1985
  %2049 = vmatpush1.bf16.msra.mxu0 %v1984
  %2050 = vmatprep.subr.bf16.mxu0 %v1987
  %2051 = vmatpush1.bf16.msra.mxu0 %v1986
  %2052 = vmatprep.subr.bf16.mxu0 %v1989
  %2053 = vmatpush1.bf16.msra.mxu0 %v1988
  %2054 = vmatprep.subr.bf16.mxu0 %v1991
  %2055 = vmatpush1.bf16.msra.mxu0 %v1990
  %2056 = vmatprep.subr.bf16.mxu0 %v1993
  %2057 = vmatpush1.bf16.msra.mxu0 %v1992
  %2058 = vmatprep.subr.bf16.mxu0 %v1995
  %2059 = vmatpush1.bf16.msra.mxu0 %v1994
  %2060 = vmatprep.subr.bf16.mxu0 %v1997
  %2061 = vmatpush1.bf16.msra.mxu0 %v1996
  %2062 = vmatprep.subr.bf16.mxu0 %v1999
  %2063 = vmatpush1.bf16.msra.mxu0 %v1998
  %2064 = vmatprep.subr.bf16.mxu0 %v2001
  %2065 = vmatpush1.bf16.msra.mxu0 %v2000
  %2066 = vmatprep.subr.bf16.mxu0 %v2003
  %2067 = vmatpush1.bf16.msra.mxu0 %v2002
  %2068 = vmatprep.subr.bf16.mxu0 %v2005
  %2069 = vmatpush1.bf16.msra.mxu0 %v2004
  %2070 = vmatprep.subr.bf16.mxu0 %v2007
  %2071 = vmatpush1.bf16.msra.mxu0 %v2006
  %2072 = vmatprep.mubr.bf16.mxu0 %v1849
  %2073 = vmatmul.mubr.bf16.gmra.mrb[0].mxu0 %v1848
  %v2074 = vpop.f32.mrb[0].mxu0
  %v2075 = vadd.f32 0.0, %v2074
  %v2076 = vpop.f32.mrb[0].mxu0
  %v2077 = vadd.f32 0.0, %v2076
  %v2078 = vpop.f32.mrb[0].mxu0
  %v2079 = vadd.f32 0.0, %v2078
  %v2080 = vpop.f32.mrb[0].mxu0
  %v2081 = vadd.f32 0.0, %v2080
  %2082 = vmatprep.mubr.bf16.mxu0 %v1851
  %2083 = vmatmul.mubr.bf16.gmra.mrb[0].mxu0 %v1850
  %v2084 = vpop.f32.mrb[0].mxu0
  %v2085 = vadd.f32 0.0, %v2084
  %v2086 = vpop.f32.mrb[0].mxu0
  %v2087 = vadd.f32 0.0, %v2086
  %v2088 = vpop.f32.mrb[0].mxu0
  %v2089 = vadd.f32 0.0, %v2088
  %v2090 = vpop.f32.mrb[0].mxu0
  %v2091 = vadd.f32 0.0, %v2090
  %2092 = vmatprep.mubr.bf16.mxu0 %v1853
  %2093 = vmatmul.mubr.bf16.gmra.mrb[0].mxu0 %v1852
  %v2094 = vpop.f32.mrb[0].mxu0
  %v2095 = vadd.f32 0.0, %v2094
  %v2096 = vpop.f32.mrb[0].mxu0
  %v2097 = vadd.f32 0.0, %v2096
  %v2098 = vpop.f32.mrb[0].mxu0
  %v2099 = vadd.f32 0.0, %v2098
  %v2100 = vpop.f32.mrb[0].mxu0
  %v2101 = vadd.f32 0.0, %v2100
  %2102 = vmatprep.mubr.bf16.mxu0 %v1855
  %2103 = vmatmul.mubr.bf16.gmra.mrb[0].mxu0 %v1854
  %v2104 = vpop.f32.mrb[0].mxu0
  %v2105 = vadd.f32 0.0, %v2104
  %v2106 = vpop.f32.mrb[0].mxu0
  %v2107 = vadd.f32 0.0, %v2106
  %v2108 = vpop.f32.mrb[0].mxu0
  %v2109 = vadd.f32 0.0, %v2108
  %v2110 = vpop.f32.mrb[0].mxu0
  %v2111 = vadd.f32 0.0, %v2110
  %2112 = vmatprep.mubr.bf16.mxu0 %v1857
  %2113 = vmatmul.mubr.bf16.gmra.mrb[0].mxu0 %v1856
  %v2114 = vpop.f32.mrb[0].mxu0
  %v2115 = vadd.f32 0.0, %v2114
  %v2116 = vpop.f32.mrb[0].mxu0
  %v2117 = vadd.f32 0.0, %v2116
  %v2118 = vpop.f32.mrb[0].mxu0
  %v2119 = vadd.f32 0.0, %v2118
  %v2120 = vpop.f32.mrb[0].mxu0
  %v2121 = vadd.f32 0.0, %v2120
  %2122 = vmatprep.mubr.bf16.mxu0 %v1859
  %2123 = vmatmul.mubr.bf16.gmra.mrb[0].mxu0 %v1858
  %v2124 = vpop.f32.mrb[0].mxu0
  %v2125 = vadd.f32 0.0, %v2124
  %v2126 = vpop.f32.mrb[0].mxu0
  %v2127 = vadd.f32 0.0, %v2126
  %v2128 = vpop.f32.mrb[0].mxu0
  %v2129 = vadd.f32 0.0, %v2128
  %v2130 = vpop.f32.mrb[0].mxu0
  %v2131 = vadd.f32 0.0, %v2130
  %2132 = vmatprep.mubr.bf16.mxu0 %v1861
  %2133 = vmatmul.mubr.bf16.gmra.mrb[0].mxu0 %v1860
  %v2134 = vpop.f32.mrb[0].mxu0
  %v2135 = vadd.f32 0.0, %v2134
  %v2136 = vpop.f32.mrb[0].mxu0
  %v2137 = vadd.f32 0.0, %v2136
  %v2138 = vpop.f32.mrb[0].mxu0
  %v2139 = vadd.f32 0.0, %v2138
  %v2140 = vpop.f32.mrb[0].mxu0
  %v2141 = vadd.f32 0.0, %v2140
  %2142 = vmatprep.mubr.bf16.mxu0 %v1863
  %2143 = vmatmul.mubr.bf16.gmra.mrb[0].mxu0 %v1862
  %v2144 = vpop.f32.mrb[0].mxu0
  %v2145 = vadd.f32 0.0, %v2144
  %v2146 = vpop.f32.mrb[0].mxu0
  %v2147 = vadd.f32 0.0, %v2146
  %v2148 = vpop.f32.mrb[0].mxu0
  %v2149 = vadd.f32 0.0, %v2148
  %v2150 = vpop.f32.mrb[0].mxu0
  %v2151 = vadd.f32 0.0, %v2150
  %2152 = vdwg.mxu0
  %v2153 = vld [vmem:[#allocation2] sm:$0xff]
  %v2154 = vld [vmem:[#allocation2 + $0x8] sm:$0xff]
  %v2155 = vld [vmem:[#allocation2 + $0x10] sm:$0xff]
  %v2156 = vld [vmem:[#allocation2 + $0x18] sm:$0xff]
  %v2157 = vld [vmem:[#allocation2 + $0x20] sm:$0xff]
  %v2158 = vld [vmem:[#allocation2 + $0x28] sm:$0xff]
  %v2159 = vld [vmem:[#allocation2 + $0x30] sm:$0xff]
  %v2160 = vld [vmem:[#allocation2 + $0x38] sm:$0xff]
  %v2161 = vld [vmem:[#allocation2 + $0x40] sm:$0xff]
  %v2162 = vld [vmem:[#allocation2 + $0x48] sm:$0xff]
  %v2163 = vld [vmem:[#allocation2 + $0x50] sm:$0xff]
  %v2164 = vld [vmem:[#allocation2 + $0x58] sm:$0xff]
  %v2165 = vld [vmem:[#allocation2 + $0x60] sm:$0xff]
  %v2166 = vld [vmem:[#allocation2 + $0x68] sm:$0xff]
  %v2167 = vld [vmem:[#allocation2 + $0x70] sm:$0xff]
  %v2168 = vld [vmem:[#allocation2 + $0x78] sm:$0xff]
  %v2169 = vld [vmem:[#allocation2 + $0x80] sm:$0xff]
  %v2170 = vld [vmem:[#allocation2 + $0x88] sm:$0xff]
  %v2171 = vld [vmem:[#allocation2 + $0x90] sm:$0xff]
  %v2172 = vld [vmem:[#allocation2 + $0x98] sm:$0xff]
  %v2173 = vld [vmem:[#allocation2 + $0xa0] sm:$0xff]
  %v2174 = vld [vmem:[#allocation2 + $0xa8] sm:$0xff]
  %v2175 = vld [vmem:[#allocation2 + $0xb0] sm:$0xff]
  %v2176 = vld [vmem:[#allocation2 + $0xb8] sm:$0xff]
  %v2177 = vld [vmem:[#allocation2 + $0xc0] sm:$0xff]
  %v2178 = vld [vmem:[#allocation2 + $0xc8] sm:$0xff]
  %v2179 = vld [vmem:[#allocation2 + $0xd0] sm:$0xff]
  %v2180 = vld [vmem:[#allocation2 + $0xd8] sm:$0xff]
  %v2181 = vld [vmem:[#allocation2 + $0xe0] sm:$0xff]
  %v2182 = vld [vmem:[#allocation2 + $0xe8] sm:$0xff]
  %v2183 = vld [vmem:[#allocation2 + $0xf0] sm:$0xff]
  %v2184 = vld [vmem:[#allocation2 + $0xf8] sm:$0xff]
  %v2185 = vadd.f32 %v2153, %v2075
  %v2186 = vadd.f32 %v2154, %v2077
  %v2187 = vadd.f32 %v2155, %v2079
  %v2188 = vadd.f32 %v2156, %v2081
  %v2189 = vadd.f32 %v2157, %v2085
  %v2190 = vadd.f32 %v2158, %v2087
  %v2191 = vadd.f32 %v2159, %v2089
  %v2192 = vadd.f32 %v2160, %v2091
  %v2193 = vadd.f32 %v2161, %v2095
  %v2194 = vadd.f32 %v2162, %v2097
  %v2195 = vadd.f32 %v2163, %v2099
  %v2196 = vadd.f32 %v2164, %v2101
  %v2197 = vadd.f32 %v2165, %v2105
  %v2198 = vadd.f32 %v2166, %v2107
  %v2199 = vadd.f32 %v2167, %v2109
  %v2200 = vadd.f32 %v2168, %v2111
  %v2201 = vadd.f32 %v2169, %v2115
  %v2202 = vadd.f32 %v2170, %v2117
  %v2203 = vadd.f32 %v2171, %v2119
  %v2204 = vadd.f32 %v2172, %v2121
  %v2205 = vadd.f32 %v2173, %v2125
  %v2206 = vadd.f32 %v2174, %v2127
  %v2207 = vadd.f32 %v2175, %v2129
  %v2208 = vadd.f32 %v2176, %v2131
  %v2209 = vadd.f32 %v2177, %v2135
  %v2210 = vadd.f32 %v2178, %v2137
  %v2211 = vadd.f32 %v2179, %v2139
  %v2212 = vadd.f32 %v2180, %v2141
  %v2213 = vadd.f32 %v2181, %v2145
  %v2214 = vadd.f32 %v2182, %v2147
  %v2215 = vadd.f32 %v2183, %v2149
  %v2216 = vadd.f32 %v2184, %v2151
  %2217 = vst [vmem:[#allocation2] sm:$0xff] %v2185
  %2218 = vst [vmem:[#allocation2 + $0x8] sm:$0xff] %v2186
  %2219 = vst [vmem:[#allocation2 + $0x10] sm:$0xff] %v2187
  %2220 = vst [vmem:[#allocation2 + $0x18] sm:$0xff] %v2188
  %2221 = vst [vmem:[#allocation2 + $0x20] sm:$0xff] %v2189
  %2222 = vst [vmem:[#allocation2 + $0x28] sm:$0xff] %v2190
  %2223 = vst [vmem:[#allocation2 + $0x30] sm:$0xff] %v2191
  %2224 = vst [vmem:[#allocation2 + $0x38] sm:$0xff] %v2192
  %2225 = vst [vmem:[#allocation2 + $0x40] sm:$0xff] %v2193
  %2226 = vst [vmem:[#allocation2 + $0x48] sm:$0xff] %v2194
  %2227 = vst [vmem:[#allocation2 + $0x50] sm:$0xff] %v2195
  %2228 = vst [vmem:[#allocation2 + $0x58] sm:$0xff] %v2196
  %2229 = vst [vmem:[#allocation2 + $0x60] sm:$0xff] %v2197
  %2230 = vst [vmem:[#allocation2 + $0x68] sm:$0xff] %v2198
  %2231 = vst [vmem:[#allocation2 + $0x70] sm:$0xff] %v2199
  %2232 = vst [vmem:[#allocation2 + $0x78] sm:$0xff] %v2200
  %2233 = vst [vmem:[#allocation2 + $0x80] sm:$0xff] %v2201
  %2234 = vst [vmem:[#allocation2 + $0x88] sm:$0xff] %v2202
  %2235 = vst [vmem:[#allocation2 + $0x90] sm:$0xff] %v2203
  %2236 = vst [vmem:[#allocation2 + $0x98] sm:$0xff] %v2204
  %2237 = vst [vmem:[#allocation2 + $0xa0] sm:$0xff] %v2205
  %2238 = vst [vmem:[#allocation2 + $0xa8] sm:$0xff] %v2206
  %2239 = vst [vmem:[#allocation2 + $0xb0] sm:$0xff] %v2207
  %2240 = vst [vmem:[#allocation2 + $0xb8] sm:$0xff] %v2208
  %2241 = vst [vmem:[#allocation2 + $0xc0] sm:$0xff] %v2209
  %2242 = vst [vmem:[#allocation2 + $0xc8] sm:$0xff] %v2210
  %2243 = vst [vmem:[#allocation2 + $0xd0] sm:$0xff] %v2211
  %2244 = vst [vmem:[#allocation2 + $0xd8] sm:$0xff] %v2212
  %2245 = vst [vmem:[#allocation2 + $0xe0] sm:$0xff] %v2213
  %2246 = vst [vmem:[#allocation2 + $0xe8] sm:$0xff] %v2214
  %2247 = vst [vmem:[#allocation2 + $0xf0] sm:$0xff] %v2215
  %2248 = vst [vmem:[#allocation2 + $0xf8] sm:$0xff] %v2216
  %v2253 = vunpack.c.l.b16 %v70
  %v2254 = vunpack.c.l.b16 %v71
  %v2255 = vunpack.c.l.b16 %v90
  %v2256 = vunpack.c.l.b16 %v91
  %s2257 = scalar_lea.vmem %s1, 768
  %v2258 = vld [vmem:[%s2257] sm:$0xff]
  %v2259 = vld [vmem:[%s2257 + $0x8] sm:$0xff]
  %v2260 = vld [vmem:[%s2257 + $0x10] sm:$0xff]
  %v2261 = vld [vmem:[%s2257 + $0x18] sm:$0xff]
  %v2262 = vld [vmem:[%s2257 + $0x20] sm:$0xff]
  %v2263 = vld [vmem:[%s2257 + $0x28] sm:$0xff]
  %v2264 = vld [vmem:[%s2257 + $0x30] sm:$0xff]
  %v2265 = vld [vmem:[%s2257 + $0x38] sm:$0xff]
  %v2266 = vld [vmem:[%s2257 + $0x40] sm:$0xff]
  %v2267 = vld [vmem:[%s2257 + $0x48] sm:$0xff]
  %v2268 = vld [vmem:[%s2257 + $0x50] sm:$0xff]
  %v2269 = vld [vmem:[%s2257 + $0x58] sm:$0xff]
  %v2270 = vld [vmem:[%s2257 + $0x60] sm:$0xff]
  %v2271 = vld [vmem:[%s2257 + $0x68] sm:$0xff]
  %v2272 = vld [vmem:[%s2257 + $0x70] sm:$0xff]
  %v2273 = vld [vmem:[%s2257 + $0x78] sm:$0xff]
  %v2274 = vld [vmem:[%s2257 + $0x80] sm:$0xff]
  %v2275 = vld [vmem:[%s2257 + $0x88] sm:$0xff]
  %v2276 = vld [vmem:[%s2257 + $0x90] sm:$0xff]
  %v2277 = vld [vmem:[%s2257 + $0x98] sm:$0xff]
  %v2278 = vld [vmem:[%s2257 + $0xa0] sm:$0xff]
  %v2279 = vld [vmem:[%s2257 + $0xa8] sm:$0xff]
  %v2280 = vld [vmem:[%s2257 + $0xb0] sm:$0xff]
  %v2281 = vld [vmem:[%s2257 + $0xb8] sm:$0xff]
  %v2282 = vld [vmem:[%s2257 + $0xc0] sm:$0xff]
  %v2283 = vld [vmem:[%s2257 + $0xc8] sm:$0xff]
  %v2284 = vld [vmem:[%s2257 + $0xd0] sm:$0xff]
  %v2285 = vld [vmem:[%s2257 + $0xd8] sm:$0xff]
  %v2286 = vld [vmem:[%s2257 + $0xe0] sm:$0xff]
  %v2287 = vld [vmem:[%s2257 + $0xe8] sm:$0xff]
  %v2288 = vld [vmem:[%s2257 + $0xf0] sm:$0xff]
  %v2289 = vld [vmem:[%s2257 + $0xf8] sm:$0xff]
  %v2290 = vpack.c.b16 %v370, %v368
  %v2291 = vpack.c.b16 %v371, %v369
  %v2292 = vpack.c.b16 %v374, %v372
  %v2293 = vpack.c.b16 %v375, %v373
  %v2294 = vpack.c.b16 %v378, %v376
  %v2295 = vpack.c.b16 %v379, %v377
  %v2296 = vpack.c.b16 %v2253, %v380
  %v2297 = vpack.c.b16 %v2254, %v381
  %v2298 = vpack.c.b16 %v386, %v384
  %v2299 = vpack.c.b16 %v387, %v385
  %v2300 = vpack.c.b16 %v390, %v388
  %v2301 = vpack.c.b16 %v391, %v389
  %v2302 = vpack.c.b16 %v394, %v392
  %v2303 = vpack.c.b16 %v395, %v393
  %v2304 = vpack.c.b16 %v2255, %v396
  %v2305 = vpack.c.b16 %v2256, %v397
  %v2354 = vunpack.c.l.b16 %v2258
  %v2355 = vunpack.c.h.b16 %v2258
  %v2356 = vunpack.c.l.b16 %v2259
  %v2357 = vunpack.c.h.b16 %v2259
  %v2358 = vunpack.c.l.b16 %v2260
  %v2359 = vunpack.c.h.b16 %v2260
  %v2360 = vunpack.c.l.b16 %v2261
  %v2361 = vunpack.c.h.b16 %v2261
  %v2362 = vunpack.c.l.b16 %v2262
  %v2363 = vunpack.c.h.b16 %v2262
  %v2364 = vunpack.c.l.b16 %v2263
  %v2365 = vunpack.c.h.b16 %v2263
  %v2366 = vunpack.c.l.b16 %v2264
  %v2367 = vunpack.c.h.b16 %v2264
  %v2368 = vunpack.c.l.b16 %v2265
  %v2369 = vunpack.c.h.b16 %v2265
  %v2370 = vunpack.c.l.b16 %v2266
  %v2371 = vunpack.c.h.b16 %v2266
  %v2372 = vunpack.c.l.b16 %v2267
  %v2373 = vunpack.c.h.b16 %v2267
  %v2374 = vunpack.c.l.b16 %v2268
  %v2375 = vunpack.c.h.b16 %v2268
  %v2376 = vunpack.c.l.b16 %v2269
  %v2377 = vunpack.c.h.b16 %v2269
  %v2378 = vunpack.c.l.b16 %v2270
  %v2379 = vunpack.c.h.b16 %v2270
  %v2380 = vunpack.c.l.b16 %v2271
  %v2381 = vunpack.c.h.b16 %v2271
  %v2382 = vunpack.c.l.b16 %v2272
  %v2383 = vunpack.c.h.b16 %v2272
  %v2384 = vunpack.c.l.b16 %v2273
  %v2385 = vunpack.c.h.b16 %v2273
  %v2386 = vunpack.c.l.b16 %v2274
  %v2387 = vunpack.c.h.b16 %v2274
  %v2388 = vunpack.c.l.b16 %v2275
  %v2389 = vunpack.c.h.b16 %v2275
  %v2390 = vunpack.c.l.b16 %v2276
  %v2391 = vunpack.c.h.b16 %v2276
  %v2392 = vunpack.c.l.b16 %v2277
  %v2393 = vunpack.c.h.b16 %v2277
  %v2394 = vunpack.c.l.b16 %v2278
  %v2395 = vunpack.c.h.b16 %v2278
  %v2396 = vunpack.c.l.b16 %v2279
  %v2397 = vunpack.c.h.b16 %v2279
  %v2398 = vunpack.c.l.b16 %v2280
  %v2399 = vunpack.c.h.b16 %v2280
  %v2400 = vunpack.c.l.b16 %v2281
  %v2401 = vunpack.c.h.b16 %v2281
  %v2402 = vunpack.c.l.b16 %v2282
  %v2403 = vunpack.c.h.b16 %v2282
  %v2404 = vunpack.c.l.b16 %v2283
  %v2405 = vunpack.c.h.b16 %v2283
  %v2406 = vunpack.c.l.b16 %v2284
  %v2407 = vunpack.c.h.b16 %v2284
  %v2408 = vunpack.c.l.b16 %v2285
  %v2409 = vunpack.c.h.b16 %v2285
  %v2410 = vunpack.c.l.b16 %v2286
  %v2411 = vunpack.c.h.b16 %v2286
  %v2412 = vunpack.c.l.b16 %v2287
  %v2413 = vunpack.c.h.b16 %v2287
  %v2414 = vunpack.c.l.b16 %v2288
  %v2415 = vunpack.c.h.b16 %v2288
  %v2416 = vunpack.c.l.b16 %v2289
  %v2417 = vunpack.c.h.b16 %v2289
  %v2418 = vpack.c.b16 %v2356, %v2354
  %v2419 = vpack.c.b16 %v2357, %v2355
  %v2420 = vpack.c.b16 %v2360, %v2358
  %v2421 = vpack.c.b16 %v2361, %v2359
  %v2422 = vpack.c.b16 %v2364, %v2362
  %v2423 = vpack.c.b16 %v2365, %v2363
  %v2424 = vpack.c.b16 %v2368, %v2366
  %v2425 = vpack.c.b16 %v2369, %v2367
  %v2426 = vpack.c.b16 %v2372, %v2370
  %v2427 = vpack.c.b16 %v2373, %v2371
  %v2428 = vpack.c.b16 %v2376, %v2374
  %v2429 = vpack.c.b16 %v2377, %v2375
  %v2430 = vpack.c.b16 %v2380, %v2378
  %v2431 = vpack.c.b16 %v2381, %v2379
  %v2432 = vpack.c.b16 %v2384, %v2382
  %v2433 = vpack.c.b16 %v2385, %v2383
  %v2434 = vpack.c.b16 %v2388, %v2386
  %v2435 = vpack.c.b16 %v2389, %v2387
  %v2436 = vpack.c.b16 %v2392, %v2390
  %v2437 = vpack.c.b16 %v2393, %v2391
  %v2438 = vpack.c.b16 %v2396, %v2394
  %v2439 = vpack.c.b16 %v2397, %v2395
  %v2440 = vpack.c.b16 %v2400, %v2398
  %v2441 = vpack.c.b16 %v2401, %v2399
  %v2442 = vpack.c.b16 %v2404, %v2402
  %v2443 = vpack.c.b16 %v2405, %v2403
  %v2444 = vpack.c.b16 %v2408, %v2406
  %v2445 = vpack.c.b16 %v2409, %v2407
  %v2446 = vpack.c.b16 %v2412, %v2410
  %v2447 = vpack.c.b16 %v2413, %v2411
  %v2448 = vpack.c.b16 %v2416, %v2414
  %v2449 = vpack.c.b16 %v2417, %v2415
  %2482 = vmatprep.subr.bf16.mxu0 %v2419
  %2483 = vmatpush1.bf16.msra.mxu0 %v2418
  %2484 = vmatprep.subr.bf16.mxu0 %v2421
  %2485 = vmatpush1.bf16.msra.mxu0 %v2420
  %2486 = vmatprep.subr.bf16.mxu0 %v2423
  %2487 = vmatpush1.bf16.msra.mxu0 %v2422
  %2488 = vmatprep.subr.bf16.mxu0 %v2425
  %2489 = vmatpush1.bf16.msra.mxu0 %v2424
  %2490 = vmatprep.subr.bf16.mxu0 %v2427
  %2491 = vmatpush1.bf16.msra.mxu0 %v2426
  %2492 = vmatprep.subr.bf16.mxu0 %v2429
  %2493 = vmatpush1.bf16.msra.mxu0 %v2428
  %2494 = vmatprep.subr.bf16.mxu0 %v2431
  %2495 = vmatpush1.bf16.msra.mxu0 %v2430
  %2496 = vmatprep.subr.bf16.mxu0 %v2433
  %2497 = vmatpush1.bf16.msra.mxu0 %v2432
  %2498 = vmatprep.subr.bf16.mxu0 %v2435
  %2499 = vmatpush1.bf16.msra.mxu0 %v2434
  %2500 = vmatprep.subr.bf16.mxu0 %v2437
  %2501 = vmatpush1.bf16.msra.mxu0 %v2436
  %2502 = vmatprep.subr.bf16.mxu0 %v2439
  %2503 = vmatpush1.bf16.msra.mxu0 %v2438
  %2504 = vmatprep.subr.bf16.mxu0 %v2441
  %2505 = vmatpush1.bf16.msra.mxu0 %v2440
  %2506 = vmatprep.subr.bf16.mxu0 %v2443
  %2507 = vmatpush1.bf16.msra.mxu0 %v2442
  %2508 = vmatprep.subr.bf16.mxu0 %v2445
  %2509 = vmatpush1.bf16.msra.mxu0 %v2444
  %2510 = vmatprep.subr.bf16.mxu0 %v2447
  %2511 = vmatpush1.bf16.msra.mxu0 %v2446
  %2512 = vmatprep.subr.bf16.mxu0 %v2449
  %2513 = vmatpush1.bf16.msra.mxu0 %v2448
  %2514 = vmatprep.mubr.bf16.mxu0 %v2291
  %2515 = vmatmul.mubr.bf16.gmra.mrb[0].mxu0 %v2290
  %v2516 = vpop.f32.mrb[0].mxu0
  %v2517 = vadd.f32 0.0, %v2516
  %v2518 = vpop.f32.mrb[0].mxu0
  %v2519 = vadd.f32 0.0, %v2518
  %v2520 = vpop.f32.mrb[0].mxu0
  %v2521 = vadd.f32 0.0, %v2520
  %v2522 = vpop.f32.mrb[0].mxu0
  %v2523 = vadd.f32 0.0, %v2522
  %2524 = vmatprep.mubr.bf16.mxu0 %v2293
  %2525 = vmatmul.mubr.bf16.gmra.mrb[0].mxu0 %v2292
  %v2526 = vpop.f32.mrb[0].mxu0
  %v2527 = vadd.f32 0.0, %v2526
  %v2528 = vpop.f32.mrb[0].mxu0
  %v2529 = vadd.f32 0.0, %v2528
  %v2530 = vpop.f32.mrb[0].mxu0
  %v2531 = vadd.f32 0.0, %v2530
  %v2532 = vpop.f32.mrb[0].mxu0
  %v2533 = vadd.f32 0.0, %v2532
  %2534 = vmatprep.mubr.bf16.mxu0 %v2295
  %2535 = vmatmul.mubr.bf16.gmra.mrb[0].mxu0 %v2294
  %v2536 = vpop.f32.mrb[0].mxu0
  %v2537 = vadd.f32 0.0, %v2536
  %v2538 = vpop.f32.mrb[0].mxu0
  %v2539 = vadd.f32 0.0, %v2538
  %v2540 = vpop.f32.mrb[0].mxu0
  %v2541 = vadd.f32 0.0, %v2540
  %v2542 = vpop.f32.mrb[0].mxu0
  %v2543 = vadd.f32 0.0, %v2542
  %2544 = vmatprep.mubr.bf16.mxu0 %v2297
  %2545 = vmatmul.mubr.bf16.gmra.mrb[0].mxu0 %v2296
  %v2546 = vpop.f32.mrb[0].mxu0
  %v2547 = vadd.f32 0.0, %v2546
  %v2548 = vpop.f32.mrb[0].mxu0
  %v2549 = vadd.f32 0.0, %v2548
  %v2550 = vpop.f32.mrb[0].mxu0
  %v2551 = vadd.f32 0.0, %v2550
  %v2552 = vpop.f32.mrb[0].mxu0
  %v2553 = vadd.f32 0.0, %v2552
  %2554 = vmatprep.mubr.bf16.mxu0 %v2299
  %2555 = vmatmul.mubr.bf16.gmra.mrb[0].mxu0 %v2298
  %v2556 = vpop.f32.mrb[0].mxu0
  %v2557 = vadd.f32 0.0, %v2556
  %v2558 = vpop.f32.mrb[0].mxu0
  %v2559 = vadd.f32 0.0, %v2558
  %v2560 = vpop.f32.mrb[0].mxu0
  %v2561 = vadd.f32 0.0, %v2560
  %v2562 = vpop.f32.mrb[0].mxu0
  %v2563 = vadd.f32 0.0, %v2562
  %2564 = vmatprep.mubr.bf16.mxu0 %v2301
  %2565 = vmatmul.mubr.bf16.gmra.mrb[0].mxu0 %v2300
  %v2566 = vpop.f32.mrb[0].mxu0
  %v2567 = vadd.f32 0.0, %v2566
  %v2568 = vpop.f32.mrb[0].mxu0
  %v2569 = vadd.f32 0.0, %v2568
  %v2570 = vpop.f32.mrb[0].mxu0
  %v2571 = vadd.f32 0.0, %v2570
  %v2572 = vpop.f32.mrb[0].mxu0
  %v2573 = vadd.f32 0.0, %v2572
  %2574 = vmatprep.mubr.bf16.mxu0 %v2303
  %2575 = vmatmul.mubr.bf16.gmra.mrb[0].mxu0 %v2302
  %v2576 = vpop.f32.mrb[0].mxu0
  %v2577 = vadd.f32 0.0, %v2576
  %v2578 = vpop.f32.mrb[0].mxu0
  %v2579 = vadd.f32 0.0, %v2578
  %v2580 = vpop.f32.mrb[0].mxu0
  %v2581 = vadd.f32 0.0, %v2580
  %v2582 = vpop.f32.mrb[0].mxu0
  %v2583 = vadd.f32 0.0, %v2582
  %2584 = vmatprep.mubr.bf16.mxu0 %v2305
  %2585 = vmatmul.mubr.bf16.gmra.mrb[0].mxu0 %v2304
  %v2586 = vpop.f32.mrb[0].mxu0
  %v2587 = vadd.f32 0.0, %v2586
  %v2588 = vpop.f32.mrb[0].mxu0
  %v2589 = vadd.f32 0.0, %v2588
  %v2590 = vpop.f32.mrb[0].mxu0
  %v2591 = vadd.f32 0.0, %v2590
  %v2592 = vpop.f32.mrb[0].mxu0
  %v2593 = vadd.f32 0.0, %v2592
  %2594 = vdwg.mxu0
  %v2595 = vld [vmem:[#allocation2] sm:$0xff]
  %v2596 = vld [vmem:[#allocation2 + $0x8] sm:$0xff]
  %v2597 = vld [vmem:[#allocation2 + $0x10] sm:$0xff]
  %v2598 = vld [vmem:[#allocation2 + $0x18] sm:$0xff]
  %v2599 = vld [vmem:[#allocation2 + $0x20] sm:$0xff]
  %v2600 = vld [vmem:[#allocation2 + $0x28] sm:$0xff]
  %v2601 = vld [vmem:[#allocation2 + $0x30] sm:$0xff]
  %v2602 = vld [vmem:[#allocation2 + $0x38] sm:$0xff]
  %v2603 = vld [vmem:[#allocation2 + $0x40] sm:$0xff]
  %v2604 = vld [vmem:[#allocation2 + $0x48] sm:$0xff]
  %v2605 = vld [vmem:[#allocation2 + $0x50] sm:$0xff]
  %v2606 = vld [vmem:[#allocation2 + $0x58] sm:$0xff]
  %v2607 = vld [vmem:[#allocation2 + $0x60] sm:$0xff]
  %v2608 = vld [vmem:[#allocation2 + $0x68] sm:$0xff]
  %v2609 = vld [vmem:[#allocation2 + $0x70] sm:$0xff]
  %v2610 = vld [vmem:[#allocation2 + $0x78] sm:$0xff]
  %v2611 = vld [vmem:[#allocation2 + $0x80] sm:$0xff]
  %v2612 = vld [vmem:[#allocation2 + $0x88] sm:$0xff]
  %v2613 = vld [vmem:[#allocation2 + $0x90] sm:$0xff]
  %v2614 = vld [vmem:[#allocation2 + $0x98] sm:$0xff]
  %v2615 = vld [vmem:[#allocation2 + $0xa0] sm:$0xff]
  %v2616 = vld [vmem:[#allocation2 + $0xa8] sm:$0xff]
  %v2617 = vld [vmem:[#allocation2 + $0xb0] sm:$0xff]
  %v2618 = vld [vmem:[#allocation2 + $0xb8] sm:$0xff]
  %v2619 = vld [vmem:[#allocation2 + $0xc0] sm:$0xff]
  %v2620 = vld [vmem:[#allocation2 + $0xc8] sm:$0xff]
  %v2621 = vld [vmem:[#allocation2 + $0xd0] sm:$0xff]
  %v2622 = vld [vmem:[#allocation2 + $0xd8] sm:$0xff]
  %v2623 = vld [vmem:[#allocation2 + $0xe0] sm:$0xff]
  %v2624 = vld [vmem:[#allocation2 + $0xe8] sm:$0xff]
  %v2625 = vld [vmem:[#allocation2 + $0xf0] sm:$0xff]
  %v2626 = vld [vmem:[#allocation2 + $0xf8] sm:$0xff]
  %v2627 = vadd.f32 %v2595, %v2517
  %v2628 = vadd.f32 %v2596, %v2519
  %v2629 = vadd.f32 %v2597, %v2521
  %v2630 = vadd.f32 %v2598, %v2523
  %v2631 = vadd.f32 %v2599, %v2527
  %v2632 = vadd.f32 %v2600, %v2529
  %v2633 = vadd.f32 %v2601, %v2531
  %v2634 = vadd.f32 %v2602, %v2533
  %v2635 = vadd.f32 %v2603, %v2537
  %v2636 = vadd.f32 %v2604, %v2539
  %v2637 = vadd.f32 %v2605, %v2541
  %v2638 = vadd.f32 %v2606, %v2543
  %v2639 = vadd.f32 %v2607, %v2547
  %v2640 = vadd.f32 %v2608, %v2549
  %v2641 = vadd.f32 %v2609, %v2551
  %v2642 = vadd.f32 %v2610, %v2553
  %v2643 = vadd.f32 %v2611, %v2557
  %v2644 = vadd.f32 %v2612, %v2559
  %v2645 = vadd.f32 %v2613, %v2561
  %v2646 = vadd.f32 %v2614, %v2563
  %v2647 = vadd.f32 %v2615, %v2567
  %v2648 = vadd.f32 %v2616, %v2569
  %v2649 = vadd.f32 %v2617, %v2571
  %v2650 = vadd.f32 %v2618, %v2573
  %v2651 = vadd.f32 %v2619, %v2577
  %v2652 = vadd.f32 %v2620, %v2579
  %v2653 = vadd.f32 %v2621, %v2581
  %v2654 = vadd.f32 %v2622, %v2583
  %v2655 = vadd.f32 %v2623, %v2587
  %v2656 = vadd.f32 %v2624, %v2589
  %v2657 = vadd.f32 %v2625, %v2591
  %v2658 = vadd.f32 %v2626, %v2593
  %2659 = vst [vmem:[#allocation2] sm:$0xff] %v2627
  %2660 = vst [vmem:[#allocation2 + $0x8] sm:$0xff] %v2628
  %2661 = vst [vmem:[#allocation2 + $0x10] sm:$0xff] %v2629
  %2662 = vst [vmem:[#allocation2 + $0x18] sm:$0xff] %v2630
  %2663 = vst [vmem:[#allocation2 + $0x20] sm:$0xff] %v2631
  %2664 = vst [vmem:[#allocation2 + $0x28] sm:$0xff] %v2632
  %2665 = vst [vmem:[#allocation2 + $0x30] sm:$0xff] %v2633
  %2666 = vst [vmem:[#allocation2 + $0x38] sm:$0xff] %v2634
  %2667 = vst [vmem:[#allocation2 + $0x40] sm:$0xff] %v2635
  %2668 = vst [vmem:[#allocation2 + $0x48] sm:$0xff] %v2636
  %2669 = vst [vmem:[#allocation2 + $0x50] sm:$0xff] %v2637
  %2670 = vst [vmem:[#allocation2 + $0x58] sm:$0xff] %v2638
  %2671 = vst [vmem:[#allocation2 + $0x60] sm:$0xff] %v2639
  %2672 = vst [vmem:[#allocation2 + $0x68] sm:$0xff] %v2640
  %2673 = vst [vmem:[#allocation2 + $0x70] sm:$0xff] %v2641
  %2674 = vst [vmem:[#allocation2 + $0x78] sm:$0xff] %v2642
  %2675 = vst [vmem:[#allocation2 + $0x80] sm:$0xff] %v2643
  %2676 = vst [vmem:[#allocation2 + $0x88] sm:$0xff] %v2644
  %2677 = vst [vmem:[#allocation2 + $0x90] sm:$0xff] %v2645
  %2678 = vst [vmem:[#allocation2 + $0x98] sm:$0xff] %v2646
  %2679 = vst [vmem:[#allocation2 + $0xa0] sm:$0xff] %v2647
  %2680 = vst [vmem:[#allocation2 + $0xa8] sm:$0xff] %v2648
  %2681 = vst [vmem:[#allocation2 + $0xb0] sm:$0xff] %v2649
  %2682 = vst [vmem:[#allocation2 + $0xb8] sm:$0xff] %v2650
  %2683 = vst [vmem:[#allocation2 + $0xc0] sm:$0xff] %v2651
  %2684 = vst [vmem:[#allocation2 + $0xc8] sm:$0xff] %v2652
  %2685 = vst [vmem:[#allocation2 + $0xd0] sm:$0xff] %v2653
  %2686 = vst [vmem:[#allocation2 + $0xd8] sm:$0xff] %v2654
  %2687 = vst [vmem:[#allocation2 + $0xe0] sm:$0xff] %v2655
  %2688 = vst [vmem:[#allocation2 + $0xe8] sm:$0xff] %v2656
  %2689 = vst [vmem:[#allocation2 + $0xf0] sm:$0xff] %v2657
  %2690 = vst [vmem:[#allocation2 + $0xf8] sm:$0xff] %v2658
  %v2695 = vunpack.c.l.b16 %v190
  %v2696 = vunpack.c.l.b16 %v191
  %v2697 = vunpack.c.h.b16 %v190
  %v2698 = vunpack.c.h.b16 %v191
  %v2699 = vunpack.c.l.b16 %v210
  %v2700 = vunpack.c.l.b16 %v211
  %v2701 = vunpack.c.h.b16 %v210
  %v2702 = vunpack.c.h.b16 %v211
  %v2703 = vpack.c.b16 %v2696, %v2695
  %v2704 = vpack.c.b16 %v2698, %v2697
  %v2705 = vpack.c.b16 %v2700, %v2699
  %v2706 = vpack.c.b16 %v2702, %v2701
  %v2708 = vshrl.u32 %v2703, 16
  %v2710 = vrot.slane %v2708, 4
  %v2711 = vshll.u32 %v2703, 16
  %v2713 = vrot.slane %v2711, 5
  %v2714 = vor.u32 %v2710, %v2713
  %v2715 = vrot.slane %v2714, 4
  %v2717 = vshll.u32 %v2704, 16
  %v2719 = vrot.slane %v2717, 5
  %v2720 = vsel %vm897, %v2715, %v2719
  %v2722 = vshrl.u32 %v2705, 16
  %v2724 = vrot.slane %v2722, 4
  %v2725 = vshll.u32 %v2705, 16
  %v2727 = vrot.slane %v2725, 5
  %v2728 = vor.u32 %v2724, %v2727
  %v2729 = vrot.slane %v2728, 4
  %v2731 = vshll.u32 %v2706, 16
  %v2733 = vrot.slane %v2731, 5
  %v2734 = vsel %vm897, %v2729, %v2733
  %s2735 = scalar_lea.vmem %s1, 1024
  %v2736 = vld [vmem:[%s2735] sm:$0xff]
  %v2737 = vld [vmem:[%s2735 + $0x8] sm:$0xff]
  %v2738 = vld [vmem:[%s2735 + $0x10] sm:$0xff]
  %v2739 = vld [vmem:[%s2735 + $0x18] sm:$0xff]
  %v2740 = vld [vmem:[%s2735 + $0x20] sm:$0xff]
  %v2741 = vld [vmem:[%s2735 + $0x28] sm:$0xff]
  %v2742 = vld [vmem:[%s2735 + $0x30] sm:$0xff]
  %v2743 = vld [vmem:[%s2735 + $0x38] sm:$0xff]
  %v2744 = vld [vmem:[%s2735 + $0x40] sm:$0xff]
  %v2745 = vld [vmem:[%s2735 + $0x48] sm:$0xff]
  %v2746 = vld [vmem:[%s2735 + $0x50] sm:$0xff]
  %v2747 = vld [vmem:[%s2735 + $0x58] sm:$0xff]
  %v2748 = vld [vmem:[%s2735 + $0x60] sm:$0xff]
  %v2749 = vld [vmem:[%s2735 + $0x68] sm:$0xff]
  %v2750 = vld [vmem:[%s2735 + $0x70] sm:$0xff]
  %v2751 = vld [vmem:[%s2735 + $0x78] sm:$0xff]
  %v2752 = vld [vmem:[%s2735 + $0x80] sm:$0xff]
  %v2753 = vld [vmem:[%s2735 + $0x88] sm:$0xff]
  %v2754 = vld [vmem:[%s2735 + $0x90] sm:$0xff]
  %v2755 = vld [vmem:[%s2735 + $0x98] sm:$0xff]
  %v2756 = vld [vmem:[%s2735 + $0xa0] sm:$0xff]
  %v2757 = vld [vmem:[%s2735 + $0xa8] sm:$0xff]
  %v2758 = vld [vmem:[%s2735 + $0xb0] sm:$0xff]
  %v2759 = vld [vmem:[%s2735 + $0xb8] sm:$0xff]
  %v2760 = vld [vmem:[%s2735 + $0xc0] sm:$0xff]
  %v2761 = vld [vmem:[%s2735 + $0xc8] sm:$0xff]
  %v2762 = vld [vmem:[%s2735 + $0xd0] sm:$0xff]
  %v2763 = vld [vmem:[%s2735 + $0xd8] sm:$0xff]
  %v2764 = vld [vmem:[%s2735 + $0xe0] sm:$0xff]
  %v2765 = vld [vmem:[%s2735 + $0xe8] sm:$0xff]
  %v2766 = vld [vmem:[%s2735 + $0xf0] sm:$0xff]
  %v2767 = vld [vmem:[%s2735 + $0xf8] sm:$0xff]
  %v2768 = vunpack.c.l.b16 %v2720
  %v2769 = vunpack.c.h.b16 %v2720
  %v2770 = vunpack.c.l.b16 %v2734
  %v2771 = vunpack.c.h.b16 %v2734
  %v2772 = vpack.c.b16 %v1159, %v1157
  %v2773 = vpack.c.b16 %v1160, %v1158
  %v2774 = vpack.c.b16 %v1163, %v1161
  %v2775 = vpack.c.b16 %v1164, %v1162
  %v2776 = vpack.c.b16 %v1167, %v1165
  %v2777 = vpack.c.b16 %v1168, %v1166
  %v2778 = vpack.c.b16 %v2768, %v1169
  %v2779 = vpack.c.b16 %v2769, %v1170
  %v2780 = vpack.c.b16 %v1175, %v1173
  %v2781 = vpack.c.b16 %v1176, %v1174
  %v2782 = vpack.c.b16 %v1179, %v1177
  %v2783 = vpack.c.b16 %v1180, %v1178
  %v2784 = vpack.c.b16 %v1183, %v1181
  %v2785 = vpack.c.b16 %v1184, %v1182
  %v2786 = vpack.c.b16 %v2770, %v1185
  %v2787 = vpack.c.b16 %v2771, %v1186
  %v2836 = vunpack.c.l.b16 %v2736
  %v2837 = vunpack.c.h.b16 %v2736
  %v2838 = vunpack.c.l.b16 %v2737
  %v2839 = vunpack.c.h.b16 %v2737
  %v2840 = vunpack.c.l.b16 %v2738
  %v2841 = vunpack.c.h.b16 %v2738
  %v2842 = vunpack.c.l.b16 %v2739
  %v2843 = vunpack.c.h.b16 %v2739
  %v2844 = vunpack.c.l.b16 %v2740
  %v2845 = vunpack.c.h.b16 %v2740
  %v2846 = vunpack.c.l.b16 %v2741
  %v2847 = vunpack.c.h.b16 %v2741
  %v2848 = vunpack.c.l.b16 %v2742
  %v2849 = vunpack.c.h.b16 %v2742
  %v2850 = vunpack.c.l.b16 %v2743
  %v2851 = vunpack.c.h.b16 %v2743
  %v2852 = vunpack.c.l.b16 %v2744
  %v2853 = vunpack.c.h.b16 %v2744
  %v2854 = vunpack.c.l.b16 %v2745
  %v2855 = vunpack.c.h.b16 %v2745
  %v2856 = vunpack.c.l.b16 %v2746
  %v2857 = vunpack.c.h.b16 %v2746
  %v2858 = vunpack.c.l.b16 %v2747
  %v2859 = vunpack.c.h.b16 %v2747
  %v2860 = vunpack.c.l.b16 %v2748
  %v2861 = vunpack.c.h.b16 %v2748
  %v2862 = vunpack.c.l.b16 %v2749
  %v2863 = vunpack.c.h.b16 %v2749
  %v2864 = vunpack.c.l.b16 %v2750
  %v2865 = vunpack.c.h.b16 %v2750
  %v2866 = vunpack.c.l.b16 %v2751
  %v2867 = vunpack.c.h.b16 %v2751
  %v2868 = vunpack.c.l.b16 %v2752
  %v2869 = vunpack.c.h.b16 %v2752
  %v2870 = vunpack.c.l.b16 %v2753
  %v2871 = vunpack.c.h.b16 %v2753
  %v2872 = vunpack.c.l.b16 %v2754
  %v2873 = vunpack.c.h.b16 %v2754
  %v2874 = vunpack.c.l.b16 %v2755
  %v2875 = vunpack.c.h.b16 %v2755
  %v2876 = vunpack.c.l.b16 %v2756
  %v2877 = vunpack.c.h.b16 %v2756
  %v2878 = vunpack.c.l.b16 %v2757
  %v2879 = vunpack.c.h.b16 %v2757
  %v2880 = vunpack.c.l.b16 %v2758
  %v2881 = vunpack.c.h.b16 %v2758
  %v2882 = vunpack.c.l.b16 %v2759
  %v2883 = vunpack.c.h.b16 %v2759
  %v2884 = vunpack.c.l.b16 %v2760
  %v2885 = vunpack.c.h.b16 %v2760
  %v2886 = vunpack.c.l.b16 %v2761
  %v2887 = vunpack.c.h.b16 %v2761
  %v2888 = vunpack.c.l.b16 %v2762
  %v2889 = vunpack.c.h.b16 %v2762
  %v2890 = vunpack.c.l.b16 %v2763
  %v2891 = vunpack.c.h.b16 %v2763
  %v2892 = vunpack.c.l.b16 %v2764
  %v2893 = vunpack.c.h.b16 %v2764
  %v2894 = vunpack.c.l.b16 %v2765
  %v2895 = vunpack.c.h.b16 %v2765
  %v2896 = vunpack.c.l.b16 %v2766
  %v2897 = vunpack.c.h.b16 %v2766
  %v2898 = vunpack.c.l.b16 %v2767
  %v2899 = vunpack.c.h.b16 %v2767
  %v2900 = vpack.c.b16 %v2838, %v2836
  %v2901 = vpack.c.b16 %v2839, %v2837
  %v2902 = vpack.c.b16 %v2842, %v2840
  %v2903 = vpack.c.b16 %v2843, %v2841
  %v2904 = vpack.c.b16 %v2846, %v2844
  %v2905 = vpack.c.b16 %v2847, %v2845
  %v2906 = vpack.c.b16 %v2850, %v2848
  %v2907 = vpack.c.b16 %v2851, %v2849
  %v2908 = vpack.c.b16 %v2854, %v2852
  %v2909 = vpack.c.b16 %v2855, %v2853
  %v2910 = vpack.c.b16 %v2858, %v2856
  %v2911 = vpack.c.b16 %v2859, %v2857
  %v2912 = vpack.c.b16 %v2862, %v2860
  %v2913 = vpack.c.b16 %v2863, %v2861
  %v2914 = vpack.c.b16 %v2866, %v2864
  %v2915 = vpack.c.b16 %v2867, %v2865
  %v2916 = vpack.c.b16 %v2870, %v2868
  %v2917 = vpack.c.b16 %v2871, %v2869
  %v2918 = vpack.c.b16 %v2874, %v2872
  %v2919 = vpack.c.b16 %v2875, %v2873
  %v2920 = vpack.c.b16 %v2878, %v2876
  %v2921 = vpack.c.b16 %v2879, %v2877
  %v2922 = vpack.c.b16 %v2882, %v2880
  %v2923 = vpack.c.b16 %v2883, %v2881
  %v2924 = vpack.c.b16 %v2886, %v2884
  %v2925 = vpack.c.b16 %v2887, %v2885
  %v2926 = vpack.c.b16 %v2890, %v2888
  %v2927 = vpack.c.b16 %v2891, %v2889
  %v2928 = vpack.c.b16 %v2894, %v2892
  %v2929 = vpack.c.b16 %v2895, %v2893
  %v2930 = vpack.c.b16 %v2898, %v2896
  %v2931 = vpack.c.b16 %v2899, %v2897
  %2964 = vmatprep.subr.bf16.mxu0 %v2901
  %2965 = vmatpush1.bf16.msra.mxu0 %v2900
  %2966 = vmatprep.subr.bf16.mxu0 %v2903
  %2967 = vmatpush1.bf16.msra.mxu0 %v2902
  %2968 = vmatprep.subr.bf16.mxu0 %v2905
  %2969 = vmatpush1.bf16.msra.mxu0 %v2904
  %2970 = vmatprep.subr.bf16.mxu0 %v2907
  %2971 = vmatpush1.bf16.msra.mxu0 %v2906
  %2972 = vmatprep.subr.bf16.mxu0 %v2909
  %2973 = vmatpush1.bf16.msra.mxu0 %v2908
  %2974 = vmatprep.subr.bf16.mxu0 %v2911
  %2975 = vmatpush1.bf16.msra.mxu0 %v2910
  %2976 = vmatprep.subr.bf16.mxu0 %v2913
  %2977 = vmatpush1.bf16.msra.mxu0 %v2912
  %2978 = vmatprep.subr.bf16.mxu0 %v2915
  %2979 = vmatpush1.bf16.msra.mxu0 %v2914
  %2980 = vmatprep.subr.bf16.mxu0 %v2917
  %2981 = vmatpush1.bf16.msra.mxu0 %v2916
  %2982 = vmatprep.subr.bf16.mxu0 %v2919
  %2983 = vmatpush1.bf16.msra.mxu0 %v2918
  %2984 = vmatprep.subr.bf16.mxu0 %v2921
  %2985 = vmatpush1.bf16.msra.mxu0 %v2920
  %2986 = vmatprep.subr.bf16.mxu0 %v2923
  %2987 = vmatpush1.bf16.msra.mxu0 %v2922
  %2988 = vmatprep.subr.bf16.mxu0 %v2925
  %2989 = vmatpush1.bf16.msra.mxu0 %v2924
  %2990 = vmatprep.subr.bf16.mxu0 %v2927
  %2991 = vmatpush1.bf16.msra.mxu0 %v2926
  %2992 = vmatprep.subr.bf16.mxu0 %v2929
  %2993 = vmatpush1.bf16.msra.mxu0 %v2928
  %2994 = vmatprep.subr.bf16.mxu0 %v2931
  %2995 = vmatpush1.bf16.msra.mxu0 %v2930
  %2996 = vmatprep.mubr.bf16.mxu0 %v2773
  %2997 = vmatmul.mubr.bf16.gmra.mrb[0].mxu0 %v2772
  %v2998 = vpop.f32.mrb[0].mxu0
  %v2999 = vadd.f32 0.0, %v2998
  %v3000 = vpop.f32.mrb[0].mxu0
  %v3001 = vadd.f32 0.0, %v3000
  %v3002 = vpop.f32.mrb[0].mxu0
  %v3003 = vadd.f32 0.0, %v3002
  %v3004 = vpop.f32.mrb[0].mxu0
  %v3005 = vadd.f32 0.0, %v3004
  %3006 = vmatprep.mubr.bf16.mxu0 %v2775
  %3007 = vmatmul.mubr.bf16.gmra.mrb[0].mxu0 %v2774
  %v3008 = vpop.f32.mrb[0].mxu0
  %v3009 = vadd.f32 0.0, %v3008
  %v3010 = vpop.f32.mrb[0].mxu0
  %v3011 = vadd.f32 0.0, %v3010
  %v3012 = vpop.f32.mrb[0].mxu0
  %v3013 = vadd.f32 0.0, %v3012
  %v3014 = vpop.f32.mrb[0].mxu0
  %v3015 = vadd.f32 0.0, %v3014
  %3016 = vmatprep.mubr.bf16.mxu0 %v2777
  %3017 = vmatmul.mubr.bf16.gmra.mrb[0].mxu0 %v2776
  %v3018 = vpop.f32.mrb[0].mxu0
  %v3019 = vadd.f32 0.0, %v3018
  %v3020 = vpop.f32.mrb[0].mxu0
  %v3021 = vadd.f32 0.0, %v3020
  %v3022 = vpop.f32.mrb[0].mxu0
  %v3023 = vadd.f32 0.0, %v3022
  %v3024 = vpop.f32.mrb[0].mxu0
  %v3025 = vadd.f32 0.0, %v3024
  %3026 = vmatprep.mubr.bf16.mxu0 %v2779
  %3027 = vmatmul.mubr.bf16.gmra.mrb[0].mxu0 %v2778
  %v3028 = vpop.f32.mrb[0].mxu0
  %v3029 = vadd.f32 0.0, %v3028
  %v3030 = vpop.f32.mrb[0].mxu0
  %v3031 = vadd.f32 0.0, %v3030
  %v3032 = vpop.f32.mrb[0].mxu0
  %v3033 = vadd.f32 0.0, %v3032
  %v3034 = vpop.f32.mrb[0].mxu0
  %v3035 = vadd.f32 0.0, %v3034
  %3036 = vmatprep.mubr.bf16.mxu0 %v2781
  %3037 = vmatmul.mubr.bf16.gmra.mrb[0].mxu0 %v2780
  %v3038 = vpop.f32.mrb[0].mxu0
  %v3039 = vadd.f32 0.0, %v3038
  %v3040 = vpop.f32.mrb[0].mxu0
  %v3041 = vadd.f32 0.0, %v3040
  %v3042 = vpop.f32.mrb[0].mxu0
  %v3043 = vadd.f32 0.0, %v3042
  %v3044 = vpop.f32.mrb[0].mxu0
  %v3045 = vadd.f32 0.0, %v3044
  %3046 = vmatprep.mubr.bf16.mxu0 %v2783
  %3047 = vmatmul.mubr.bf16.gmra.mrb[0].mxu0 %v2782
  %v3048 = vpop.f32.mrb[0].mxu0
  %v3049 = vadd.f32 0.0, %v3048
  %v3050 = vpop.f32.mrb[0].mxu0
  %v3051 = vadd.f32 0.0, %v3050
  %v3052 = vpop.f32.mrb[0].mxu0
  %v3053 = vadd.f32 0.0, %v3052
  %v3054 = vpop.f32.mrb[0].mxu0
  %v3055 = vadd.f32 0.0, %v3054
  %3056 = vmatprep.mubr.bf16.mxu0 %v2785
  %3057 = vmatmul.mubr.bf16.gmra.mrb[0].mxu0 %v2784
  %v3058 = vpop.f32.mrb[0].mxu0
  %v3059 = vadd.f32 0.0, %v3058
  %v3060 = vpop.f32.mrb[0].mxu0
  %v3061 = vadd.f32 0.0, %v3060
  %v3062 = vpop.f32.mrb[0].mxu0
  %v3063 = vadd.f32 0.0, %v3062
  %v3064 = vpop.f32.mrb[0].mxu0
  %v3065 = vadd.f32 0.0, %v3064
  %3066 = vmatprep.mubr.bf16.mxu0 %v2787
  %3067 = vmatmul.mubr.bf16.gmra.mrb[0].mxu0 %v2786
  %v3068 = vpop.f32.mrb[0].mxu0
  %v3069 = vadd.f32 0.0, %v3068
  %v3070 = vpop.f32.mrb[0].mxu0
  %v3071 = vadd.f32 0.0, %v3070
  %v3072 = vpop.f32.mrb[0].mxu0
  %v3073 = vadd.f32 0.0, %v3072
  %v3074 = vpop.f32.mrb[0].mxu0
  %v3075 = vadd.f32 0.0, %v3074
  %3076 = vdwg.mxu0
  %v3077 = vld [vmem:[#allocation2] sm:$0xff]
  %v3078 = vld [vmem:[#allocation2 + $0x8] sm:$0xff]
  %v3079 = vld [vmem:[#allocation2 + $0x10] sm:$0xff]
  %v3080 = vld [vmem:[#allocation2 + $0x18] sm:$0xff]
  %v3081 = vld [vmem:[#allocation2 + $0x20] sm:$0xff]
  %v3082 = vld [vmem:[#allocation2 + $0x28] sm:$0xff]
  %v3083 = vld [vmem:[#allocation2 + $0x30] sm:$0xff]
  %v3084 = vld [vmem:[#allocation2 + $0x38] sm:$0xff]
  %v3085 = vld [vmem:[#allocation2 + $0x40] sm:$0xff]
  %v3086 = vld [vmem:[#allocation2 + $0x48] sm:$0xff]
  %v3087 = vld [vmem:[#allocation2 + $0x50] sm:$0xff]
  %v3088 = vld [vmem:[#allocation2 + $0x58] sm:$0xff]
  %v3089 = vld [vmem:[#allocation2 + $0x60] sm:$0xff]
  %v3090 = vld [vmem:[#allocation2 + $0x68] sm:$0xff]
  %v3091 = vld [vmem:[#allocation2 + $0x70] sm:$0xff]
  %v3092 = vld [vmem:[#allocation2 + $0x78] sm:$0xff]
  %v3093 = vld [vmem:[#allocation2 + $0x80] sm:$0xff]
  %v3094 = vld [vmem:[#allocation2 + $0x88] sm:$0xff]
  %v3095 = vld [vmem:[#allocation2 + $0x90] sm:$0xff]
  %v3096 = vld [vmem:[#allocation2 + $0x98] sm:$0xff]
  %v3097 = vld [vmem:[#allocation2 + $0xa0] sm:$0xff]
  %v3098 = vld [vmem:[#allocation2 + $0xa8] sm:$0xff]
  %v3099 = vld [vmem:[#allocation2 + $0xb0] sm:$0xff]
  %v3100 = vld [vmem:[#allocation2 + $0xb8] sm:$0xff]
  %v3101 = vld [vmem:[#allocation2 + $0xc0] sm:$0xff]
  %v3102 = vld [vmem:[#allocation2 + $0xc8] sm:$0xff]
  %v3103 = vld [vmem:[#allocation2 + $0xd0] sm:$0xff]
  %v3104 = vld [vmem:[#allocation2 + $0xd8] sm:$0xff]
  %v3105 = vld [vmem:[#allocation2 + $0xe0] sm:$0xff]
  %v3106 = vld [vmem:[#allocation2 + $0xe8] sm:$0xff]
  %v3107 = vld [vmem:[#allocation2 + $0xf0] sm:$0xff]
  %v3108 = vld [vmem:[#allocation2 + $0xf8] sm:$0xff]
  %v3109 = vadd.f32 %v3077, %v2999
  %v3110 = vadd.f32 %v3078, %v3001
  %v3111 = vadd.f32 %v3079, %v3003
  %v3112 = vadd.f32 %v3080, %v3005
  %v3113 = vadd.f32 %v3081, %v3009
  %v3114 = vadd.f32 %v3082, %v3011
  %v3115 = vadd.f32 %v3083, %v3013
  %v3116 = vadd.f32 %v3084, %v3015
  %v3117 = vadd.f32 %v3085, %v3019
  %v3118 = vadd.f32 %v3086, %v3021
  %v3119 = vadd.f32 %v3087, %v3023
  %v3120 = vadd.f32 %v3088, %v3025
  %v3121 = vadd.f32 %v3089, %v3029
  %v3122 = vadd.f32 %v3090, %v3031
  %v3123 = vadd.f32 %v3091, %v3033
  %v3124 = vadd.f32 %v3092, %v3035
  %v3125 = vadd.f32 %v3093, %v3039
  %v3126 = vadd.f32 %v3094, %v3041
  %v3127 = vadd.f32 %v3095, %v3043
  %v3128 = vadd.f32 %v3096, %v3045
  %v3129 = vadd.f32 %v3097, %v3049
  %v3130 = vadd.f32 %v3098, %v3051
  %v3131 = vadd.f32 %v3099, %v3053
  %v3132 = vadd.f32 %v3100, %v3055
  %v3133 = vadd.f32 %v3101, %v3059
  %v3134 = vadd.f32 %v3102, %v3061
  %v3135 = vadd.f32 %v3103, %v3063
  %v3136 = vadd.f32 %v3104, %v3065
  %v3137 = vadd.f32 %v3105, %v3069
  %v3138 = vadd.f32 %v3106, %v3071
  %v3139 = vadd.f32 %v3107, %v3073
  %v3140 = vadd.f32 %v3108, %v3075
  %3141 = vst [vmem:[#allocation2] sm:$0xff] %v3109
  %3142 = vst [vmem:[#allocation2 + $0x8] sm:$0xff] %v3110
  %3143 = vst [vmem:[#allocation2 + $0x10] sm:$0xff] %v3111
  %3144 = vst [vmem:[#allocation2 + $0x18] sm:$0xff] %v3112
  %3145 = vst [vmem:[#allocation2 + $0x20] sm:$0xff] %v3113
  %3146 = vst [vmem:[#allocation2 + $0x28] sm:$0xff] %v3114
  %3147 = vst [vmem:[#allocation2 + $0x30] sm:$0xff] %v3115
  %3148 = vst [vmem:[#allocation2 + $0x38] sm:$0xff] %v3116
  %3149 = vst [vmem:[#allocation2 + $0x40] sm:$0xff] %v3117
  %3150 = vst [vmem:[#allocation2 + $0x48] sm:$0xff] %v3118
  %3151 = vst [vmem:[#allocation2 + $0x50] sm:$0xff] %v3119
  %3152 = vst [vmem:[#allocation2 + $0x58] sm:$0xff] %v3120
  %3153 = vst [vmem:[#allocation2 + $0x60] sm:$0xff] %v3121
  %3154 = vst [vmem:[#allocation2 + $0x68] sm:$0xff] %v3122
  %3155 = vst [vmem:[#allocation2 + $0x70] sm:$0xff] %v3123
  %3156 = vst [vmem:[#allocation2 + $0x78] sm:$0xff] %v3124
  %3157 = vst [vmem:[#allocation2 + $0x80] sm:$0xff] %v3125
  %3158 = vst [vmem:[#allocation2 + $0x88] sm:$0xff] %v3126
  %3159 = vst [vmem:[#allocation2 + $0x90] sm:$0xff] %v3127
  %3160 = vst [vmem:[#allocation2 + $0x98] sm:$0xff] %v3128
  %3161 = vst [vmem:[#allocation2 + $0xa0] sm:$0xff] %v3129
  %3162 = vst [vmem:[#allocation2 + $0xa8] sm:$0xff] %v3130
  %3163 = vst [vmem:[#allocation2 + $0xb0] sm:$0xff] %v3131
  %3164 = vst [vmem:[#allocation2 + $0xb8] sm:$0xff] %v3132
  %3165 = vst [vmem:[#allocation2 + $0xc0] sm:$0xff] %v3133
  %3166 = vst [vmem:[#allocation2 + $0xc8] sm:$0xff] %v3134
  %3167 = vst [vmem:[#allocation2 + $0xd0] sm:$0xff] %v3135
  %3168 = vst [vmem:[#allocation2 + $0xd8] sm:$0xff] %v3136
  %3169 = vst [vmem:[#allocation2 + $0xe0] sm:$0xff] %v3137
  %3170 = vst [vmem:[#allocation2 + $0xe8] sm:$0xff] %v3138
  %3171 = vst [vmem:[#allocation2 + $0xf0] sm:$0xff] %v3139
  %3172 = vst [vmem:[#allocation2 + $0xf8] sm:$0xff] %v3140
  %v3177 = vunpack.c.l.b16 %v310
  %v3178 = vunpack.c.l.b16 %v311
  %v3179 = vunpack.c.h.b16 %v310
  %v3180 = vunpack.c.h.b16 %v311
  %v3181 = vunpack.c.l.b16 %v330
  %v3182 = vunpack.c.l.b16 %v331
  %v3183 = vunpack.c.h.b16 %v330
  %v3184 = vunpack.c.h.b16 %v331
  %v3185 = vpack.c.b16 %v3178, %v3177
  %v3186 = vpack.c.b16 %v3180, %v3179
  %v3187 = vpack.c.b16 %v3182, %v3181
  %v3188 = vpack.c.b16 %v3184, %v3183
  %v3189 = vrot.slane %v3185, 5
  %v3190 = vrot.slane %v3189, 4
  %v3191 = vrot.slane %v3186, 5
  %v3192 = vsel %vm1718, %v3190, %v3191
  %v3193 = vrot.slane %v3187, 5
  %v3194 = vrot.slane %v3193, 4
  %v3195 = vrot.slane %v3188, 5
  %v3196 = vsel %vm1718, %v3194, %v3195
  %s3197 = scalar_lea.vmem %s1, 1280
  %v3198 = vld [vmem:[%s3197] sm:$0xff]
  %v3199 = vld [vmem:[%s3197 + $0x8] sm:$0xff]
  %v3200 = vld [vmem:[%s3197 + $0x10] sm:$0xff]
  %v3201 = vld [vmem:[%s3197 + $0x18] sm:$0xff]
  %v3202 = vld [vmem:[%s3197 + $0x20] sm:$0xff]
  %v3203 = vld [vmem:[%s3197 + $0x28] sm:$0xff]
  %v3204 = vld [vmem:[%s3197 + $0x30] sm:$0xff]
  %v3205 = vld [vmem:[%s3197 + $0x38] sm:$0xff]
  %v3206 = vld [vmem:[%s3197 + $0x40] sm:$0xff]
  %v3207 = vld [vmem:[%s3197 + $0x48] sm:$0xff]
  %v3208 = vld [vmem:[%s3197 + $0x50] sm:$0xff]
  %v3209 = vld [vmem:[%s3197 + $0x58] sm:$0xff]
  %v3210 = vld [vmem:[%s3197 + $0x60] sm:$0xff]
  %v3211 = vld [vmem:[%s3197 + $0x68] sm:$0xff]
  %v3212 = vld [vmem:[%s3197 + $0x70] sm:$0xff]
  %v3213 = vld [vmem:[%s3197 + $0x78] sm:$0xff]
  %v3214 = vld [vmem:[%s3197 + $0x80] sm:$0xff]
  %v3215 = vld [vmem:[%s3197 + $0x88] sm:$0xff]
  %v3216 = vld [vmem:[%s3197 + $0x90] sm:$0xff]
  %v3217 = vld [vmem:[%s3197 + $0x98] sm:$0xff]
  %v3218 = vld [vmem:[%s3197 + $0xa0] sm:$0xff]
  %v3219 = vld [vmem:[%s3197 + $0xa8] sm:$0xff]
  %v3220 = vld [vmem:[%s3197 + $0xb0] sm:$0xff]
  %v3221 = vld [vmem:[%s3197 + $0xb8] sm:$0xff]
  %v3222 = vld [vmem:[%s3197 + $0xc0] sm:$0xff]
  %v3223 = vld [vmem:[%s3197 + $0xc8] sm:$0xff]
  %v3224 = vld [vmem:[%s3197 + $0xd0] sm:$0xff]
  %v3225 = vld [vmem:[%s3197 + $0xd8] sm:$0xff]
  %v3226 = vld [vmem:[%s3197 + $0xe0] sm:$0xff]
  %v3227 = vld [vmem:[%s3197 + $0xe8] sm:$0xff]
  %v3228 = vld [vmem:[%s3197 + $0xf0] sm:$0xff]
  %v3229 = vld [vmem:[%s3197 + $0xf8] sm:$0xff]
  %v3230 = vunpack.c.l.b16 %v3192
  %v3231 = vunpack.c.h.b16 %v3192
  %v3232 = vunpack.c.l.b16 %v3196
  %v3233 = vunpack.c.h.b16 %v3196
  %v3234 = vpack.c.b16 %v1820, %v1818
  %v3235 = vpack.c.b16 %v1821, %v1819
  %v3236 = vpack.c.b16 %v1824, %v1822
  %v3237 = vpack.c.b16 %v1825, %v1823
  %v3238 = vpack.c.b16 %v1828, %v1826
  %v3239 = vpack.c.b16 %v1829, %v1827
  %v3240 = vpack.c.b16 %v3230, %v1830
  %v3241 = vpack.c.b16 %v3231, %v1831
  %v3242 = vpack.c.b16 %v1836, %v1834
  %v3243 = vpack.c.b16 %v1837, %v1835
  %v3244 = vpack.c.b16 %v1840, %v1838
  %v3245 = vpack.c.b16 %v1841, %v1839
  %v3246 = vpack.c.b16 %v1844, %v1842
  %v3247 = vpack.c.b16 %v1845, %v1843
  %v3248 = vpack.c.b16 %v3232, %v1846
  %v3249 = vpack.c.b16 %v3233, %v1847
  %v3298 = vunpack.c.l.b16 %v3198
  %v3299 = vunpack.c.h.b16 %v3198
  %v3300 = vunpack.c.l.b16 %v3199
  %v3301 = vunpack.c.h.b16 %v3199
  %v3302 = vunpack.c.l.b16 %v3200
  %v3303 = vunpack.c.h.b16 %v3200
  %v3304 = vunpack.c.l.b16 %v3201
  %v3305 = vunpack.c.h.b16 %v3201
  %v3306 = vunpack.c.l.b16 %v3202
  %v3307 = vunpack.c.h.b16 %v3202
  %v3308 = vunpack.c.l.b16 %v3203
  %v3309 = vunpack.c.h.b16 %v3203
  %v3310 = vunpack.c.l.b16 %v3204
  %v3311 = vunpack.c.h.b16 %v3204
  %v3312 = vunpack.c.l.b16 %v3205
  %v3313 = vunpack.c.h.b16 %v3205
  %v3314 = vunpack.c.l.b16 %v3206
  %v3315 = vunpack.c.h.b16 %v3206
  %v3316 = vunpack.c.l.b16 %v3207
  %v3317 = vunpack.c.h.b16 %v3207
  %v3318 = vunpack.c.l.b16 %v3208
  %v3319 = vunpack.c.h.b16 %v3208
  %v3320 = vunpack.c.l.b16 %v3209
  %v3321 = vunpack.c.h.b16 %v3209
  %v3322 = vunpack.c.l.b16 %v3210
  %v3323 = vunpack.c.h.b16 %v3210
  %v3324 = vunpack.c.l.b16 %v3211
  %v3325 = vunpack.c.h.b16 %v3211
  %v3326 = vunpack.c.l.b16 %v3212
  %v3327 = vunpack.c.h.b16 %v3212
  %v3328 = vunpack.c.l.b16 %v3213
  %v3329 = vunpack.c.h.b16 %v3213
  %v3330 = vunpack.c.l.b16 %v3214
  %v3331 = vunpack.c.h.b16 %v3214
  %v3332 = vunpack.c.l.b16 %v3215
  %v3333 = vunpack.c.h.b16 %v3215
  %v3334 = vunpack.c.l.b16 %v3216
  %v3335 = vunpack.c.h.b16 %v3216
  %v3336 = vunpack.c.l.b16 %v3217
  %v3337 = vunpack.c.h.b16 %v3217
  %v3338 = vunpack.c.l.b16 %v3218
  %v3339 = vunpack.c.h.b16 %v3218
  %v3340 = vunpack.c.l.b16 %v3219
  %v3341 = vunpack.c.h.b16 %v3219
  %v3342 = vunpack.c.l.b16 %v3220
  %v3343 = vunpack.c.h.b16 %v3220
  %v3344 = vunpack.c.l.b16 %v3221
  %v3345 = vunpack.c.h.b16 %v3221
  %v3346 = vunpack.c.l.b16 %v3222
  %v3347 = vunpack.c.h.b16 %v3222
  %v3348 = vunpack.c.l.b16 %v3223
  %v3349 = vunpack.c.h.b16 %v3223
  %v3350 = vunpack.c.l.b16 %v3224
  %v3351 = vunpack.c.h.b16 %v3224
  %v3352 = vunpack.c.l.b16 %v3225
  %v3353 = vunpack.c.h.b16 %v3225
  %v3354 = vunpack.c.l.b16 %v3226
  %v3355 = vunpack.c.h.b16 %v3226
  %v3356 = vunpack.c.l.b16 %v3227
  %v3357 = vunpack.c.h.b16 %v3227
  %v3358 = vunpack.c.l.b16 %v3228
  %v3359 = vunpack.c.h.b16 %v3228
  %v3360 = vunpack.c.l.b16 %v3229
  %v3361 = vunpack.c.h.b16 %v3229
  %v3362 = vpack.c.b16 %v3300, %v3298
  %v3363 = vpack.c.b16 %v3301, %v3299
  %v3364 = vpack.c.b16 %v3304, %v3302
  %v3365 = vpack.c.b16 %v3305, %v3303
  %v3366 = vpack.c.b16 %v3308, %v3306
  %v3367 = vpack.c.b16 %v3309, %v3307
  %v3368 = vpack.c.b16 %v3312, %v3310
  %v3369 = vpack.c.b16 %v3313, %v3311
  %v3370 = vpack.c.b16 %v3316, %v3314
  %v3371 = vpack.c.b16 %v3317, %v3315
  %v3372 = vpack.c.b16 %v3320, %v3318
  %v3373 = vpack.c.b16 %v3321, %v3319
  %v3374 = vpack.c.b16 %v3324, %v3322
  %v3375 = vpack.c.b16 %v3325, %v3323
  %v3376 = vpack.c.b16 %v3328, %v3326
  %v3377 = vpack.c.b16 %v3329, %v3327
  %v3378 = vpack.c.b16 %v3332, %v3330
  %v3379 = vpack.c.b16 %v3333, %v3331
  %v3380 = vpack.c.b16 %v3336, %v3334
  %v3381 = vpack.c.b16 %v3337, %v3335
  %v3382 = vpack.c.b16 %v3340, %v3338
  %v3383 = vpack.c.b16 %v3341, %v3339
  %v3384 = vpack.c.b16 %v3344, %v3342
  %v3385 = vpack.c.b16 %v3345, %v3343
  %v3386 = vpack.c.b16 %v3348, %v3346
  %v3387 = vpack.c.b16 %v3349, %v3347
  %v3388 = vpack.c.b16 %v3352, %v3350
  %v3389 = vpack.c.b16 %v3353, %v3351
  %v3390 = vpack.c.b16 %v3356, %v3354
  %v3391 = vpack.c.b16 %v3357, %v3355
  %v3392 = vpack.c.b16 %v3360, %v3358
  %v3393 = vpack.c.b16 %v3361, %v3359
  %3426 = vmatprep.subr.bf16.mxu0 %v3363
  %3427 = vmatpush1.bf16.msra.mxu0 %v3362
  %3428 = vmatprep.subr.bf16.mxu0 %v3365
  %3429 = vmatpush1.bf16.msra.mxu0 %v3364
  %3430 = vmatprep.subr.bf16.mxu0 %v3367
  %3431 = vmatpush1.bf16.msra.mxu0 %v3366
  %3432 = vmatprep.subr.bf16.mxu0 %v3369
  %3433 = vmatpush1.bf16.msra.mxu0 %v3368
  %3434 = vmatprep.subr.bf16.mxu0 %v3371
  %3435 = vmatpush1.bf16.msra.mxu0 %v3370
  %3436 = vmatprep.subr.bf16.mxu0 %v3373
  %3437 = vmatpush1.bf16.msra.mxu0 %v3372
  %3438 = vmatprep.subr.bf16.mxu0 %v3375
  %3439 = vmatpush1.bf16.msra.mxu0 %v3374
  %3440 = vmatprep.subr.bf16.mxu0 %v3377
  %3441 = vmatpush1.bf16.msra.mxu0 %v3376
  %3442 = vmatprep.subr.bf16.mxu0 %v3379
  %3443 = vmatpush1.bf16.msra.mxu0 %v3378
  %3444 = vmatprep.subr.bf16.mxu0 %v3381
  %3445 = vmatpush1.bf16.msra.mxu0 %v3380
  %3446 = vmatprep.subr.bf16.mxu0 %v3383
  %3447 = vmatpush1.bf16.msra.mxu0 %v3382
  %3448 = vmatprep.subr.bf16.mxu0 %v3385
  %3449 = vmatpush1.bf16.msra.mxu0 %v3384
  %3450 = vmatprep.subr.bf16.mxu0 %v3387
  %3451 = vmatpush1.bf16.msra.mxu0 %v3386
  %3452 = vmatprep.subr.bf16.mxu0 %v3389
  %3453 = vmatpush1.bf16.msra.mxu0 %v3388
  %3454 = vmatprep.subr.bf16.mxu0 %v3391
  %3455 = vmatpush1.bf16.msra.mxu0 %v3390
  %3456 = vmatprep.subr.bf16.mxu0 %v3393
  %3457 = vmatpush1.bf16.msra.mxu0 %v3392
  %3458 = vmatprep.mubr.bf16.mxu0 %v3235
  %3459 = vmatmul.mubr.bf16.gmra.mrb[0].mxu0 %v3234
  %v3460 = vpop.f32.mrb[0].mxu0
  %v3461 = vadd.f32 0.0, %v3460
  %v3462 = vpop.f32.mrb[0].mxu0
  %v3463 = vadd.f32 0.0, %v3462
  %v3464 = vpop.f32.mrb[0].mxu0
  %v3465 = vadd.f32 0.0, %v3464
  %v3466 = vpop.f32.mrb[0].mxu0
  %v3467 = vadd.f32 0.0, %v3466
  %3468 = vmatprep.mubr.bf16.mxu0 %v3237
  %3469 = vmatmul.mubr.bf16.gmra.mrb[0].mxu0 %v3236
  %v3470 = vpop.f32.mrb[0].mxu0
  %v3471 = vadd.f32 0.0, %v3470
  %v3472 = vpop.f32.mrb[0].mxu0
  %v3473 = vadd.f32 0.0, %v3472
  %v3474 = vpop.f32.mrb[0].mxu0
  %v3475 = vadd.f32 0.0, %v3474
  %v3476 = vpop.f32.mrb[0].mxu0
  %v3477 = vadd.f32 0.0, %v3476
  %3478 = vmatprep.mubr.bf16.mxu0 %v3239
  %3479 = vmatmul.mubr.bf16.gmra.mrb[0].mxu0 %v3238
  %v3480 = vpop.f32.mrb[0].mxu0
  %v3481 = vadd.f32 0.0, %v3480
  %v3482 = vpop.f32.mrb[0].mxu0
  %v3483 = vadd.f32 0.0, %v3482
  %v3484 = vpop.f32.mrb[0].mxu0
  %v3485 = vadd.f32 0.0, %v3484
  %v3486 = vpop.f32.mrb[0].mxu0
  %v3487 = vadd.f32 0.0, %v3486
  %3488 = vmatprep.mubr.bf16.mxu0 %v3241
  %3489 = vmatmul.mubr.bf16.gmra.mrb[0].mxu0 %v3240
  %v3490 = vpop.f32.mrb[0].mxu0
  %v3491 = vadd.f32 0.0, %v3490
  %v3492 = vpop.f32.mrb[0].mxu0
  %v3493 = vadd.f32 0.0, %v3492
  %v3494 = vpop.f32.mrb[0].mxu0
  %v3495 = vadd.f32 0.0, %v3494
  %v3496 = vpop.f32.mrb[0].mxu0
  %v3497 = vadd.f32 0.0, %v3496
  %3498 = vmatprep.mubr.bf16.mxu0 %v3243
  %3499 = vmatmul.mubr.bf16.gmra.mrb[0].mxu0 %v3242
  %v3500 = vpop.f32.mrb[0].mxu0
  %v3501 = vadd.f32 0.0, %v3500
  %v3502 = vpop.f32.mrb[0].mxu0
  %v3503 = vadd.f32 0.0, %v3502
  %v3504 = vpop.f32.mrb[0].mxu0
  %v3505 = vadd.f32 0.0, %v3504
  %v3506 = vpop.f32.mrb[0].mxu0
  %v3507 = vadd.f32 0.0, %v3506
  %3508 = vmatprep.mubr.bf16.mxu0 %v3245
  %3509 = vmatmul.mubr.bf16.gmra.mrb[0].mxu0 %v3244
  %v3510 = vpop.f32.mrb[0].mxu0
  %v3511 = vadd.f32 0.0, %v3510
  %v3512 = vpop.f32.mrb[0].mxu0
  %v3513 = vadd.f32 0.0, %v3512
  %v3514 = vpop.f32.mrb[0].mxu0
  %v3515 = vadd.f32 0.0, %v3514
  %v3516 = vpop.f32.mrb[0].mxu0
  %v3517 = vadd.f32 0.0, %v3516
  %3518 = vmatprep.mubr.bf16.mxu0 %v3247
  %3519 = vmatmul.mubr.bf16.gmra.mrb[0].mxu0 %v3246
  %v3520 = vpop.f32.mrb[0].mxu0
  %v3521 = vadd.f32 0.0, %v3520
  %v3522 = vpop.f32.mrb[0].mxu0
  %v3523 = vadd.f32 0.0, %v3522
  %v3524 = vpop.f32.mrb[0].mxu0
  %v3525 = vadd.f32 0.0, %v3524
  %v3526 = vpop.f32.mrb[0].mxu0
  %v3527 = vadd.f32 0.0, %v3526
  %3528 = vmatprep.mubr.bf16.mxu0 %v3249
  %3529 = vmatmul.mubr.bf16.gmra.mrb[0].mxu0 %v3248
  %v3530 = vpop.f32.mrb[0].mxu0
  %v3531 = vadd.f32 0.0, %v3530
  %v3532 = vpop.f32.mrb[0].mxu0
  %v3533 = vadd.f32 0.0, %v3532
  %v3534 = vpop.f32.mrb[0].mxu0
  %v3535 = vadd.f32 0.0, %v3534
  %v3536 = vpop.f32.mrb[0].mxu0
  %v3537 = vadd.f32 0.0, %v3536
  %3538 = vdwg.mxu0
  %v3539 = vld [vmem:[#allocation2] sm:$0xff]
  %v3540 = vld [vmem:[#allocation2 + $0x8] sm:$0xff]
  %v3541 = vld [vmem:[#allocation2 + $0x10] sm:$0xff]
  %v3542 = vld [vmem:[#allocation2 + $0x18] sm:$0xff]
  %v3543 = vld [vmem:[#allocation2 + $0x20] sm:$0xff]
  %v3544 = vld [vmem:[#allocation2 + $0x28] sm:$0xff]
  %v3545 = vld [vmem:[#allocation2 + $0x30] sm:$0xff]
  %v3546 = vld [vmem:[#allocation2 + $0x38] sm:$0xff]
  %v3547 = vld [vmem:[#allocation2 + $0x40] sm:$0xff]
  %v3548 = vld [vmem:[#allocation2 + $0x48] sm:$0xff]
  %v3549 = vld [vmem:[#allocation2 + $0x50] sm:$0xff]
  %v3550 = vld [vmem:[#allocation2 + $0x58] sm:$0xff]
  %v3551 = vld [vmem:[#allocation2 + $0x60] sm:$0xff]
  %v3552 = vld [vmem:[#allocation2 + $0x68] sm:$0xff]
  %v3553 = vld [vmem:[#allocation2 + $0x70] sm:$0xff]
  %v3554 = vld [vmem:[#allocation2 + $0x78] sm:$0xff]
  %v3555 = vld [vmem:[#allocation2 + $0x80] sm:$0xff]
  %v3556 = vld [vmem:[#allocation2 + $0x88] sm:$0xff]
  %v3557 = vld [vmem:[#allocation2 + $0x90] sm:$0xff]
  %v3558 = vld [vmem:[#allocation2 + $0x98] sm:$0xff]
  %v3559 = vld [vmem:[#allocation2 + $0xa0] sm:$0xff]
  %v3560 = vld [vmem:[#allocation2 + $0xa8] sm:$0xff]
  %v3561 = vld [vmem:[#allocation2 + $0xb0] sm:$0xff]
  %v3562 = vld [vmem:[#allocation2 + $0xb8] sm:$0xff]
  %v3563 = vld [vmem:[#allocation2 + $0xc0] sm:$0xff]
  %v3564 = vld [vmem:[#allocation2 + $0xc8] sm:$0xff]
  %v3565 = vld [vmem:[#allocation2 + $0xd0] sm:$0xff]
  %v3566 = vld [vmem:[#allocation2 + $0xd8] sm:$0xff]
  %v3567 = vld [vmem:[#allocation2 + $0xe0] sm:$0xff]
  %v3568 = vld [vmem:[#allocation2 + $0xe8] sm:$0xff]
  %v3569 = vld [vmem:[#allocation2 + $0xf0] sm:$0xff]
  %v3570 = vld [vmem:[#allocation2 + $0xf8] sm:$0xff]
  %v3571 = vadd.f32 %v3539, %v3461
  %v3572 = vadd.f32 %v3540, %v3463
  %v3573 = vadd.f32 %v3541, %v3465
  %v3574 = vadd.f32 %v3542, %v3467
  %v3575 = vadd.f32 %v3543, %v3471
  %v3576 = vadd.f32 %v3544, %v3473
  %v3577 = vadd.f32 %v3545, %v3475
  %v3578 = vadd.f32 %v3546, %v3477
  %v3579 = vadd.f32 %v3547, %v3481
  %v3580 = vadd.f32 %v3548, %v3483
  %v3581 = vadd.f32 %v3549, %v3485
  %v3582 = vadd.f32 %v3550, %v3487
  %v3583 = vadd.f32 %v3551, %v3491
  %v3584 = vadd.f32 %v3552, %v3493
  %v3585 = vadd.f32 %v3553, %v3495
  %v3586 = vadd.f32 %v3554, %v3497
  %v3587 = vadd.f32 %v3555, %v3501
  %v3588 = vadd.f32 %v3556, %v3503
  %v3589 = vadd.f32 %v3557, %v3505
  %v3590 = vadd.f32 %v3558, %v3507
  %v3591 = vadd.f32 %v3559, %v3511
  %v3592 = vadd.f32 %v3560, %v3513
  %v3593 = vadd.f32 %v3561, %v3515
  %v3594 = vadd.f32 %v3562, %v3517
  %v3595 = vadd.f32 %v3563, %v3521
  %v3596 = vadd.f32 %v3564, %v3523
  %v3597 = vadd.f32 %v3565, %v3525
  %v3598 = vadd.f32 %v3566, %v3527
  %v3599 = vadd.f32 %v3567, %v3531
  %v3600 = vadd.f32 %v3568, %v3533
  %v3601 = vadd.f32 %v3569, %v3535
  %v3602 = vadd.f32 %v3570, %v3537
  %3603 = vst [vmem:[#allocation2] sm:$0xff] %v3571
  %3604 = vst [vmem:[#allocation2 + $0x8] sm:$0xff] %v3572
  %3605 = vst [vmem:[#allocation2 + $0x10] sm:$0xff] %v3573
  %3606 = vst [vmem:[#allocation2 + $0x18] sm:$0xff] %v3574
  %3607 = vst [vmem:[#allocation2 + $0x20] sm:$0xff] %v3575
  %3608 = vst [vmem:[#allocation2 + $0x28] sm:$0xff] %v3576
  %3609 = vst [vmem:[#allocation2 + $0x30] sm:$0xff] %v3577
  %3610 = vst [vmem:[#allocation2 + $0x38] sm:$0xff] %v3578
  %3611 = vst [vmem:[#allocation2 + $0x40] sm:$0xff] %v3579
  %3612 = vst [vmem:[#allocation2 + $0x48] sm:$0xff] %v3580
  %3613 = vst [vmem:[#allocation2 + $0x50] sm:$0xff] %v3581
  %3614 = vst [vmem:[#allocation2 + $0x58] sm:$0xff] %v3582
  %3615 = vst [vmem:[#allocation2 + $0x60] sm:$0xff] %v3583
  %3616 = vst [vmem:[#allocation2 + $0x68] sm:$0xff] %v3584
  %3617 = vst [vmem:[#allocation2 + $0x70] sm:$0xff] %v3585
  %3618 = vst [vmem:[#allocation2 + $0x78] sm:$0xff] %v3586
  %3619 = vst [vmem:[#allocation2 + $0x80] sm:$0xff] %v3587
  %3620 = vst [vmem:[#allocation2 + $0x88] sm:$0xff] %v3588
  %3621 = vst [vmem:[#allocation2 + $0x90] sm:$0xff] %v3589
  %3622 = vst [vmem:[#allocation2 + $0x98] sm:$0xff] %v3590
  %3623 = vst [vmem:[#allocation2 + $0xa0] sm:$0xff] %v3591
  %3624 = vst [vmem:[#allocation2 + $0xa8] sm:$0xff] %v3592
  %3625 = vst [vmem:[#allocation2 + $0xb0] sm:$0xff] %v3593
  %3626 = vst [vmem:[#allocation2 + $0xb8] sm:$0xff] %v3594
  %3627 = vst [vmem:[#allocation2 + $0xc0] sm:$0xff] %v3595
  %3628 = vst [vmem:[#allocation2 + $0xc8] sm:$0xff] %v3596
  %3629 = vst [vmem:[#allocation2 + $0xd0] sm:$0xff] %v3597
  %3630 = vst [vmem:[#allocation2 + $0xd8] sm:$0xff] %v3598
  %3631 = vst [vmem:[#allocation2 + $0xe0] sm:$0xff] %v3599
  %3632 = vst [vmem:[#allocation2 + $0xe8] sm:$0xff] %v3600
  %3633 = vst [vmem:[#allocation2 + $0xf0] sm:$0xff] %v3601
  %3634 = vst [vmem:[#allocation2 + $0xf8] sm:$0xff] %v3602
  %v3639 = vunpack.c.l.b16 %v72
  %v3640 = vunpack.c.l.b16 %v73
  %v3641 = vunpack.c.l.b16 %v92
  %v3642 = vunpack.c.l.b16 %v93
  %s3643 = scalar_lea.vmem %s1, 1536
  %v3644 = vld [vmem:[%s3643] sm:$0xff]
  %v3645 = vld [vmem:[%s3643 + $0x8] sm:$0xff]
  %v3646 = vld [vmem:[%s3643 + $0x10] sm:$0xff]
  %v3647 = vld [vmem:[%s3643 + $0x18] sm:$0xff]
  %v3648 = vld [vmem:[%s3643 + $0x20] sm:$0xff]
  %v3649 = vld [vmem:[%s3643 + $0x28] sm:$0xff]
  %v3650 = vld [vmem:[%s3643 + $0x30] sm:$0xff]
  %v3651 = vld [vmem:[%s3643 + $0x38] sm:$0xff]
  %v3652 = vld [vmem:[%s3643 + $0x40] sm:$0xff]
  %v3653 = vld [vmem:[%s3643 + $0x48] sm:$0xff]
  %v3654 = vld [vmem:[%s3643 + $0x50] sm:$0xff]
  %v3655 = vld [vmem:[%s3643 + $0x58] sm:$0xff]
  %v3656 = vld [vmem:[%s3643 + $0x60] sm:$0xff]
  %v3657 = vld [vmem:[%s3643 + $0x68] sm:$0xff]
  %v3658 = vld [vmem:[%s3643 + $0x70] sm:$0xff]
  %v3659 = vld [vmem:[%s3643 + $0x78] sm:$0xff]
  %v3660 = vld [vmem:[%s3643 + $0x80] sm:$0xff]
  %v3661 = vld [vmem:[%s3643 + $0x88] sm:$0xff]
  %v3662 = vld [vmem:[%s3643 + $0x90] sm:$0xff]
  %v3663 = vld [vmem:[%s3643 + $0x98] sm:$0xff]
  %v3664 = vld [vmem:[%s3643 + $0xa0] sm:$0xff]
  %v3665 = vld [vmem:[%s3643 + $0xa8] sm:$0xff]
  %v3666 = vld [vmem:[%s3643 + $0xb0] sm:$0xff]
  %v3667 = vld [vmem:[%s3643 + $0xb8] sm:$0xff]
  %v3668 = vld [vmem:[%s3643 + $0xc0] sm:$0xff]
  %v3669 = vld [vmem:[%s3643 + $0xc8] sm:$0xff]
  %v3670 = vld [vmem:[%s3643 + $0xd0] sm:$0xff]
  %v3671 = vld [vmem:[%s3643 + $0xd8] sm:$0xff]
  %v3672 = vld [vmem:[%s3643 + $0xe0] sm:$0xff]
  %v3673 = vld [vmem:[%s3643 + $0xe8] sm:$0xff]
  %v3674 = vld [vmem:[%s3643 + $0xf0] sm:$0xff]
  %v3675 = vld [vmem:[%s3643 + $0xf8] sm:$0xff]
  %v3676 = vpack.c.b16 %v3639, %v2253
  %v3677 = vpack.c.b16 %v3640, %v2254
  %v3678 = vpack.c.b16 %v3641, %v2255
  %v3679 = vpack.c.b16 %v3642, %v2256
  %v3716 = vunpack.c.l.b16 %v3644
  %v3717 = vunpack.c.h.b16 %v3644
  %v3718 = vunpack.c.l.b16 %v3645
  %v3719 = vunpack.c.h.b16 %v3645
  %v3720 = vunpack.c.l.b16 %v3646
  %v3721 = vunpack.c.h.b16 %v3646
  %v3722 = vunpack.c.l.b16 %v3647
  %v3723 = vunpack.c.h.b16 %v3647
  %v3724 = vunpack.c.l.b16 %v3648
  %v3725 = vunpack.c.h.b16 %v3648
  %v3726 = vunpack.c.l.b16 %v3649
  %v3727 = vunpack.c.h.b16 %v3649
  %v3728 = vunpack.c.l.b16 %v3650
  %v3729 = vunpack.c.h.b16 %v3650
  %v3730 = vunpack.c.l.b16 %v3651
  %v3731 = vunpack.c.h.b16 %v3651
  %v3732 = vunpack.c.l.b16 %v3652
  %v3733 = vunpack.c.h.b16 %v3652
  %v3734 = vunpack.c.l.b16 %v3653
  %v3735 = vunpack.c.h.b16 %v3653
  %v3736 = vunpack.c.l.b16 %v3654
  %v3737 = vunpack.c.h.b16 %v3654
  %v3738 = vunpack.c.l.b16 %v3655
  %v3739 = vunpack.c.h.b16 %v3655
  %v3740 = vunpack.c.l.b16 %v3656
  %v3741 = vunpack.c.h.b16 %v3656
  %v3742 = vunpack.c.l.b16 %v3657
  %v3743 = vunpack.c.h.b16 %v3657
  %v3744 = vunpack.c.l.b16 %v3658
  %v3745 = vunpack.c.h.b16 %v3658
  %v3746 = vunpack.c.l.b16 %v3659
  %v3747 = vunpack.c.h.b16 %v3659
  %v3748 = vunpack.c.l.b16 %v3660
  %v3749 = vunpack.c.h.b16 %v3660
  %v3750 = vunpack.c.l.b16 %v3661
  %v3751 = vunpack.c.h.b16 %v3661
  %v3752 = vunpack.c.l.b16 %v3662
  %v3753 = vunpack.c.h.b16 %v3662
  %v3754 = vunpack.c.l.b16 %v3663
  %v3755 = vunpack.c.h.b16 %v3663
  %v3756 = vunpack.c.l.b16 %v3664
  %v3757 = vunpack.c.h.b16 %v3664
  %v3758 = vunpack.c.l.b16 %v3665
  %v3759 = vunpack.c.h.b16 %v3665
  %v3760 = vunpack.c.l.b16 %v3666
  %v3761 = vunpack.c.h.b16 %v3666
  %v3762 = vunpack.c.l.b16 %v3667
  %v3763 = vunpack.c.h.b16 %v3667
  %v3764 = vunpack.c.l.b16 %v3668
  %v3765 = vunpack.c.h.b16 %v3668
  %v3766 = vunpack.c.l.b16 %v3669
  %v3767 = vunpack.c.h.b16 %v3669
  %v3768 = vunpack.c.l.b16 %v3670
  %v3769 = vunpack.c.h.b16 %v3670
  %v3770 = vunpack.c.l.b16 %v3671
  %v3771 = vunpack.c.h.b16 %v3671
  %v3772 = vunpack.c.l.b16 %v3672
  %v3773 = vunpack.c.h.b16 %v3672
  %v3774 = vunpack.c.l.b16 %v3673
  %v3775 = vunpack.c.h.b16 %v3673
  %v3776 = vunpack.c.l.b16 %v3674
  %v3777 = vunpack.c.h.b16 %v3674
  %v3778 = vunpack.c.l.b16 %v3675
  %v3779 = vunpack.c.h.b16 %v3675
  %v3780 = vpack.c.b16 %v3718, %v3716
  %v3781 = vpack.c.b16 %v3719, %v3717
  %v3782 = vpack.c.b16 %v3722, %v3720
  %v3783 = vpack.c.b16 %v3723, %v3721
  %v3784 = vpack.c.b16 %v3726, %v3724
  %v3785 = vpack.c.b16 %v3727, %v3725
  %v3786 = vpack.c.b16 %v3730, %v3728
  %v3787 = vpack.c.b16 %v3731, %v3729
  %v3788 = vpack.c.b16 %v3734, %v3732
  %v3789 = vpack.c.b16 %v3735, %v3733
  %v3790 = vpack.c.b16 %v3738, %v3736
  %v3791 = vpack.c.b16 %v3739, %v3737
  %v3792 = vpack.c.b16 %v3742, %v3740
  %v3793 = vpack.c.b16 %v3743, %v3741
  %v3794 = vpack.c.b16 %v3746, %v3744
  %v3795 = vpack.c.b16 %v3747, %v3745
  %v3796 = vpack.c.b16 %v3750, %v3748
  %v3797 = vpack.c.b16 %v3751, %v3749
  %v3798 = vpack.c.b16 %v3754, %v3752
  %v3799 = vpack.c.b16 %v3755, %v3753
  %v3800 = vpack.c.b16 %v3758, %v3756
  %v3801 = vpack.c.b16 %v3759, %v3757
  %v3802 = vpack.c.b16 %v3762, %v3760
  %v3803 = vpack.c.b16 %v3763, %v3761
  %v3804 = vpack.c.b16 %v3766, %v3764
  %v3805 = vpack.c.b16 %v3767, %v3765
  %v3806 = vpack.c.b16 %v3770, %v3768
  %v3807 = vpack.c.b16 %v3771, %v3769
  %v3808 = vpack.c.b16 %v3774, %v3772
  %v3809 = vpack.c.b16 %v3775, %v3773
  %v3810 = vpack.c.b16 %v3778, %v3776
  %v3811 = vpack.c.b16 %v3779, %v3777
  %3844 = vmatprep.subr.bf16.mxu0 %v3781
  %3845 = vmatpush1.bf16.msra.mxu0 %v3780
  %3846 = vmatprep.subr.bf16.mxu0 %v3783
  %3847 = vmatpush1.bf16.msra.mxu0 %v3782
  %3848 = vmatprep.subr.bf16.mxu0 %v3785
  %3849 = vmatpush1.bf16.msra.mxu0 %v3784
  %3850 = vmatprep.subr.bf16.mxu0 %v3787
  %3851 = vmatpush1.bf16.msra.mxu0 %v3786
  %3852 = vmatprep.subr.bf16.mxu0 %v3789
  %3853 = vmatpush1.bf16.msra.mxu0 %v3788
  %3854 = vmatprep.subr.bf16.mxu0 %v3791
  %3855 = vmatpush1.bf16.msra.mxu0 %v3790
  %3856 = vmatprep.subr.bf16.mxu0 %v3793
  %3857 = vmatpush1.bf16.msra.mxu0 %v3792
  %3858 = vmatprep.subr.bf16.mxu0 %v3795
  %3859 = vmatpush1.bf16.msra.mxu0 %v3794
  %3860 = vmatprep.subr.bf16.mxu0 %v3797
  %3861 = vmatpush1.bf16.msra.mxu0 %v3796
  %3862 = vmatprep.subr.bf16.mxu0 %v3799
  %3863 = vmatpush1.bf16.msra.mxu0 %v3798
  %3864 = vmatprep.subr.bf16.mxu0 %v3801
  %3865 = vmatpush1.bf16.msra.mxu0 %v3800
  %3866 = vmatprep.subr.bf16.mxu0 %v3803
  %3867 = vmatpush1.bf16.msra.mxu0 %v3802
  %3868 = vmatprep.subr.bf16.mxu0 %v3805
  %3869 = vmatpush1.bf16.msra.mxu0 %v3804
  %3870 = vmatprep.subr.bf16.mxu0 %v3807
  %3871 = vmatpush1.bf16.msra.mxu0 %v3806
  %3872 = vmatprep.subr.bf16.mxu0 %v3809
  %3873 = vmatpush1.bf16.msra.mxu0 %v3808
  %3874 = vmatprep.subr.bf16.mxu0 %v3811
  %3875 = vmatpush1.bf16.msra.mxu0 %v3810
  %3876 = vmatprep.mubr.bf16.mxu0 %v433
  %3877 = vmatmul.mubr.bf16.gmra.mrb[0].mxu0 %v432
  %v3878 = vpop.f32.mrb[0].mxu0
  %v3879 = vadd.f32 0.0, %v3878
  %v3880 = vpop.f32.mrb[0].mxu0
  %v3881 = vadd.f32 0.0, %v3880
  %v3882 = vpop.f32.mrb[0].mxu0
  %v3883 = vadd.f32 0.0, %v3882
  %v3884 = vpop.f32.mrb[0].mxu0
  %v3885 = vadd.f32 0.0, %v3884
  %3886 = vmatprep.mubr.bf16.mxu0 %v435
  %3887 = vmatmul.mubr.bf16.gmra.mrb[0].mxu0 %v434
  %v3888 = vpop.f32.mrb[0].mxu0
  %v3889 = vadd.f32 0.0, %v3888
  %v3890 = vpop.f32.mrb[0].mxu0
  %v3891 = vadd.f32 0.0, %v3890
  %v3892 = vpop.f32.mrb[0].mxu0
  %v3893 = vadd.f32 0.0, %v3892
  %v3894 = vpop.f32.mrb[0].mxu0
  %v3895 = vadd.f32 0.0, %v3894
  %3896 = vmatprep.mubr.bf16.mxu0 %v437
  %3897 = vmatmul.mubr.bf16.gmra.mrb[0].mxu0 %v436
  %v3898 = vpop.f32.mrb[0].mxu0
  %v3899 = vadd.f32 0.0, %v3898
  %v3900 = vpop.f32.mrb[0].mxu0
  %v3901 = vadd.f32 0.0, %v3900
  %v3902 = vpop.f32.mrb[0].mxu0
  %v3903 = vadd.f32 0.0, %v3902
  %v3904 = vpop.f32.mrb[0].mxu0
  %v3905 = vadd.f32 0.0, %v3904
  %3906 = vmatprep.mubr.bf16.mxu0 %v3677
  %3907 = vmatmul.mubr.bf16.gmra.mrb[0].mxu0 %v3676
  %v3908 = vpop.f32.mrb[0].mxu0
  %v3909 = vadd.f32 0.0, %v3908
  %v3910 = vpop.f32.mrb[0].mxu0
  %v3911 = vadd.f32 0.0, %v3910
  %v3912 = vpop.f32.mrb[0].mxu0
  %v3913 = vadd.f32 0.0, %v3912
  %v3914 = vpop.f32.mrb[0].mxu0
  %v3915 = vadd.f32 0.0, %v3914
  %3916 = vmatprep.mubr.bf16.mxu0 %v441
  %3917 = vmatmul.mubr.bf16.gmra.mrb[0].mxu0 %v440
  %v3918 = vpop.f32.mrb[0].mxu0
  %v3919 = vadd.f32 0.0, %v3918
  %v3920 = vpop.f32.mrb[0].mxu0
  %v3921 = vadd.f32 0.0, %v3920
  %v3922 = vpop.f32.mrb[0].mxu0
  %v3923 = vadd.f32 0.0, %v3922
  %v3924 = vpop.f32.mrb[0].mxu0
  %v3925 = vadd.f32 0.0, %v3924
  %3926 = vmatprep.mubr.bf16.mxu0 %v443
  %3927 = vmatmul.mubr.bf16.gmra.mrb[0].mxu0 %v442
  %v3928 = vpop.f32.mrb[0].mxu0
  %v3929 = vadd.f32 0.0, %v3928
  %v3930 = vpop.f32.mrb[0].mxu0
  %v3931 = vadd.f32 0.0, %v3930
  %v3932 = vpop.f32.mrb[0].mxu0
  %v3933 = vadd.f32 0.0, %v3932
  %v3934 = vpop.f32.mrb[0].mxu0
  %v3935 = vadd.f32 0.0, %v3934
  %3936 = vmatprep.mubr.bf16.mxu0 %v445
  %3937 = vmatmul.mubr.bf16.gmra.mrb[0].mxu0 %v444
  %v3938 = vpop.f32.mrb[0].mxu0
  %v3939 = vadd.f32 0.0, %v3938
  %v3940 = vpop.f32.mrb[0].mxu0
  %v3941 = vadd.f32 0.0, %v3940
  %v3942 = vpop.f32.mrb[0].mxu0
  %v3943 = vadd.f32 0.0, %v3942
  %v3944 = vpop.f32.mrb[0].mxu0
  %v3945 = vadd.f32 0.0, %v3944
  %3946 = vmatprep.mubr.bf16.mxu0 %v3679
  %3947 = vmatmul.mubr.bf16.gmra.mrb[0].mxu0 %v3678
  %v3948 = vpop.f32.mrb[0].mxu0
  %v3949 = vadd.f32 0.0, %v3948
  %v3950 = vpop.f32.mrb[0].mxu0
  %v3951 = vadd.f32 0.0, %v3950
  %v3952 = vpop.f32.mrb[0].mxu0
  %v3953 = vadd.f32 0.0, %v3952
  %v3954 = vpop.f32.mrb[0].mxu0
  %v3955 = vadd.f32 0.0, %v3954
  %3956 = vdwg.mxu0
  %v3957 = vld [vmem:[#allocation2] sm:$0xff]
  %v3958 = vld [vmem:[#allocation2 + $0x8] sm:$0xff]
  %v3959 = vld [vmem:[#allocation2 + $0x10] sm:$0xff]
  %v3960 = vld [vmem:[#allocation2 + $0x18] sm:$0xff]
  %v3961 = vld [vmem:[#allocation2 + $0x20] sm:$0xff]
  %v3962 = vld [vmem:[#allocation2 + $0x28] sm:$0xff]
  %v3963 = vld [vmem:[#allocation2 + $0x30] sm:$0xff]
  %v3964 = vld [vmem:[#allocation2 + $0x38] sm:$0xff]
  %v3965 = vld [vmem:[#allocation2 + $0x40] sm:$0xff]
  %v3966 = vld [vmem:[#allocation2 + $0x48] sm:$0xff]
  %v3967 = vld [vmem:[#allocation2 + $0x50] sm:$0xff]
  %v3968 = vld [vmem:[#allocation2 + $0x58] sm:$0xff]
  %v3969 = vld [vmem:[#allocation2 + $0x60] sm:$0xff]
  %v3970 = vld [vmem:[#allocation2 + $0x68] sm:$0xff]
  %v3971 = vld [vmem:[#allocation2 + $0x70] sm:$0xff]
  %v3972 = vld [vmem:[#allocation2 + $0x78] sm:$0xff]
  %v3973 = vld [vmem:[#allocation2 + $0x80] sm:$0xff]
  %v3974 = vld [vmem:[#allocation2 + $0x88] sm:$0xff]
  %v3975 = vld [vmem:[#allocation2 + $0x90] sm:$0xff]
  %v3976 = vld [vmem:[#allocation2 + $0x98] sm:$0xff]
  %v3977 = vld [vmem:[#allocation2 + $0xa0] sm:$0xff]
  %v3978 = vld [vmem:[#allocation2 + $0xa8] sm:$0xff]
  %v3979 = vld [vmem:[#allocation2 + $0xb0] sm:$0xff]
  %v3980 = vld [vmem:[#allocation2 + $0xb8] sm:$0xff]
  %v3981 = vld [vmem:[#allocation2 + $0xc0] sm:$0xff]
  %v3982 = vld [vmem:[#allocation2 + $0xc8] sm:$0xff]
  %v3983 = vld [vmem:[#allocation2 + $0xd0] sm:$0xff]
  %v3984 = vld [vmem:[#allocation2 + $0xd8] sm:$0xff]
  %v3985 = vld [vmem:[#allocation2 + $0xe0] sm:$0xff]
  %v3986 = vld [vmem:[#allocation2 + $0xe8] sm:$0xff]
  %v3987 = vld [vmem:[#allocation2 + $0xf0] sm:$0xff]
  %v3988 = vld [vmem:[#allocation2 + $0xf8] sm:$0xff]
  %v3989 = vadd.f32 %v3957, %v3879
  %v3990 = vadd.f32 %v3958, %v3881
  %v3991 = vadd.f32 %v3959, %v3883
  %v3992 = vadd.f32 %v3960, %v3885
  %v3993 = vadd.f32 %v3961, %v3889
  %v3994 = vadd.f32 %v3962, %v3891
  %v3995 = vadd.f32 %v3963, %v3893
  %v3996 = vadd.f32 %v3964, %v3895
  %v3997 = vadd.f32 %v3965, %v3899
  %v3998 = vadd.f32 %v3966, %v3901
  %v3999 = vadd.f32 %v3967, %v3903
  %v4000 = vadd.f32 %v3968, %v3905
  %v4001 = vadd.f32 %v3969, %v3909
  %v4002 = vadd.f32 %v3970, %v3911
  %v4003 = vadd.f32 %v3971, %v3913
  %v4004 = vadd.f32 %v3972, %v3915
  %v4005 = vadd.f32 %v3973, %v3919
  %v4006 = vadd.f32 %v3974, %v3921
  %v4007 = vadd.f32 %v3975, %v3923
  %v4008 = vadd.f32 %v3976, %v3925
  %v4009 = vadd.f32 %v3977, %v3929
  %v4010 = vadd.f32 %v3978, %v3931
  %v4011 = vadd.f32 %v3979, %v3933
  %v4012 = vadd.f32 %v3980, %v3935
  %v4013 = vadd.f32 %v3981, %v3939
  %v4014 = vadd.f32 %v3982, %v3941
  %v4015 = vadd.f32 %v3983, %v3943
  %v4016 = vadd.f32 %v3984, %v3945
  %v4017 = vadd.f32 %v3985, %v3949
  %v4018 = vadd.f32 %v3986, %v3951
  %v4019 = vadd.f32 %v3987, %v3953
  %v4020 = vadd.f32 %v3988, %v3955
  %4021 = vst [vmem:[#allocation2] sm:$0xff] %v3989
  %4022 = vst [vmem:[#allocation2 + $0x8] sm:$0xff] %v3990
  %4023 = vst [vmem:[#allocation2 + $0x10] sm:$0xff] %v3991
  %4024 = vst [vmem:[#allocation2 + $0x18] sm:$0xff] %v3992
  %4025 = vst [vmem:[#allocation2 + $0x20] sm:$0xff] %v3993
  %4026 = vst [vmem:[#allocation2 + $0x28] sm:$0xff] %v3994
  %4027 = vst [vmem:[#allocation2 + $0x30] sm:$0xff] %v3995
  %4028 = vst [vmem:[#allocation2 + $0x38] sm:$0xff] %v3996
  %4029 = vst [vmem:[#allocation2 + $0x40] sm:$0xff] %v3997
  %4030 = vst [vmem:[#allocation2 + $0x48] sm:$0xff] %v3998
  %4031 = vst [vmem:[#allocation2 + $0x50] sm:$0xff] %v3999
  %4032 = vst [vmem:[#allocation2 + $0x58] sm:$0xff] %v4000
  %4033 = vst [vmem:[#allocation2 + $0x60] sm:$0xff] %v4001
  %4034 = vst [vmem:[#allocation2 + $0x68] sm:$0xff] %v4002
  %4035 = vst [vmem:[#allocation2 + $0x70] sm:$0xff] %v4003
  %4036 = vst [vmem:[#allocation2 + $0x78] sm:$0xff] %v4004
  %4037 = vst [vmem:[#allocation2 + $0x80] sm:$0xff] %v4005
  %4038 = vst [vmem:[#allocation2 + $0x88] sm:$0xff] %v4006
  %4039 = vst [vmem:[#allocation2 + $0x90] sm:$0xff] %v4007
  %4040 = vst [vmem:[#allocation2 + $0x98] sm:$0xff] %v4008
  %4041 = vst [vmem:[#allocation2 + $0xa0] sm:$0xff] %v4009
  %4042 = vst [vmem:[#allocation2 + $0xa8] sm:$0xff] %v4010
  %4043 = vst [vmem:[#allocation2 + $0xb0] sm:$0xff] %v4011
  %4044 = vst [vmem:[#allocation2 + $0xb8] sm:$0xff] %v4012
  %4045 = vst [vmem:[#allocation2 + $0xc0] sm:$0xff] %v4013
  %4046 = vst [vmem:[#allocation2 + $0xc8] sm:$0xff] %v4014
  %4047 = vst [vmem:[#allocation2 + $0xd0] sm:$0xff] %v4015
  %4048 = vst [vmem:[#allocation2 + $0xd8] sm:$0xff] %v4016
  %4049 = vst [vmem:[#allocation2 + $0xe0] sm:$0xff] %v4017
  %4050 = vst [vmem:[#allocation2 + $0xe8] sm:$0xff] %v4018
  %4051 = vst [vmem:[#allocation2 + $0xf0] sm:$0xff] %v4019
  %4052 = vst [vmem:[#allocation2 + $0xf8] sm:$0xff] %v4020
  %v4057 = vunpack.c.l.b16 %v192
  %v4058 = vunpack.c.l.b16 %v193
  %v4059 = vunpack.c.h.b16 %v192
  %v4060 = vunpack.c.h.b16 %v193
  %v4061 = vunpack.c.l.b16 %v212
  %v4062 = vunpack.c.l.b16 %v213
  %v4063 = vunpack.c.h.b16 %v212
  %v4064 = vunpack.c.h.b16 %v213
  %v4065 = vpack.c.b16 %v4058, %v4057
  %v4066 = vpack.c.b16 %v4060, %v4059
  %v4067 = vpack.c.b16 %v4062, %v4061
  %v4068 = vpack.c.b16 %v4064, %v4063
  %v4070 = vshrl.u32 %v4065, 16
  %v4072 = vrot.slane %v4070, 4
  %v4073 = vshll.u32 %v4065, 16
  %v4075 = vrot.slane %v4073, 5
  %v4076 = vor.u32 %v4072, %v4075
  %v4077 = vrot.slane %v4076, 4
  %v4079 = vshll.u32 %v4066, 16
  %v4081 = vrot.slane %v4079, 5
  %v4082 = vsel %vm897, %v4077, %v4081
  %v4084 = vshrl.u32 %v4067, 16
  %v4086 = vrot.slane %v4084, 4
  %v4087 = vshll.u32 %v4067, 16
  %v4089 = vrot.slane %v4087, 5
  %v4090 = vor.u32 %v4086, %v4089
  %v4091 = vrot.slane %v4090, 4
  %v4093 = vshll.u32 %v4068, 16
  %v4095 = vrot.slane %v4093, 5
  %v4096 = vsel %vm897, %v4091, %v4095
  %s4097 = scalar_lea.vmem %s1, 1792
  %v4098 = vld [vmem:[%s4097] sm:$0xff]
  %v4099 = vld [vmem:[%s4097 + $0x8] sm:$0xff]
  %v4100 = vld [vmem:[%s4097 + $0x10] sm:$0xff]
  %v4101 = vld [vmem:[%s4097 + $0x18] sm:$0xff]
  %v4102 = vld [vmem:[%s4097 + $0x20] sm:$0xff]
  %v4103 = vld [vmem:[%s4097 + $0x28] sm:$0xff]
  %v4104 = vld [vmem:[%s4097 + $0x30] sm:$0xff]
  %v4105 = vld [vmem:[%s4097 + $0x38] sm:$0xff]
  %v4106 = vld [vmem:[%s4097 + $0x40] sm:$0xff]
  %v4107 = vld [vmem:[%s4097 + $0x48] sm:$0xff]
  %v4108 = vld [vmem:[%s4097 + $0x50] sm:$0xff]
  %v4109 = vld [vmem:[%s4097 + $0x58] sm:$0xff]
  %v4110 = vld [vmem:[%s4097 + $0x60] sm:$0xff]
  %v4111 = vld [vmem:[%s4097 + $0x68] sm:$0xff]
  %v4112 = vld [vmem:[%s4097 + $0x70] sm:$0xff]
  %v4113 = vld [vmem:[%s4097 + $0x78] sm:$0xff]
  %v4114 = vld [vmem:[%s4097 + $0x80] sm:$0xff]
  %v4115 = vld [vmem:[%s4097 + $0x88] sm:$0xff]
  %v4116 = vld [vmem:[%s4097 + $0x90] sm:$0xff]
  %v4117 = vld [vmem:[%s4097 + $0x98] sm:$0xff]
  %v4118 = vld [vmem:[%s4097 + $0xa0] sm:$0xff]
  %v4119 = vld [vmem:[%s4097 + $0xa8] sm:$0xff]
  %v4120 = vld [vmem:[%s4097 + $0xb0] sm:$0xff]
  %v4121 = vld [vmem:[%s4097 + $0xb8] sm:$0xff]
  %v4122 = vld [vmem:[%s4097 + $0xc0] sm:$0xff]
  %v4123 = vld [vmem:[%s4097 + $0xc8] sm:$0xff]
  %v4124 = vld [vmem:[%s4097 + $0xd0] sm:$0xff]
  %v4125 = vld [vmem:[%s4097 + $0xd8] sm:$0xff]
  %v4126 = vld [vmem:[%s4097 + $0xe0] sm:$0xff]
  %v4127 = vld [vmem:[%s4097 + $0xe8] sm:$0xff]
  %v4128 = vld [vmem:[%s4097 + $0xf0] sm:$0xff]
  %v4129 = vld [vmem:[%s4097 + $0xf8] sm:$0xff]
  %v4130 = vunpack.c.l.b16 %v4082
  %v4131 = vunpack.c.h.b16 %v4082
  %v4132 = vunpack.c.l.b16 %v4096
  %v4133 = vunpack.c.h.b16 %v4096
  %v4134 = vpack.c.b16 %v4130, %v2768
  %v4135 = vpack.c.b16 %v4131, %v2769
  %v4136 = vpack.c.b16 %v4132, %v2770
  %v4137 = vpack.c.b16 %v4133, %v2771
  %v4174 = vunpack.c.l.b16 %v4098
  %v4175 = vunpack.c.h.b16 %v4098
  %v4176 = vunpack.c.l.b16 %v4099
  %v4177 = vunpack.c.h.b16 %v4099
  %v4178 = vunpack.c.l.b16 %v4100
  %v4179 = vunpack.c.h.b16 %v4100
  %v4180 = vunpack.c.l.b16 %v4101
  %v4181 = vunpack.c.h.b16 %v4101
  %v4182 = vunpack.c.l.b16 %v4102
  %v4183 = vunpack.c.h.b16 %v4102
  %v4184 = vunpack.c.l.b16 %v4103
  %v4185 = vunpack.c.h.b16 %v4103
  %v4186 = vunpack.c.l.b16 %v4104
  %v4187 = vunpack.c.h.b16 %v4104
  %v4188 = vunpack.c.l.b16 %v4105
  %v4189 = vunpack.c.h.b16 %v4105
  %v4190 = vunpack.c.l.b16 %v4106
  %v4191 = vunpack.c.h.b16 %v4106
  %v4192 = vunpack.c.l.b16 %v4107
  %v4193 = vunpack.c.h.b16 %v4107
  %v4194 = vunpack.c.l.b16 %v4108
  %v4195 = vunpack.c.h.b16 %v4108
  %v4196 = vunpack.c.l.b16 %v4109
  %v4197 = vunpack.c.h.b16 %v4109
  %v4198 = vunpack.c.l.b16 %v4110
  %v4199 = vunpack.c.h.b16 %v4110
  %v4200 = vunpack.c.l.b16 %v4111
  %v4201 = vunpack.c.h.b16 %v4111
  %v4202 = vunpack.c.l.b16 %v4112
  %v4203 = vunpack.c.h.b16 %v4112
  %v4204 = vunpack.c.l.b16 %v4113
  %v4205 = vunpack.c.h.b16 %v4113
  %v4206 = vunpack.c.l.b16 %v4114
  %v4207 = vunpack.c.h.b16 %v4114
  %v4208 = vunpack.c.l.b16 %v4115
  %v4209 = vunpack.c.h.b16 %v4115
  %v4210 = vunpack.c.l.b16 %v4116
  %v4211 = vunpack.c.h.b16 %v4116
  %v4212 = vunpack.c.l.b16 %v4117
  %v4213 = vunpack.c.h.b16 %v4117
  %v4214 = vunpack.c.l.b16 %v4118
  %v4215 = vunpack.c.h.b16 %v4118
  %v4216 = vunpack.c.l.b16 %v4119
  %v4217 = vunpack.c.h.b16 %v4119
  %v4218 = vunpack.c.l.b16 %v4120
  %v4219 = vunpack.c.h.b16 %v4120
  %v4220 = vunpack.c.l.b16 %v4121
  %v4221 = vunpack.c.h.b16 %v4121
  %v4222 = vunpack.c.l.b16 %v4122
  %v4223 = vunpack.c.h.b16 %v4122
  %v4224 = vunpack.c.l.b16 %v4123
  %v4225 = vunpack.c.h.b16 %v4123
  %v4226 = vunpack.c.l.b16 %v4124
  %v4227 = vunpack.c.h.b16 %v4124
  %v4228 = vunpack.c.l.b16 %v4125
  %v4229 = vunpack.c.h.b16 %v4125
  %v4230 = vunpack.c.l.b16 %v4126
  %v4231 = vunpack.c.h.b16 %v4126
  %v4232 = vunpack.c.l.b16 %v4127
  %v4233 = vunpack.c.h.b16 %v4127
  %v4234 = vunpack.c.l.b16 %v4128
  %v4235 = vunpack.c.h.b16 %v4128
  %v4236 = vunpack.c.l.b16 %v4129
  %v4237 = vunpack.c.h.b16 %v4129
  %v4238 = vpack.c.b16 %v4176, %v4174
  %v4239 = vpack.c.b16 %v4177, %v4175
  %v4240 = vpack.c.b16 %v4180, %v4178
  %v4241 = vpack.c.b16 %v4181, %v4179
  %v4242 = vpack.c.b16 %v4184, %v4182
  %v4243 = vpack.c.b16 %v4185, %v4183
  %v4244 = vpack.c.b16 %v4188, %v4186
  %v4245 = vpack.c.b16 %v4189, %v4187
  %v4246 = vpack.c.b16 %v4192, %v4190
  %v4247 = vpack.c.b16 %v4193, %v4191
  %v4248 = vpack.c.b16 %v4196, %v4194
  %v4249 = vpack.c.b16 %v4197, %v4195
  %v4250 = vpack.c.b16 %v4200, %v4198
  %v4251 = vpack.c.b16 %v4201, %v4199
  %v4252 = vpack.c.b16 %v4204, %v4202
  %v4253 = vpack.c.b16 %v4205, %v4203
  %v4254 = vpack.c.b16 %v4208, %v4206
  %v4255 = vpack.c.b16 %v4209, %v4207
  %v4256 = vpack.c.b16 %v4212, %v4210
  %v4257 = vpack.c.b16 %v4213, %v4211
  %v4258 = vpack.c.b16 %v4216, %v4214
  %v4259 = vpack.c.b16 %v4217, %v4215
  %v4260 = vpack.c.b16 %v4220, %v4218
  %v4261 = vpack.c.b16 %v4221, %v4219
  %v4262 = vpack.c.b16 %v4224, %v4222
  %v4263 = vpack.c.b16 %v4225, %v4223
  %v4264 = vpack.c.b16 %v4228, %v4226
  %v4265 = vpack.c.b16 %v4229, %v4227
  %v4266 = vpack.c.b16 %v4232, %v4230
  %v4267 = vpack.c.b16 %v4233, %v4231
  %v4268 = vpack.c.b16 %v4236, %v4234
  %v4269 = vpack.c.b16 %v4237, %v4235
  %4302 = vmatprep.subr.bf16.mxu0 %v4239
  %4303 = vmatpush1.bf16.msra.mxu0 %v4238
  %4304 = vmatprep.subr.bf16.mxu0 %v4241
  %4305 = vmatpush1.bf16.msra.mxu0 %v4240
  %4306 = vmatprep.subr.bf16.mxu0 %v4243
  %4307 = vmatpush1.bf16.msra.mxu0 %v4242
  %4308 = vmatprep.subr.bf16.mxu0 %v4245
  %4309 = vmatpush1.bf16.msra.mxu0 %v4244
  %4310 = vmatprep.subr.bf16.mxu0 %v4247
  %4311 = vmatpush1.bf16.msra.mxu0 %v4246
  %4312 = vmatprep.subr.bf16.mxu0 %v4249
  %4313 = vmatpush1.bf16.msra.mxu0 %v4248
  %4314 = vmatprep.subr.bf16.mxu0 %v4251
  %4315 = vmatpush1.bf16.msra.mxu0 %v4250
  %4316 = vmatprep.subr.bf16.mxu0 %v4253
  %4317 = vmatpush1.bf16.msra.mxu0 %v4252
  %4318 = vmatprep.subr.bf16.mxu0 %v4255
  %4319 = vmatpush1.bf16.msra.mxu0 %v4254
  %4320 = vmatprep.subr.bf16.mxu0 %v4257
  %4321 = vmatpush1.bf16.msra.mxu0 %v4256
  %4322 = vmatprep.subr.bf16.mxu0 %v4259
  %4323 = vmatpush1.bf16.msra.mxu0 %v4258
  %4324 = vmatprep.subr.bf16.mxu0 %v4261
  %4325 = vmatpush1.bf16.msra.mxu0 %v4260
  %4326 = vmatprep.subr.bf16.mxu0 %v4263
  %4327 = vmatpush1.bf16.msra.mxu0 %v4262
  %4328 = vmatprep.subr.bf16.mxu0 %v4265
  %4329 = vmatpush1.bf16.msra.mxu0 %v4264
  %4330 = vmatprep.subr.bf16.mxu0 %v4267
  %4331 = vmatpush1.bf16.msra.mxu0 %v4266
  %4332 = vmatprep.subr.bf16.mxu0 %v4269
  %4333 = vmatpush1.bf16.msra.mxu0 %v4268
  %4334 = vmatprep.mubr.bf16.mxu0 %v1190
  %4335 = vmatmul.mubr.bf16.gmra.mrb[0].mxu0 %v1189
  %v4336 = vpop.f32.mrb[0].mxu0
  %v4337 = vadd.f32 0.0, %v4336
  %v4338 = vpop.f32.mrb[0].mxu0
  %v4339 = vadd.f32 0.0, %v4338
  %v4340 = vpop.f32.mrb[0].mxu0
  %v4341 = vadd.f32 0.0, %v4340
  %v4342 = vpop.f32.mrb[0].mxu0
  %v4343 = vadd.f32 0.0, %v4342
  %4344 = vmatprep.mubr.bf16.mxu0 %v1192
  %4345 = vmatmul.mubr.bf16.gmra.mrb[0].mxu0 %v1191
  %v4346 = vpop.f32.mrb[0].mxu0
  %v4347 = vadd.f32 0.0, %v4346
  %v4348 = vpop.f32.mrb[0].mxu0
  %v4349 = vadd.f32 0.0, %v4348
  %v4350 = vpop.f32.mrb[0].mxu0
  %v4351 = vadd.f32 0.0, %v4350
  %v4352 = vpop.f32.mrb[0].mxu0
  %v4353 = vadd.f32 0.0, %v4352
  %4354 = vmatprep.mubr.bf16.mxu0 %v1194
  %4355 = vmatmul.mubr.bf16.gmra.mrb[0].mxu0 %v1193
  %v4356 = vpop.f32.mrb[0].mxu0
  %v4357 = vadd.f32 0.0, %v4356
  %v4358 = vpop.f32.mrb[0].mxu0
  %v4359 = vadd.f32 0.0, %v4358
  %v4360 = vpop.f32.mrb[0].mxu0
  %v4361 = vadd.f32 0.0, %v4360
  %v4362 = vpop.f32.mrb[0].mxu0
  %v4363 = vadd.f32 0.0, %v4362
  %4364 = vmatprep.mubr.bf16.mxu0 %v4135
  %4365 = vmatmul.mubr.bf16.gmra.mrb[0].mxu0 %v4134
  %v4366 = vpop.f32.mrb[0].mxu0
  %v4367 = vadd.f32 0.0, %v4366
  %v4368 = vpop.f32.mrb[0].mxu0
  %v4369 = vadd.f32 0.0, %v4368
  %v4370 = vpop.f32.mrb[0].mxu0
  %v4371 = vadd.f32 0.0, %v4370
  %v4372 = vpop.f32.mrb[0].mxu0
  %v4373 = vadd.f32 0.0, %v4372
  %4374 = vmatprep.mubr.bf16.mxu0 %v1198
  %4375 = vmatmul.mubr.bf16.gmra.mrb[0].mxu0 %v1197
  %v4376 = vpop.f32.mrb[0].mxu0
  %v4377 = vadd.f32 0.0, %v4376
  %v4378 = vpop.f32.mrb[0].mxu0
  %v4379 = vadd.f32 0.0, %v4378
  %v4380 = vpop.f32.mrb[0].mxu0
  %v4381 = vadd.f32 0.0, %v4380
  %v4382 = vpop.f32.mrb[0].mxu0
  %v4383 = vadd.f32 0.0, %v4382
  %4384 = vmatprep.mubr.bf16.mxu0 %v1200
  %4385 = vmatmul.mubr.bf16.gmra.mrb[0].mxu0 %v1199
  %v4386 = vpop.f32.mrb[0].mxu0
  %v4387 = vadd.f32 0.0, %v4386
  %v4388 = vpop.f32.mrb[0].mxu0
  %v4389 = vadd.f32 0.0, %v4388
  %v4390 = vpop.f32.mrb[0].mxu0
  %v4391 = vadd.f32 0.0, %v4390
  %v4392 = vpop.f32.mrb[0].mxu0
  %v4393 = vadd.f32 0.0, %v4392
  %4394 = vmatprep.mubr.bf16.mxu0 %v1202
  %4395 = vmatmul.mubr.bf16.gmra.mrb[0].mxu0 %v1201
  %v4396 = vpop.f32.mrb[0].mxu0
  %v4397 = vadd.f32 0.0, %v4396
  %v4398 = vpop.f32.mrb[0].mxu0
  %v4399 = vadd.f32 0.0, %v4398
  %v4400 = vpop.f32.mrb[0].mxu0
  %v4401 = vadd.f32 0.0, %v4400
  %v4402 = vpop.f32.mrb[0].mxu0
  %v4403 = vadd.f32 0.0, %v4402
  %4404 = vmatprep.mubr.bf16.mxu0 %v4137
  %4405 = vmatmul.mubr.bf16.gmra.mrb[0].mxu0 %v4136
  %v4406 = vpop.f32.mrb[0].mxu0
  %v4407 = vadd.f32 0.0, %v4406
  %v4408 = vpop.f32.mrb[0].mxu0
  %v4409 = vadd.f32 0.0, %v4408
  %v4410 = vpop.f32.mrb[0].mxu0
  %v4411 = vadd.f32 0.0, %v4410
  %v4412 = vpop.f32.mrb[0].mxu0
  %v4413 = vadd.f32 0.0, %v4412
  %4414 = vdwg.mxu0
  %v4415 = vld [vmem:[#allocation2] sm:$0xff]
  %v4416 = vld [vmem:[#allocation2 + $0x8] sm:$0xff]
  %v4417 = vld [vmem:[#allocation2 + $0x10] sm:$0xff]
  %v4418 = vld [vmem:[#allocation2 + $0x18] sm:$0xff]
  %v4419 = vld [vmem:[#allocation2 + $0x20] sm:$0xff]
  %v4420 = vld [vmem:[#allocation2 + $0x28] sm:$0xff]
  %v4421 = vld [vmem:[#allocation2 + $0x30] sm:$0xff]
  %v4422 = vld [vmem:[#allocation2 + $0x38] sm:$0xff]
  %v4423 = vld [vmem:[#allocation2 + $0x40] sm:$0xff]
  %v4424 = vld [vmem:[#allocation2 + $0x48] sm:$0xff]
  %v4425 = vld [vmem:[#allocation2 + $0x50] sm:$0xff]
  %v4426 = vld [vmem:[#allocation2 + $0x58] sm:$0xff]
  %v4427 = vld [vmem:[#allocation2 + $0x60] sm:$0xff]
  %v4428 = vld [vmem:[#allocation2 + $0x68] sm:$0xff]
  %v4429 = vld [vmem:[#allocation2 + $0x70] sm:$0xff]
  %v4430 = vld [vmem:[#allocation2 + $0x78] sm:$0xff]
  %v4431 = vld [vmem:[#allocation2 + $0x80] sm:$0xff]
  %v4432 = vld [vmem:[#allocation2 + $0x88] sm:$0xff]
  %v4433 = vld [vmem:[#allocation2 + $0x90] sm:$0xff]
  %v4434 = vld [vmem:[#allocation2 + $0x98] sm:$0xff]
  %v4435 = vld [vmem:[#allocation2 + $0xa0] sm:$0xff]
  %v4436 = vld [vmem:[#allocation2 + $0xa8] sm:$0xff]
  %v4437 = vld [vmem:[#allocation2 + $0xb0] sm:$0xff]
  %v4438 = vld [vmem:[#allocation2 + $0xb8] sm:$0xff]
  %v4439 = vld [vmem:[#allocation2 + $0xc0] sm:$0xff]
  %v4440 = vld [vmem:[#allocation2 + $0xc8] sm:$0xff]
  %v4441 = vld [vmem:[#allocation2 + $0xd0] sm:$0xff]
  %v4442 = vld [vmem:[#allocation2 + $0xd8] sm:$0xff]
  %v4443 = vld [vmem:[#allocation2 + $0xe0] sm:$0xff]
  %v4444 = vld [vmem:[#allocation2 + $0xe8] sm:$0xff]
  %v4445 = vld [vmem:[#allocation2 + $0xf0] sm:$0xff]
  %v4446 = vld [vmem:[#allocation2 + $0xf8] sm:$0xff]
  %v4447 = vadd.f32 %v4415, %v4337
  %v4448 = vadd.f32 %v4416, %v4339
  %v4449 = vadd.f32 %v4417, %v4341
  %v4450 = vadd.f32 %v4418, %v4343
  %v4451 = vadd.f32 %v4419, %v4347
  %v4452 = vadd.f32 %v4420, %v4349
  %v4453 = vadd.f32 %v4421, %v4351
  %v4454 = vadd.f32 %v4422, %v4353
  %v4455 = vadd.f32 %v4423, %v4357
  %v4456 = vadd.f32 %v4424, %v4359
  %v4457 = vadd.f32 %v4425, %v4361
  %v4458 = vadd.f32 %v4426, %v4363
  %v4459 = vadd.f32 %v4427, %v4367
  %v4460 = vadd.f32 %v4428, %v4369
  %v4461 = vadd.f32 %v4429, %v4371
  %v4462 = vadd.f32 %v4430, %v4373
  %v4463 = vadd.f32 %v4431, %v4377
  %v4464 = vadd.f32 %v4432, %v4379
  %v4465 = vadd.f32 %v4433, %v4381
  %v4466 = vadd.f32 %v4434, %v4383
  %v4467 = vadd.f32 %v4435, %v4387
  %v4468 = vadd.f32 %v4436, %v4389
  %v4469 = vadd.f32 %v4437, %v4391
  %v4470 = vadd.f32 %v4438, %v4393
  %v4471 = vadd.f32 %v4439, %v4397
  %v4472 = vadd.f32 %v4440, %v4399
  %v4473 = vadd.f32 %v4441, %v4401
  %v4474 = vadd.f32 %v4442, %v4403
  %v4475 = vadd.f32 %v4443, %v4407
  %v4476 = vadd.f32 %v4444, %v4409
  %v4477 = vadd.f32 %v4445, %v4411
  %v4478 = vadd.f32 %v4446, %v4413
  %4479 = vst [vmem:[#allocation2] sm:$0xff] %v4447
  %4480 = vst [vmem:[#allocation2 + $0x8] sm:$0xff] %v4448
  %4481 = vst [vmem:[#allocation2 + $0x10] sm:$0xff] %v4449
  %4482 = vst [vmem:[#allocation2 + $0x18] sm:$0xff] %v4450
  %4483 = vst [vmem:[#allocation2 + $0x20] sm:$0xff] %v4451
  %4484 = vst [vmem:[#allocation2 + $0x28] sm:$0xff] %v4452
  %4485 = vst [vmem:[#allocation2 + $0x30] sm:$0xff] %v4453
  %4486 = vst [vmem:[#allocation2 + $0x38] sm:$0xff] %v4454
  %4487 = vst [vmem:[#allocation2 + $0x40] sm:$0xff] %v4455
  %4488 = vst [vmem:[#allocation2 + $0x48] sm:$0xff] %v4456
  %4489 = vst [vmem:[#allocation2 + $0x50] sm:$0xff] %v4457
  %4490 = vst [vmem:[#allocation2 + $0x58] sm:$0xff] %v4458
  %4491 = vst [vmem:[#allocation2 + $0x60] sm:$0xff] %v4459
  %4492 = vst [vmem:[#allocation2 + $0x68] sm:$0xff] %v4460
  %4493 = vst [vmem:[#allocation2 + $0x70] sm:$0xff] %v4461
  %4494 = vst [vmem:[#allocation2 + $0x78] sm:$0xff] %v4462
  %4495 = vst [vmem:[#allocation2 + $0x80] sm:$0xff] %v4463
  %4496 = vst [vmem:[#allocation2 + $0x88] sm:$0xff] %v4464
  %4497 = vst [vmem:[#allocation2 + $0x90] sm:$0xff] %v4465
  %4498 = vst [vmem:[#allocation2 + $0x98] sm:$0xff] %v4466
  %4499 = vst [vmem:[#allocation2 + $0xa0] sm:$0xff] %v4467
  %4500 = vst [vmem:[#allocation2 + $0xa8] sm:$0xff] %v4468
  %4501 = vst [vmem:[#allocation2 + $0xb0] sm:$0xff] %v4469
  %4502 = vst [vmem:[#allocation2 + $0xb8] sm:$0xff] %v4470
  %4503 = vst [vmem:[#allocation2 + $0xc0] sm:$0xff] %v4471
  %4504 = vst [vmem:[#allocation2 + $0xc8] sm:$0xff] %v4472
  %4505 = vst [vmem:[#allocation2 + $0xd0] sm:$0xff] %v4473
  %4506 = vst [vmem:[#allocation2 + $0xd8] sm:$0xff] %v4474
  %4507 = vst [vmem:[#allocation2 + $0xe0] sm:$0xff] %v4475
  %4508 = vst [vmem:[#allocation2 + $0xe8] sm:$0xff] %v4476
  %4509 = vst [vmem:[#allocation2 + $0xf0] sm:$0xff] %v4477
  %4510 = vst [vmem:[#allocation2 + $0xf8] sm:$0xff] %v4478
  %v4515 = vunpack.c.l.b16 %v312
  %v4516 = vunpack.c.l.b16 %v313
  %v4517 = vunpack.c.h.b16 %v312
  %v4518 = vunpack.c.h.b16 %v313
  %v4519 = vunpack.c.l.b16 %v332
  %v4520 = vunpack.c.l.b16 %v333
  %v4521 = vunpack.c.h.b16 %v332
  %v4522 = vunpack.c.h.b16 %v333
  %v4523 = vpack.c.b16 %v4516, %v4515
  %v4524 = vpack.c.b16 %v4518, %v4517
  %v4525 = vpack.c.b16 %v4520, %v4519
  %v4526 = vpack.c.b16 %v4522, %v4521
  %v4527 = vrot.slane %v4523, 5
  %v4528 = vrot.slane %v4527, 4
  %v4529 = vrot.slane %v4524, 5
  %v4530 = vsel %vm1718, %v4528, %v4529
  %v4531 = vrot.slane %v4525, 5
  %v4532 = vrot.slane %v4531, 4
  %v4533 = vrot.slane %v4526, 5
  %v4534 = vsel %vm1718, %v4532, %v4533
  %s4535 = scalar_lea.vmem %s1, 2048
  %v4536 = vld [vmem:[%s4535] sm:$0xff]
  %v4537 = vld [vmem:[%s4535 + $0x8] sm:$0xff]
  %v4538 = vld [vmem:[%s4535 + $0x10] sm:$0xff]
  %v4539 = vld [vmem:[%s4535 + $0x18] sm:$0xff]
  %v4540 = vld [vmem:[%s4535 + $0x20] sm:$0xff]
  %v4541 = vld [vmem:[%s4535 + $0x28] sm:$0xff]
  %v4542 = vld [vmem:[%s4535 + $0x30] sm:$0xff]
  %v4543 = vld [vmem:[%s4535 + $0x38] sm:$0xff]
  %v4544 = vld [vmem:[%s4535 + $0x40] sm:$0xff]
  %v4545 = vld [vmem:[%s4535 + $0x48] sm:$0xff]
  %v4546 = vld [vmem:[%s4535 + $0x50] sm:$0xff]
  %v4547 = vld [vmem:[%s4535 + $0x58] sm:$0xff]
  %v4548 = vld [vmem:[%s4535 + $0x60] sm:$0xff]
  %v4549 = vld [vmem:[%s4535 + $0x68] sm:$0xff]
  %v4550 = vld [vmem:[%s4535 + $0x70] sm:$0xff]
  %v4551 = vld [vmem:[%s4535 + $0x78] sm:$0xff]
  %v4552 = vld [vmem:[%s4535 + $0x80] sm:$0xff]
  %v4553 = vld [vmem:[%s4535 + $0x88] sm:$0xff]
  %v4554 = vld [vmem:[%s4535 + $0x90] sm:$0xff]
  %v4555 = vld [vmem:[%s4535 + $0x98] sm:$0xff]
  %v4556 = vld [vmem:[%s4535 + $0xa0] sm:$0xff]
  %v4557 = vld [vmem:[%s4535 + $0xa8] sm:$0xff]
  %v4558 = vld [vmem:[%s4535 + $0xb0] sm:$0xff]
  %v4559 = vld [vmem:[%s4535 + $0xb8] sm:$0xff]
  %v4560 = vld [vmem:[%s4535 + $0xc0] sm:$0xff]
  %v4561 = vld [vmem:[%s4535 + $0xc8] sm:$0xff]
  %v4562 = vld [vmem:[%s4535 + $0xd0] sm:$0xff]
  %v4563 = vld [vmem:[%s4535 + $0xd8] sm:$0xff]
  %v4564 = vld [vmem:[%s4535 + $0xe0] sm:$0xff]
  %v4565 = vld [vmem:[%s4535 + $0xe8] sm:$0xff]
  %v4566 = vld [vmem:[%s4535 + $0xf0] sm:$0xff]
  %v4567 = vld [vmem:[%s4535 + $0xf8] sm:$0xff]
  %v4568 = vunpack.c.l.b16 %v4530
  %v4569 = vunpack.c.h.b16 %v4530
  %v4570 = vunpack.c.l.b16 %v4534
  %v4571 = vunpack.c.h.b16 %v4534
  %v4572 = vpack.c.b16 %v4568, %v3230
  %v4573 = vpack.c.b16 %v4569, %v3231
  %v4574 = vpack.c.b16 %v4570, %v3232
  %v4575 = vpack.c.b16 %v4571, %v3233
  %v4612 = vunpack.c.l.b16 %v4536
  %v4613 = vunpack.c.h.b16 %v4536
  %v4614 = vunpack.c.l.b16 %v4537
  %v4615 = vunpack.c.h.b16 %v4537
  %v4616 = vunpack.c.l.b16 %v4538
  %v4617 = vunpack.c.h.b16 %v4538
  %v4618 = vunpack.c.l.b16 %v4539
  %v4619 = vunpack.c.h.b16 %v4539
  %v4620 = vunpack.c.l.b16 %v4540
  %v4621 = vunpack.c.h.b16 %v4540
  %v4622 = vunpack.c.l.b16 %v4541
  %v4623 = vunpack.c.h.b16 %v4541
  %v4624 = vunpack.c.l.b16 %v4542
  %v4625 = vunpack.c.h.b16 %v4542
  %v4626 = vunpack.c.l.b16 %v4543
  %v4627 = vunpack.c.h.b16 %v4543
  %v4628 = vunpack.c.l.b16 %v4544
  %v4629 = vunpack.c.h.b16 %v4544
  %v4630 = vunpack.c.l.b16 %v4545
  %v4631 = vunpack.c.h.b16 %v4545
  %v4632 = vunpack.c.l.b16 %v4546
  %v4633 = vunpack.c.h.b16 %v4546
  %v4634 = vunpack.c.l.b16 %v4547
  %v4635 = vunpack.c.h.b16 %v4547
  %v4636 = vunpack.c.l.b16 %v4548
  %v4637 = vunpack.c.h.b16 %v4548
  %v4638 = vunpack.c.l.b16 %v4549
  %v4639 = vunpack.c.h.b16 %v4549
  %v4640 = vunpack.c.l.b16 %v4550
  %v4641 = vunpack.c.h.b16 %v4550
  %v4642 = vunpack.c.l.b16 %v4551
  %v4643 = vunpack.c.h.b16 %v4551
  %v4644 = vunpack.c.l.b16 %v4552
  %v4645 = vunpack.c.h.b16 %v4552
  %v4646 = vunpack.c.l.b16 %v4553
  %v4647 = vunpack.c.h.b16 %v4553
  %v4648 = vunpack.c.l.b16 %v4554
  %v4649 = vunpack.c.h.b16 %v4554
  %v4650 = vunpack.c.l.b16 %v4555
  %v4651 = vunpack.c.h.b16 %v4555
  %v4652 = vunpack.c.l.b16 %v4556
  %v4653 = vunpack.c.h.b16 %v4556
  %v4654 = vunpack.c.l.b16 %v4557
  %v4655 = vunpack.c.h.b16 %v4557
  %v4656 = vunpack.c.l.b16 %v4558
  %v4657 = vunpack.c.h.b16 %v4558
  %v4658 = vunpack.c.l.b16 %v4559
  %v4659 = vunpack.c.h.b16 %v4559
  %v4660 = vunpack.c.l.b16 %v4560
  %v4661 = vunpack.c.h.b16 %v4560
  %v4662 = vunpack.c.l.b16 %v4561
  %v4663 = vunpack.c.h.b16 %v4561
  %v4664 = vunpack.c.l.b16 %v4562
  %v4665 = vunpack.c.h.b16 %v4562
  %v4666 = vunpack.c.l.b16 %v4563
  %v4667 = vunpack.c.h.b16 %v4563
  %v4668 = vunpack.c.l.b16 %v4564
  %v4669 = vunpack.c.h.b16 %v4564
  %v4670 = vunpack.c.l.b16 %v4565
  %v4671 = vunpack.c.h.b16 %v4565
  %v4672 = vunpack.c.l.b16 %v4566
  %v4673 = vunpack.c.h.b16 %v4566
  %v4674 = vunpack.c.l.b16 %v4567
  %v4675 = vunpack.c.h.b16 %v4567
  %v4676 = vpack.c.b16 %v4614, %v4612
  %v4677 = vpack.c.b16 %v4615, %v4613
  %v4678 = vpack.c.b16 %v4618, %v4616
  %v4679 = vpack.c.b16 %v4619, %v4617
  %v4680 = vpack.c.b16 %v4622, %v4620
  %v4681 = vpack.c.b16 %v4623, %v4621
  %v4682 = vpack.c.b16 %v4626, %v4624
  %v4683 = vpack.c.b16 %v4627, %v4625
  %v4684 = vpack.c.b16 %v4630, %v4628
  %v4685 = vpack.c.b16 %v4631, %v4629
  %v4686 = vpack.c.b16 %v4634, %v4632
  %v4687 = vpack.c.b16 %v4635, %v4633
  %v4688 = vpack.c.b16 %v4638, %v4636
  %v4689 = vpack.c.b16 %v4639, %v4637
  %v4690 = vpack.c.b16 %v4642, %v4640
  %v4691 = vpack.c.b16 %v4643, %v4641
  %v4692 = vpack.c.b16 %v4646, %v4644
  %v4693 = vpack.c.b16 %v4647, %v4645
  %v4694 = vpack.c.b16 %v4650, %v4648
  %v4695 = vpack.c.b16 %v4651, %v4649
  %v4696 = vpack.c.b16 %v4654, %v4652
  %v4697 = vpack.c.b16 %v4655, %v4653
  %v4698 = vpack.c.b16 %v4658, %v4656
  %v4699 = vpack.c.b16 %v4659, %v4657
  %v4700 = vpack.c.b16 %v4662, %v4660
  %v4701 = vpack.c.b16 %v4663, %v4661
  %v4702 = vpack.c.b16 %v4666, %v4664
  %v4703 = vpack.c.b16 %v4667, %v4665
  %v4704 = vpack.c.b16 %v4670, %v4668
  %v4705 = vpack.c.b16 %v4671, %v4669
  %v4706 = vpack.c.b16 %v4674, %v4672
  %v4707 = vpack.c.b16 %v4675, %v4673
  %4740 = vmatprep.subr.bf16.mxu0 %v4677
  %4741 = vmatpush1.bf16.msra.mxu0 %v4676
  %4742 = vmatprep.subr.bf16.mxu0 %v4679
  %4743 = vmatpush1.bf16.msra.mxu0 %v4678
  %4744 = vmatprep.subr.bf16.mxu0 %v4681
  %4745 = vmatpush1.bf16.msra.mxu0 %v4680
  %4746 = vmatprep.subr.bf16.mxu0 %v4683
  %4747 = vmatpush1.bf16.msra.mxu0 %v4682
  %4748 = vmatprep.subr.bf16.mxu0 %v4685
  %4749 = vmatpush1.bf16.msra.mxu0 %v4684
  %4750 = vmatprep.subr.bf16.mxu0 %v4687
  %4751 = vmatpush1.bf16.msra.mxu0 %v4686
  %4752 = vmatprep.subr.bf16.mxu0 %v4689
  %4753 = vmatpush1.bf16.msra.mxu0 %v4688
  %4754 = vmatprep.subr.bf16.mxu0 %v4691
  %4755 = vmatpush1.bf16.msra.mxu0 %v4690
  %4756 = vmatprep.subr.bf16.mxu0 %v4693
  %4757 = vmatpush1.bf16.msra.mxu0 %v4692
  %4758 = vmatprep.subr.bf16.mxu0 %v4695
  %4759 = vmatpush1.bf16.msra.mxu0 %v4694
  %4760 = vmatprep.subr.bf16.mxu0 %v4697
  %4761 = vmatpush1.bf16.msra.mxu0 %v4696
  %4762 = vmatprep.subr.bf16.mxu0 %v4699
  %4763 = vmatpush1.bf16.msra.mxu0 %v4698
  %4764 = vmatprep.subr.bf16.mxu0 %v4701
  %4765 = vmatpush1.bf16.msra.mxu0 %v4700
  %4766 = vmatprep.subr.bf16.mxu0 %v4703
  %4767 = vmatpush1.bf16.msra.mxu0 %v4702
  %4768 = vmatprep.subr.bf16.mxu0 %v4705
  %4769 = vmatpush1.bf16.msra.mxu0 %v4704
  %4770 = vmatprep.subr.bf16.mxu0 %v4707
  %4771 = vmatpush1.bf16.msra.mxu0 %v4706
  %4772 = vmatprep.mubr.bf16.mxu0 %v1851
  %4773 = vmatmul.mubr.bf16.gmra.mrb[0].mxu0 %v1850
  %v4774 = vpop.f32.mrb[0].mxu0
  %v4775 = vadd.f32 0.0, %v4774
  %v4776 = vpop.f32.mrb[0].mxu0
  %v4777 = vadd.f32 0.0, %v4776
  %v4778 = vpop.f32.mrb[0].mxu0
  %v4779 = vadd.f32 0.0, %v4778
  %v4780 = vpop.f32.mrb[0].mxu0
  %v4781 = vadd.f32 0.0, %v4780
  %4782 = vmatprep.mubr.bf16.mxu0 %v1853
  %4783 = vmatmul.mubr.bf16.gmra.mrb[0].mxu0 %v1852
  %v4784 = vpop.f32.mrb[0].mxu0
  %v4785 = vadd.f32 0.0, %v4784
  %v4786 = vpop.f32.mrb[0].mxu0
  %v4787 = vadd.f32 0.0, %v4786
  %v4788 = vpop.f32.mrb[0].mxu0
  %v4789 = vadd.f32 0.0, %v4788
  %v4790 = vpop.f32.mrb[0].mxu0
  %v4791 = vadd.f32 0.0, %v4790
  %4792 = vmatprep.mubr.bf16.mxu0 %v1855
  %4793 = vmatmul.mubr.bf16.gmra.mrb[0].mxu0 %v1854
  %v4794 = vpop.f32.mrb[0].mxu0
  %v4795 = vadd.f32 0.0, %v4794
  %v4796 = vpop.f32.mrb[0].mxu0
  %v4797 = vadd.f32 0.0, %v4796
  %v4798 = vpop.f32.mrb[0].mxu0
  %v4799 = vadd.f32 0.0, %v4798
  %v4800 = vpop.f32.mrb[0].mxu0
  %v4801 = vadd.f32 0.0, %v4800
  %4802 = vmatprep.mubr.bf16.mxu0 %v4573
  %4803 = vmatmul.mubr.bf16.gmra.mrb[0].mxu0 %v4572
  %v4804 = vpop.f32.mrb[0].mxu0
  %v4805 = vadd.f32 0.0, %v4804
  %v4806 = vpop.f32.mrb[0].mxu0
  %v4807 = vadd.f32 0.0, %v4806
  %v4808 = vpop.f32.mrb[0].mxu0
  %v4809 = vadd.f32 0.0, %v4808
  %v4810 = vpop.f32.mrb[0].mxu0
  %v4811 = vadd.f32 0.0, %v4810
  %4812 = vmatprep.mubr.bf16.mxu0 %v1859
  %4813 = vmatmul.mubr.bf16.gmra.mrb[0].mxu0 %v1858
  %v4814 = vpop.f32.mrb[0].mxu0
  %v4815 = vadd.f32 0.0, %v4814
  %v4816 = vpop.f32.mrb[0].mxu0
  %v4817 = vadd.f32 0.0, %v4816
  %v4818 = vpop.f32.mrb[0].mxu0
  %v4819 = vadd.f32 0.0, %v4818
  %v4820 = vpop.f32.mrb[0].mxu0
  %v4821 = vadd.f32 0.0, %v4820
  %4822 = vmatprep.mubr.bf16.mxu0 %v1861
  %4823 = vmatmul.mubr.bf16.gmra.mrb[0].mxu0 %v1860
  %v4824 = vpop.f32.mrb[0].mxu0
  %v4825 = vadd.f32 0.0, %v4824
  %v4826 = vpop.f32.mrb[0].mxu0
  %v4827 = vadd.f32 0.0, %v4826
  %v4828 = vpop.f32.mrb[0].mxu0
  %v4829 = vadd.f32 0.0, %v4828
  %v4830 = vpop.f32.mrb[0].mxu0
  %v4831 = vadd.f32 0.0, %v4830
  %4832 = vmatprep.mubr.bf16.mxu0 %v1863
  %4833 = vmatmul.mubr.bf16.gmra.mrb[0].mxu0 %v1862
  %v4834 = vpop.f32.mrb[0].mxu0
  %v4835 = vadd.f32 0.0, %v4834
  %v4836 = vpop.f32.mrb[0].mxu0
  %v4837 = vadd.f32 0.0, %v4836
  %v4838 = vpop.f32.mrb[0].mxu0
  %v4839 = vadd.f32 0.0, %v4838
  %v4840 = vpop.f32.mrb[0].mxu0
  %v4841 = vadd.f32 0.0, %v4840
  %4842 = vmatprep.mubr.bf16.mxu0 %v4575
  %4843 = vmatmul.mubr.bf16.gmra.mrb[0].mxu0 %v4574
  %v4844 = vpop.f32.mrb[0].mxu0
  %v4845 = vadd.f32 0.0, %v4844
  %v4846 = vpop.f32.mrb[0].mxu0
  %v4847 = vadd.f32 0.0, %v4846
  %v4848 = vpop.f32.mrb[0].mxu0
  %v4849 = vadd.f32 0.0, %v4848
  %v4850 = vpop.f32.mrb[0].mxu0
  %v4851 = vadd.f32 0.0, %v4850
  %4852 = vdwg.mxu0
  %v4853 = vld [vmem:[#allocation2] sm:$0xff]
  %v4854 = vld [vmem:[#allocation2 + $0x8] sm:$0xff]
  %v4855 = vld [vmem:[#allocation2 + $0x10] sm:$0xff]
  %v4856 = vld [vmem:[#allocation2 + $0x18] sm:$0xff]
  %v4857 = vld [vmem:[#allocation2 + $0x20] sm:$0xff]
  %v4858 = vld [vmem:[#allocation2 + $0x28] sm:$0xff]
  %v4859 = vld [vmem:[#allocation2 + $0x30] sm:$0xff]
  %v4860 = vld [vmem:[#allocation2 + $0x38] sm:$0xff]
  %v4861 = vld [vmem:[#allocation2 + $0x40] sm:$0xff]
  %v4862 = vld [vmem:[#allocation2 + $0x48] sm:$0xff]
  %v4863 = vld [vmem:[#allocation2 + $0x50] sm:$0xff]
  %v4864 = vld [vmem:[#allocation2 + $0x58] sm:$0xff]
  %v4865 = vld [vmem:[#allocation2 + $0x60] sm:$0xff]
  %v4866 = vld [vmem:[#allocation2 + $0x68] sm:$0xff]
  %v4867 = vld [vmem:[#allocation2 + $0x70] sm:$0xff]
  %v4868 = vld [vmem:[#allocation2 + $0x78] sm:$0xff]
  %v4869 = vld [vmem:[#allocation2 + $0x80] sm:$0xff]
  %v4870 = vld [vmem:[#allocation2 + $0x88] sm:$0xff]
  %v4871 = vld [vmem:[#allocation2 + $0x90] sm:$0xff]
  %v4872 = vld [vmem:[#allocation2 + $0x98] sm:$0xff]
  %v4873 = vld [vmem:[#allocation2 + $0xa0] sm:$0xff]
  %v4874 = vld [vmem:[#allocation2 + $0xa8] sm:$0xff]
  %v4875 = vld [vmem:[#allocation2 + $0xb0] sm:$0xff]
  %v4876 = vld [vmem:[#allocation2 + $0xb8] sm:$0xff]
  %v4877 = vld [vmem:[#allocation2 + $0xc0] sm:$0xff]
  %v4878 = vld [vmem:[#allocation2 + $0xc8] sm:$0xff]
  %v4879 = vld [vmem:[#allocation2 + $0xd0] sm:$0xff]
  %v4880 = vld [vmem:[#allocation2 + $0xd8] sm:$0xff]
  %v4881 = vld [vmem:[#allocation2 + $0xe0] sm:$0xff]
  %v4882 = vld [vmem:[#allocation2 + $0xe8] sm:$0xff]
  %v4883 = vld [vmem:[#allocation2 + $0xf0] sm:$0xff]
  %v4884 = vld [vmem:[#allocation2 + $0xf8] sm:$0xff]
  %v4885 = vadd.f32 %v4853, %v4775
  %v4886 = vadd.f32 %v4854, %v4777
  %v4887 = vadd.f32 %v4855, %v4779
  %v4888 = vadd.f32 %v4856, %v4781
  %v4889 = vadd.f32 %v4857, %v4785
  %v4890 = vadd.f32 %v4858, %v4787
  %v4891 = vadd.f32 %v4859, %v4789
  %v4892 = vadd.f32 %v4860, %v4791
  %v4893 = vadd.f32 %v4861, %v4795
  %v4894 = vadd.f32 %v4862, %v4797
  %v4895 = vadd.f32 %v4863, %v4799
  %v4896 = vadd.f32 %v4864, %v4801
  %v4897 = vadd.f32 %v4865, %v4805
  %v4898 = vadd.f32 %v4866, %v4807
  %v4899 = vadd.f32 %v4867, %v4809
  %v4900 = vadd.f32 %v4868, %v4811
  %v4901 = vadd.f32 %v4869, %v4815
  %v4902 = vadd.f32 %v4870, %v4817
  %v4903 = vadd.f32 %v4871, %v4819
  %v4904 = vadd.f32 %v4872, %v4821
  %v4905 = vadd.f32 %v4873, %v4825
  %v4906 = vadd.f32 %v4874, %v4827
  %v4907 = vadd.f32 %v4875, %v4829
  %v4908 = vadd.f32 %v4876, %v4831
  %v4909 = vadd.f32 %v4877, %v4835
  %v4910 = vadd.f32 %v4878, %v4837
  %v4911 = vadd.f32 %v4879, %v4839
  %v4912 = vadd.f32 %v4880, %v4841
  %v4913 = vadd.f32 %v4881, %v4845
  %v4914 = vadd.f32 %v4882, %v4847
  %v4915 = vadd.f32 %v4883, %v4849
  %v4916 = vadd.f32 %v4884, %v4851
  %4917 = vst [vmem:[#allocation2] sm:$0xff] %v4885
  %4918 = vst [vmem:[#allocation2 + $0x8] sm:$0xff] %v4886
  %4919 = vst [vmem:[#allocation2 + $0x10] sm:$0xff] %v4887
  %4920 = vst [vmem:[#allocation2 + $0x18] sm:$0xff] %v4888
  %4921 = vst [vmem:[#allocation2 + $0x20] sm:$0xff] %v4889
  %4922 = vst [vmem:[#allocation2 + $0x28] sm:$0xff] %v4890
  %4923 = vst [vmem:[#allocation2 + $0x30] sm:$0xff] %v4891
  %4924 = vst [vmem:[#allocation2 + $0x38] sm:$0xff] %v4892
  %4925 = vst [vmem:[#allocation2 + $0x40] sm:$0xff] %v4893
  %4926 = vst [vmem:[#allocation2 + $0x48] sm:$0xff] %v4894
  %4927 = vst [vmem:[#allocation2 + $0x50] sm:$0xff] %v4895
  %4928 = vst [vmem:[#allocation2 + $0x58] sm:$0xff] %v4896
  %4929 = vst [vmem:[#allocation2 + $0x60] sm:$0xff] %v4897
  %4930 = vst [vmem:[#allocation2 + $0x68] sm:$0xff] %v4898
  %4931 = vst [vmem:[#allocation2 + $0x70] sm:$0xff] %v4899
  %4932 = vst [vmem:[#allocation2 + $0x78] sm:$0xff] %v4900
  %4933 = vst [vmem:[#allocation2 + $0x80] sm:$0xff] %v4901
  %4934 = vst [vmem:[#allocation2 + $0x88] sm:$0xff] %v4902
  %4935 = vst [vmem:[#allocation2 + $0x90] sm:$0xff] %v4903
  %4936 = vst [vmem:[#allocation2 + $0x98] sm:$0xff] %v4904
  %4937 = vst [vmem:[#allocation2 + $0xa0] sm:$0xff] %v4905
  %4938 = vst [vmem:[#allocation2 + $0xa8] sm:$0xff] %v4906
  %4939 = vst [vmem:[#allocation2 + $0xb0] sm:$0xff] %v4907
  %4940 = vst [vmem:[#allocation2 + $0xb8] sm:$0xff] %v4908
  %4941 = vst [vmem:[#allocation2 + $0xc0] sm:$0xff] %v4909
  %4942 = vst [vmem:[#allocation2 + $0xc8] sm:$0xff] %v4910
  %4943 = vst [vmem:[#allocation2 + $0xd0] sm:$0xff] %v4911
  %4944 = vst [vmem:[#allocation2 + $0xd8] sm:$0xff] %v4912
  %4945 = vst [vmem:[#allocation2 + $0xe0] sm:$0xff] %v4913
  %4946 = vst [vmem:[#allocation2 + $0xe8] sm:$0xff] %v4914
  %4947 = vst [vmem:[#allocation2 + $0xf0] sm:$0xff] %v4915
  %4948 = vst [vmem:[#allocation2 + $0xf8] sm:$0xff] %v4916
  %v4949 = vld [vmem:[#allocation2] sm:$0xff]
  %v4950 = vld [vmem:[#allocation2 + $0x8] sm:$0xff]
  %v4951 = vld [vmem:[#allocation2 + $0x10] sm:$0xff]
  %v4952 = vld [vmem:[#allocation2 + $0x18] sm:$0xff]
  %v4953 = vld [vmem:[#allocation2 + $0x20] sm:$0xff]
  %v4954 = vld [vmem:[#allocation2 + $0x28] sm:$0xff]
  %v4955 = vld [vmem:[#allocation2 + $0x30] sm:$0xff]
  %v4956 = vld [vmem:[#allocation2 + $0x38] sm:$0xff]
  %v4957 = vld [vmem:[#allocation2 + $0x40] sm:$0xff]
  %v4958 = vld [vmem:[#allocation2 + $0x48] sm:$0xff]
  %v4959 = vld [vmem:[#allocation2 + $0x50] sm:$0xff]
  %v4960 = vld [vmem:[#allocation2 + $0x58] sm:$0xff]
  %v4961 = vld [vmem:[#allocation2 + $0x60] sm:$0xff]
  %v4962 = vld [vmem:[#allocation2 + $0x68] sm:$0xff]
  %v4963 = vld [vmem:[#allocation2 + $0x70] sm:$0xff]
  %v4964 = vld [vmem:[#allocation2 + $0x78] sm:$0xff]
  %v4965 = vld [vmem:[#allocation2 + $0x80] sm:$0xff]
  %v4966 = vld [vmem:[#allocation2 + $0x88] sm:$0xff]
  %v4967 = vld [vmem:[#allocation2 + $0x90] sm:$0xff]
  %v4968 = vld [vmem:[#allocation2 + $0x98] sm:$0xff]
  %v4969 = vld [vmem:[#allocation2 + $0xa0] sm:$0xff]
  %v4970 = vld [vmem:[#allocation2 + $0xa8] sm:$0xff]
  %v4971 = vld [vmem:[#allocation2 + $0xb0] sm:$0xff]
  %v4972 = vld [vmem:[#allocation2 + $0xb8] sm:$0xff]
  %v4973 = vld [vmem:[#allocation2 + $0xc0] sm:$0xff]
  %v4974 = vld [vmem:[#allocation2 + $0xc8] sm:$0xff]
  %v4975 = vld [vmem:[#allocation2 + $0xd0] sm:$0xff]
  %v4976 = vld [vmem:[#allocation2 + $0xd8] sm:$0xff]
  %v4977 = vld [vmem:[#allocation2 + $0xe0] sm:$0xff]
  %v4978 = vld [vmem:[#allocation2 + $0xe8] sm:$0xff]
  %v4979 = vld [vmem:[#allocation2 + $0xf0] sm:$0xff]
  %v4980 = vld [vmem:[#allocation2 + $0xf8] sm:$0xff]
  %v4981 = vld [vmem:[%s2] sm:$0x3]
  %v4983 = vlaneseq
  %v4984 = vshrl.u32 %v4983, 7
  %v4985 = vsub.s32 0, %v4984
  %v4986 = vrot.slane %v4981, %v4985
  %v4987 = vlaneseq
  %v4988 = vshrl.u32 %v4987, 7
  %v4989 = vsub.s32 1, %v4988
  %v4990 = vrot.slane %v4981, %v4989
  %v4993 = vadd.f32 %v4949, %v4986
  %v4994 = vadd.f32 %v4950, %v4990
  %v4995 = vadd.f32 %v4951, %v4986
  %v4996 = vadd.f32 %v4952, %v4990
  %v4997 = vadd.f32 %v4953, %v4986
  %v4998 = vadd.f32 %v4954, %v4990
  %v4999 = vadd.f32 %v4955, %v4986
  %v5000 = vadd.f32 %v4956, %v4990
  %v5001 = vadd.f32 %v4957, %v4986
  %v5002 = vadd.f32 %v4958, %v4990
  %v5003 = vadd.f32 %v4959, %v4986
  %v5004 = vadd.f32 %v4960, %v4990
  %v5005 = vadd.f32 %v4961, %v4986
  %v5006 = vadd.f32 %v4962, %v4990
  %v5007 = vadd.f32 %v4963, %v4986
  %v5008 = vadd.f32 %v4964, %v4990
  %v5009 = vadd.f32 %v4965, %v4986
  %v5010 = vadd.f32 %v4966, %v4990
  %v5011 = vadd.f32 %v4967, %v4986
  %v5012 = vadd.f32 %v4968, %v4990
  %v5013 = vadd.f32 %v4969, %v4986
  %v5014 = vadd.f32 %v4970, %v4990
  %v5015 = vadd.f32 %v4971, %v4986
  %v5016 = vadd.f32 %v4972, %v4990
  %v5017 = vadd.f32 %v4973, %v4986
  %v5018 = vadd.f32 %v4974, %v4990
  %v5019 = vadd.f32 %v4975, %v4986
  %v5020 = vadd.f32 %v4976, %v4990
  %v5021 = vadd.f32 %v4977, %v4986
  %v5022 = vadd.f32 %v4978, %v4990
  %v5023 = vadd.f32 %v4979, %v4986
  %v5024 = vadd.f32 %v4980, %v4990
  %v5025 = vmax.f32 %v4993, 0.0
  %v5026 = vmax.f32 %v4994, 0.0
  %v5027 = vmax.f32 %v4995, 0.0
  %v5028 = vmax.f32 %v4996, 0.0
  %v5029 = vmax.f32 %v4997, 0.0
  %v5030 = vmax.f32 %v4998, 0.0
  %v5031 = vmax.f32 %v4999, 0.0
  %v5032 = vmax.f32 %v5000, 0.0
  %v5033 = vmax.f32 %v5001, 0.0
  %v5034 = vmax.f32 %v5002, 0.0
  %v5035 = vmax.f32 %v5003, 0.0
  %v5036 = vmax.f32 %v5004, 0.0
  %v5037 = vmax.f32 %v5005, 0.0
  %v5038 = vmax.f32 %v5006, 0.0
  %v5039 = vmax.f32 %v5007, 0.0
  %v5040 = vmax.f32 %v5008, 0.0
  %v5041 = vmax.f32 %v5009, 0.0
  %v5042 = vmax.f32 %v5010, 0.0
  %v5043 = vmax.f32 %v5011, 0.0
  %v5044 = vmax.f32 %v5012, 0.0
  %v5045 = vmax.f32 %v5013, 0.0
  %v5046 = vmax.f32 %v5014, 0.0
  %v5047 = vmax.f32 %v5015, 0.0
  %v5048 = vmax.f32 %v5016, 0.0
  %v5049 = vmax.f32 %v5017, 0.0
  %v5050 = vmax.f32 %v5018, 0.0
  %v5051 = vmax.f32 %v5019, 0.0
  %v5052 = vmax.f32 %v5020, 0.0
  %v5053 = vmax.f32 %v5021, 0.0
  %v5054 = vmax.f32 %v5022, 0.0
  %v5055 = vmax.f32 %v5023, 0.0
  %v5056 = vmax.f32 %v5024, 0.0
  %5057 = vst [vmem:[%s3] sm:$0xff] %v5025
  %5058 = vst [vmem:[%s3 + $0x8] sm:$0xff] %v5026
  %5059 = vst [vmem:[%s3 + $0x10] sm:$0xff] %v5027
  %5060 = vst [vmem:[%s3 + $0x18] sm:$0xff] %v5028
  %5061 = vst [vmem:[%s3 + $0x20] sm:$0xff] %v5029
  %5062 = vst [vmem:[%s3 + $0x28] sm:$0xff] %v5030
  %5063 = vst [vmem:[%s3 + $0x30] sm:$0xff] %v5031
  %5064 = vst [vmem:[%s3 + $0x38] sm:$0xff] %v5032
  %5065 = vst [vmem:[%s3 + $0x40] sm:$0xff] %v5033
  %5066 = vst [vmem:[%s3 + $0x48] sm:$0xff] %v5034
  %5067 = vst [vmem:[%s3 + $0x50] sm:$0xff] %v5035
  %5068 = vst [vmem:[%s3 + $0x58] sm:$0xff] %v5036
  %5069 = vst [vmem:[%s3 + $0x60] sm:$0xff] %v5037
  %5070 = vst [vmem:[%s3 + $0x68] sm:$0xff] %v5038
  %5071 = vst [vmem:[%s3 + $0x70] sm:$0xff] %v5039
  %5072 = vst [vmem:[%s3 + $0x78] sm:$0xff] %v5040
  %5073 = vst [vmem:[%s3 + $0x80] sm:$0xff] %v5041
  %5074 = vst [vmem:[%s3 + $0x88] sm:$0xff] %v5042
  %5075 = vst [vmem:[%s3 + $0x90] sm:$0xff] %v5043
  %5076 = vst [vmem:[%s3 + $0x98] sm:$0xff] %v5044
  %5077 = vst [vmem:[%s3 + $0xa0] sm:$0xff] %v5045
  %5078 = vst [vmem:[%s3 + $0xa8] sm:$0xff] %v5046
  %5079 = vst [vmem:[%s3 + $0xb0] sm:$0xff] %v5047
  %5080 = vst [vmem:[%s3 + $0xb8] sm:$0xff] %v5048
  %5081 = vst [vmem:[%s3 + $0xc0] sm:$0xff] %v5049
  %5082 = vst [vmem:[%s3 + $0xc8] sm:$0xff] %v5050
  %5083 = vst [vmem:[%s3 + $0xd0] sm:$0xff] %v5051
  %5084 = vst [vmem:[%s3 + $0xd8] sm:$0xff] %v5052
  %5085 = vst [vmem:[%s3 + $0xe0] sm:$0xff] %v5053
  %5086 = vst [vmem:[%s3 + $0xe8] sm:$0xff] %v5054
  %5087 = vst [vmem:[%s3 + $0xf0] sm:$0xff] %v5055
  %5088 = vst [vmem:[%s3 + $0xf8] sm:$0xff] %v5056
  // Predicated region
  $region14: #{inference_forward.4} parent=0 // pred_check
    _
  $region15: #{inference_forward.4} parent=0 // pred_check_branch
    %5090 = sbr.rel (0) target = $region17
  $region16: #{inference_forward.4} parent=0 // pred_region
    _
  $region17: #{inference_forward.4} parent=0 // pred_fallthru
    _
  // Predicated region
  $region18: #{inference_forward.4} parent=0 // pred_check
    _
  $region19: #{inference_forward.4} parent=0 // pred_check_branch
    %5092 = sbr.rel (0) target = $region21
  $region20: #{inference_forward.4} parent=0 // pred_region
    _
  $region21: #{inference_forward.4} parent=0 // pred_fallthru
    _

</llo_original>
